<compile_context>
chip_gen: v7x
topology: tpu7x:2x2x1
jax: 0.10.0
libtpu: 0.0.40
codegen_flags: <defaults>
</compile_context>

<pallas_src>
import functools
import math

import jax
import jax.numpy as jnp
from jax.experimental import pallas as pl
from jax.experimental.pallas import tpu as pltpu


# ----------------------------------------------------------------------------
# In-kernel helpers
# ----------------------------------------------------------------------------
def _layernorm(v, w, b, eps=1e-5):
    # f32 statistics (biased variance), matching PyTorch LayerNorm defaults.
    mu = jnp.mean(v, axis=-1, keepdims=True)
    var = jnp.mean((v - mu) ** 2, axis=-1, keepdims=True)
    return (v - mu) * jax.lax.rsqrt(var + eps) * w + b


def _pick_batch_tile(batch, requested=None):
    """Expose >=2 grid steps on the (parallel) batch axis so both v7x
    TensorCores get work, while keeping tiles as large as possible so the
    per-layer weight stack is re-streamed as few times as possible (v5e/v6e)."""
    if requested is not None:
        assert batch % requested == 0
        return requested
    if batch >= 2 and batch % 2 == 0:
        return batch // 2
    return batch


def _vmem_limit(block_bytes):
    # Per-generation scoped-VMEM budget: ~85% of physical VMEM (64 MiB v7x,
    # 128 MiB v5e/v6e) instead of a hard cross-generation 48 MiB cap.
    try:
        cap = int(pltpu.get_tpu_info().vmem_capacity_bytes)
    except Exception:
        cap = 64 << 20                     # conservative (v7x-sized) fallback
    budget = int(cap * 0.85)
    want = int(2.5 * block_bytes) + (16 << 20)
    return max(min(want, budget), 32 << 20)


# ----------------------------------------------------------------------------
# Fused kernel: patch embed (layer 0) + L pre-norm encoder layers + head.
#   grid = (B/bt, L); the layer axis is the inner "arbitrary" axis.
#   The residual stream lives in acc_ref (VMEM scratch) across the layer axis.
#   NOTE: correctness relies on the layer axis being the innermost grid axis
#   and on the output index_map ignoring the layer index (flash-attn pattern).
# ----------------------------------------------------------------------------
def vit_fused_kernel(patches_ref, pw_ref, pb_ref, cls_ref, pos_ref,
                     in_w_ref, in_b_ref, out_w_ref, out_b_ref,
                     n1_w_ref, n1_b_ref, n2_w_ref, n2_b_ref,
                     l1_w_ref, l1_b_ref, l2_w_ref, l2_b_ref,
                     hn_w_ref, hn_b_ref, hw_ref, hb_ref,
                     o_ref, acc_ref, *, num_heads, seq_len):
    layer = pl.program_id(1)
    num_layers = pl.num_programs(1)
    bt, s_pad, e = acc_ref.shape
    dh = e // num_heads
    s = seq_len

    # ---- layer 0: strided-Conv2d-as-matmul patch embed + cls + pos ---------
    @pl.when(layer == 0)
    def _():
        btn, n, k = patches_ref.shape
        emb = jnp.dot(patches_ref[...].reshape(btn * n, k), pw_ref[...],
                      preferred_element_type=jnp.float32)
        emb = emb.reshape(btn, n, e) + pb_ref[...]
        cls_tok = jnp.broadcast_to(cls_ref[...], (btn, 1, e))
        pieces = [cls_tok, emb]
        if s_pad > s:
            pieces.append(jnp.zeros((btn, s_pad - s, e), jnp.float32))
        seq = jnp.concatenate(pieces, axis=1) + pos_ref[...][None]
        acc_ref[...] = seq                 # single aligned full-block store
        # TODO(synk): PatchEmbedding dropout is identity in eval mode.

    x2 = acc_ref[...].reshape(bt * s_pad, e)          # f32 residual stream

    # ---- self-attention block (pre-norm) ------------------------------------
    h = _layernorm(x2, n1_w_ref[0], n1_b_ref[0]).astype(jnp.bfloat16)
    qkv = jnp.dot(h, in_w_ref[0], preferred_element_type=jnp.float32) + in_b_ref[0]
    scale = 1.0 / math.sqrt(dh)                       # folded into q
    q = (qkv[:, :e] * scale).reshape(bt, s_pad, e).astype(jnp.bfloat16)
    k = qkv[:, e:2 * e].reshape(bt, s_pad, e).astype(jnp.bfloat16)
    v = qkv[:, 2 * e:].reshape(bt, s_pad, e).astype(jnp.bfloat16)

    if s_pad > s:   # softmax bias masking the padded keys (shared by heads)
        key_idx = jax.lax.broadcasted_iota(jnp.int32, (1, 1, s_pad), 2)
        mask_bias = jnp.where(key_idx < s, 0.0, -1e30).astype(jnp.float32)

    # TODO(synk): a single 'bqhd,bkhd->bhqk' einsum over heads would remove the
    # per-head lane slices + concat; kept as a loop for Mosaic lowering
    # robustness (no 4-D batched dot_general / non-minor transposes in-kernel).
    heads = []
    for hh in range(num_heads):
        sl = slice(hh * dh, (hh + 1) * dh)
        sc = jnp.einsum('bqd,bkd->bqk', q[..., sl], k[..., sl],
                        preferred_element_type=jnp.float32)
        if s_pad > s:
            sc = sc + mask_bias
        sc = sc - jnp.max(sc, axis=-1, keepdims=True)
        p = jnp.exp(sc)
        p = p * pl.reciprocal(jnp.sum(p, axis=-1, keepdims=True), approx=True)
        heads.append(jnp.einsum('bqk,bkd->bqd', p.astype(jnp.bfloat16),
                                v[..., sl], preferred_element_type=jnp.float32))
    # Single K=E out-projection of the concatenated heads.
    ao = jnp.concatenate(heads, axis=-1).reshape(bt * s_pad, e).astype(jnp.bfloat16)
    x2 = x2 + jnp.dot(ao, out_w_ref[0],
                      preferred_element_type=jnp.float32) + out_b_ref[0]

    # ---- feed-forward block (pre-norm, relu) --------------------------------
    h2 = _layernorm(x2, n2_w_ref[0], n2_b_ref[0]).astype(jnp.bfloat16)
    ff = jnp.dot(h2, l1_w_ref[0], preferred_element_type=jnp.float32) + l1_b_ref[0]
    ff = jnp.maximum(ff, 0.0).astype(jnp.bfloat16)
    ff = jnp.dot(ff, l2_w_ref[0], preferred_element_type=jnp.float32) + l2_b_ref[0]
    x_out = x2 + ff
    acc_ref[...] = x_out.reshape(bt, s_pad, e)
    # TODO(synk): all encoder dropouts are identity in eval mode.
    # TODO(synk): for ViT-Base (E=768, dff=3072) on v7x, additionally stream
    # l1_w/l2_w over a dff reduction axis (pltpu.emit_pipeline) to halve the
    # ~28 MiB double-buffered weight residency; unnecessary at these shapes.

    # ---- classification head on the resident CLS token at the last layer ----
    @pl.when(layer == num_layers - 1)
    def _():
        cls_vec = x_out.reshape(bt, s_pad, e)[:, 0, :]          # (bt, E) f32
        hc = _layernorm(cls_vec, hn_w_ref[...], hn_b_ref[...]).astype(jnp.bfloat16)
        logits = jnp.dot(hc, hw_ref[...],
                         preferred_element_type=jnp.float32) + hb_ref[...]
        o_ref[...] = logits.reshape(o_ref.shape)


def vit_fused(patches, prep, num_heads, *, batch_tile=None, weight_buffers=None):
    B, N, K = patches.shape
    E = prep["w_patch"].shape[1]
    L = prep["in_w"].shape[0]
    dff = prep["l1_w"].shape[2]
    S, Spad = prep["seq_len"], prep["seq_pad"]
    Cpad = prep["head_w"].shape[1]
    assert S == N + 1 and E % num_heads == 0
    bt = _pick_batch_tile(B, batch_tile)

    kern = functools.partial(vit_fused_kernel, num_heads=num_heads, seq_len=S)

    def cspec(d1, d2):                        # broadcast (per-call constant)
        return pl.BlockSpec((d1, d2), lambda b, l: (0, 0))

    def lspec(d1, d2, buffers=None):          # per-layer streamed operand
        if buffers is None:
            return pl.BlockSpec((1, d1, d2), lambda b, l: (l, 0, 0))
        # Optional deeper pipelining for the big weights if their DMA is
        # exposed on v5e (review item); default keeps double buffering.
        return pl.BlockSpec((1, d1, d2), lambda b, l: (l, 0, 0),
                            pipeline_mode=pl.Buffered(buffers))

    in_specs = [
        pl.BlockSpec((bt, N, K), lambda b, l: (b, 0, 0)),      # patches
        cspec(K, E), cspec(1, E), cspec(1, E), cspec(Spad, E),  # pw, pb, cls, pos
        lspec(E, 3 * E, weight_buffers), lspec(1, 3 * E),
        lspec(E, E), lspec(1, E),
        lspec(1, E), lspec(1, E), lspec(1, E), lspec(1, E),
        lspec(E, dff, weight_buffers), lspec(1, dff),
        lspec(dff, E, weight_buffers), lspec(1, E),
        cspec(1, E), cspec(1, E), cspec(E, Cpad), cspec(1, Cpad),
    ]

    # VMEM footprint estimate: double-buffered streams + resident scratch +
    # largest in-kernel temporaries (qkv, ff, per-head scores).
    wbytes = (E * 3 * E + E * E + 2 * E * dff) * 2             # bf16 / layer
    bbytes = (3 * E + 6 * E + dff) * 4                         # f32 biases + LN
    const_bytes = (K * E + E * Cpad) * 2 + (Spad * E + 6 * E + Cpad) * 4
    act_bytes = bt * N * K * 2 + bt * Cpad * 4
    scratch_bytes = bt * Spad * E * 4
    tmp_bytes = bt * Spad * (3 * E + dff) * 4 + num_heads * bt * Spad * Spad * 4
    block_bytes = (2 * (wbytes + bbytes) + const_bytes + 2 * act_bytes
                   + scratch_bytes + tmp_bytes)

    return pl.pallas_call(
        kern,
        out_shape=jax.ShapeDtypeStruct((B, 1, Cpad), jnp.float32),
        grid=(B // bt, L),
        in_specs=in_specs,
        out_specs=pl.BlockSpec((bt, 1, Cpad), lambda b, l: (b, 0, 0)),
        scratch_shapes=[pltpu.VMEM((bt, Spad, E), jnp.float32)],
        compiler_params=pltpu.CompilerParams(
            dimension_semantics=("parallel", "arbitrary"),
            vmem_limit_bytes=_vmem_limit(block_bytes)),
    )(patches, prep["w_patch"], prep["conv_b"], prep["cls"], prep["pos"],
      prep["in_w"], prep["in_b"], prep["out_w"], prep["out_b"],
      prep["n1_w"], prep["n1_b"], prep["n2_w"], prep["n2_b"],
      prep["l1_w"], prep["l1_b"], prep["l2_w"], prep["l2_b"],
      prep["head_n_w"], prep["head_n_b"], prep["head_w"], prep["head_b"])


# ----------------------------------------------------------------------------
# One-time parameter preparation (stacking, bf16 casts, padding) + forward glue
# ----------------------------------------------------------------------------
def prepare_params(params):
    bf, f32 = jnp.bfloat16, jnp.float32
    E = params["conv_w"].shape[0]
    layers = params["layers"]

    def stack(name, dtype):
        return jnp.stack([lp[name] for lp in layers]).astype(dtype)

    S = params["pos"].shape[0]                       # num_patches + 1
    Spad = ((S + 127) // 128) * 128                  # lane-dense score / row dims
    pos_pad = jnp.zeros((Spad, E), f32).at[:S].set(params["pos"])
    C_out = params["head_w"].shape[1]
    Cpad = ((C_out + 127) // 128) * 128
    head_w_pad = jnp.zeros((E, Cpad), f32).at[:, :C_out].set(
        params["head_w"]).astype(bf)
    head_b_pad = jnp.zeros((1, Cpad), f32).at[:, :C_out].set(params["head_b"])

    return {
        "w_patch": params["conv_w"].reshape(E, -1).T.astype(bf),   # (C*p*p, E)
        "conv_b": params["conv_b"].astype(f32),
        "cls": params["cls"].astype(f32),
        "pos": pos_pad,
        "in_w": stack("in_w", bf), "in_b": stack("in_b", f32),
        "out_w": stack("out_w", bf), "out_b": stack("out_b", f32),
        "n1_w": stack("n1_w", f32), "n1_b": stack("n1_b", f32),
        "n2_w": stack("n2_w", f32), "n2_b": stack("n2_b", f32),
        "l1_w": stack("l1_w", bf), "l1_b": stack("l1_b", f32),
        "l2_w": stack("l2_w", bf), "l2_b": stack("l2_b", f32),
        "head_n_w": params["head_n_w"].astype(f32),
        "head_n_b": params["head_n_b"].astype(f32),
        "head_w": head_w_pad, "head_b": head_b_pad,
        "seq_len": S, "seq_pad": Spad, "num_classes": C_out,
    }


def vit_forward(x, prep, patch_size, num_heads, *, batch_tile=None):
    B, C, H, W = x.shape
    p = patch_size
    # Non-overlapping patches, flattened in (C, ph, pw) order to match the
    # Conv2d weight layout (E, C, ph, pw).
    xp = x.reshape(B, C, H // p, p, W // p, p).transpose(0, 2, 4, 1, 3, 5)
    patches = xp.reshape(B, (H // p) * (W // p), C * p * p).astype(jnp.bfloat16)
    logits = vit_fused(patches, prep, num_heads, batch_tile=batch_tile)
    return logits[:, 0, :prep["num_classes"]]


# ----------------------------------------------------------------------------
# Pure-JAX f32 reference (same math) for the correctness check
# ----------------------------------------------------------------------------
def vit_reference(x, params, patch_size, num_heads):
    B, C, H, W = x.shape
    p = patch_size
    E = params["conv_w"].shape[0]
    xp = x.reshape(B, C, H // p, p, W // p, p).transpose(0, 2, 4, 1, 3, 5)
    patches = xp.reshape(B, (H // p) * (W // p), C * p * p)
    w_patch = params["conv_w"].reshape(E, -1).T
    emb = patches @ w_patch + params["conv_b"]
    cls = jnp.broadcast_to(params["cls"][None, :, :], (B, 1, E))
    seq = jnp.concatenate([cls, emb], axis=1) + params["pos"][None]
    S = seq.shape[1]
    dh = E // num_heads

    def ln(v, w, b):
        mu = v.mean(-1, keepdims=True)
        var = ((v - mu) ** 2).mean(-1, keepdims=True)
        return (v - mu) * jax.lax.rsqrt(var + 1e-5) * w + b

    for lp in params["layers"]:
        h = ln(seq, lp["n1_w"], lp["n1_b"])
        qkv = h @ lp["in_w"] + lp["in_b"]
        q, k, v = qkv[..., :E], qkv[..., E:2 * E], qkv[..., 2 * E:]

        def split(t):
            return t.reshape(B, S, num_heads, dh).transpose(0, 2, 1, 3)

        q, k, v = split(q), split(k), split(v)
        scores = (q @ k.transpose(0, 1, 3, 2)) / math.sqrt(dh)
        pw = jax.nn.softmax(scores, axis=-1)
        ao = (pw @ v).transpose(0, 2, 1, 3).reshape(B, S, E)
        seq = seq + ao @ lp["out_w"] + lp["out_b"]
        h2 = ln(seq, lp["n2_w"], lp["n2_b"])
        ff = jnp.maximum(h2 @ lp["l1_w"] + lp["l1_b"], 0.0)
        seq = seq + ff @ lp["l2_w"] + lp["l2_b"]

    cls_out = seq[:, 0, :]
    h = ln(cls_out, params["head_n_w"], params["head_n_b"])
    return h @ params["head_w"] + params["head_b"]


# ----------------------------------------------------------------------------
# Deterministic parameter initialization (shapes from ViT.__init__)
# ----------------------------------------------------------------------------
def init_params(key, in_channels, patch_size, embed_dim, num_patches,
                num_encoders, num_classes, dff=2048):
    # dff=2048 matches nn.TransformerEncoderLayer's default dim_feedforward.
    E = embed_dim
    ks = jax.random.split(key, 6 + num_encoders)

    def rnd(k, shape, scale=0.02):
        return (scale * jax.random.normal(k, shape)).astype(jnp.float32)

    params = {
        "conv_w": rnd(ks[0], (E, in_channels, patch_size, patch_size)),
        "conv_b": rnd(ks[1], (1, E)),
        # cls_token / position_embedding are nn.Parameters (zeros in __init__);
        # use small random values so the compute path is exercised.
        "cls": rnd(ks[2], (1, E)),
        "pos": rnd(ks[3], (num_patches + 1, E)),
        "head_n_w": jnp.ones((1, E), jnp.float32),
        "head_n_b": jnp.zeros((1, E), jnp.float32),
        "head_w": rnd(ks[4], (E, num_classes)),
        "head_b": rnd(ks[5], (1, num_classes)),
        "layers": [],
    }
    for l in range(num_encoders):
        lk = jax.random.split(ks[6 + l], 8)
        params["layers"].append({
            "in_w": rnd(lk[0], (E, 3 * E)),     # in_proj_weight.T
            "in_b": rnd(lk[1], (1, 3 * E)),
            "out_w": rnd(lk[2], (E, E)),        # out_proj.weight.T
            "out_b": rnd(lk[3], (1, E)),
            "n1_w": jnp.ones((1, E), jnp.float32),
            "n1_b": jnp.zeros((1, E), jnp.float32),
            "n2_w": jnp.ones((1, E), jnp.float32),
            "n2_b": jnp.zeros((1, E), jnp.float32),
            "l1_w": rnd(lk[4], (E, dff)),       # linear1.weight.T
            "l1_b": rnd(lk[5], (1, dff)),
            "l2_w": rnd(lk[6], (dff, E)),       # linear2.weight.T
            "l2_b": rnd(lk[7], (1, E)),
        })
    return params


if __name__ == "__main__":
    in_channels = 4
    patch_size = 4
    img_size = 16
    embed_dim = 32
    num_patches = (img_size // patch_size) ** 2       # 16 -> seq len 17
    num_heads = 2
    num_encoders = 2
    num_classes = 10

    key = jax.random.PRNGKey(0)
    kx, kp = jax.random.split(key)
    x = jax.random.normal(kx, (2, in_channels, img_size, img_size), jnp.float32)
    params = init_params(kp, in_channels, patch_size, embed_dim, num_patches,
                         num_encoders, num_classes)
    prep = prepare_params(params)     # one-time: stacking / padding / bf16

    out = vit_forward(x, prep, patch_size, num_heads)
    out = jax.block_until_ready(out)
    assert out.shape == (2, num_classes), out.shape

    # f32 reference; kernel uses bf16 weights/matmuls -> relative tolerance.
    ref = vit_reference(x, params, patch_size, num_heads)
    abs_err = float(jnp.max(jnp.abs(out - ref)))
    rel_err = abs_err / (float(jnp.max(jnp.abs(ref))) + 1e-6)
    assert rel_err < 5e-2, f"rel err {rel_err} (abs {abs_err})"

    print("KERNEL_OK")
</pallas_src>

<mosaic_0001>
module attributes {stable_mosaic.version = 11 : i64} {
  func.func @vit_fused_kernel(%arg0: i32, %arg1: i32, %arg2: memref<1x16x64xbf16, #tpu.memory_space<vmem>>, %arg3: memref<64x32xbf16, #tpu.memory_space<vmem>>, %arg4: memref<1x32xf32, #tpu.memory_space<vmem>>, %arg5: memref<1x32xf32, #tpu.memory_space<vmem>>, %arg6: memref<128x32xf32, #tpu.memory_space<vmem>>, %arg7: memref<1x32x96xbf16, #tpu.memory_space<vmem>>, %arg8: memref<1x1x96xf32, #tpu.memory_space<vmem>>, %arg9: memref<1x32x32xbf16, #tpu.memory_space<vmem>>, %arg10: memref<1x1x32xf32, #tpu.memory_space<vmem>>, %arg11: memref<1x1x32xf32, #tpu.memory_space<vmem>>, %arg12: memref<1x1x32xf32, #tpu.memory_space<vmem>>, %arg13: memref<1x1x32xf32, #tpu.memory_space<vmem>>, %arg14: memref<1x1x32xf32, #tpu.memory_space<vmem>>, %arg15: memref<1x32x2048xbf16, #tpu.memory_space<vmem>>, %arg16: memref<1x1x2048xf32, #tpu.memory_space<vmem>>, %arg17: memref<1x2048x32xbf16, #tpu.memory_space<vmem>>, %arg18: memref<1x1x32xf32, #tpu.memory_space<vmem>>, %arg19: memref<1x32xf32, #tpu.memory_space<vmem>>, %arg20: memref<1x32xf32, #tpu.memory_space<vmem>>, %arg21: memref<32x128xbf16, #tpu.memory_space<vmem>>, %arg22: memref<1x128xf32, #tpu.memory_space<vmem>>, %arg23: memref<1x1x128xf32, #tpu.memory_space<vmem>>, %arg24: memref<1x128x32xf32, #tpu.memory_space<vmem>>) attributes {dimension_semantics = [#tpu.dimension_semantics<parallel>, #tpu.dimension_semantics<arbitrary>], iteration_bounds = array<i64: 2, 2>, scalar_prefetch = 0 : i64, scratch_operands = 1 : i64, tpu.core_type = #tpu.core_type<tc>, window_params = [{transform_indices = @transform_0, window_bounds = array<i64: 1, 16, 64>}, {pipeline_mode = #tpu.pipeline_mode<synchronous>, transform_indices = @transform_1, window_bounds = array<i64: 64, 32>}, {pipeline_mode = #tpu.pipeline_mode<synchronous>, transform_indices = @transform_2, window_bounds = array<i64: 1, 32>}, {pipeline_mode = #tpu.pipeline_mode<synchronous>, transform_indices = @transform_3, window_bounds = array<i64: 1, 32>}, {pipeline_mode = #tpu.pipeline_mode<synchronous>, transform_indices = @transform_4, window_bounds = array<i64: 128, 32>}, {transform_indices = @transform_5, window_bounds = array<i64: 1, 32, 96>}, {transform_indices = @transform_6, window_bounds = array<i64: 1, 1, 96>}, {transform_indices = @transform_7, window_bounds = array<i64: 1, 32, 32>}, {transform_indices = @transform_8, window_bounds = array<i64: 1, 1, 32>}, {transform_indices = @transform_9, window_bounds = array<i64: 1, 1, 32>}, {transform_indices = @transform_10, window_bounds = array<i64: 1, 1, 32>}, {transform_indices = @transform_11, window_bounds = array<i64: 1, 1, 32>}, {transform_indices = @transform_12, window_bounds = array<i64: 1, 1, 32>}, {transform_indices = @transform_13, window_bounds = array<i64: 1, 32, 2048>}, {transform_indices = @transform_14, window_bounds = array<i64: 1, 1, 2048>}, {transform_indices = @transform_15, window_bounds = array<i64: 1, 2048, 32>}, {transform_indices = @transform_16, window_bounds = array<i64: 1, 1, 32>}, {pipeline_mode = #tpu.pipeline_mode<synchronous>, transform_indices = @transform_17, window_bounds = array<i64: 1, 32>}, {pipeline_mode = #tpu.pipeline_mode<synchronous>, transform_indices = @transform_18, window_bounds = array<i64: 1, 32>}, {pipeline_mode = #tpu.pipeline_mode<synchronous>, transform_indices = @transform_19, window_bounds = array<i64: 32, 128>}, {pipeline_mode = #tpu.pipeline_mode<synchronous>, transform_indices = @transform_20, window_bounds = array<i64: 1, 128>}, {transform_indices = @transform_21, window_bounds = array<i64: 1, 1, 128>}]} {
    %c0_i32 = arith.constant 0 : i32
    %0 = arith.cmpi eq, %arg1, %c0_i32 : i32
    %1 = arith.extui %0 : i1 to i32
    %c0_i32_0 = arith.constant 0 : i32
    %2 = arith.cmpi ne, %1, %c0_i32_0 : i32
    scf.if %2 {
      %c0_68 = arith.constant 0 : index
      %c0_69 = arith.constant 0 : index
      %c0_70 = arith.constant 0 : index
      %153 = vector.load %arg2[%c0_68, %c0_69, %c0_70] : memref<1x16x64xbf16, #tpu.memory_space<vmem>>, vector<1x16x64xbf16>
      %154 = vector.shape_cast %153 : vector<1x16x64xbf16> to vector<16x64xbf16>
      %c0_71 = arith.constant 0 : index
      %c0_72 = arith.constant 0 : index
      %155 = vector.load %arg3[%c0_71, %c0_72] : memref<64x32xbf16, #tpu.memory_space<vmem>>, vector<64x32xbf16>
      %cst_73 = arith.constant dense<0.000000e+00> : vector<16x32xf32>
      %156 = tpu.matmul %154, %155, %cst_73 {dimension_numbers = #tpu.dot_dimension_numbers<[1], [0], [0], [1], [0, 0, 1, 1], [], []>} : vector<16x64xbf16>, vector<64x32xbf16>, vector<16x32xf32> -> vector<16x32xf32>
      %157 = vector.shape_cast %156 : vector<16x32xf32> to vector<1x16x32xf32>
      %c0_74 = arith.constant 0 : index
      %c0_75 = arith.constant 0 : index
      %158 = vector.load %arg4[%c0_74, %c0_75] : memref<1x32xf32, #tpu.memory_space<vmem>>, vector<1x32xf32>
      %159 = vector.shape_cast %158 : vector<1x32xf32> to vector<1x1x32xf32>
      %160 = vector.broadcast %159 : vector<1x1x32xf32> to vector<1x16x32xf32>
      %161 = arith.addf %157, %160 : vector<1x16x32xf32>
      %c0_76 = arith.constant 0 : index
      %c0_77 = arith.constant 0 : index
      %162 = vector.load %arg5[%c0_76, %c0_77] : memref<1x32xf32, #tpu.memory_space<vmem>>, vector<1x32xf32>
      %163 = vector.shape_cast %162 : vector<1x32xf32> to vector<1x1x32xf32>
      %cst_78 = arith.constant 0.000000e+00 : f32
      %164 = vector.broadcast %cst_78 : f32 to vector<1x111x32xf32>
      %165 = tpu.concatenate %163, %161, %164 in 1 : vector<1x1x32xf32>, vector<1x16x32xf32>, vector<1x111x32xf32> -> vector<1x128x32xf32>
      %c0_79 = arith.constant 0 : index
      %c0_80 = arith.constant 0 : index
      %166 = vector.load %arg6[%c0_79, %c0_80] : memref<128x32xf32, #tpu.memory_space<vmem>>, vector<128x32xf32>
      %167 = vector.shape_cast %166 : vector<128x32xf32> to vector<1x128x32xf32>
      %168 = arith.addf %165, %167 : vector<1x128x32xf32>
      %c0_81 = arith.constant 0 : index
      %c0_82 = arith.constant 0 : index
      %c0_83 = arith.constant 0 : index
      %169 = vector.load %arg24[%c0_81, %c0_82, %c0_83] : memref<1x128x32xf32, #tpu.memory_space<vmem>>, vector<1x128x32xf32>
      tpu.vector_store %arg24[%c0_81, %c0_82, %c0_83], %168 {strides = array<i32>} : memref<1x128x32xf32, #tpu.memory_space<vmem>>, vector<1x128x32xf32>,
    } else {
    }
    %c0 = arith.constant 0 : index
    %c0_1 = arith.constant 0 : index
    %c0_2 = arith.constant 0 : index
    %3 = vector.load %arg24[%c0, %c0_1, %c0_2] : memref<1x128x32xf32, #tpu.memory_space<vmem>>, vector<1x128x32xf32>
    %4 = vector.shape_cast %3 : vector<1x128x32xf32> to vector<128x32xf32>
    %c0_3 = arith.constant 0 : index
    %c0_4 = arith.constant 0 : index
    %c0_5 = arith.constant 0 : index
    %5 = vector.load %arg11[%c0_3, %c0_4, %c0_5] : memref<1x1x32xf32, #tpu.memory_space<vmem>>, vector<1x1x32xf32>
    %6 = vector.shape_cast %5 : vector<1x1x32xf32> to vector<1x32xf32>
    %c0_6 = arith.constant 0 : index
    %c0_7 = arith.constant 0 : index
    %c0_8 = arith.constant 0 : index
    %7 = vector.load %arg12[%c0_6, %c0_7, %c0_8] : memref<1x1x32xf32, #tpu.memory_space<vmem>>, vector<1x1x32xf32>
    %8 = vector.shape_cast %7 : vector<1x1x32xf32> to vector<1x32xf32>
    %cst = arith.constant dense<0.000000e+00> : vector<128xf32>
    %9 = vector.multi_reduction <add>, %4, %cst [1] : vector<128x32xf32> to vector<128xf32>
    %10 = vector.shape_cast %9 : vector<128xf32> to vector<128x1xf32>
    %cst_9 = arith.constant 3.200000e+01 : f32
    %11 = vector.broadcast %cst_9 : f32 to vector<128x1xf32>
    %12 = arith.divf %10, %11 : vector<128x1xf32>
    %13 = vector.broadcast %12 : vector<128x1xf32> to vector<128x32xf32>
    %14 = arith.subf %4, %13 : vector<128x32xf32>
    %15 = arith.mulf %14, %14 : vector<128x32xf32>
    %cst_10 = arith.constant dense<0.000000e+00> : vector<128xf32>
    %16 = vector.multi_reduction <add>, %15, %cst_10 [1] : vector<128x32xf32> to vector<128xf32>
    %17 = vector.shape_cast %16 : vector<128xf32> to vector<128x1xf32>
    %cst_11 = arith.constant 3.200000e+01 : f32
    %18 = vector.broadcast %cst_11 : f32 to vector<128x1xf32>
    %19 = arith.divf %17, %18 : vector<128x1xf32>
    %20 = vector.broadcast %12 : vector<128x1xf32> to vector<128x32xf32>
    %21 = arith.subf %4, %20 : vector<128x32xf32>
    %cst_12 = arith.constant 9.99999974E-6 : f32
    %22 = vector.broadcast %cst_12 : f32 to vector<128x1xf32>
    %23 = arith.addf %19, %22 : vector<128x1xf32>
    %24 = math.rsqrt %23 : vector<128x1xf32>
    %25 = vector.broadcast %24 : vector<128x1xf32> to vector<128x32xf32>
    %26 = arith.mulf %21, %25 : vector<128x32xf32>
    %27 = vector.broadcast %6 : vector<1x32xf32> to vector<128x32xf32>
    %28 = arith.mulf %26, %27 : vector<128x32xf32>
    %29 = vector.broadcast %8 : vector<1x32xf32> to vector<128x32xf32>
    %30 = arith.addf %28, %29 : vector<128x32xf32>
    %31 = arith.truncf %30 : vector<128x32xf32> to vector<128x32xbf16>
    %c0_13 = arith.constant 0 : index
    %c0_14 = arith.constant 0 : index
    %c0_15 = arith.constant 0 : index
    %32 = vector.load %arg7[%c0_13, %c0_14, %c0_15] : memref<1x32x96xbf16, #tpu.memory_space<vmem>>, vector<1x32x96xbf16>
    %33 = vector.shape_cast %32 : vector<1x32x96xbf16> to vector<32x96xbf16>
    %cst_16 = arith.constant dense<0.000000e+00> : vector<128x96xf32>
    %34 = tpu.matmul %31, %33, %cst_16 {dimension_numbers = #tpu.dot_dimension_numbers<[1], [0], [0], [1], [0, 0, 1, 1], [], []>} : vector<128x32xbf16>, vector<32x96xbf16>, vector<128x96xf32> -> vector<128x96xf32>
    %c0_17 = arith.constant 0 : index
    %c0_18 = arith.constant 0 : index
    %c0_19 = arith.constant 0 : index
    %35 = vector.load %arg8[%c0_17, %c0_18, %c0_19] : memref<1x1x96xf32, #tpu.memory_space<vmem>>, vector<1x1x96xf32>
    %36 = vector.shape_cast %35 : vector<1x1x96xf32> to vector<1x96xf32>
    %37 = vector.broadcast %36 : vector<1x96xf32> to vector<128x96xf32>
    %38 = arith.addf %34, %37 : vector<128x96xf32>
    %39 = vector.extract_strided_slice %38 {offsets = [0, 0], sizes = [128, 32], strides = [1, 1]} : vector<128x96xf32> to vector<128x32xf32>
    %cst_20 = arith.constant 2.500000e-01 : f32
    %40 = vector.broadcast %cst_20 : f32 to vector<128x32xf32>
    %41 = arith.mulf %39, %40 : vector<128x32xf32>
    %42 = vector.shape_cast %41 : vector<128x32xf32> to vector<1x128x32xf32>
    %43 = arith.truncf %42 : vector<1x128x32xf32> to vector<1x128x32xbf16>
    %44 = vector.extract_strided_slice %38 {offsets = [0, 32], sizes = [128, 32], strides = [1, 1]} : vector<128x96xf32> to vector<128x32xf32>
    %45 = vector.shape_cast %44 : vector<128x32xf32> to vector<1x128x32xf32>
    %46 = arith.truncf %45 : vector<1x128x32xf32> to vector<1x128x32xbf16>
    %47 = vector.extract_strided_slice %38 {offsets = [0, 64], sizes = [128, 32], strides = [1, 1]} : vector<128x96xf32> to vector<128x32xf32>
    %48 = vector.shape_cast %47 : vector<128x32xf32> to vector<1x128x32xf32>
    %49 = arith.truncf %48 : vector<1x128x32xf32> to vector<1x128x32xbf16>
    %50 = tpu.iota {dimensions = array<i32: 2>} : vector<1x1x128xi32>
    %c17_i32 = arith.constant 17 : i32
    %51 = vector.broadcast %c17_i32 : i32 to vector<1x1x128xi32>
    %52 = arith.cmpi slt, %50, %51 : vector<1x1x128xi32>
    %cst_21 = arith.constant 0.000000e+00 : f32
    %cst_22 = arith.constant -1.000000e+30 : f32
    %53 = vector.broadcast %cst_21 : f32 to vector<1x1x128xf32>
    %54 = vector.broadcast %cst_22 : f32 to vector<1x1x128xf32>
    %55 = arith.select %52, %53, %54 : vector<1x1x128xi1>, vector<1x1x128xf32>
    %56 = vector.extract_strided_slice %43 {offsets = [0, 0, 0], sizes = [1, 128, 16], strides = [1, 1, 1]} : vector<1x128x32xbf16> to vector<1x128x16xbf16>
    %57 = vector.extract_strided_slice %46 {offsets = [0, 0, 0], sizes = [1, 128, 16], strides = [1, 1, 1]} : vector<1x128x32xbf16> to vector<1x128x16xbf16>
    "tpu.trace_start"() <{level = 10 : i32, message = "bqd,bkd->bqk"}> : () -> ()
    %cst_23 = arith.constant dense<0.000000e+00> : vector<1x128x128xf32>
    %58 = tpu.matmul %56, %57, %cst_23 {dimension_numbers = #tpu.dot_dimension_numbers<[2], [2], [1], [1], [0, 0, 0, 1, 1, 1], [0], [0]>} : vector<1x128x16xbf16>, vector<1x128x16xbf16>, vector<1x128x128xf32> -> vector<1x128x128xf32>
    "tpu.trace_stop"() : () -> ()
    %59 = vector.broadcast %55 : vector<1x1x128xf32> to vector<1x128x128xf32>
    %60 = arith.addf %58, %59 : vector<1x128x128xf32>
    %cst_24 = arith.constant dense<0xFF800000> : vector<1x128xf32>
    %61 = vector.multi_reduction <maximumf>, %60, %cst_24 [2] : vector<1x128x128xf32> to vector<1x128xf32>
    %62 = vector.shape_cast %61 : vector<1x128xf32> to vector<1x128x1xf32>
    %63 = vector.broadcast %62 : vector<1x128x1xf32> to vector<1x128x128xf32>
    %64 = arith.subf %60, %63 : vector<1x128x128xf32>
    %65 = math.exp %64 : vector<1x128x128xf32>
    %cst_25 = arith.constant dense<0.000000e+00> : vector<1x128xf32>
    %66 = vector.multi_reduction <add>, %65, %cst_25 [2] : vector<1x128x128xf32> to vector<1x128xf32>
    %67 = vector.shape_cast %66 : vector<1x128xf32> to vector<1x128x1xf32>
    %68 = tpu.reciprocal %67 {approx = true} : vector<1x128x1xf32> -> vector<1x128x1xf32>
    %69 = vector.broadcast %68 : vector<1x128x1xf32> to vector<1x128x128xf32>
    %70 = arith.mulf %65, %69 : vector<1x128x128xf32>
    %71 = arith.truncf %70 : vector<1x128x128xf32> to vector<1x128x128xbf16>
    %72 = vector.extract_strided_slice %49 {offsets = [0, 0, 0], sizes = [1, 128, 16], strides = [1, 1, 1]} : vector<1x128x32xbf16> to vector<1x128x16xbf16>
    "tpu.trace_start"() <{level = 10 : i32, message = "bqk,bkd->bqd"}> : () -> ()
    %cst_26 = arith.constant dense<0.000000e+00> : vector<1x128x16xf32>
    %73 = tpu.matmul %71, %72, %cst_26 {dimension_numbers = #tpu.dot_dimension_numbers<[2], [1], [1], [2], [0, 0, 0, 1, 1, 2], [0], [0]>} : vector<1x128x128xbf16>, vector<1x128x16xbf16>, vector<1x128x16xf32> -> vector<1x128x16xf32>
    "tpu.trace_stop"() : () -> ()
    %74 = vector.extract_strided_slice %43 {offsets = [0, 0, 16], sizes = [1, 128, 16], strides = [1, 1, 1]} : vector<1x128x32xbf16> to vector<1x128x16xbf16>
    %75 = vector.extract_strided_slice %46 {offsets = [0, 0, 16], sizes = [1, 128, 16], strides = [1, 1, 1]} : vector<1x128x32xbf16> to vector<1x128x16xbf16>
    "tpu.trace_start"() <{level = 10 : i32, message = "bqd,bkd->bqk"}> : () -> ()
    %cst_27 = arith.constant dense<0.000000e+00> : vector<1x128x128xf32>
    %76 = tpu.matmul %74, %75, %cst_27 {dimension_numbers = #tpu.dot_dimension_numbers<[2], [2], [1], [1], [0, 0, 0, 1, 1, 1], [0], [0]>} : vector<1x128x16xbf16>, vector<1x128x16xbf16>, vector<1x128x128xf32> -> vector<1x128x128xf32>
    "tpu.trace_stop"() : () -> ()
    %77 = vector.broadcast %55 : vector<1x1x128xf32> to vector<1x128x128xf32>
    %78 = arith.addf %76, %77 : vector<1x128x128xf32>
    %cst_28 = arith.constant dense<0xFF800000> : vector<1x128xf32>
    %79 = vector.multi_reduction <maximumf>, %78, %cst_28 [2] : vector<1x128x128xf32> to vector<1x128xf32>
    %80 = vector.shape_cast %79 : vector<1x128xf32> to vector<1x128x1xf32>
    %81 = vector.broadcast %80 : vector<1x128x1xf32> to vector<1x128x128xf32>
    %82 = arith.subf %78, %81 : vector<1x128x128xf32>
    %83 = math.exp %82 : vector<1x128x128xf32>
    %cst_29 = arith.constant dense<0.000000e+00> : vector<1x128xf32>
    %84 = vector.multi_reduction <add>, %83, %cst_29 [2] : vector<1x128x128xf32> to vector<1x128xf32>
    %85 = vector.shape_cast %84 : vector<1x128xf32> to vector<1x128x1xf32>
    %86 = tpu.reciprocal %85 {approx = true} : vector<1x128x1xf32> -> vector<1x128x1xf32>
    %87 = vector.broadcast %86 : vector<1x128x1xf32> to vector<1x128x128xf32>
    %88 = arith.mulf %83, %87 : vector<1x128x128xf32>
    %89 = arith.truncf %88 : vector<1x128x128xf32> to vector<1x128x128xbf16>
    %90 = vector.extract_strided_slice %49 {offsets = [0, 0, 16], sizes = [1, 128, 16], strides = [1, 1, 1]} : vector<1x128x32xbf16> to vector<1x128x16xbf16>
    "tpu.trace_start"() <{level = 10 : i32, message = "bqk,bkd->bqd"}> : () -> ()
    %cst_30 = arith.constant dense<0.000000e+00> : vector<1x128x16xf32>
    %91 = tpu.matmul %89, %90, %cst_30 {dimension_numbers = #tpu.dot_dimension_numbers<[2], [1], [1], [2], [0, 0, 0, 1, 1, 2], [0], [0]>} : vector<1x128x128xbf16>, vector<1x128x16xbf16>, vector<1x128x16xf32> -> vector<1x128x16xf32>
    "tpu.trace_stop"() : () -> ()
    %92 = tpu.concatenate %73, %91 in 2 : vector<1x128x16xf32>, vector<1x128x16xf32> -> vector<1x128x32xf32>
    %93 = vector.shape_cast %92 : vector<1x128x32xf32> to vector<128x32xf32>
    %94 = arith.truncf %93 : vector<128x32xf32> to vector<128x32xbf16>
    %c0_31 = arith.constant 0 : index
    %c0_32 = arith.constant 0 : index
    %c0_33 = arith.constant 0 : index
    %95 = vector.load %arg9[%c0_31, %c0_32, %c0_33] : memref<1x32x32xbf16, #tpu.memory_space<vmem>>, vector<1x32x32xbf16>
    %96 = vector.shape_cast %95 : vector<1x32x32xbf16> to vector<32x32xbf16>
    %cst_34 = arith.constant dense<0.000000e+00> : vector<128x32xf32>
    %97 = tpu.matmul %94, %96, %cst_34 {dimension_numbers = #tpu.dot_dimension_numbers<[1], [0], [0], [1], [0, 0, 1, 1], [], []>} : vector<128x32xbf16>, vector<32x32xbf16>, vector<128x32xf32> -> vector<128x32xf32>
    %98 = arith.addf %4, %97 : vector<128x32xf32>
    %c0_35 = arith.constant 0 : index
    %c0_36 = arith.constant 0 : index
    %c0_37 = arith.constant 0 : index
    %99 = vector.load %arg10[%c0_35, %c0_36, %c0_37] : memref<1x1x32xf32, #tpu.memory_space<vmem>>, vector<1x1x32xf32>
    %100 = vector.shape_cast %99 : vector<1x1x32xf32> to vector<1x32xf32>
    %101 = vector.broadcast %100 : vector<1x32xf32> to vector<128x32xf32>
    %102 = arith.addf %98, %101 : vector<128x32xf32>
    %c0_38 = arith.constant 0 : index
    %c0_39 = arith.constant 0 : index
    %c0_40 = arith.constant 0 : index
    %103 = vector.load %arg13[%c0_38, %c0_39, %c0_40] : memref<1x1x32xf32, #tpu.memory_space<vmem>>, vector<1x1x32xf32>
    %104 = vector.shape_cast %103 : vector<1x1x32xf32> to vector<1x32xf32>
    %c0_41 = arith.constant 0 : index
    %c0_42 = arith.constant 0 : index
    %c0_43 = arith.constant 0 : index
    %105 = vector.load %arg14[%c0_41, %c0_42, %c0_43] : memref<1x1x32xf32, #tpu.memory_space<vmem>>, vector<1x1x32xf32>
    %106 = vector.shape_cast %105 : vector<1x1x32xf32> to vector<1x32xf32>
    %cst_44 = arith.constant dense<0.000000e+00> : vector<128xf32>
    %107 = vector.multi_reduction <add>, %102, %cst_44 [1] : vector<128x32xf32> to vector<128xf32>
    %108 = vector.shape_cast %107 : vector<128xf32> to vector<128x1xf32>
    %cst_45 = arith.constant 3.200000e+01 : f32
    %109 = vector.broadcast %cst_45 : f32 to vector<128x1xf32>
    %110 = arith.divf %108, %109 : vector<128x1xf32>
    %111 = vector.broadcast %110 : vector<128x1xf32> to vector<128x32xf32>
    %112 = arith.subf %102, %111 : vector<128x32xf32>
    %113 = arith.mulf %112, %112 : vector<128x32xf32>
    %cst_46 = arith.constant dense<0.000000e+00> : vector<128xf32>
    %114 = vector.multi_reduction <add>, %113, %cst_46 [1] : vector<128x32xf32> to vector<128xf32>
    %115 = vector.shape_cast %114 : vector<128xf32> to vector<128x1xf32>
    %cst_47 = arith.constant 3.200000e+01 : f32
    %116 = vector.broadcast %cst_47 : f32 to vector<128x1xf32>
    %117 = arith.divf %115, %116 : vector<128x1xf32>
    %118 = vector.broadcast %110 : vector<128x1xf32> to vector<128x32xf32>
    %119 = arith.subf %102, %118 : vector<128x32xf32>
    %cst_48 = arith.constant 9.99999974E-6 : f32
    %120 = vector.broadcast %cst_48 : f32 to vector<128x1xf32>
    %121 = arith.addf %117, %120 : vector<128x1xf32>
    %122 = math.rsqrt %121 : vector<128x1xf32>
    %123 = vector.broadcast %122 : vector<128x1xf32> to vector<128x32xf32>
    %124 = arith.mulf %119, %123 : vector<128x32xf32>
    %125 = vector.broadcast %104 : vector<1x32xf32> to vector<128x32xf32>
    %126 = arith.mulf %124, %125 : vector<128x32xf32>
    %127 = vector.broadcast %106 : vector<1x32xf32> to vector<128x32xf32>
    %128 = arith.addf %126, %127 : vector<128x32xf32>
    %129 = arith.truncf %128 : vector<128x32xf32> to vector<128x32xbf16>
    %c0_49 = arith.constant 0 : index
    %c0_50 = arith.constant 0 : index
    %c0_51 = arith.constant 0 : index
    %130 = vector.load %arg15[%c0_49, %c0_50, %c0_51] : memref<1x32x2048xbf16, #tpu.memory_space<vmem>>, vector<1x32x2048xbf16>
    %131 = vector.shape_cast %130 : vector<1x32x2048xbf16> to vector<32x2048xbf16>
    %cst_52 = arith.constant dense<0.000000e+00> : vector<128x2048xf32>
    %132 = tpu.matmul %129, %131, %cst_52 {dimension_numbers = #tpu.dot_dimension_numbers<[1], [0], [0], [1], [0, 0, 1, 1], [], []>} : vector<128x32xbf16>, vector<32x2048xbf16>, vector<128x2048xf32> -> vector<128x2048xf32>
    %c0_53 = arith.constant 0 : index
    %c0_54 = arith.constant 0 : index
    %c0_55 = arith.constant 0 : index
    %133 = vector.load %arg16[%c0_53, %c0_54, %c0_55] : memref<1x1x2048xf32, #tpu.memory_space<vmem>>, vector<1x1x2048xf32>
    %134 = vector.shape_cast %133 : vector<1x1x2048xf32> to vector<1x2048xf32>
    %135 = vector.broadcast %134 : vector<1x2048xf32> to vector<128x2048xf32>
    %136 = arith.addf %132, %135 : vector<128x2048xf32>
    %cst_56 = arith.constant 0.000000e+00 : f32
    %137 = vector.broadcast %cst_56 : f32 to vector<128x2048xf32>
    %138 = arith.maximumf %136, %137 : vector<128x2048xf32>
    %139 = arith.truncf %138 : vector<128x2048xf32> to vector<128x2048xbf16>
    %c0_57 = arith.constant 0 : index
    %c0_58 = arith.constant 0 : index
    %c0_59 = arith.constant 0 : index
    %140 = vector.load %arg17[%c0_57, %c0_58, %c0_59] : memref<1x2048x32xbf16, #tpu.memory_space<vmem>>, vector<1x2048x32xbf16>
    %141 = vector.shape_cast %140 : vector<1x2048x32xbf16> to vector<2048x32xbf16>
    %cst_60 = arith.constant dense<0.000000e+00> : vector<128x32xf32>
    %142 = tpu.matmul %139, %141, %cst_60 {dimension_numbers = #tpu.dot_dimension_numbers<[1], [0], [0], [1], [0, 0, 1, 1], [], []>} : vector<128x2048xbf16>, vector<2048x32xbf16>, vector<128x32xf32> -> vector<128x32xf32>
    %c0_61 = arith.constant 0 : index
    %c0_62 = arith.constant 0 : index
    %c0_63 = arith.constant 0 : index
    %143 = vector.load %arg18[%c0_61, %c0_62, %c0_63] : memref<1x1x32xf32, #tpu.memory_space<vmem>>, vector<1x1x32xf32>
    %144 = vector.shape_cast %143 : vector<1x1x32xf32> to vector<1x32xf32>
    %145 = vector.broadcast %144 : vector<1x32xf32> to vector<128x32xf32>
    %146 = arith.addf %142, %145 : vector<128x32xf32>
    %147 = arith.addf %102, %146 : vector<128x32xf32>
    %148 = vector.shape_cast %147 : vector<128x32xf32> to vector<1x128x32xf32>
    %c0_64 = arith.constant 0 : index
    %c0_65 = arith.constant 0 : index
    %c0_66 = arith.constant 0 : index
    %149 = vector.load %arg24[%c0_64, %c0_65, %c0_66] : memref<1x128x32xf32, #tpu.memory_space<vmem>>, vector<1x128x32xf32>
    tpu.vector_store %arg24[%c0_64, %c0_65, %c0_66], %148 {strides = array<i32>} : memref<1x128x32xf32, #tpu.memory_space<vmem>>, vector<1x128x32xf32>,
    %c1_i32 = arith.constant 1 : i32
    %150 = arith.cmpi eq, %arg1, %c1_i32 : i32
    %151 = arith.extui %150 : i1 to i32
    %c0_i32_67 = arith.constant 0 : i32
    %152 = arith.cmpi ne, %151, %c0_i32_67 : i32
    scf.if %152 {
      %153 = vector.shape_cast %147 : vector<128x32xf32> to vector<1x128x32xf32>
      %154 = vector.extract_strided_slice %153 {offsets = [0, 0, 0], sizes = [1, 1, 32], strides = [1, 1, 1]} : vector<1x128x32xf32> to vector<1x1x32xf32>
      %155 = vector.shape_cast %154 : vector<1x1x32xf32> to vector<1x32xf32>
      %c0_68 = arith.constant 0 : index
      %c0_69 = arith.constant 0 : index
      %156 = vector.load %arg19[%c0_68, %c0_69] : memref<1x32xf32, #tpu.memory_space<vmem>>, vector<1x32xf32>
      %c0_70 = arith.constant 0 : index
      %c0_71 = arith.constant 0 : index
      %157 = vector.load %arg20[%c0_70, %c0_71] : memref<1x32xf32, #tpu.memory_space<vmem>>, vector<1x32xf32>
      %cst_72 = arith.constant dense<0.000000e+00> : vector<1xf32>
      %158 = vector.multi_reduction <add>, %155, %cst_72 [1] : vector<1x32xf32> to vector<1xf32>
      %159 = vector.shape_cast %158 : vector<1xf32> to vector<1x1xf32>
      %cst_73 = arith.constant 3.200000e+01 : f32
      %160 = vector.broadcast %cst_73 : f32 to vector<1x1xf32>
      %161 = arith.divf %159, %160 : vector<1x1xf32>
      %162 = vector.broadcast %161 : vector<1x1xf32> to vector<1x32xf32>
      %163 = arith.subf %155, %162 : vector<1x32xf32>
      %164 = arith.mulf %163, %163 : vector<1x32xf32>
      %cst_74 = arith.constant dense<0.000000e+00> : vector<1xf32>
      %165 = vector.multi_reduction <add>, %164, %cst_74 [1] : vector<1x32xf32> to vector<1xf32>
      %166 = vector.shape_cast %165 : vector<1xf32> to vector<1x1xf32>
      %cst_75 = arith.constant 3.200000e+01 : f32
      %167 = vector.broadcast %cst_75 : f32 to vector<1x1xf32>
      %168 = arith.divf %166, %167 : vector<1x1xf32>
      %169 = vector.broadcast %161 : vector<1x1xf32> to vector<1x32xf32>
      %170 = arith.subf %155, %169 : vector<1x32xf32>
      %cst_76 = arith.constant 9.99999974E-6 : f32
      %171 = vector.broadcast %cst_76 : f32 to vector<1x1xf32>
      %172 = arith.addf %168, %171 : vector<1x1xf32>
      %173 = math.rsqrt %172 : vector<1x1xf32>
      %174 = vector.broadcast %173 : vector<1x1xf32> to vector<1x32xf32>
      %175 = arith.mulf %170, %174 : vector<1x32xf32>
      %176 = arith.mulf %175, %156 : vector<1x32xf32>
      %177 = arith.addf %176, %157 : vector<1x32xf32>
      %178 = arith.truncf %177 : vector<1x32xf32> to vector<1x32xbf16>
      %c0_77 = arith.constant 0 : index
      %c0_78 = arith.constant 0 : index
      %179 = vector.load %arg21[%c0_77, %c0_78] : memref<32x128xbf16, #tpu.memory_space<vmem>>, vector<32x128xbf16>
      %cst_79 = arith.constant dense<0.000000e+00> : vector<1x128xf32>
      %180 = tpu.matmul %178, %179, %cst_79 {dimension_numbers = #tpu.dot_dimension_numbers<[1], [0], [0], [1], [0, 0, 1, 1], [], []>} : vector<1x32xbf16>, vector<32x128xbf16>, vector<1x128xf32> -> vector<1x128xf32>
      %c0_80 = arith.constant 0 : index
      %c0_81 = arith.constant 0 : index
      %181 = vector.load %arg22[%c0_80, %c0_81] : memref<1x128xf32, #tpu.memory_space<vmem>>, vector<1x128xf32>
      %182 = arith.addf %180, %181 : vector<1x128xf32>
      %183 = vector.shape_cast %182 : vector<1x128xf32> to vector<1x1x128xf32>
      %c0_82 = arith.constant 0 : index
      %c0_83 = arith.constant 0 : index
      %c0_84 = arith.constant 0 : index
      %184 = vector.load %arg23[%c0_82, %c0_83, %c0_84] : memref<1x1x128xf32, #tpu.memory_space<vmem>>, vector<1x1x128xf32>
      tpu.vector_store %arg23[%c0_82, %c0_83, %c0_84], %183 {strides = array<i32>} : memref<1x1x128xf32, #tpu.memory_space<vmem>>, vector<1x1x128xf32>,
    } else {
    }
    return
  }
  func.func @transform_0(%arg0: i32, %arg1: i32) -> (i32, i32, i32) {
    %c0_i32 = arith.constant 0 : i32
    %c0_i32_0 = arith.constant 0 : i32
    %c0_i32_1 = arith.constant 0 : i32
    return %arg0, %c0_i32, %c0_i32_0 : i32, i32, i32
  }
  func.func @transform_1(%arg0: i32, %arg1: i32) -> (i32, i32) {
    %c0_i32 = arith.constant 0 : i32
    %c0_i32_0 = arith.constant 0 : i32
    %c0_i32_1 = arith.constant 0 : i32
    return %c0_i32, %c0_i32_0 : i32, i32
  }
  func.func @transform_2(%arg0: i32, %arg1: i32) -> (i32, i32) {
    %c0_i32 = arith.constant 0 : i32
    %c0_i32_0 = arith.constant 0 : i32
    %c0_i32_1 = arith.constant 0 : i32
    return %c0_i32, %c0_i32_0 : i32, i32
  }
  func.func @transform_3(%arg0: i32, %arg1: i32) -> (i32, i32) {
    %c0_i32 = arith.constant 0 : i32
    %c0_i32_0 = arith.constant 0 : i32
    %c0_i32_1 = arith.constant 0 : i32
    return %c0_i32, %c0_i32_0 : i32, i32
  }
  func.func @transform_4(%arg0: i32, %arg1: i32) -> (i32, i32) {
    %c0_i32 = arith.constant 0 : i32
    %c0_i32_0 = arith.constant 0 : i32
    %c0_i32_1 = arith.constant 0 : i32
    return %c0_i32, %c0_i32_0 : i32, i32
  }
  func.func @transform_5(%arg0: i32, %arg1: i32) -> (i32, i32, i32) {
    %c0_i32 = arith.constant 0 : i32
    %c0_i32_0 = arith.constant 0 : i32
    %c0_i32_1 = arith.constant 0 : i32
    return %arg1, %c0_i32, %c0_i32_0 : i32, i32, i32
  }
  func.func @transform_6(%arg0: i32, %arg1: i32) -> (i32, i32, i32) {
    %c0_i32 = arith.constant 0 : i32
    %c0_i32_0 = arith.constant 0 : i32
    %c0_i32_1 = arith.constant 0 : i32
    return %arg1, %c0_i32, %c0_i32_0 : i32, i32, i32
  }
  func.func @transform_7(%arg0: i32, %arg1: i32) -> (i32, i32, i32) {
    %c0_i32 = arith.constant 0 : i32
    %c0_i32_0 = arith.constant 0 : i32
    %c0_i32_1 = arith.constant 0 : i32
    return %arg1, %c0_i32, %c0_i32_0 : i32, i32, i32
  }
  func.func @transform_8(%arg0: i32, %arg1: i32) -> (i32, i32, i32) {
    %c0_i32 = arith.constant 0 : i32
    %c0_i32_0 = arith.constant 0 : i32
    %c0_i32_1 = arith.constant 0 : i32
    return %arg1, %c0_i32, %c0_i32_0 : i32, i32, i32
  }
  func.func @transform_9(%arg0: i32, %arg1: i32) -> (i32, i32, i32) {
    %c0_i32 = arith.constant 0 : i32
    %c0_i32_0 = arith.constant 0 : i32
    %c0_i32_1 = arith.constant 0 : i32
    return %arg1, %c0_i32, %c0_i32_0 : i32, i32, i32
  }
  func.func @transform_10(%arg0: i32, %arg1: i32) -> (i32, i32, i32) {
    %c0_i32 = arith.constant 0 : i32
    %c0_i32_0 = arith.constant 0 : i32
    %c0_i32_1 = arith.constant 0 : i32
    return %arg1, %c0_i32, %c0_i32_0 : i32, i32, i32
  }
  func.func @transform_11(%arg0: i32, %arg1: i32) -> (i32, i32, i32) {
    %c0_i32 = arith.constant 0 : i32
    %c0_i32_0 = arith.constant 0 : i32
    %c0_i32_1 = arith.constant 0 : i32
    return %arg1, %c0_i32, %c0_i32_0 : i32, i32, i32
  }
  func.func @transform_12(%arg0: i32, %arg1: i32) -> (i32, i32, i32) {
    %c0_i32 = arith.constant 0 : i32
    %c0_i32_0 = arith.constant 0 : i32
    %c0_i32_1 = arith.constant 0 : i32
    return %arg1, %c0_i32, %c0_i32_0 : i32, i32, i32
  }
  func.func @transform_13(%arg0: i32, %arg1: i32) -> (i32, i32, i32) {
    %c0_i32 = arith.constant 0 : i32
    %c0_i32_0 = arith.constant 0 : i32
    %c0_i32_1 = arith.constant 0 : i32
    return %arg1, %c0_i32, %c0_i32_0 : i32, i32, i32
  }
  func.func @transform_14(%arg0: i32, %arg1: i32) -> (i32, i32, i32) {
    %c0_i32 = arith.constant 0 : i32
    %c0_i32_0 = arith.constant 0 : i32
    %c0_i32_1 = arith.constant 0 : i32
    return %arg1, %c0_i32, %c0_i32_0 : i32, i32, i32
  }
  func.func @transform_15(%arg0: i32, %arg1: i32) -> (i32, i32, i32) {
    %c0_i32 = arith.constant 0 : i32
    %c0_i32_0 = arith.constant 0 : i32
    %c0_i32_1 = arith.constant 0 : i32
    return %arg1, %c0_i32, %c0_i32_0 : i32, i32, i32
  }
  func.func @transform_16(%arg0: i32, %arg1: i32) -> (i32, i32, i32) {
    %c0_i32 = arith.constant 0 : i32
    %c0_i32_0 = arith.constant 0 : i32
    %c0_i32_1 = arith.constant 0 : i32
    return %arg1, %c0_i32, %c0_i32_0 : i32, i32, i32
  }
  func.func @transform_17(%arg0: i32, %arg1: i32) -> (i32, i32) {
    %c0_i32 = arith.constant 0 : i32
    %c0_i32_0 = arith.constant 0 : i32
    %c0_i32_1 = arith.constant 0 : i32
    return %c0_i32, %c0_i32_0 : i32, i32
  }
  func.func @transform_18(%arg0: i32, %arg1: i32) -> (i32, i32) {
    %c0_i32 = arith.constant 0 : i32
    %c0_i32_0 = arith.constant 0 : i32
    %c0_i32_1 = arith.constant 0 : i32
    return %c0_i32, %c0_i32_0 : i32, i32
  }
  func.func @transform_19(%arg0: i32, %arg1: i32) -> (i32, i32) {
    %c0_i32 = arith.constant 0 : i32
    %c0_i32_0 = arith.constant 0 : i32
    %c0_i32_1 = arith.constant 0 : i32
    return %c0_i32, %c0_i32_0 : i32, i32
  }
  func.func @transform_20(%arg0: i32, %arg1: i32) -> (i32, i32) {
    %c0_i32 = arith.constant 0 : i32
    %c0_i32_0 = arith.constant 0 : i32
    %c0_i32_1 = arith.constant 0 : i32
    return %c0_i32, %c0_i32_0 : i32, i32
  }
  func.func @transform_21(%arg0: i32, %arg1: i32) -> (i32, i32, i32) {
    %c0_i32 = arith.constant 0 : i32
    %c0_i32_0 = arith.constant 0 : i32
    %c0_i32_1 = arith.constant 0 : i32
    return %arg0, %c0_i32, %c0_i32_0 : i32, i32, i32
  }
}

</mosaic_0001>

<llo_original>
// kernel: tpu_custom_call.1
$region0: #{tpu_custom_call.1}
  #allocation0 [shape = 'u32[]', space=smem, size = 0x4, offset = 0x4, fixed_abs, tag = 'smem constant byte address 0x4 - core index']
  #allocation1 [shape = 'u32[144,128]{1,0:T(1,128)}', space=vmem, size = 0x12000, scoped, tag = 'internal scratch']
  #allocation2 [shape = 'f32[1,128,32]{2,1,0:T(8,128)}', space=vmem, size = 0x10000, scoped, tag = 'scratch operand']
  %s0 = inlined_call_operand.vmem [shape: bf16[2,16,64], index: 0, kind: input, shape index: {}]
  %s1 = inlined_call_operand.vmem [shape: bf16[64,32], index: 1, kind: input, shape index: {}]
  %s2 = inlined_call_operand.vmem [shape: f32[1,32], index: 2, kind: input, shape index: {}]
  %s3 = inlined_call_operand.vmem [shape: f32[1,32], index: 3, kind: input, shape index: {}]
  %s4 = inlined_call_operand.vmem [shape: f32[128,32], index: 4, kind: input, shape index: {}]
  %s5 = inlined_call_operand.vmem [shape: bf16[2,32,96], index: 5, kind: input, shape index: {}]
  %s6 = inlined_call_operand.vmem [shape: f32[2,1,96], index: 6, kind: input, shape index: {}]
  %s7 = inlined_call_operand.vmem [shape: bf16[2,32,32], index: 7, kind: input, shape index: {}]
  %s8 = inlined_call_operand.vmem [shape: f32[2,1,32], index: 8, kind: input, shape index: {}]
  %s9 = inlined_call_operand.vmem [shape: f32[2,1,32], index: 9, kind: input, shape index: {}]
  %s10 = inlined_call_operand.vmem [shape: f32[2,1,32], index: 10, kind: input, shape index: {}]
  %s11 = inlined_call_operand.vmem [shape: f32[2,1,32], index: 11, kind: input, shape index: {}]
  %s12 = inlined_call_operand.vmem [shape: f32[2,1,32], index: 12, kind: input, shape index: {}]
  %s13 = inlined_call_operand.vmem [shape: bf16[2,32,2048], index: 13, kind: input, shape index: {}]
  %s14 = inlined_call_operand.vmem [shape: f32[2,1,2048], index: 14, kind: input, shape index: {}]
  %s15 = inlined_call_operand.vmem [shape: bf16[2,2048,32], index: 15, kind: input, shape index: {}]
  %s16 = inlined_call_operand.vmem [shape: f32[2,1,32], index: 16, kind: input, shape index: {}]
  %s17 = inlined_call_operand.vmem [shape: f32[1,32], index: 17, kind: input, shape index: {}]
  %s18 = inlined_call_operand.vmem [shape: f32[1,32], index: 18, kind: input, shape index: {}]
  %s19 = inlined_call_operand.vmem [shape: bf16[32,128], index: 19, kind: input, shape index: {}]
  %s20 = inlined_call_operand.vmem [shape: f32[1,128], index: 20, kind: input, shape index: {}]
  %s21 = inlined_call_operand.hbm [shape: f32[2,1,128], index: 21, kind: output, shape index: {}]
  %s22 = sld [smem:[#allocation0]]
  $region125: #{tpu_custom_call.1} parent=0
    _
  %s24 = ssub.s32 1, %s22
  %s25 = scalar_select 0, %s24, %s22
  $region1: #{tpu_custom_call.1} parent=0
    #allocation3 [shape = 'u8[1024]{0}', space=vmem, size = 0x400, scoped, tag = 'output window, operand 0']
    #allocation4 [shape = 's32[2]{0}', space=sflag, size = 0x8, scoped, tag = 'scoped memory for tpu_custom_call.1']
    %26 = vsyncpa [#allocation4], 0
    %s27 = scalar_lea.sflag [#allocation4], 1
    %28 = vsyncpa %s27, 0
    loop: start=0, step=1, limit=6
    $region2: #{tpu_custom_call.1} parent=1 // loop_pre_header
      _
    $region3: #{tpu_custom_call.1} parent=1 // loop_header
      %s30 = sphi 0, %s34
      %p31 = scmp.ge.s32.totalorder %s30, 6
      %s37 = sphi 0, %s49
      %s38 = sphi 0, %s45
      %s39 = sphi 0, %s37
      %s40 = sphi 0, %s38
      %s41 = sphi 0, %s39
      %s42 = sphi 0, %s40
      %s52 = sphi 0, %s54
      %s55 = sphi 0, %s52
      %s56 = sphi 0, %s55
      %s72 = sphi 0, %s56
      %s76 = sphi 0, %s76
      %s78 = sphi 0, %s76
      %s79 = sphi 0, %s78
      %s93 = sphi 0, %s79
      %s97 = sphi 0, %s97
      %s99 = sphi 0, %s97
      %s100 = sphi 0, %s99
      %s114 = sphi 0, %s100
      %s118 = sphi 0, %s118
      %s120 = sphi 0, %s118
      %s121 = sphi 0, %s120
      %s135 = sphi 0, %s121
      %s139 = sphi 0, %s139
      %s141 = sphi 0, %s139
      %s142 = sphi 0, %s141
      %s156 = sphi 0, %s142
      %s162 = sphi 0, %s164
      %s165 = sphi 0, %s162
      %s166 = sphi 0, %s165
      %s182 = sphi 0, %s166
      %s188 = sphi 0, %s190
      %s191 = sphi 0, %s188
      %s192 = sphi 0, %s191
      %s208 = sphi 0, %s192
      %s214 = sphi 0, %s216
      %s217 = sphi 0, %s214
      %s218 = sphi 0, %s217
      %s234 = sphi 0, %s218
      %s240 = sphi 0, %s242
      %s243 = sphi 0, %s240
      %s244 = sphi 0, %s243
      %s260 = sphi 0, %s244
      %s266 = sphi 0, %s268
      %s269 = sphi 0, %s266
      %s270 = sphi 0, %s269
      %s286 = sphi 0, %s270
      %s292 = sphi 0, %s294
      %s295 = sphi 0, %s292
      %s296 = sphi 0, %s295
      %s312 = sphi 0, %s296
      %s318 = sphi 0, %s320
      %s321 = sphi 0, %s318
      %s322 = sphi 0, %s321
      %s338 = sphi 0, %s322
      %s344 = sphi 0, %s346
      %s347 = sphi 0, %s344
      %s348 = sphi 0, %s347
      %s364 = sphi 0, %s348
      %s370 = sphi 0, %s372
      %s373 = sphi 0, %s370
      %s374 = sphi 0, %s373
      %s390 = sphi 0, %s374
      %s396 = sphi 0, %s398
      %s399 = sphi 0, %s396
      %s400 = sphi 0, %s399
      %s416 = sphi 0, %s400
      %s422 = sphi 0, %s424
      %s425 = sphi 0, %s422
      %s426 = sphi 0, %s425
      %s442 = sphi 0, %s426
      %s448 = sphi 0, %s450
      %s451 = sphi 0, %s448
      %s452 = sphi 0, %s451
      %s468 = sphi 0, %s452
      %s472 = sphi 0, %s472
      %s474 = sphi 0, %s472
      %s475 = sphi 0, %s474
      %s489 = sphi 0, %s475
      %s493 = sphi 0, %s493
      %s495 = sphi 0, %s493
      %s496 = sphi 0, %s495
      %s510 = sphi 0, %s496
      %s514 = sphi 0, %s514
      %s516 = sphi 0, %s514
      %s517 = sphi 0, %s516
      %s531 = sphi 0, %s517
      %s535 = sphi 0, %s535
      %s537 = sphi 0, %s535
      %s538 = sphi 0, %s537
      %s552 = sphi 0, %s538
      %s558 = sphi 0, %s560
      %s561 = sphi 0, %s558
      %s562 = sphi 0, %s561
      %s578 = sphi 0, %s562
    $region4: #{tpu_custom_call.1} parent=1 // loop_header_branch
      %33 = sbr.rel (%p31) target = $region8
    $region5: #{tpu_custom_call.1} parent=1 // loop_body
      %s35 = ssub.s32 %s30, 1
      %s36 = ssub.s32 %s30, 2
      %s43 = sadd.s32 1, %s38
      %p44 = scmp.ge.s32.totalorder %s43, 2
      %s45 = scalar_select %p44, 0, %s43
      %s46 = sadd.s32 1, %s37
      %s47 = scalar_select %p44, %s46, %s37
      %p48 = scmp.ge.s32.totalorder %s47, 2
      %s49 = scalar_select %p48, 0, %s47
      %s50 = ssub.s32 %s37, %s49
      %p51 = scmp.eq.s32.totalorder %s50, 0
      %s53 = sadd.s32 %s52, 1
      %s54 = scalar_select %p51, %s52, %s53
      %p57 = pneg %p51
      %p58 = scmp.eq.s32.totalorder %s30, 3
      %p59 = por %p57, %p58
      %p60 = scmp.ne.s32.totalorder %s52, %s55
      %p61 = scmp.eq.s32.totalorder %s30, 0
      %p62 = por %p60, %p61
      %p63 = scmp.ne.s32.totalorder %s52, %s55
      %p64 = scmp.eq.s32.totalorder %s35, 3
      %p65 = por %p63, %p64
      %p66 = scmp.ne.s32.totalorder %s55, %s56
      %p67 = scmp.eq.s32.totalorder %s35, 0
      %p68 = por %p66, %p67
      %p69 = scmp.ne.s32.totalorder %s55, %s56
      %p70 = scmp.eq.s32.totalorder %s36, 3
      %p71 = por %p69, %p70
      %p73 = scmp.ne.s32.totalorder %s56, %s72
      %p74 = scmp.eq.s32.totalorder %s36, 0
      %p75 = por %p73, %p74
      %s77 = sadd.s32 %s76, 1
      %p80 = scmp.eq.s32.totalorder %s30, 3
      %p81 = scmp.ne.s32.totalorder %s76, %s78
      %p82 = scmp.eq.s32.totalorder %s30, 0
      %p83 = por %p81, %p82
      %p84 = scmp.ne.s32.totalorder %s76, %s78
      %p85 = scmp.eq.s32.totalorder %s35, 3
      %p86 = por %p84, %p85
      %p87 = scmp.ne.s32.totalorder %s78, %s79
      %p88 = scmp.eq.s32.totalorder %s35, 0
      %p89 = por %p87, %p88
      %p90 = scmp.ne.s32.totalorder %s78, %s79
      %p91 = scmp.eq.s32.totalorder %s36, 3
      %p92 = por %p90, %p91
      %p94 = scmp.ne.s32.totalorder %s79, %s93
      %p95 = scmp.eq.s32.totalorder %s36, 0
      %p96 = por %p94, %p95
      %s98 = sadd.s32 %s97, 1
      %p101 = scmp.eq.s32.totalorder %s30, 3
      %p102 = scmp.ne.s32.totalorder %s97, %s99
      %p103 = scmp.eq.s32.totalorder %s30, 0
      %p104 = por %p102, %p103
      %p105 = scmp.ne.s32.totalorder %s97, %s99
      %p106 = scmp.eq.s32.totalorder %s35, 3
      %p107 = por %p105, %p106
      %p108 = scmp.ne.s32.totalorder %s99, %s100
      %p109 = scmp.eq.s32.totalorder %s35, 0
      %p110 = por %p108, %p109
      %p111 = scmp.ne.s32.totalorder %s99, %s100
      %p112 = scmp.eq.s32.totalorder %s36, 3
      %p113 = por %p111, %p112
      %p115 = scmp.ne.s32.totalorder %s100, %s114
      %p116 = scmp.eq.s32.totalorder %s36, 0
      %p117 = por %p115, %p116
      %s119 = sadd.s32 %s118, 1
      %p122 = scmp.eq.s32.totalorder %s30, 3
      %p123 = scmp.ne.s32.totalorder %s118, %s120
      %p124 = scmp.eq.s32.totalorder %s30, 0
      %p125 = por %p123, %p124
      %p126 = scmp.ne.s32.totalorder %s118, %s120
      %p127 = scmp.eq.s32.totalorder %s35, 3
      %p128 = por %p126, %p127
      %p129 = scmp.ne.s32.totalorder %s120, %s121
      %p130 = scmp.eq.s32.totalorder %s35, 0
      %p131 = por %p129, %p130
      %p132 = scmp.ne.s32.totalorder %s120, %s121
      %p133 = scmp.eq.s32.totalorder %s36, 3
      %p134 = por %p132, %p133
      %p136 = scmp.ne.s32.totalorder %s121, %s135
      %p137 = scmp.eq.s32.totalorder %s36, 0
      %p138 = por %p136, %p137
      %s140 = sadd.s32 %s139, 1
      %p143 = scmp.eq.s32.totalorder %s30, 3
      %p144 = scmp.ne.s32.totalorder %s139, %s141
      %p145 = scmp.eq.s32.totalorder %s30, 0
      %p146 = por %p144, %p145
      %p147 = scmp.ne.s32.totalorder %s139, %s141
      %p148 = scmp.eq.s32.totalorder %s35, 3
      %p149 = por %p147, %p148
      %p150 = scmp.ne.s32.totalorder %s141, %s142
      %p151 = scmp.eq.s32.totalorder %s35, 0
      %p152 = por %p150, %p151
      %p153 = scmp.ne.s32.totalorder %s141, %s142
      %p154 = scmp.eq.s32.totalorder %s36, 3
      %p155 = por %p153, %p154
      %p157 = scmp.ne.s32.totalorder %s142, %s156
      %p158 = scmp.eq.s32.totalorder %s36, 0
      %p159 = por %p157, %p158
      %s160 = ssub.s32 %s38, %s45
      %p161 = scmp.eq.s32.totalorder %s160, 0
      %s163 = sadd.s32 %s162, 1
      %s164 = scalar_select %p161, %s162, %s163
      %p167 = pneg %p161
      %p168 = scmp.eq.s32.totalorder %s30, 3
      %p169 = por %p167, %p168
      %p170 = scmp.ne.s32.totalorder %s162, %s165
      %p171 = scmp.eq.s32.totalorder %s30, 0
      %p172 = por %p170, %p171
      %p173 = scmp.ne.s32.totalorder %s162, %s165
      %p174 = scmp.eq.s32.totalorder %s35, 3
      %p175 = por %p173, %p174
      %p176 = scmp.ne.s32.totalorder %s165, %s166
      %p177 = scmp.eq.s32.totalorder %s35, 0
      %p178 = por %p176, %p177
      %p179 = scmp.ne.s32.totalorder %s165, %s166
      %p180 = scmp.eq.s32.totalorder %s36, 3
      %p181 = por %p179, %p180
      %p183 = scmp.ne.s32.totalorder %s166, %s182
      %p184 = scmp.eq.s32.totalorder %s36, 0
      %p185 = por %p183, %p184
      %s186 = ssub.s32 %s38, %s45
      %p187 = scmp.eq.s32.totalorder %s186, 0
      %s189 = sadd.s32 %s188, 1
      %s190 = scalar_select %p187, %s188, %s189
      %p193 = pneg %p187
      %p194 = scmp.eq.s32.totalorder %s30, 3
      %p195 = por %p193, %p194
      %p196 = scmp.ne.s32.totalorder %s188, %s191
      %p197 = scmp.eq.s32.totalorder %s30, 0
      %p198 = por %p196, %p197
      %p199 = scmp.ne.s32.totalorder %s188, %s191
      %p200 = scmp.eq.s32.totalorder %s35, 3
      %p201 = por %p199, %p200
      %p202 = scmp.ne.s32.totalorder %s191, %s192
      %p203 = scmp.eq.s32.totalorder %s35, 0
      %p204 = por %p202, %p203
      %p205 = scmp.ne.s32.totalorder %s191, %s192
      %p206 = scmp.eq.s32.totalorder %s36, 3
      %p207 = por %p205, %p206
      %p209 = scmp.ne.s32.totalorder %s192, %s208
      %p210 = scmp.eq.s32.totalorder %s36, 0
      %p211 = por %p209, %p210
      %s212 = ssub.s32 %s38, %s45
      %p213 = scmp.eq.s32.totalorder %s212, 0
      %s215 = sadd.s32 %s214, 1
      %s216 = scalar_select %p213, %s214, %s215
      %p219 = pneg %p213
      %p220 = scmp.eq.s32.totalorder %s30, 3
      %p221 = por %p219, %p220
      %p222 = scmp.ne.s32.totalorder %s214, %s217
      %p223 = scmp.eq.s32.totalorder %s30, 0
      %p224 = por %p222, %p223
      %p225 = scmp.ne.s32.totalorder %s214, %s217
      %p226 = scmp.eq.s32.totalorder %s35, 3
      %p227 = por %p225, %p226
      %p228 = scmp.ne.s32.totalorder %s217, %s218
      %p229 = scmp.eq.s32.totalorder %s35, 0
      %p230 = por %p228, %p229
      %p231 = scmp.ne.s32.totalorder %s217, %s218
      %p232 = scmp.eq.s32.totalorder %s36, 3
      %p233 = por %p231, %p232
      %p235 = scmp.ne.s32.totalorder %s218, %s234
      %p236 = scmp.eq.s32.totalorder %s36, 0
      %p237 = por %p235, %p236
      %s238 = ssub.s32 %s38, %s45
      %p239 = scmp.eq.s32.totalorder %s238, 0
      %s241 = sadd.s32 %s240, 1
      %s242 = scalar_select %p239, %s240, %s241
      %p245 = pneg %p239
      %p246 = scmp.eq.s32.totalorder %s30, 3
      %p247 = por %p245, %p246
      %p248 = scmp.ne.s32.totalorder %s240, %s243
      %p249 = scmp.eq.s32.totalorder %s30, 0
      %p250 = por %p248, %p249
      %p251 = scmp.ne.s32.totalorder %s240, %s243
      %p252 = scmp.eq.s32.totalorder %s35, 3
      %p253 = por %p251, %p252
      %p254 = scmp.ne.s32.totalorder %s243, %s244
      %p255 = scmp.eq.s32.totalorder %s35, 0
      %p256 = por %p254, %p255
      %p257 = scmp.ne.s32.totalorder %s243, %s244
      %p258 = scmp.eq.s32.totalorder %s36, 3
      %p259 = por %p257, %p258
      %p261 = scmp.ne.s32.totalorder %s244, %s260
      %p262 = scmp.eq.s32.totalorder %s36, 0
      %p263 = por %p261, %p262
      %s264 = ssub.s32 %s38, %s45
      %p265 = scmp.eq.s32.totalorder %s264, 0
      %s267 = sadd.s32 %s266, 1
      %s268 = scalar_select %p265, %s266, %s267
      %p271 = pneg %p265
      %p272 = scmp.eq.s32.totalorder %s30, 3
      %p273 = por %p271, %p272
      %p274 = scmp.ne.s32.totalorder %s266, %s269
      %p275 = scmp.eq.s32.totalorder %s30, 0
      %p276 = por %p274, %p275
      %p277 = scmp.ne.s32.totalorder %s266, %s269
      %p278 = scmp.eq.s32.totalorder %s35, 3
      %p279 = por %p277, %p278
      %p280 = scmp.ne.s32.totalorder %s269, %s270
      %p281 = scmp.eq.s32.totalorder %s35, 0
      %p282 = por %p280, %p281
      %p283 = scmp.ne.s32.totalorder %s269, %s270
      %p284 = scmp.eq.s32.totalorder %s36, 3
      %p285 = por %p283, %p284
      %p287 = scmp.ne.s32.totalorder %s270, %s286
      %p288 = scmp.eq.s32.totalorder %s36, 0
      %p289 = por %p287, %p288
      %s290 = ssub.s32 %s38, %s45
      %p291 = scmp.eq.s32.totalorder %s290, 0
      %s293 = sadd.s32 %s292, 1
      %s294 = scalar_select %p291, %s292, %s293
      %p297 = pneg %p291
      %p298 = scmp.eq.s32.totalorder %s30, 3
      %p299 = por %p297, %p298
      %p300 = scmp.ne.s32.totalorder %s292, %s295
      %p301 = scmp.eq.s32.totalorder %s30, 0
      %p302 = por %p300, %p301
      %p303 = scmp.ne.s32.totalorder %s292, %s295
      %p304 = scmp.eq.s32.totalorder %s35, 3
      %p305 = por %p303, %p304
      %p306 = scmp.ne.s32.totalorder %s295, %s296
      %p307 = scmp.eq.s32.totalorder %s35, 0
      %p308 = por %p306, %p307
      %p309 = scmp.ne.s32.totalorder %s295, %s296
      %p310 = scmp.eq.s32.totalorder %s36, 3
      %p311 = por %p309, %p310
      %p313 = scmp.ne.s32.totalorder %s296, %s312
      %p314 = scmp.eq.s32.totalorder %s36, 0
      %p315 = por %p313, %p314
      %s316 = ssub.s32 %s38, %s45
      %p317 = scmp.eq.s32.totalorder %s316, 0
      %s319 = sadd.s32 %s318, 1
      %s320 = scalar_select %p317, %s318, %s319
      %p323 = pneg %p317
      %p324 = scmp.eq.s32.totalorder %s30, 3
      %p325 = por %p323, %p324
      %p326 = scmp.ne.s32.totalorder %s318, %s321
      %p327 = scmp.eq.s32.totalorder %s30, 0
      %p328 = por %p326, %p327
      %p329 = scmp.ne.s32.totalorder %s318, %s321
      %p330 = scmp.eq.s32.totalorder %s35, 3
      %p331 = por %p329, %p330
      %p332 = scmp.ne.s32.totalorder %s321, %s322
      %p333 = scmp.eq.s32.totalorder %s35, 0
      %p334 = por %p332, %p333
      %p335 = scmp.ne.s32.totalorder %s321, %s322
      %p336 = scmp.eq.s32.totalorder %s36, 3
      %p337 = por %p335, %p336
      %p339 = scmp.ne.s32.totalorder %s322, %s338
      %p340 = scmp.eq.s32.totalorder %s36, 0
      %p341 = por %p339, %p340
      %s342 = ssub.s32 %s38, %s45
      %p343 = scmp.eq.s32.totalorder %s342, 0
      %s345 = sadd.s32 %s344, 1
      %s346 = scalar_select %p343, %s344, %s345
      %p349 = pneg %p343
      %p350 = scmp.eq.s32.totalorder %s30, 3
      %p351 = por %p349, %p350
      %p352 = scmp.ne.s32.totalorder %s344, %s347
      %p353 = scmp.eq.s32.totalorder %s30, 0
      %p354 = por %p352, %p353
      %p355 = scmp.ne.s32.totalorder %s344, %s347
      %p356 = scmp.eq.s32.totalorder %s35, 3
      %p357 = por %p355, %p356
      %p358 = scmp.ne.s32.totalorder %s347, %s348
      %p359 = scmp.eq.s32.totalorder %s35, 0
      %p360 = por %p358, %p359
      %p361 = scmp.ne.s32.totalorder %s347, %s348
      %p362 = scmp.eq.s32.totalorder %s36, 3
      %p363 = por %p361, %p362
      %p365 = scmp.ne.s32.totalorder %s348, %s364
      %p366 = scmp.eq.s32.totalorder %s36, 0
      %p367 = por %p365, %p366
      %s368 = ssub.s32 %s38, %s45
      %p369 = scmp.eq.s32.totalorder %s368, 0
      %s371 = sadd.s32 %s370, 1
      %s372 = scalar_select %p369, %s370, %s371
      %p375 = pneg %p369
      %p376 = scmp.eq.s32.totalorder %s30, 3
      %p377 = por %p375, %p376
      %p378 = scmp.ne.s32.totalorder %s370, %s373
      %p379 = scmp.eq.s32.totalorder %s30, 0
      %p380 = por %p378, %p379
      %p381 = scmp.ne.s32.totalorder %s370, %s373
      %p382 = scmp.eq.s32.totalorder %s35, 3
      %p383 = por %p381, %p382
      %p384 = scmp.ne.s32.totalorder %s373, %s374
      %p385 = scmp.eq.s32.totalorder %s35, 0
      %p386 = por %p384, %p385
      %p387 = scmp.ne.s32.totalorder %s373, %s374
      %p388 = scmp.eq.s32.totalorder %s36, 3
      %p389 = por %p387, %p388
      %p391 = scmp.ne.s32.totalorder %s374, %s390
      %p392 = scmp.eq.s32.totalorder %s36, 0
      %p393 = por %p391, %p392
      %s394 = ssub.s32 %s38, %s45
      %p395 = scmp.eq.s32.totalorder %s394, 0
      %s397 = sadd.s32 %s396, 1
      %s398 = scalar_select %p395, %s396, %s397
      %p401 = pneg %p395
      %p402 = scmp.eq.s32.totalorder %s30, 3
      %p403 = por %p401, %p402
      %p404 = scmp.ne.s32.totalorder %s396, %s399
      %p405 = scmp.eq.s32.totalorder %s30, 0
      %p406 = por %p404, %p405
      %p407 = scmp.ne.s32.totalorder %s396, %s399
      %p408 = scmp.eq.s32.totalorder %s35, 3
      %p409 = por %p407, %p408
      %p410 = scmp.ne.s32.totalorder %s399, %s400
      %p411 = scmp.eq.s32.totalorder %s35, 0
      %p412 = por %p410, %p411
      %p413 = scmp.ne.s32.totalorder %s399, %s400
      %p414 = scmp.eq.s32.totalorder %s36, 3
      %p415 = por %p413, %p414
      %p417 = scmp.ne.s32.totalorder %s400, %s416
      %p418 = scmp.eq.s32.totalorder %s36, 0
      %p419 = por %p417, %p418
      %s420 = ssub.s32 %s38, %s45
      %p421 = scmp.eq.s32.totalorder %s420, 0
      %s423 = sadd.s32 %s422, 1
      %s424 = scalar_select %p421, %s422, %s423
      %p427 = pneg %p421
      %p428 = scmp.eq.s32.totalorder %s30, 3
      %p429 = por %p427, %p428
      %p430 = scmp.ne.s32.totalorder %s422, %s425
      %p431 = scmp.eq.s32.totalorder %s30, 0
      %p432 = por %p430, %p431
      %p433 = scmp.ne.s32.totalorder %s422, %s425
      %p434 = scmp.eq.s32.totalorder %s35, 3
      %p435 = por %p433, %p434
      %p436 = scmp.ne.s32.totalorder %s425, %s426
      %p437 = scmp.eq.s32.totalorder %s35, 0
      %p438 = por %p436, %p437
      %p439 = scmp.ne.s32.totalorder %s425, %s426
      %p440 = scmp.eq.s32.totalorder %s36, 3
      %p441 = por %p439, %p440
      %p443 = scmp.ne.s32.totalorder %s426, %s442
      %p444 = scmp.eq.s32.totalorder %s36, 0
      %p445 = por %p443, %p444
      %s446 = ssub.s32 %s38, %s45
      %p447 = scmp.eq.s32.totalorder %s446, 0
      %s449 = sadd.s32 %s448, 1
      %s450 = scalar_select %p447, %s448, %s449
      %p453 = pneg %p447
      %p454 = scmp.eq.s32.totalorder %s30, 3
      %p455 = por %p453, %p454
      %p456 = scmp.ne.s32.totalorder %s448, %s451
      %p457 = scmp.eq.s32.totalorder %s30, 0
      %p458 = por %p456, %p457
      %p459 = scmp.ne.s32.totalorder %s448, %s451
      %p460 = scmp.eq.s32.totalorder %s35, 3
      %p461 = por %p459, %p460
      %p462 = scmp.ne.s32.totalorder %s451, %s452
      %p463 = scmp.eq.s32.totalorder %s35, 0
      %p464 = por %p462, %p463
      %p465 = scmp.ne.s32.totalorder %s451, %s452
      %p466 = scmp.eq.s32.totalorder %s36, 3
      %p467 = por %p465, %p466
      %p469 = scmp.ne.s32.totalorder %s452, %s468
      %p470 = scmp.eq.s32.totalorder %s36, 0
      %p471 = por %p469, %p470
      %s473 = sadd.s32 %s472, 1
      %p476 = scmp.eq.s32.totalorder %s30, 3
      %p477 = scmp.ne.s32.totalorder %s472, %s474
      %p478 = scmp.eq.s32.totalorder %s30, 0
      %p479 = por %p477, %p478
      %p480 = scmp.ne.s32.totalorder %s472, %s474
      %p481 = scmp.eq.s32.totalorder %s35, 3
      %p482 = por %p480, %p481
      %p483 = scmp.ne.s32.totalorder %s474, %s475
      %p484 = scmp.eq.s32.totalorder %s35, 0
      %p485 = por %p483, %p484
      %p486 = scmp.ne.s32.totalorder %s474, %s475
      %p487 = scmp.eq.s32.totalorder %s36, 3
      %p488 = por %p486, %p487
      %p490 = scmp.ne.s32.totalorder %s475, %s489
      %p491 = scmp.eq.s32.totalorder %s36, 0
      %p492 = por %p490, %p491
      %s494 = sadd.s32 %s493, 1
      %p497 = scmp.eq.s32.totalorder %s30, 3
      %p498 = scmp.ne.s32.totalorder %s493, %s495
      %p499 = scmp.eq.s32.totalorder %s30, 0
      %p500 = por %p498, %p499
      %p501 = scmp.ne.s32.totalorder %s493, %s495
      %p502 = scmp.eq.s32.totalorder %s35, 3
      %p503 = por %p501, %p502
      %p504 = scmp.ne.s32.totalorder %s495, %s496
      %p505 = scmp.eq.s32.totalorder %s35, 0
      %p506 = por %p504, %p505
      %p507 = scmp.ne.s32.totalorder %s495, %s496
      %p508 = scmp.eq.s32.totalorder %s36, 3
      %p509 = por %p507, %p508
      %p511 = scmp.ne.s32.totalorder %s496, %s510
      %p512 = scmp.eq.s32.totalorder %s36, 0
      %p513 = por %p511, %p512
      %s515 = sadd.s32 %s514, 1
      %p518 = scmp.eq.s32.totalorder %s30, 3
      %p519 = scmp.ne.s32.totalorder %s514, %s516
      %p520 = scmp.eq.s32.totalorder %s30, 0
      %p521 = por %p519, %p520
      %p522 = scmp.ne.s32.totalorder %s514, %s516
      %p523 = scmp.eq.s32.totalorder %s35, 3
      %p524 = por %p522, %p523
      %p525 = scmp.ne.s32.totalorder %s516, %s517
      %p526 = scmp.eq.s32.totalorder %s35, 0
      %p527 = por %p525, %p526
      %p528 = scmp.ne.s32.totalorder %s516, %s517
      %p529 = scmp.eq.s32.totalorder %s36, 3
      %p530 = por %p528, %p529
      %p532 = scmp.ne.s32.totalorder %s517, %s531
      %p533 = scmp.eq.s32.totalorder %s36, 0
      %p534 = por %p532, %p533
      %s536 = sadd.s32 %s535, 1
      %p539 = scmp.eq.s32.totalorder %s30, 3
      %p540 = scmp.ne.s32.totalorder %s535, %s537
      %p541 = scmp.eq.s32.totalorder %s30, 0
      %p542 = por %p540, %p541
      %p543 = scmp.ne.s32.totalorder %s535, %s537
      %p544 = scmp.eq.s32.totalorder %s35, 3
      %p545 = por %p543, %p544
      %p546 = scmp.ne.s32.totalorder %s537, %s538
      %p547 = scmp.eq.s32.totalorder %s35, 0
      %p548 = por %p546, %p547
      %p549 = scmp.ne.s32.totalorder %s537, %s538
      %p550 = scmp.eq.s32.totalorder %s36, 3
      %p551 = por %p549, %p550
      %p553 = scmp.ne.s32.totalorder %s538, %s552
      %p554 = scmp.eq.s32.totalorder %s36, 0
      %p555 = por %p553, %p554
      %s556 = ssub.s32 %s37, %s49
      %p557 = scmp.eq.s32.totalorder %s556, 0
      %s559 = sadd.s32 %s558, 1
      %s560 = scalar_select %p557, %s558, %s559
      %p563 = pneg %p557
      %p564 = scmp.eq.s32.totalorder %s30, 3
      %p565 = por %p563, %p564
      %p566 = scmp.ne.s32.totalorder %s558, %s561
      %p567 = scmp.eq.s32.totalorder %s30, 0
      %p568 = por %p566, %p567
      %p569 = scmp.ne.s32.totalorder %s558, %s561
      %p570 = scmp.eq.s32.totalorder %s35, 3
      %p571 = por %p569, %p570
      %p572 = scmp.ne.s32.totalorder %s561, %s562
      %p573 = scmp.eq.s32.totalorder %s35, 0
      %p574 = por %p572, %p573
      %p575 = scmp.ne.s32.totalorder %s561, %s562
      %p576 = scmp.eq.s32.totalorder %s36, 3
      %p577 = por %p575, %p576
      %p579 = scmp.ne.s32.totalorder %s562, %s578
      %p580 = scmp.eq.s32.totalorder %s36, 0
      %p581 = por %p579, %p580
      %p582 = scmp.le.s32.totalorder 1, %s30
      %p583 = scmp.lt.s32.totalorder %s30, 5
      %p584 = pnand %p582, %p583
      %p585 = pneg %p584
      // Predicated region
      $region9: #{tpu_custom_call.1} parent=5 // pred_check
        _
      $region10: #{tpu_custom_call.1} parent=5 // pred_check_branch
        %587 = sbr.rel (%p584) target = $region12
      $region11: #{tpu_custom_call.1} parent=5 // pred_region
        %s588 = ssub.s32 %s30, 1
        // Predicated region
        $region13: #{tpu_custom_call.1} parent=11 // pred_check
          %p589 = pneg %p89
        $region14: #{tpu_custom_call.1} parent=11 // pred_check_branch
          %591 = sbr.rel (%p589) target = $region16
        $region15: #{tpu_custom_call.1} parent=11 // pred_region
          _
        $region16: #{tpu_custom_call.1} parent=11 // pred_fallthru
          _
        // Predicated region
        $region17: #{tpu_custom_call.1} parent=11 // pred_check
          %p592 = pneg %p110
        $region18: #{tpu_custom_call.1} parent=11 // pred_check_branch
          %594 = sbr.rel (%p592) target = $region20
        $region19: #{tpu_custom_call.1} parent=11 // pred_region
          _
        $region20: #{tpu_custom_call.1} parent=11 // pred_fallthru
          _
        // Predicated region
        $region21: #{tpu_custom_call.1} parent=11 // pred_check
          %p595 = pneg %p131
        $region22: #{tpu_custom_call.1} parent=11 // pred_check_branch
          %597 = sbr.rel (%p595) target = $region24
        $region23: #{tpu_custom_call.1} parent=11 // pred_region
          _
        $region24: #{tpu_custom_call.1} parent=11 // pred_fallthru
          _
        // Predicated region
        $region25: #{tpu_custom_call.1} parent=11 // pred_check
          %p598 = pneg %p152
        $region26: #{tpu_custom_call.1} parent=11 // pred_check_branch
          %600 = sbr.rel (%p598) target = $region28
        $region27: #{tpu_custom_call.1} parent=11 // pred_region
          _
        $region28: #{tpu_custom_call.1} parent=11 // pred_fallthru
          _
        // Predicated region
        $region29: #{tpu_custom_call.1} parent=11 // pred_check
          %p601 = pneg %p485
        $region30: #{tpu_custom_call.1} parent=11 // pred_check_branch
          %603 = sbr.rel (%p601) target = $region32
        $region31: #{tpu_custom_call.1} parent=11 // pred_region
          _
        $region32: #{tpu_custom_call.1} parent=11 // pred_fallthru
          _
        // Predicated region
        $region33: #{tpu_custom_call.1} parent=11 // pred_check
          %p604 = pneg %p506
        $region34: #{tpu_custom_call.1} parent=11 // pred_check_branch
          %606 = sbr.rel (%p604) target = $region36
        $region35: #{tpu_custom_call.1} parent=11 // pred_region
          _
        $region36: #{tpu_custom_call.1} parent=11 // pred_fallthru
          _
        // Predicated region
        $region37: #{tpu_custom_call.1} parent=11 // pred_check
          %p607 = pneg %p527
        $region38: #{tpu_custom_call.1} parent=11 // pred_check_branch
          %609 = sbr.rel (%p607) target = $region40
        $region39: #{tpu_custom_call.1} parent=11 // pred_region
          _
        $region40: #{tpu_custom_call.1} parent=11 // pred_fallthru
          _
        // Predicated region
        $region41: #{tpu_custom_call.1} parent=11 // pred_check
          %p610 = pneg %p548
        $region42: #{tpu_custom_call.1} parent=11 // pred_check_branch
          %612 = sbr.rel (%p610) target = $region44
        $region43: #{tpu_custom_call.1} parent=11 // pred_region
          _
        $region44: #{tpu_custom_call.1} parent=11 // pred_fallthru
          _
      $region12: #{tpu_custom_call.1} parent=5 // pred_fallthru
        _
      %p613 = scmp.lt.s32.totalorder %s30, 4
      // Predicated region
      $region45: #{tpu_custom_call.1} parent=5 // pred_check
        %p614 = pneg %p613
      $region46: #{tpu_custom_call.1} parent=5 // pred_check_branch
        %616 = sbr.rel (%p614) target = $region48
      $region47: #{tpu_custom_call.1} parent=5 // pred_region
        // Predicated region
        $region49: #{tpu_custom_call.1} parent=47 // pred_check
          %p617 = pneg %p62
        $region50: #{tpu_custom_call.1} parent=47 // pred_check_branch
          %619 = sbr.rel (%p617) target = $region52
        $region51: #{tpu_custom_call.1} parent=47 // pred_region
          %p620 = scmp.lt.s32.totalorder %s37, 1
          %s621 = scalar_select %p620, %s37, 1
          %s622 = smul.addr %s621, 2
          %s623 = smul.addr %s622, 4
          %s624 = scalar_lea.vmem %s0, %s623
        $region52: #{tpu_custom_call.1} parent=47 // pred_fallthru
          _
        // Predicated region
        $region53: #{tpu_custom_call.1} parent=47 // pred_check
          %p625 = pneg %p172
        $region54: #{tpu_custom_call.1} parent=47 // pred_check_branch
          %627 = sbr.rel (%p625) target = $region56
        $region55: #{tpu_custom_call.1} parent=47 // pred_region
          %p628 = scmp.lt.s32.totalorder %s38, 1
          %s629 = scalar_select %p628, %s38, 1
          %s630 = smul.addr %s629, 4
          %s631 = smul.addr %s630, 4
          %s632 = scalar_lea.vmem %s5, %s631
        $region56: #{tpu_custom_call.1} parent=47 // pred_fallthru
          _
        // Predicated region
        $region57: #{tpu_custom_call.1} parent=47 // pred_check
          %p633 = pneg %p198
        $region58: #{tpu_custom_call.1} parent=47 // pred_check_branch
          %635 = sbr.rel (%p633) target = $region60
        $region59: #{tpu_custom_call.1} parent=47 // pred_region
          %p636 = scmp.lt.s32.totalorder %s38, 1
          %s637 = scalar_select %p636, %s38, 1
          %s638 = scalar_lea.vmem %s6, %s637
        $region60: #{tpu_custom_call.1} parent=47 // pred_fallthru
          _
        // Predicated region
        $region61: #{tpu_custom_call.1} parent=47 // pred_check
          %p639 = pneg %p224
        $region62: #{tpu_custom_call.1} parent=47 // pred_check_branch
          %641 = sbr.rel (%p639) target = $region64
        $region63: #{tpu_custom_call.1} parent=47 // pred_region
          %p642 = scmp.lt.s32.totalorder %s38, 1
          %s643 = scalar_select %p642, %s38, 1
          %s644 = smul.addr %s643, 4
          %s645 = smul.addr %s644, 4
          %s646 = scalar_lea.vmem %s7, %s645
        $region64: #{tpu_custom_call.1} parent=47 // pred_fallthru
          _
        // Predicated region
        $region65: #{tpu_custom_call.1} parent=47 // pred_check
          %p647 = pneg %p250
        $region66: #{tpu_custom_call.1} parent=47 // pred_check_branch
          %649 = sbr.rel (%p647) target = $region68
        $region67: #{tpu_custom_call.1} parent=47 // pred_region
          %p650 = scmp.lt.s32.totalorder %s38, 1
          %s651 = scalar_select %p650, %s38, 1
          %s652 = scalar_lea.vmem %s8, %s651
        $region68: #{tpu_custom_call.1} parent=47 // pred_fallthru
          _
        // Predicated region
        $region69: #{tpu_custom_call.1} parent=47 // pred_check
          %p653 = pneg %p276
        $region70: #{tpu_custom_call.1} parent=47 // pred_check_branch
          %655 = sbr.rel (%p653) target = $region72
        $region71: #{tpu_custom_call.1} parent=47 // pred_region
          %p656 = scmp.lt.s32.totalorder %s38, 1
          %s657 = scalar_select %p656, %s38, 1
          %s658 = scalar_lea.vmem %s9, %s657
        $region72: #{tpu_custom_call.1} parent=47 // pred_fallthru
          _
        // Predicated region
        $region73: #{tpu_custom_call.1} parent=47 // pred_check
          %p659 = pneg %p302
        $region74: #{tpu_custom_call.1} parent=47 // pred_check_branch
          %661 = sbr.rel (%p659) target = $region76
        $region75: #{tpu_custom_call.1} parent=47 // pred_region
          %p662 = scmp.lt.s32.totalorder %s38, 1
          %s663 = scalar_select %p662, %s38, 1
          %s664 = scalar_lea.vmem %s10, %s663
        $region76: #{tpu_custom_call.1} parent=47 // pred_fallthru
          _
        // Predicated region
        $region77: #{tpu_custom_call.1} parent=47 // pred_check
          %p665 = pneg %p328
        $region78: #{tpu_custom_call.1} parent=47 // pred_check_branch
          %667 = sbr.rel (%p665) target = $region80
        $region79: #{tpu_custom_call.1} parent=47 // pred_region
          %p668 = scmp.lt.s32.totalorder %s38, 1
          %s669 = scalar_select %p668, %s38, 1
          %s670 = scalar_lea.vmem %s11, %s669
        $region80: #{tpu_custom_call.1} parent=47 // pred_fallthru
          _
        // Predicated region
        $region81: #{tpu_custom_call.1} parent=47 // pred_check
          %p671 = pneg %p354
        $region82: #{tpu_custom_call.1} parent=47 // pred_check_branch
          %673 = sbr.rel (%p671) target = $region84
        $region83: #{tpu_custom_call.1} parent=47 // pred_region
          %p674 = scmp.lt.s32.totalorder %s38, 1
          %s675 = scalar_select %p674, %s38, 1
          %s676 = scalar_lea.vmem %s12, %s675
        $region84: #{tpu_custom_call.1} parent=47 // pred_fallthru
          _
        // Predicated region
        $region85: #{tpu_custom_call.1} parent=47 // pred_check
          %p677 = pneg %p380
        $region86: #{tpu_custom_call.1} parent=47 // pred_check_branch
          %679 = sbr.rel (%p677) target = $region88
        $region87: #{tpu_custom_call.1} parent=47 // pred_region
          %p680 = scmp.lt.s32.totalorder %s38, 1
          %s681 = scalar_select %p680, %s38, 1
          %s682 = smul.addr %s681, 64
          %s683 = smul.addr %s682, 4
          %s684 = scalar_lea.vmem %s13, %s683
        $region88: #{tpu_custom_call.1} parent=47 // pred_fallthru
          _
        // Predicated region
        $region89: #{tpu_custom_call.1} parent=47 // pred_check
          %p685 = pneg %p406
        $region90: #{tpu_custom_call.1} parent=47 // pred_check_branch
          %687 = sbr.rel (%p685) target = $region92
        $region91: #{tpu_custom_call.1} parent=47 // pred_region
          %p688 = scmp.lt.s32.totalorder %s38, 1
          %s689 = scalar_select %p688, %s38, 1
          %s690 = smul.addr %s689, 16
          %s691 = scalar_lea.vmem %s14, %s690
        $region92: #{tpu_custom_call.1} parent=47 // pred_fallthru
          _
        // Predicated region
        $region93: #{tpu_custom_call.1} parent=47 // pred_check
          %p692 = pneg %p432
        $region94: #{tpu_custom_call.1} parent=47 // pred_check_branch
          %694 = sbr.rel (%p692) target = $region96
        $region95: #{tpu_custom_call.1} parent=47 // pred_region
          %p695 = scmp.lt.s32.totalorder %s38, 1
          %s696 = scalar_select %p695, %s38, 1
          %s697 = smul.addr %s696, 256
          %s698 = smul.addr %s697, 4
          %s699 = scalar_lea.vmem %s15, %s698
        $region96: #{tpu_custom_call.1} parent=47 // pred_fallthru
          _
        // Predicated region
        $region97: #{tpu_custom_call.1} parent=47 // pred_check
          %p700 = pneg %p458
        $region98: #{tpu_custom_call.1} parent=47 // pred_check_branch
          %702 = sbr.rel (%p700) target = $region100
        $region99: #{tpu_custom_call.1} parent=47 // pred_region
          %p703 = scmp.lt.s32.totalorder %s38, 1
          %s704 = scalar_select %p703, %s38, 1
          %s705 = scalar_lea.vmem %s16, %s704
        $region100: #{tpu_custom_call.1} parent=47 // pred_fallthru
          _
      $region48: #{tpu_custom_call.1} parent=5 // pred_fallthru
        _
      %p706 = scmp.le.s32.totalorder 1, %s30
      %p707 = scmp.lt.s32.totalorder %s30, 5
      %p708 = pnand %p706, %p707
      %p709 = pneg %p708
      // Predicated region
      $region101: #{tpu_custom_call.1} parent=5 // pred_check
        _
      $region102: #{tpu_custom_call.1} parent=5 // pred_check_branch
        %711 = sbr.rel (%p708) target = $region104
      $region103: #{tpu_custom_call.1} parent=5 // pred_region
        %s712 = ssub.s32 %s30, 1
        %p713 = scmp.lt.s32.totalorder %s39, 1
        %s714 = scalar_select %p713, %s39, 1
        %s715 = smul.addr %s714, 2
        %s716 = smul.addr %s715, 4
        %s717 = scalar_lea.vmem %s0, %s716
        %p718 = pneg %p68
        %p719 = pneg %p65
        %p720 = pneg %p89
        %p721 = pneg %p86
        %p722 = pneg %p110
        %p723 = pneg %p107
        %p724 = pneg %p131
        %p725 = pneg %p128
        %p726 = pneg %p152
        %p727 = pneg %p149
        %p728 = scmp.lt.s32.totalorder %s40, 1
        %s729 = scalar_select %p728, %s40, 1
        %s730 = smul.addr %s729, 4
        %s731 = smul.addr %s730, 4
        %s732 = scalar_lea.vmem %s5, %s731
        %p733 = pneg %p178
        %p734 = pneg %p175
        %p735 = scmp.lt.s32.totalorder %s40, 1
        %s736 = scalar_select %p735, %s40, 1
        %s737 = scalar_lea.vmem %s6, %s736
        %p738 = pneg %p204
        %p739 = pneg %p201
        %p740 = scmp.lt.s32.totalorder %s40, 1
        %s741 = scalar_select %p740, %s40, 1
        %s742 = smul.addr %s741, 4
        %s743 = smul.addr %s742, 4
        %s744 = scalar_lea.vmem %s7, %s743
        %p745 = pneg %p230
        %p746 = pneg %p227
        %p747 = scmp.lt.s32.totalorder %s40, 1
        %s748 = scalar_select %p747, %s40, 1
        %s749 = scalar_lea.vmem %s8, %s748
        %p750 = pneg %p256
        %p751 = pneg %p253
        %p752 = scmp.lt.s32.totalorder %s40, 1
        %s753 = scalar_select %p752, %s40, 1
        %s754 = scalar_lea.vmem %s9, %s753
        %p755 = pneg %p282
        %p756 = pneg %p279
        %p757 = scmp.lt.s32.totalorder %s40, 1
        %s758 = scalar_select %p757, %s40, 1
        %s759 = scalar_lea.vmem %s10, %s758
        %p760 = pneg %p308
        %p761 = pneg %p305
        %p762 = scmp.lt.s32.totalorder %s40, 1
        %s763 = scalar_select %p762, %s40, 1
        %s764 = scalar_lea.vmem %s11, %s763
        %p765 = pneg %p334
        %p766 = pneg %p331
        %p767 = scmp.lt.s32.totalorder %s40, 1
        %s768 = scalar_select %p767, %s40, 1
        %s769 = scalar_lea.vmem %s12, %s768
        %p770 = pneg %p360
        %p771 = pneg %p357
        %p772 = scmp.lt.s32.totalorder %s40, 1
        %s773 = scalar_select %p772, %s40, 1
        %s774 = smul.addr %s773, 64
        %s775 = smul.addr %s774, 4
        %s776 = scalar_lea.vmem %s13, %s775
        %p777 = pneg %p386
        %p778 = pneg %p383
        %p779 = scmp.lt.s32.totalorder %s40, 1
        %s780 = scalar_select %p779, %s40, 1
        %s781 = smul.addr %s780, 16
        %s782 = scalar_lea.vmem %s14, %s781
        %p783 = pneg %p412
        %p784 = pneg %p409
        %p785 = scmp.lt.s32.totalorder %s40, 1
        %s786 = scalar_select %p785, %s40, 1
        %s787 = smul.addr %s786, 256
        %s788 = smul.addr %s787, 4
        %s789 = scalar_lea.vmem %s15, %s788
        %p790 = pneg %p438
        %p791 = pneg %p435
        %p792 = scmp.lt.s32.totalorder %s40, 1
        %s793 = scalar_select %p792, %s40, 1
        %s794 = scalar_lea.vmem %s16, %s793
        %p795 = pneg %p464
        %p796 = pneg %p461
        %p797 = pneg %p485
        %p798 = pneg %p482
        %p799 = pneg %p506
        %p800 = pneg %p503
        %p801 = pneg %p527
        %p802 = pneg %p524
        %p803 = pneg %p548
        %p804 = pneg %p545
        %p805 = pneg %p574
        %p806 = pneg %p571
        %s807 = sand.u32 %s561, 1
        %s808 = scalar_lea.sflag [#allocation4], %s807
        %s809 = sand.u32 %s561, 1
        %s810 = scalar_lea.vmem [#allocation3], %s809
        %p811 = scmp.lt.s32.totalorder %s39, 1
        %s812 = scalar_select %p811, %s39, 1
        %s813 = smul.addr %s812, 2
        %s814 = smul.addr %s813, 4
        %s815 = scalar_lea.vmem %s0, %s814
        %p816 = scmp.lt.s32.totalorder %s40, 1
        %s817 = scalar_select %p816, %s40, 1
        %s818 = smul.addr %s817, 4
        %s819 = smul.addr %s818, 4
        %s820 = scalar_lea.vmem %s5, %s819
        %p821 = scmp.lt.s32.totalorder %s40, 1
        %s822 = scalar_select %p821, %s40, 1
        %s823 = scalar_lea.vmem %s6, %s822
        %p824 = scmp.lt.s32.totalorder %s40, 1
        %s825 = scalar_select %p824, %s40, 1
        %s826 = smul.addr %s825, 4
        %s827 = smul.addr %s826, 4
        %s828 = scalar_lea.vmem %s7, %s827
        %p829 = scmp.lt.s32.totalorder %s40, 1
        %s830 = scalar_select %p829, %s40, 1
        %s831 = scalar_lea.vmem %s8, %s830
        %p832 = scmp.lt.s32.totalorder %s40, 1
        %s833 = scalar_select %p832, %s40, 1
        %s834 = scalar_lea.vmem %s9, %s833
        %p835 = scmp.lt.s32.totalorder %s40, 1
        %s836 = scalar_select %p835, %s40, 1
        %s837 = scalar_lea.vmem %s10, %s836
        %p838 = scmp.lt.s32.totalorder %s40, 1
        %s839 = scalar_select %p838, %s40, 1
        %s840 = scalar_lea.vmem %s11, %s839
        %p841 = scmp.lt.s32.totalorder %s40, 1
        %s842 = scalar_select %p841, %s40, 1
        %s843 = scalar_lea.vmem %s12, %s842
        %p844 = scmp.lt.s32.totalorder %s40, 1
        %s845 = scalar_select %p844, %s40, 1
        %s846 = smul.addr %s845, 64
        %s847 = smul.addr %s846, 4
        %s848 = scalar_lea.vmem %s13, %s847
        %p849 = scmp.lt.s32.totalorder %s40, 1
        %s850 = scalar_select %p849, %s40, 1
        %s851 = smul.addr %s850, 16
        %s852 = scalar_lea.vmem %s14, %s851
        %p853 = scmp.lt.s32.totalorder %s40, 1
        %s854 = scalar_select %p853, %s40, 1
        %s855 = smul.addr %s854, 256
        %s856 = smul.addr %s855, 4
        %s857 = scalar_lea.vmem %s15, %s856
        %p858 = scmp.lt.s32.totalorder %s40, 1
        %s859 = scalar_select %p858, %s40, 1
        %s860 = scalar_lea.vmem %s16, %s859
        %p862 = scmp.eq.s32.totalorder %s40, 0
        // Predicated region
        $region105: #{tpu_custom_call.1} parent=103 // pred_check
          %p863 = pneg %p862
        $region106: #{tpu_custom_call.1} parent=103 // pred_check_branch
          %865 = sbr.rel (%p863) target = $region108
        $region107: #{tpu_custom_call.1} parent=103 // pred_region
          %v866 = vld [vmem:[%s815] sm:$0xf]
          %v867 = vld [vmem:[%s815 + $0x4] sm:$0xf]
          %v868 = vld [vmem:[%s1] sm:$0xf]
          %v869 = vld [vmem:[%s1 + $0x4] sm:$0xf]
          %v870 = vld [vmem:[%s1 + $0x8] sm:$0xf]
          %v871 = vld [vmem:[%s1 + $0xc] sm:$0xf]
          %v872 = vld [vmem:[%s1 + $0x10] sm:$0xf]
          %v873 = vld [vmem:[%s1 + $0x14] sm:$0xf]
          %v874 = vld [vmem:[%s1 + $0x18] sm:$0xf]
          %v875 = vld [vmem:[%s1 + $0x1c] sm:$0xf]
          %v878 = vunpack.c.l.b16 %v866
          %v879 = vunpack.c.l.b16 %v867
          %v880 = vpack.c.b16 %v879, %v878
          %v889 = vunpack.c.l.b16 %v868
          %v890 = vunpack.c.l.b16 %v869
          %v891 = vunpack.c.l.b16 %v870
          %v892 = vunpack.c.l.b16 %v871
          %v893 = vunpack.c.l.b16 %v872
          %v894 = vunpack.c.l.b16 %v873
          %v895 = vunpack.c.l.b16 %v874
          %v896 = vunpack.c.l.b16 %v875
          %v897 = vpack.c.b16 %v890, %v889
          %v898 = vpack.c.b16 %v892, %v891
          %v899 = vpack.c.b16 %v894, %v893
          %v900 = vpack.c.b16 %v896, %v895
          %vm905 = vcmask 523264
          %v907 = vsel %vm905, %v880, 0
          %909 = vmatprep.subr.bf16.mxu0 0
          %910 = vmatpush1.bf16.msra.mxu0 %v897
          %911 = vmatprep.subr.bf16.mxu0 0
          %912 = vmatpush1.bf16.msra.mxu0 %v898
          %913 = vmatprep.subr.bf16.mxu0 0
          %914 = vmatpush1.bf16.msra.mxu0 %v899
          %915 = vmatprep.subr.bf16.mxu0 0
          %916 = vmatpush1.bf16.msra.mxu0 %v900
          %917 = vmatprep.subr.bf16.mxu0 0
          %918 = vmatpush1.bf16.msra.mxu0 0
          %919 = vmatprep.subr.bf16.mxu0 0
          %920 = vmatpush1.bf16.msra.mxu0 0
          %921 = vmatprep.subr.bf16.mxu0 0
          %922 = vmatpush1.bf16.msra.mxu0 0
          %923 = vmatprep.subr.bf16.mxu0 0
          %924 = vmatpush1.bf16.msra.mxu0 0
          %925 = vmatprep.subr.bf16.mxu0 0
          %926 = vmatpush1.bf16.msra.mxu0 0
          %927 = vmatprep.subr.bf16.mxu0 0
          %928 = vmatpush1.bf16.msra.mxu0 0
          %929 = vmatprep.subr.bf16.mxu0 0
          %930 = vmatpush1.bf16.msra.mxu0 0
          %931 = vmatprep.subr.bf16.mxu0 0
          %932 = vmatpush1.bf16.msra.mxu0 0
          %933 = vmatprep.subr.bf16.mxu0 0
          %934 = vmatpush1.bf16.msra.mxu0 0
          %935 = vmatprep.subr.bf16.mxu0 0
          %936 = vmatpush1.bf16.msra.mxu0 0
          %937 = vmatprep.subr.bf16.mxu0 0
          %938 = vmatpush1.bf16.msra.mxu0 0
          %939 = vmatprep.subr.bf16.mxu0 0
          %940 = vmatpush1.bf16.msra.mxu0 0
          %941 = vmatprep.mubr.bf16.mxu0 0
          %942 = vmatmul.mubr.bf16.gmra.mrb[0].mxu0 %v907
          %v943 = vpop.f32.mrb[0].mxu0
          %v944 = vadd.f32 0.0, %v943
          %v945 = vpop.f32.mrb[0].mxu0
          %v946 = vpop.f32.mrb[0].mxu0
          %v947 = vadd.f32 0.0, %v946
          %v948 = vpop.f32.mrb[0].mxu0
          %949 = vdwg.mxu0
          %v950 = vld [vmem:[%s2] sm:$0x1]
          %v952 = vlaneseq
          %v953 = vshrl.u32 %v952, 7
          %v954 = vsub.s32 0, %v953
          %v955 = vrot.slane %v950, %v954
          %v957 = vadd.f32 %v944, %v955
          %v958 = vadd.f32 %v947, %v955
          %v959 = vld [vmem:[%s3] sm:$0x1]
          %vm962 = vcmask 1040384
          %v963 = vrot.slane %v957, 7
          %v964 = vrot.slane %v958, 7
          %v965 = vsel %vm962, %v963, %v964
          %v969 = vsel %vm962, %v959, %v963
          %v970 = vsel %vm962, %v964, 0.0
          %v971 = vld [vmem:[%s4] sm:$0xff]
          %v972 = vld [vmem:[%s4 + $0x8] sm:$0xff]
          %v973 = vld [vmem:[%s4 + $0x10] sm:$0xff]
          %v974 = vld [vmem:[%s4 + $0x18] sm:$0xff]
          %v975 = vld [vmem:[%s4 + $0x20] sm:$0xff]
          %v976 = vld [vmem:[%s4 + $0x28] sm:$0xff]
          %v977 = vld [vmem:[%s4 + $0x30] sm:$0xff]
          %v978 = vld [vmem:[%s4 + $0x38] sm:$0xff]
          %v979 = vld [vmem:[%s4 + $0x40] sm:$0xff]
          %v980 = vld [vmem:[%s4 + $0x48] sm:$0xff]
          %v981 = vld [vmem:[%s4 + $0x50] sm:$0xff]
          %v982 = vld [vmem:[%s4 + $0x58] sm:$0xff]
          %v983 = vld [vmem:[%s4 + $0x60] sm:$0xff]
          %v984 = vld [vmem:[%s4 + $0x68] sm:$0xff]
          %v985 = vld [vmem:[%s4 + $0x70] sm:$0xff]
          %v986 = vld [vmem:[%s4 + $0x78] sm:$0xff]
          %v987 = vadd.f32 %v969, %v971
          %v988 = vadd.f32 %v965, %v972
          %v989 = vadd.f32 %v970, %v973
          %v990 = vadd.f32 %v974, 0.0
          %v991 = vadd.f32 %v975, 0.0
          %v992 = vadd.f32 %v976, 0.0
          %v993 = vadd.f32 %v977, 0.0
          %v994 = vadd.f32 %v978, 0.0
          %v995 = vadd.f32 %v979, 0.0
          %v996 = vadd.f32 %v980, 0.0
          %v997 = vadd.f32 %v981, 0.0
          %v998 = vadd.f32 %v982, 0.0
          %v999 = vadd.f32 %v983, 0.0
          %v1000 = vadd.f32 %v984, 0.0
          %v1001 = vadd.f32 %v985, 0.0
          %v1002 = vadd.f32 %v986, 0.0
          %vm1003 = vcmask 261120
          %1004 = vst.msk [vmem:[#allocation2] sm:$0xff] %vm1003, %v987
          %1005 = vst.msk [vmem:[#allocation2 + $0x8] sm:$0xff] %vm1003, %v988
          %1006 = vst.msk [vmem:[#allocation2 + $0x10] sm:$0xff] %vm1003, %v989
          %1007 = vst.msk [vmem:[#allocation2 + $0x18] sm:$0xff] %vm1003, %v990
          %1008 = vst.msk [vmem:[#allocation2 + $0x20] sm:$0xff] %vm1003, %v991
          %1009 = vst.msk [vmem:[#allocation2 + $0x28] sm:$0xff] %vm1003, %v992
          %1010 = vst.msk [vmem:[#allocation2 + $0x30] sm:$0xff] %vm1003, %v993
          %1011 = vst.msk [vmem:[#allocation2 + $0x38] sm:$0xff] %vm1003, %v994
          %1012 = vst.msk [vmem:[#allocation2 + $0x40] sm:$0xff] %vm1003, %v995
          %1013 = vst.msk [vmem:[#allocation2 + $0x48] sm:$0xff] %vm1003, %v996
          %1014 = vst.msk [vmem:[#allocation2 + $0x50] sm:$0xff] %vm1003, %v997
          %1015 = vst.msk [vmem:[#allocation2 + $0x58] sm:$0xff] %vm1003, %v998
          %1016 = vst.msk [vmem:[#allocation2 + $0x60] sm:$0xff] %vm1003, %v999
          %1017 = vst.msk [vmem:[#allocation2 + $0x68] sm:$0xff] %vm1003, %v1000
          %1018 = vst.msk [vmem:[#allocation2 + $0x70] sm:$0xff] %vm1003, %v1001
          %1019 = vst.msk [vmem:[#allocation2 + $0x78] sm:$0xff] %vm1003, %v1002
        $region108: #{tpu_custom_call.1} parent=103 // pred_fallthru
          _
        %v1020 = vld [vmem:[#allocation2] sm:$0xff]
        %v1021 = vld [vmem:[#allocation2 + $0x8] sm:$0xff]
        %v1022 = vld [vmem:[#allocation2 + $0x10] sm:$0xff]
        %v1023 = vld [vmem:[#allocation2 + $0x18] sm:$0xff]
        %v1024 = vld [vmem:[#allocation2 + $0x20] sm:$0xff]
        %v1025 = vld [vmem:[#allocation2 + $0x28] sm:$0xff]
        %v1026 = vld [vmem:[#allocation2 + $0x30] sm:$0xff]
        %v1027 = vld [vmem:[#allocation2 + $0x38] sm:$0xff]
        %v1028 = vld [vmem:[#allocation2 + $0x40] sm:$0xff]
        %v1029 = vld [vmem:[#allocation2 + $0x48] sm:$0xff]
        %v1030 = vld [vmem:[#allocation2 + $0x50] sm:$0xff]
        %v1031 = vld [vmem:[#allocation2 + $0x58] sm:$0xff]
        %v1032 = vld [vmem:[#allocation2 + $0x60] sm:$0xff]
        %v1033 = vld [vmem:[#allocation2 + $0x68] sm:$0xff]
        %v1034 = vld [vmem:[#allocation2 + $0x70] sm:$0xff]
        %v1035 = vld [vmem:[#allocation2 + $0x78] sm:$0xff]
        %v1036 = vld [vmem:[%s834] sm:$0x1]
        %v1037 = vld [vmem:[%s837] sm:$0x1]
        %vm1038 = vcmask 261120
        %v1039 = vsel %vm1038, %v1020, 0.0
        %1040 = vadd.xlane.f32.xlu0 %v1039
        %v1041 = vpop.xlane.xlu0 %1040
        %v1042 = vsel %vm1038, %v1021, 0.0
        %1043 = vadd.xlane.f32.xlu0 %v1042
        %v1044 = vpop.xlane.xlu0 %1043
        %v1045 = vsel %vm1038, %v1022, 0.0
        %1046 = vadd.xlane.f32.xlu0 %v1045
        %v1047 = vpop.xlane.xlu0 %1046
        %v1048 = vsel %vm1038, %v1023, 0.0
        %1049 = vadd.xlane.f32.xlu0 %v1048
        %v1050 = vpop.xlane.xlu0 %1049
        %v1051 = vsel %vm1038, %v1024, 0.0
        %1052 = vadd.xlane.f32.xlu0 %v1051
        %v1053 = vpop.xlane.xlu0 %1052
        %v1054 = vsel %vm1038, %v1025, 0.0
        %1055 = vadd.xlane.f32.xlu0 %v1054
        %v1056 = vpop.xlane.xlu0 %1055
        %v1057 = vsel %vm1038, %v1026, 0.0
        %1058 = vadd.xlane.f32.xlu0 %v1057
        %v1059 = vpop.xlane.xlu0 %1058
        %v1060 = vsel %vm1038, %v1027, 0.0
        %1061 = vadd.xlane.f32.xlu0 %v1060
        %v1062 = vpop.xlane.xlu0 %1061
        %v1063 = vsel %vm1038, %v1028, 0.0
        %1064 = vadd.xlane.f32.xlu0 %v1063
        %v1065 = vpop.xlane.xlu0 %1064
        %v1066 = vsel %vm1038, %v1029, 0.0
        %1067 = vadd.xlane.f32.xlu0 %v1066
        %v1068 = vpop.xlane.xlu0 %1067
        %v1069 = vsel %vm1038, %v1030, 0.0
        %1070 = vadd.xlane.f32.xlu0 %v1069
        %v1071 = vpop.xlane.xlu0 %1070
        %v1072 = vsel %vm1038, %v1031, 0.0
        %1073 = vadd.xlane.f32.xlu0 %v1072
        %v1074 = vpop.xlane.xlu0 %1073
        %v1075 = vsel %vm1038, %v1032, 0.0
        %1076 = vadd.xlane.f32.xlu0 %v1075
        %v1077 = vpop.xlane.xlu0 %1076
        %v1078 = vsel %vm1038, %v1033, 0.0
        %1079 = vadd.xlane.f32.xlu0 %v1078
        %v1080 = vpop.xlane.xlu0 %1079
        %v1081 = vsel %vm1038, %v1034, 0.0
        %1082 = vadd.xlane.f32.xlu0 %v1081
        %v1083 = vpop.xlane.xlu0 %1082
        %v1084 = vsel %vm1038, %v1035, 0.0
        %1085 = vadd.xlane.f32.xlu0 %v1084
        %v1086 = vpop.xlane.xlu0 %1085
        %v1087 = vrcp.pop 32.0
        %v1088 = vmul.f32 %v1041, %v1087
        %v1089 = vmul.f32 %v1044, %v1087
        %v1090 = vmul.f32 %v1047, %v1087
        %v1091 = vmul.f32 %v1050, %v1087
        %v1092 = vmul.f32 %v1053, %v1087
        %v1093 = vmul.f32 %v1056, %v1087
        %v1094 = vmul.f32 %v1059, %v1087
        %v1095 = vmul.f32 %v1062, %v1087
        %v1096 = vmul.f32 %v1065, %v1087
        %v1097 = vmul.f32 %v1068, %v1087
        %v1098 = vmul.f32 %v1071, %v1087
        %v1099 = vmul.f32 %v1074, %v1087
        %v1100 = vmul.f32 %v1077, %v1087
        %v1101 = vmul.f32 %v1080, %v1087
        %v1102 = vmul.f32 %v1083, %v1087
        %v1103 = vmul.f32 %v1086, %v1087
        %v1104 = vsub.f32 %v1020, %v1088
        %v1105 = vsub.f32 %v1021, %v1089
        %v1106 = vsub.f32 %v1022, %v1090
        %v1107 = vsub.f32 %v1023, %v1091
        %v1108 = vsub.f32 %v1024, %v1092
        %v1109 = vsub.f32 %v1025, %v1093
        %v1110 = vsub.f32 %v1026, %v1094
        %v1111 = vsub.f32 %v1027, %v1095
        %v1112 = vsub.f32 %v1028, %v1096
        %v1113 = vsub.f32 %v1029, %v1097
        %v1114 = vsub.f32 %v1030, %v1098
        %v1115 = vsub.f32 %v1031, %v1099
        %v1116 = vsub.f32 %v1032, %v1100
        %v1117 = vsub.f32 %v1033, %v1101
        %v1118 = vsub.f32 %v1034, %v1102
        %v1119 = vsub.f32 %v1035, %v1103
        %v1120 = vmul.f32 %v1104, %v1104
        %v1121 = vmul.f32 %v1105, %v1105
        %v1122 = vmul.f32 %v1106, %v1106
        %v1123 = vmul.f32 %v1107, %v1107
        %v1124 = vmul.f32 %v1108, %v1108
        %v1125 = vmul.f32 %v1109, %v1109
        %v1126 = vmul.f32 %v1110, %v1110
        %v1127 = vmul.f32 %v1111, %v1111
        %v1128 = vmul.f32 %v1112, %v1112
        %v1129 = vmul.f32 %v1113, %v1113
        %v1130 = vmul.f32 %v1114, %v1114
        %v1131 = vmul.f32 %v1115, %v1115
        %v1132 = vmul.f32 %v1116, %v1116
        %v1133 = vmul.f32 %v1117, %v1117
        %v1134 = vmul.f32 %v1118, %v1118
        %v1135 = vmul.f32 %v1119, %v1119
        %v1136 = vsel %vm1038, %v1120, 0.0
        %1137 = vadd.xlane.f32.xlu0 %v1136
        %v1138 = vpop.xlane.xlu0 %1137
        %v1139 = vsel %vm1038, %v1121, 0.0
        %1140 = vadd.xlane.f32.xlu0 %v1139
        %v1141 = vpop.xlane.xlu0 %1140
        %v1142 = vsel %vm1038, %v1122, 0.0
        %1143 = vadd.xlane.f32.xlu0 %v1142
        %v1144 = vpop.xlane.xlu0 %1143
        %v1145 = vsel %vm1038, %v1123, 0.0
        %1146 = vadd.xlane.f32.xlu0 %v1145
        %v1147 = vpop.xlane.xlu0 %1146
        %v1148 = vsel %vm1038, %v1124, 0.0
        %1149 = vadd.xlane.f32.xlu0 %v1148
        %v1150 = vpop.xlane.xlu0 %1149
        %v1151 = vsel %vm1038, %v1125, 0.0
        %1152 = vadd.xlane.f32.xlu0 %v1151
        %v1153 = vpop.xlane.xlu0 %1152
        %v1154 = vsel %vm1038, %v1126, 0.0
        %1155 = vadd.xlane.f32.xlu0 %v1154
        %v1156 = vpop.xlane.xlu0 %1155
        %v1157 = vsel %vm1038, %v1127, 0.0
        %1158 = vadd.xlane.f32.xlu0 %v1157
        %v1159 = vpop.xlane.xlu0 %1158
        %v1160 = vsel %vm1038, %v1128, 0.0
        %1161 = vadd.xlane.f32.xlu0 %v1160
        %v1162 = vpop.xlane.xlu0 %1161
        %v1163 = vsel %vm1038, %v1129, 0.0
        %1164 = vadd.xlane.f32.xlu0 %v1163
        %v1165 = vpop.xlane.xlu0 %1164
        %v1166 = vsel %vm1038, %v1130, 0.0
        %1167 = vadd.xlane.f32.xlu0 %v1166
        %v1168 = vpop.xlane.xlu0 %1167
        %v1169 = vsel %vm1038, %v1131, 0.0
        %1170 = vadd.xlane.f32.xlu0 %v1169
        %v1171 = vpop.xlane.xlu0 %1170
        %v1172 = vsel %vm1038, %v1132, 0.0
        %1173 = vadd.xlane.f32.xlu0 %v1172
        %v1174 = vpop.xlane.xlu0 %1173
        %v1175 = vsel %vm1038, %v1133, 0.0
        %1176 = vadd.xlane.f32.xlu0 %v1175
        %v1177 = vpop.xlane.xlu0 %1176
        %v1178 = vsel %vm1038, %v1134, 0.0
        %1179 = vadd.xlane.f32.xlu0 %v1178
        %v1180 = vpop.xlane.xlu0 %1179
        %v1181 = vsel %vm1038, %v1135, 0.0
        %1182 = vadd.xlane.f32.xlu0 %v1181
        %v1183 = vpop.xlane.xlu0 %1182
        %v1184 = vmul.f32 %v1138, %v1087
        %v1185 = vmul.f32 %v1141, %v1087
        %v1186 = vmul.f32 %v1144, %v1087
        %v1187 = vmul.f32 %v1147, %v1087
        %v1188 = vmul.f32 %v1150, %v1087
        %v1189 = vmul.f32 %v1153, %v1087
        %v1190 = vmul.f32 %v1156, %v1087
        %v1191 = vmul.f32 %v1159, %v1087
        %v1192 = vmul.f32 %v1162, %v1087
        %v1193 = vmul.f32 %v1165, %v1087
        %v1194 = vmul.f32 %v1168, %v1087
        %v1195 = vmul.f32 %v1171, %v1087
        %v1196 = vmul.f32 %v1174, %v1087
        %v1197 = vmul.f32 %v1177, %v1087
        %v1198 = vmul.f32 %v1180, %v1087
        %v1199 = vmul.f32 %v1183, %v1087
        %v1200 = vadd.f32 %v1184, 1e-05
        %v1201 = vadd.f32 %v1185, 1e-05
        %v1202 = vadd.f32 %v1186, 1e-05
        %v1203 = vadd.f32 %v1187, 1e-05
        %v1204 = vadd.f32 %v1188, 1e-05
        %v1205 = vadd.f32 %v1189, 1e-05
        %v1206 = vadd.f32 %v1190, 1e-05
        %v1207 = vadd.f32 %v1191, 1e-05
        %v1208 = vadd.f32 %v1192, 1e-05
        %v1209 = vadd.f32 %v1193, 1e-05
        %v1210 = vadd.f32 %v1194, 1e-05
        %v1211 = vadd.f32 %v1195, 1e-05
        %v1212 = vadd.f32 %v1196, 1e-05
        %v1213 = vadd.f32 %v1197, 1e-05
        %v1214 = vadd.f32 %v1198, 1e-05
        %v1215 = vadd.f32 %v1199, 1e-05
        %v1216 = vrsqrt.pop %v1200
        %v1217 = vrsqrt.pop %v1201
        %v1218 = vrsqrt.pop %v1202
        %v1219 = vrsqrt.pop %v1203
        %v1220 = vrsqrt.pop %v1204
        %v1221 = vrsqrt.pop %v1205
        %v1222 = vrsqrt.pop %v1206
        %v1223 = vrsqrt.pop %v1207
        %v1224 = vrsqrt.pop %v1208
        %v1225 = vrsqrt.pop %v1209
        %v1226 = vrsqrt.pop %v1210
        %v1227 = vrsqrt.pop %v1211
        %v1228 = vrsqrt.pop %v1212
        %v1229 = vrsqrt.pop %v1213
        %v1230 = vrsqrt.pop %v1214
        %v1231 = vrsqrt.pop %v1215
        %v1232 = vmul.f32 %v1104, %v1216
        %v1233 = vmul.f32 %v1105, %v1217
        %v1234 = vmul.f32 %v1106, %v1218
        %v1235 = vmul.f32 %v1107, %v1219
        %v1236 = vmul.f32 %v1108, %v1220
        %v1237 = vmul.f32 %v1109, %v1221
        %v1238 = vmul.f32 %v1110, %v1222
        %v1239 = vmul.f32 %v1111, %v1223
        %v1240 = vmul.f32 %v1112, %v1224
        %v1241 = vmul.f32 %v1113, %v1225
        %v1242 = vmul.f32 %v1114, %v1226
        %v1243 = vmul.f32 %v1115, %v1227
        %v1244 = vmul.f32 %v1116, %v1228
        %v1245 = vmul.f32 %v1117, %v1229
        %v1246 = vmul.f32 %v1118, %v1230
        %v1247 = vmul.f32 %v1119, %v1231
        %v1249 = vlaneseq
        %v1250 = vshrl.u32 %v1249, 7
        %v1251 = vsub.s32 0, %v1250
        %v1252 = vrot.slane %v1036, %v1251
        %v1254 = vmul.f32 %v1232, %v1252
        %v1255 = vmul.f32 %v1233, %v1252
        %v1256 = vmul.f32 %v1234, %v1252
        %v1257 = vmul.f32 %v1235, %v1252
        %v1258 = vmul.f32 %v1236, %v1252
        %v1259 = vmul.f32 %v1237, %v1252
        %v1260 = vmul.f32 %v1238, %v1252
        %v1261 = vmul.f32 %v1239, %v1252
        %v1262 = vmul.f32 %v1240, %v1252
        %v1263 = vmul.f32 %v1241, %v1252
        %v1264 = vmul.f32 %v1242, %v1252
        %v1265 = vmul.f32 %v1243, %v1252
        %v1266 = vmul.f32 %v1244, %v1252
        %v1267 = vmul.f32 %v1245, %v1252
        %v1268 = vmul.f32 %v1246, %v1252
        %v1269 = vmul.f32 %v1247, %v1252
        %v1271 = vlaneseq
        %v1272 = vshrl.u32 %v1271, 7
        %v1273 = vsub.s32 0, %v1272
        %v1274 = vrot.slane %v1037, %v1273
        %v1276 = vadd.f32 %v1254, %v1274
        %v1277 = vadd.f32 %v1255, %v1274
        %v1278 = vadd.f32 %v1256, %v1274
        %v1279 = vadd.f32 %v1257, %v1274
        %v1280 = vadd.f32 %v1258, %v1274
        %v1281 = vadd.f32 %v1259, %v1274
        %v1282 = vadd.f32 %v1260, %v1274
        %v1283 = vadd.f32 %v1261, %v1274
        %v1284 = vadd.f32 %v1262, %v1274
        %v1285 = vadd.f32 %v1263, %v1274
        %v1286 = vadd.f32 %v1264, %v1274
        %v1287 = vadd.f32 %v1265, %v1274
        %v1288 = vadd.f32 %v1266, %v1274
        %v1289 = vadd.f32 %v1267, %v1274
        %v1290 = vadd.f32 %v1268, %v1274
        %v1291 = vadd.f32 %v1269, %v1274
        %v1292 = vpack.c.bf16 %v1277, %v1276
        %v1293 = vpack.c.bf16 %v1279, %v1278
        %v1294 = vpack.c.bf16 %v1281, %v1280
        %v1295 = vpack.c.bf16 %v1283, %v1282
        %v1296 = vpack.c.bf16 %v1285, %v1284
        %v1297 = vpack.c.bf16 %v1287, %v1286
        %v1298 = vpack.c.bf16 %v1289, %v1288
        %v1299 = vpack.c.bf16 %v1291, %v1290
        %v1300 = vld [vmem:[%s820] sm:$0xf]
        %v1301 = vld [vmem:[%s820 + $0x4] sm:$0xf]
        %v1302 = vld [vmem:[%s820 + $0x8] sm:$0xf]
        %v1303 = vld [vmem:[%s820 + $0xc] sm:$0xf]
        %v1304 = vld [vmem:[%s823] sm:$0x1]
        %v1306 = vlaneseq
        %v1307 = vshrl.u32 %v1306, 7
        %v1308 = vsub.s32 0, %v1307
        %v1309 = vrot.slane %v1304, %v1308
        %v1315 = vunpack.c.l.b16 %v1300
        %v1316 = vunpack.c.l.b16 %v1301
        %v1317 = vunpack.c.l.b16 %v1302
        %v1318 = vunpack.c.l.b16 %v1303
        %v1319 = vpack.c.b16 %v1316, %v1315
        %v1320 = vpack.c.b16 %v1318, %v1317
        %v1324 = vsel %vm1038, %v1292, 0
        %v1327 = vsel %vm1038, %v1293, 0
        %v1330 = vsel %vm1038, %v1294, 0
        %v1333 = vsel %vm1038, %v1295, 0
        %v1336 = vsel %vm1038, %v1296, 0
        %v1339 = vsel %vm1038, %v1297, 0
        %v1342 = vsel %vm1038, %v1298, 0
        %v1345 = vsel %vm1038, %v1299, 0
        %1347 = vmatprep.subr.bf16.mxu0 0
        %1348 = vmatpush1.bf16.msra.mxu0 %v1319
        %1349 = vmatprep.subr.bf16.mxu0 0
        %1350 = vmatpush1.bf16.msra.mxu0 %v1320
        %1351 = vmatprep.subr.bf16.mxu0 0
        %1352 = vmatpush1.bf16.msra.mxu0 0
        %1353 = vmatprep.subr.bf16.mxu0 0
        %1354 = vmatpush1.bf16.msra.mxu0 0
        %1355 = vmatprep.subr.bf16.mxu0 0
        %1356 = vmatpush1.bf16.msra.mxu0 0
        %1357 = vmatprep.subr.bf16.mxu0 0
        %1358 = vmatpush1.bf16.msra.mxu0 0
        %1359 = vmatprep.subr.bf16.mxu0 0
        %1360 = vmatpush1.bf16.msra.mxu0 0
        %1361 = vmatprep.subr.bf16.mxu0 0
        %1362 = vmatpush1.bf16.msra.mxu0 0
        %1363 = vmatprep.subr.bf16.mxu0 0
        %1364 = vmatpush1.bf16.msra.mxu0 0
        %1365 = vmatprep.subr.bf16.mxu0 0
        %1366 = vmatpush1.bf16.msra.mxu0 0
        %1367 = vmatprep.subr.bf16.mxu0 0
        %1368 = vmatpush1.bf16.msra.mxu0 0
        %1369 = vmatprep.subr.bf16.mxu0 0
        %1370 = vmatpush1.bf16.msra.mxu0 0
        %1371 = vmatprep.subr.bf16.mxu0 0
        %1372 = vmatpush1.bf16.msra.mxu0 0
        %1373 = vmatprep.subr.bf16.mxu0 0
        %1374 = vmatpush1.bf16.msra.mxu0 0
        %1375 = vmatprep.subr.bf16.mxu0 0
        %1376 = vmatpush1.bf16.msra.mxu0 0
        %1377 = vmatprep.subr.bf16.mxu0 0
        %1378 = vmatpush1.bf16.msra.mxu0 0
        %1379 = vmatprep.mubr.bf16.mxu0 0
        %1380 = vmatmul.mubr.bf16.gmra.mrb[0].mxu0 %v1324
        %v1381 = vpop.f32.mrb[0].mxu0
        %v1382 = vadd.f32 %v1309, %v1381
        %v1383 = vpop.f32.mrb[0].mxu0
        %v1384 = vpop.f32.mrb[0].mxu0
        %v1385 = vadd.f32 %v1309, %v1384
        %v1386 = vpop.f32.mrb[0].mxu0
        %1387 = vmatprep.mubr.bf16.mxu0 0
        %1388 = vmatmul.mubr.bf16.gmra.mrb[0].mxu0 %v1327
        %v1389 = vpop.f32.mrb[0].mxu0
        %v1390 = vadd.f32 %v1309, %v1389
        %v1391 = vpop.f32.mrb[0].mxu0
        %v1392 = vpop.f32.mrb[0].mxu0
        %v1393 = vadd.f32 %v1309, %v1392
        %v1394 = vpop.f32.mrb[0].mxu0
        %1395 = vmatprep.mubr.bf16.mxu0 0
        %1396 = vmatmul.mubr.bf16.gmra.mrb[0].mxu0 %v1330
        %v1397 = vpop.f32.mrb[0].mxu0
        %v1398 = vadd.f32 %v1309, %v1397
        %v1399 = vpop.f32.mrb[0].mxu0
        %v1400 = vpop.f32.mrb[0].mxu0
        %v1401 = vadd.f32 %v1309, %v1400
        %v1402 = vpop.f32.mrb[0].mxu0
        %1403 = vmatprep.mubr.bf16.mxu0 0
        %1404 = vmatmul.mubr.bf16.gmra.mrb[0].mxu0 %v1333
        %v1405 = vpop.f32.mrb[0].mxu0
        %v1406 = vadd.f32 %v1309, %v1405
        %v1407 = vpop.f32.mrb[0].mxu0
        %v1408 = vpop.f32.mrb[0].mxu0
        %v1409 = vadd.f32 %v1309, %v1408
        %v1410 = vpop.f32.mrb[0].mxu0
        %1411 = vmatprep.mubr.bf16.mxu0 0
        %1412 = vmatmul.mubr.bf16.gmra.mrb[0].mxu0 %v1336
        %v1413 = vpop.f32.mrb[0].mxu0
        %v1414 = vadd.f32 %v1309, %v1413
        %v1415 = vpop.f32.mrb[0].mxu0
        %v1416 = vpop.f32.mrb[0].mxu0
        %v1417 = vadd.f32 %v1309, %v1416
        %v1418 = vpop.f32.mrb[0].mxu0
        %1419 = vmatprep.mubr.bf16.mxu0 0
        %1420 = vmatmul.mubr.bf16.gmra.mrb[0].mxu0 %v1339
        %v1421 = vpop.f32.mrb[0].mxu0
        %v1422 = vadd.f32 %v1309, %v1421
        %v1423 = vpop.f32.mrb[0].mxu0
        %v1424 = vpop.f32.mrb[0].mxu0
        %v1425 = vadd.f32 %v1309, %v1424
        %v1426 = vpop.f32.mrb[0].mxu0
        %1427 = vmatprep.mubr.bf16.mxu0 0
        %1428 = vmatmul.mubr.bf16.gmra.mrb[0].mxu0 %v1342
        %v1429 = vpop.f32.mrb[0].mxu0
        %v1430 = vadd.f32 %v1309, %v1429
        %v1431 = vpop.f32.mrb[0].mxu0
        %v1432 = vpop.f32.mrb[0].mxu0
        %v1433 = vadd.f32 %v1309, %v1432
        %v1434 = vpop.f32.mrb[0].mxu0
        %1435 = vmatprep.mubr.bf16.mxu0 0
        %1436 = vmatmul.mubr.bf16.gmra.mrb[0].mxu0 %v1345
        %v1437 = vpop.f32.mrb[0].mxu0
        %v1438 = vadd.f32 %v1309, %v1437
        %v1439 = vpop.f32.mrb[0].mxu0
        %v1440 = vpop.f32.mrb[0].mxu0
        %v1441 = vadd.f32 %v1309, %v1440
        %v1442 = vpop.f32.mrb[0].mxu0
        %1443 = vdwg.mxu0
        %v1444 = vmul.f32 %v1382, 0.25
        %v1445 = vmul.f32 %v1385, 0.25
        %v1446 = vmul.f32 %v1390, 0.25
        %v1447 = vmul.f32 %v1393, 0.25
        %v1448 = vmul.f32 %v1398, 0.25
        %v1449 = vmul.f32 %v1401, 0.25
        %v1450 = vmul.f32 %v1406, 0.25
        %v1451 = vmul.f32 %v1409, 0.25
        %v1452 = vmul.f32 %v1414, 0.25
        %v1453 = vmul.f32 %v1417, 0.25
        %v1454 = vmul.f32 %v1422, 0.25
        %v1455 = vmul.f32 %v1425, 0.25
        %v1456 = vmul.f32 %v1430, 0.25
        %v1457 = vmul.f32 %v1433, 0.25
        %v1458 = vmul.f32 %v1438, 0.25
        %v1459 = vmul.f32 %v1441, 0.25
        %v1460 = vpack.c.bf16 %v1445, %v1444
        %v1461 = vpack.c.bf16 %v1447, %v1446
        %v1462 = vpack.c.bf16 %v1449, %v1448
        %v1463 = vpack.c.bf16 %v1451, %v1450
        %v1464 = vpack.c.bf16 %v1453, %v1452
        %v1465 = vpack.c.bf16 %v1455, %v1454
        %v1466 = vpack.c.bf16 %v1457, %v1456
        %v1467 = vpack.c.bf16 %v1459, %v1458
        %v1468 = vpack.c.bf16 %v1385, %v1382
        %v1469 = vpack.c.bf16 %v1393, %v1390
        %v1470 = vpack.c.bf16 %v1401, %v1398
        %v1471 = vpack.c.bf16 %v1409, %v1406
        %v1472 = vpack.c.bf16 %v1417, %v1414
        %v1473 = vpack.c.bf16 %v1425, %v1422
        %v1474 = vpack.c.bf16 %v1433, %v1430
        %v1475 = vpack.c.bf16 %v1441, %v1438
        %v1476 = vlaneseq
        %v1477 = vand.u32 %v1476, 127
        %vm1478 = vcmp.lt.s32.totalorder %v1477, 17
        %v1479 = vsel %vm1478, 0.0, -1e+30
        %1488 = vrot.lane.b32.xlu0 %v1468, 96
        %v1489 = vpop.permute.xlu0 %1488
        %1490 = vrot.lane.b32.xlu0 %v1469, 96
        %v1491 = vpop.permute.xlu0 %1490
        %1492 = vrot.lane.b32.xlu0 %v1470, 96
        %v1493 = vpop.permute.xlu0 %1492
        %1494 = vrot.lane.b32.xlu0 %v1471, 96
        %v1495 = vpop.permute.xlu0 %1494
        %1496 = vrot.lane.b32.xlu0 %v1472, 96
        %v1497 = vpop.permute.xlu0 %1496
        %1498 = vrot.lane.b32.xlu0 %v1473, 96
        %v1499 = vpop.permute.xlu0 %1498
        %1500 = vrot.lane.b32.xlu0 %v1474, 96
        %v1501 = vpop.permute.xlu0 %1500
        %1502 = vrot.lane.b32.xlu0 %v1475, 96
        %v1503 = vpop.permute.xlu0 %1502
        %vm1504 = vcmask 130048
        %v1506 = vsel %vm1504, %v1460, 0
        %v1509 = vsel %vm1504, %v1461, 0
        %v1512 = vsel %vm1504, %v1462, 0
        %v1515 = vsel %vm1504, %v1463, 0
        %v1518 = vsel %vm1504, %v1464, 0
        %v1521 = vsel %vm1504, %v1465, 0
        %v1524 = vsel %vm1504, %v1466, 0
        %v1527 = vsel %vm1504, %v1467, 0
        %v1530 = vsel %vm1504, %v1489, 0
        %v1533 = vsel %vm1504, %v1491, 0
        %v1536 = vsel %vm1504, %v1493, 0
        %v1539 = vsel %vm1504, %v1495, 0
        %v1542 = vsel %vm1504, %v1497, 0
        %v1545 = vsel %vm1504, %v1499, 0
        %v1548 = vsel %vm1504, %v1501, 0
        %v1551 = vsel %vm1504, %v1503, 0
        %1553 = vmatprep.subr.bf16.mxu0 0
        %1554 = vmatpush1.bf16.xpose.msra.mxu0 %v1530
        %1555 = vmatprep.subr.bf16.mxu0 0
        %1556 = vmatpush1.bf16.xpose.msra.mxu0 %v1533
        %1557 = vmatprep.subr.bf16.mxu0 0
        %1558 = vmatpush1.bf16.xpose.msra.mxu0 %v1536
        %1559 = vmatprep.subr.bf16.mxu0 0
        %1560 = vmatpush1.bf16.xpose.msra.mxu0 %v1539
        %1561 = vmatprep.subr.bf16.mxu0 0
        %1562 = vmatpush1.bf16.xpose.msra.mxu0 %v1542
        %1563 = vmatprep.subr.bf16.mxu0 0
        %1564 = vmatpush1.bf16.xpose.msra.mxu0 %v1545
        %1565 = vmatprep.subr.bf16.mxu0 0
        %1566 = vmatpush1.bf16.xpose.msra.mxu0 %v1548
        %1567 = vmatprep.subr.bf16.mxu0 0
        %1568 = vmatpush1.bf16.xpose.msra.mxu0 %v1551
        %1569 = vmatprep.subr.bf16.mxu0 0
        %1570 = vmatpush1.bf16.xpose.msra.mxu0 0
        %1571 = vmatprep.subr.bf16.mxu0 0
        %1572 = vmatpush1.bf16.xpose.msra.mxu0 0
        %1573 = vmatprep.subr.bf16.mxu0 0
        %1574 = vmatpush1.bf16.xpose.msra.mxu0 0
        %1575 = vmatprep.subr.bf16.mxu0 0
        %1576 = vmatpush1.bf16.xpose.msra.mxu0 0
        %1577 = vmatprep.subr.bf16.mxu0 0
        %1578 = vmatpush1.bf16.xpose.msra.mxu0 0
        %1579 = vmatprep.subr.bf16.mxu0 0
        %1580 = vmatpush1.bf16.xpose.msra.mxu0 0
        %1581 = vmatprep.subr.bf16.mxu0 0
        %1582 = vmatpush1.bf16.xpose.msra.mxu0 0
        %1583 = vmatprep.subr.bf16.mxu0 0
        %1584 = vmatpush1.bf16.xpose.msra.mxu0 0
        %1585 = vmatprep.mubr.bf16.mxu0 0
        %1586 = vmatmul.mubr.bf16.gmra.mrb[0].mxu0 %v1506
        %v1587 = vpop.f32.mrb[0].mxu0
        %v1588 = vadd.f32 %v1479, %v1587
        %v1589 = vpop.f32.mrb[0].mxu0
        %v1590 = vpop.f32.mrb[0].mxu0
        %v1591 = vadd.f32 %v1479, %v1590
        %v1592 = vpop.f32.mrb[0].mxu0
        %1593 = vmatprep.mubr.bf16.mxu0 0
        %1594 = vmatmul.mubr.bf16.gmra.mrb[0].mxu0 %v1509
        %v1595 = vpop.f32.mrb[0].mxu0
        %v1596 = vadd.f32 %v1479, %v1595
        %v1597 = vpop.f32.mrb[0].mxu0
        %v1598 = vpop.f32.mrb[0].mxu0
        %v1599 = vadd.f32 %v1479, %v1598
        %v1600 = vpop.f32.mrb[0].mxu0
        %1601 = vmatprep.mubr.bf16.mxu0 0
        %1602 = vmatmul.mubr.bf16.gmra.mrb[0].mxu0 %v1512
        %v1603 = vpop.f32.mrb[0].mxu0
        %v1604 = vadd.f32 %v1479, %v1603
        %v1605 = vpop.f32.mrb[0].mxu0
        %v1606 = vpop.f32.mrb[0].mxu0
        %v1607 = vadd.f32 %v1479, %v1606
        %v1608 = vpop.f32.mrb[0].mxu0
        %1609 = vmatprep.mubr.bf16.mxu0 0
        %1610 = vmatmul.mubr.bf16.gmra.mrb[0].mxu0 %v1515
        %v1611 = vpop.f32.mrb[0].mxu0
        %v1612 = vadd.f32 %v1479, %v1611
        %v1613 = vpop.f32.mrb[0].mxu0
        %v1614 = vpop.f32.mrb[0].mxu0
        %v1615 = vadd.f32 %v1479, %v1614
        %v1616 = vpop.f32.mrb[0].mxu0
        %1617 = vmatprep.mubr.bf16.mxu0 0
        %1618 = vmatmul.mubr.bf16.gmra.mrb[0].mxu0 %v1518
        %v1619 = vpop.f32.mrb[0].mxu0
        %v1620 = vadd.f32 %v1479, %v1619
        %v1621 = vpop.f32.mrb[0].mxu0
        %v1622 = vpop.f32.mrb[0].mxu0
        %v1623 = vadd.f32 %v1479, %v1622
        %v1624 = vpop.f32.mrb[0].mxu0
        %1625 = vmatprep.mubr.bf16.mxu0 0
        %1626 = vmatmul.mubr.bf16.gmra.mrb[0].mxu0 %v1521
        %v1627 = vpop.f32.mrb[0].mxu0
        %v1628 = vadd.f32 %v1479, %v1627
        %v1629 = vpop.f32.mrb[0].mxu0
        %v1630 = vpop.f32.mrb[0].mxu0
        %v1631 = vadd.f32 %v1479, %v1630
        %v1632 = vpop.f32.mrb[0].mxu0
        %1633 = vmatprep.mubr.bf16.mxu0 0
        %1634 = vmatmul.mubr.bf16.gmra.mrb[0].mxu0 %v1524
        %v1635 = vpop.f32.mrb[0].mxu0
        %v1636 = vadd.f32 %v1479, %v1635
        %v1637 = vpop.f32.mrb[0].mxu0
        %v1638 = vpop.f32.mrb[0].mxu0
        %v1639 = vadd.f32 %v1479, %v1638
        %v1640 = vpop.f32.mrb[0].mxu0
        %1641 = vmatprep.mubr.bf16.mxu0 0
        %1642 = vmatmul.mubr.bf16.gmra.mrb[0].mxu0 %v1527
        %v1643 = vpop.f32.mrb[0].mxu0
        %v1644 = vadd.f32 %v1479, %v1643
        %v1645 = vpop.f32.mrb[0].mxu0
        %v1646 = vpop.f32.mrb[0].mxu0
        %v1647 = vadd.f32 %v1479, %v1646
        %v1648 = vpop.f32.mrb[0].mxu0
        %1649 = vdwg.mxu0
        %1650 = vmax.xlane.f32.xlu0 %v1588
        %v1651 = vpop.xlane.xlu0 %1650
        %1652 = vmax.xlane.f32.xlu0 %v1591
        %v1653 = vpop.xlane.xlu0 %1652
        %1654 = vmax.xlane.f32.xlu0 %v1596
        %v1655 = vpop.xlane.xlu0 %1654
        %1656 = vmax.xlane.f32.xlu0 %v1599
        %v1657 = vpop.xlane.xlu0 %1656
        %1658 = vmax.xlane.f32.xlu0 %v1604
        %v1659 = vpop.xlane.xlu0 %1658
        %1660 = vmax.xlane.f32.xlu0 %v1607
        %v1661 = vpop.xlane.xlu0 %1660
        %1662 = vmax.xlane.f32.xlu0 %v1612
        %v1663 = vpop.xlane.xlu0 %1662
        %1664 = vmax.xlane.f32.xlu0 %v1615
        %v1665 = vpop.xlane.xlu0 %1664
        %1666 = vmax.xlane.f32.xlu0 %v1620
        %v1667 = vpop.xlane.xlu0 %1666
        %1668 = vmax.xlane.f32.xlu0 %v1623
        %v1669 = vpop.xlane.xlu0 %1668
        %1670 = vmax.xlane.f32.xlu0 %v1628
        %v1671 = vpop.xlane.xlu0 %1670
        %1672 = vmax.xlane.f32.xlu0 %v1631
        %v1673 = vpop.xlane.xlu0 %1672
        %1674 = vmax.xlane.f32.xlu0 %v1636
        %v1675 = vpop.xlane.xlu0 %1674
        %1676 = vmax.xlane.f32.xlu0 %v1639
        %v1677 = vpop.xlane.xlu0 %1676
        %1678 = vmax.xlane.f32.xlu0 %v1644
        %v1679 = vpop.xlane.xlu0 %1678
        %1680 = vmax.xlane.f32.xlu0 %v1647
        %v1681 = vpop.xlane.xlu0 %1680
        %v1682 = vsub.f32 %v1588, %v1651
        %v1683 = vsub.f32 %v1591, %v1653
        %v1684 = vsub.f32 %v1596, %v1655
        %v1685 = vsub.f32 %v1599, %v1657
        %v1686 = vsub.f32 %v1604, %v1659
        %v1687 = vsub.f32 %v1607, %v1661
        %v1688 = vsub.f32 %v1612, %v1663
        %v1689 = vsub.f32 %v1615, %v1665
        %v1690 = vsub.f32 %v1620, %v1667
        %v1691 = vsub.f32 %v1623, %v1669
        %v1692 = vsub.f32 %v1628, %v1671
        %v1693 = vsub.f32 %v1631, %v1673
        %v1694 = vsub.f32 %v1636, %v1675
        %v1695 = vsub.f32 %v1639, %v1677
        %v1696 = vsub.f32 %v1644, %v1679
        %v1697 = vsub.f32 %v1647, %v1681
        %v1698 = vmul.f32 %v1682, 1.442695
        %v1699 = vpow.pop %v1698
        %v1700 = vmul.f32 %v1683, 1.442695
        %v1701 = vpow.pop %v1700
        %v1702 = vmul.f32 %v1684, 1.442695
        %v1703 = vpow.pop %v1702
        %v1704 = vmul.f32 %v1685, 1.442695
        %v1705 = vpow.pop %v1704
        %v1706 = vmul.f32 %v1686, 1.442695
        %v1707 = vpow.pop %v1706
        %v1708 = vmul.f32 %v1687, 1.442695
        %v1709 = vpow.pop %v1708
        %v1710 = vmul.f32 %v1688, 1.442695
        %v1711 = vpow.pop %v1710
        %v1712 = vmul.f32 %v1689, 1.442695
        %v1713 = vpow.pop %v1712
        %v1714 = vmul.f32 %v1690, 1.442695
        %v1715 = vpow.pop %v1714
        %v1716 = vmul.f32 %v1691, 1.442695
        %v1717 = vpow.pop %v1716
        %v1718 = vmul.f32 %v1692, 1.442695
        %v1719 = vpow.pop %v1718
        %v1720 = vmul.f32 %v1693, 1.442695
        %v1721 = vpow.pop %v1720
        %v1722 = vmul.f32 %v1694, 1.442695
        %v1723 = vpow.pop %v1722
        %v1724 = vmul.f32 %v1695, 1.442695
        %v1725 = vpow.pop %v1724
        %v1726 = vmul.f32 %v1696, 1.442695
        %v1727 = vpow.pop %v1726
        %v1728 = vmul.f32 %v1697, 1.442695
        %v1729 = vpow.pop %v1728
        %1730 = vadd.xlane.f32.xlu0 %v1699
        %v1731 = vpop.xlane.xlu0 %1730
        %1732 = vadd.xlane.f32.xlu0 %v1701
        %v1733 = vpop.xlane.xlu0 %1732
        %1734 = vadd.xlane.f32.xlu0 %v1703
        %v1735 = vpop.xlane.xlu0 %1734
        %1736 = vadd.xlane.f32.xlu0 %v1705
        %v1737 = vpop.xlane.xlu0 %1736
        %1738 = vadd.xlane.f32.xlu0 %v1707
        %v1739 = vpop.xlane.xlu0 %1738
        %1740 = vadd.xlane.f32.xlu0 %v1709
        %v1741 = vpop.xlane.xlu0 %1740
        %1742 = vadd.xlane.f32.xlu0 %v1711
        %v1743 = vpop.xlane.xlu0 %1742
        %1744 = vadd.xlane.f32.xlu0 %v1713
        %v1745 = vpop.xlane.xlu0 %1744
        %1746 = vadd.xlane.f32.xlu0 %v1715
        %v1747 = vpop.xlane.xlu0 %1746
        %1748 = vadd.xlane.f32.xlu0 %v1717
        %v1749 = vpop.xlane.xlu0 %1748
        %1750 = vadd.xlane.f32.xlu0 %v1719
        %v1751 = vpop.xlane.xlu0 %1750
        %1752 = vadd.xlane.f32.xlu0 %v1721
        %v1753 = vpop.xlane.xlu0 %1752
        %1754 = vadd.xlane.f32.xlu0 %v1723
        %v1755 = vpop.xlane.xlu0 %1754
        %1756 = vadd.xlane.f32.xlu0 %v1725
        %v1757 = vpop.xlane.xlu0 %1756
        %1758 = vadd.xlane.f32.xlu0 %v1727
        %v1759 = vpop.xlane.xlu0 %1758
        %1760 = vadd.xlane.f32.xlu0 %v1729
        %v1761 = vpop.xlane.xlu0 %1760
        %v1762 = vrcp.pop %v1731
        %v1763 = vrcp.pop %v1733
        %v1764 = vrcp.pop %v1735
        %v1765 = vrcp.pop %v1737
        %v1766 = vrcp.pop %v1739
        %v1767 = vrcp.pop %v1741
        %v1768 = vrcp.pop %v1743
        %v1769 = vrcp.pop %v1745
        %v1770 = vrcp.pop %v1747
        %v1771 = vrcp.pop %v1749
        %v1772 = vrcp.pop %v1751
        %v1773 = vrcp.pop %v1753
        %v1774 = vrcp.pop %v1755
        %v1775 = vrcp.pop %v1757
        %v1776 = vrcp.pop %v1759
        %v1777 = vrcp.pop %v1761
        %v1778 = vmul.f32 %v1699, %v1762
        %v1779 = vmul.f32 %v1701, %v1763
        %v1780 = vmul.f32 %v1703, %v1764
        %v1781 = vmul.f32 %v1705, %v1765
        %v1782 = vmul.f32 %v1707, %v1766
        %v1783 = vmul.f32 %v1709, %v1767
        %v1784 = vmul.f32 %v1711, %v1768
        %v1785 = vmul.f32 %v1713, %v1769
        %v1786 = vmul.f32 %v1715, %v1770
        %v1787 = vmul.f32 %v1717, %v1771
        %v1788 = vmul.f32 %v1719, %v1772
        %v1789 = vmul.f32 %v1721, %v1773
        %v1790 = vmul.f32 %v1723, %v1774
        %v1791 = vmul.f32 %v1725, %v1775
        %v1792 = vmul.f32 %v1727, %v1776
        %v1793 = vmul.f32 %v1729, %v1777
        %v1794 = vpack.c.bf16 %v1779, %v1778
        %v1795 = vpack.c.bf16 %v1781, %v1780
        %v1796 = vpack.c.bf16 %v1783, %v1782
        %v1797 = vpack.c.bf16 %v1785, %v1784
        %v1798 = vpack.c.bf16 %v1787, %v1786
        %v1799 = vpack.c.bf16 %v1789, %v1788
        %v1800 = vpack.c.bf16 %v1791, %v1790
        %v1801 = vpack.c.bf16 %v1793, %v1792
        %1802 = vrot.lane.b32.xlu0 %v1468, 64
        %v1803 = vpop.permute.xlu0 %1802
        %1804 = vrot.lane.b32.xlu0 %v1469, 64
        %v1805 = vpop.permute.xlu0 %1804
        %1806 = vrot.lane.b32.xlu0 %v1470, 64
        %v1807 = vpop.permute.xlu0 %1806
        %1808 = vrot.lane.b32.xlu0 %v1471, 64
        %v1809 = vpop.permute.xlu0 %1808
        %1810 = vrot.lane.b32.xlu0 %v1472, 64
        %v1811 = vpop.permute.xlu0 %1810
        %1812 = vrot.lane.b32.xlu0 %v1473, 64
        %v1813 = vpop.permute.xlu0 %1812
        %1814 = vrot.lane.b32.xlu0 %v1474, 64
        %v1815 = vpop.permute.xlu0 %1814
        %1816 = vrot.lane.b32.xlu0 %v1475, 64
        %v1817 = vpop.permute.xlu0 %1816
        %1826 = vmatprep.subr.bf16.mxu0 0
        %1827 = vmatpush1.bf16.msra.mxu0 %v1803
        %1828 = vmatprep.subr.bf16.mxu0 0
        %1829 = vmatpush1.bf16.msra.mxu0 %v1805
        %1830 = vmatprep.subr.bf16.mxu0 0
        %1831 = vmatpush1.bf16.msra.mxu0 %v1807
        %1832 = vmatprep.subr.bf16.mxu0 0
        %1833 = vmatpush1.bf16.msra.mxu0 %v1809
        %1834 = vmatprep.subr.bf16.mxu0 0
        %1835 = vmatpush1.bf16.msra.mxu0 %v1811
        %1836 = vmatprep.subr.bf16.mxu0 0
        %1837 = vmatpush1.bf16.msra.mxu0 %v1813
        %1838 = vmatprep.subr.bf16.mxu0 0
        %1839 = vmatpush1.bf16.msra.mxu0 %v1815
        %1840 = vmatprep.subr.bf16.mxu0 0
        %1841 = vmatpush1.bf16.msra.mxu0 %v1817
        %1842 = vmatprep.subr.bf16.mxu0 0
        %1843 = vmatpush1.bf16.msra.mxu0 0
        %1844 = vmatprep.subr.bf16.mxu0 0
        %1845 = vmatpush1.bf16.msra.mxu0 0
        %1846 = vmatprep.subr.bf16.mxu0 0
        %1847 = vmatpush1.bf16.msra.mxu0 0
        %1848 = vmatprep.subr.bf16.mxu0 0
        %1849 = vmatpush1.bf16.msra.mxu0 0
        %1850 = vmatprep.subr.bf16.mxu0 0
        %1851 = vmatpush1.bf16.msra.mxu0 0
        %1852 = vmatprep.subr.bf16.mxu0 0
        %1853 = vmatpush1.bf16.msra.mxu0 0
        %1854 = vmatprep.subr.bf16.mxu0 0
        %1855 = vmatpush1.bf16.msra.mxu0 0
        %1856 = vmatprep.subr.bf16.mxu0 0
        %1857 = vmatpush1.bf16.msra.mxu0 0
        %1858 = vmatprep.mubr.bf16.mxu0 0
        %1859 = vmatmul.mubr.bf16.gmra.mrb[0].mxu0 %v1794
        %v1860 = vpop.f32.mrb[0].mxu0
        %v1861 = vadd.f32 0.0, %v1860
        %v1862 = vpop.f32.mrb[0].mxu0
        %v1863 = vpop.f32.mrb[0].mxu0
        %v1864 = vadd.f32 0.0, %v1863
        %v1865 = vpop.f32.mrb[0].mxu0
        %1866 = vmatprep.mubr.bf16.mxu0 0
        %1867 = vmatmul.mubr.bf16.gmra.mrb[0].mxu0 %v1795
        %v1868 = vpop.f32.mrb[0].mxu0
        %v1869 = vadd.f32 0.0, %v1868
        %v1870 = vpop.f32.mrb[0].mxu0
        %v1871 = vpop.f32.mrb[0].mxu0
        %v1872 = vadd.f32 0.0, %v1871
        %v1873 = vpop.f32.mrb[0].mxu0
        %1874 = vmatprep.mubr.bf16.mxu0 0
        %1875 = vmatmul.mubr.bf16.gmra.mrb[0].mxu0 %v1796
        %v1876 = vpop.f32.mrb[0].mxu0
        %v1877 = vadd.f32 0.0, %v1876
        %v1878 = vpop.f32.mrb[0].mxu0
        %v1879 = vpop.f32.mrb[0].mxu0
        %v1880 = vadd.f32 0.0, %v1879
        %v1881 = vpop.f32.mrb[0].mxu0
        %1882 = vmatprep.mubr.bf16.mxu0 0
        %1883 = vmatmul.mubr.bf16.gmra.mrb[0].mxu0 %v1797
        %v1884 = vpop.f32.mrb[0].mxu0
        %v1885 = vadd.f32 0.0, %v1884
        %v1886 = vpop.f32.mrb[0].mxu0
        %v1887 = vpop.f32.mrb[0].mxu0
        %v1888 = vadd.f32 0.0, %v1887
        %v1889 = vpop.f32.mrb[0].mxu0
        %1890 = vmatprep.mubr.bf16.mxu0 0
        %1891 = vmatmul.mubr.bf16.gmra.mrb[0].mxu0 %v1798
        %v1892 = vpop.f32.mrb[0].mxu0
        %v1893 = vadd.f32 0.0, %v1892
        %v1894 = vpop.f32.mrb[0].mxu0
        %v1895 = vpop.f32.mrb[0].mxu0
        %v1896 = vadd.f32 0.0, %v1895
        %v1897 = vpop.f32.mrb[0].mxu0
        %1898 = vmatprep.mubr.bf16.mxu0 0
        %1899 = vmatmul.mubr.bf16.gmra.mrb[0].mxu0 %v1799
        %v1900 = vpop.f32.mrb[0].mxu0
        %v1901 = vadd.f32 0.0, %v1900
        %v1902 = vpop.f32.mrb[0].mxu0
        %v1903 = vpop.f32.mrb[0].mxu0
        %v1904 = vadd.f32 0.0, %v1903
        %v1905 = vpop.f32.mrb[0].mxu0
        %1906 = vmatprep.mubr.bf16.mxu0 0
        %1907 = vmatmul.mubr.bf16.gmra.mrb[0].mxu0 %v1800
        %v1908 = vpop.f32.mrb[0].mxu0
        %v1909 = vadd.f32 0.0, %v1908
        %v1910 = vpop.f32.mrb[0].mxu0
        %v1911 = vpop.f32.mrb[0].mxu0
        %v1912 = vadd.f32 0.0, %v1911
        %v1913 = vpop.f32.mrb[0].mxu0
        %1914 = vmatprep.mubr.bf16.mxu0 0
        %1915 = vmatmul.mubr.bf16.gmra.mrb[0].mxu0 %v1801
        %v1916 = vpop.f32.mrb[0].mxu0
        %v1917 = vadd.f32 0.0, %v1916
        %v1918 = vpop.f32.mrb[0].mxu0
        %v1919 = vpop.f32.mrb[0].mxu0
        %v1920 = vadd.f32 0.0, %v1919
        %v1921 = vpop.f32.mrb[0].mxu0
        %1922 = vdwg.mxu0
        %1931 = vrot.lane.b32.xlu0 %v1460, 112
        %v1932 = vpop.permute.xlu0 %1931
        %1933 = vrot.lane.b32.xlu0 %v1461, 112
        %v1934 = vpop.permute.xlu0 %1933
        %1935 = vrot.lane.b32.xlu0 %v1462, 112
        %v1936 = vpop.permute.xlu0 %1935
        %1937 = vrot.lane.b32.xlu0 %v1463, 112
        %v1938 = vpop.permute.xlu0 %1937
        %1939 = vrot.lane.b32.xlu0 %v1464, 112
        %v1940 = vpop.permute.xlu0 %1939
        %1941 = vrot.lane.b32.xlu0 %v1465, 112
        %v1942 = vpop.permute.xlu0 %1941
        %1943 = vrot.lane.b32.xlu0 %v1466, 112
        %v1944 = vpop.permute.xlu0 %1943
        %1945 = vrot.lane.b32.xlu0 %v1467, 112
        %v1946 = vpop.permute.xlu0 %1945
        %1947 = vrot.lane.b32.xlu0 %v1468, 80
        %v1948 = vpop.permute.xlu0 %1947
        %1949 = vrot.lane.b32.xlu0 %v1469, 80
        %v1950 = vpop.permute.xlu0 %1949
        %1951 = vrot.lane.b32.xlu0 %v1470, 80
        %v1952 = vpop.permute.xlu0 %1951
        %1953 = vrot.lane.b32.xlu0 %v1471, 80
        %v1954 = vpop.permute.xlu0 %1953
        %1955 = vrot.lane.b32.xlu0 %v1472, 80
        %v1956 = vpop.permute.xlu0 %1955
        %1957 = vrot.lane.b32.xlu0 %v1473, 80
        %v1958 = vpop.permute.xlu0 %1957
        %1959 = vrot.lane.b32.xlu0 %v1474, 80
        %v1960 = vpop.permute.xlu0 %1959
        %1961 = vrot.lane.b32.xlu0 %v1475, 80
        %v1962 = vpop.permute.xlu0 %1961
        %v1964 = vsel %vm1504, %v1932, 0
        %v1967 = vsel %vm1504, %v1934, 0
        %v1970 = vsel %vm1504, %v1936, 0
        %v1973 = vsel %vm1504, %v1938, 0
        %v1976 = vsel %vm1504, %v1940, 0
        %v1979 = vsel %vm1504, %v1942, 0
        %v1982 = vsel %vm1504, %v1944, 0
        %v1985 = vsel %vm1504, %v1946, 0
        %v1988 = vsel %vm1504, %v1948, 0
        %v1991 = vsel %vm1504, %v1950, 0
        %v1994 = vsel %vm1504, %v1952, 0
        %v1997 = vsel %vm1504, %v1954, 0
        %v2000 = vsel %vm1504, %v1956, 0
        %v2003 = vsel %vm1504, %v1958, 0
        %v2006 = vsel %vm1504, %v1960, 0
        %v2009 = vsel %vm1504, %v1962, 0
        %2011 = vmatprep.subr.bf16.mxu0 0
        %2012 = vmatpush1.bf16.xpose.msra.mxu0 %v1988
        %2013 = vmatprep.subr.bf16.mxu0 0
        %2014 = vmatpush1.bf16.xpose.msra.mxu0 %v1991
        %2015 = vmatprep.subr.bf16.mxu0 0
        %2016 = vmatpush1.bf16.xpose.msra.mxu0 %v1994
        %2017 = vmatprep.subr.bf16.mxu0 0
        %2018 = vmatpush1.bf16.xpose.msra.mxu0 %v1997
        %2019 = vmatprep.subr.bf16.mxu0 0
        %2020 = vmatpush1.bf16.xpose.msra.mxu0 %v2000
        %2021 = vmatprep.subr.bf16.mxu0 0
        %2022 = vmatpush1.bf16.xpose.msra.mxu0 %v2003
        %2023 = vmatprep.subr.bf16.mxu0 0
        %2024 = vmatpush1.bf16.xpose.msra.mxu0 %v2006
        %2025 = vmatprep.subr.bf16.mxu0 0
        %2026 = vmatpush1.bf16.xpose.msra.mxu0 %v2009
        %2027 = vmatprep.subr.bf16.mxu0 0
        %2028 = vmatpush1.bf16.xpose.msra.mxu0 0
        %2029 = vmatprep.subr.bf16.mxu0 0
        %2030 = vmatpush1.bf16.xpose.msra.mxu0 0
        %2031 = vmatprep.subr.bf16.mxu0 0
        %2032 = vmatpush1.bf16.xpose.msra.mxu0 0
        %2033 = vmatprep.subr.bf16.mxu0 0
        %2034 = vmatpush1.bf16.xpose.msra.mxu0 0
        %2035 = vmatprep.subr.bf16.mxu0 0
        %2036 = vmatpush1.bf16.xpose.msra.mxu0 0
        %2037 = vmatprep.subr.bf16.mxu0 0
        %2038 = vmatpush1.bf16.xpose.msra.mxu0 0
        %2039 = vmatprep.subr.bf16.mxu0 0
        %2040 = vmatpush1.bf16.xpose.msra.mxu0 0
        %2041 = vmatprep.subr.bf16.mxu0 0
        %2042 = vmatpush1.bf16.xpose.msra.mxu0 0
        %2043 = vmatprep.mubr.bf16.mxu0 0
        %2044 = vmatmul.mubr.bf16.gmra.mrb[0].mxu0 %v1964
        %v2045 = vpop.f32.mrb[0].mxu0
        %v2046 = vadd.f32 %v1479, %v2045
        %v2047 = vpop.f32.mrb[0].mxu0
        %v2048 = vpop.f32.mrb[0].mxu0
        %v2049 = vadd.f32 %v1479, %v2048
        %v2050 = vpop.f32.mrb[0].mxu0
        %2051 = vmatprep.mubr.bf16.mxu0 0
        %2052 = vmatmul.mubr.bf16.gmra.mrb[0].mxu0 %v1967
        %v2053 = vpop.f32.mrb[0].mxu0
        %v2054 = vadd.f32 %v1479, %v2053
        %v2055 = vpop.f32.mrb[0].mxu0
        %v2056 = vpop.f32.mrb[0].mxu0
        %v2057 = vadd.f32 %v1479, %v2056
        %v2058 = vpop.f32.mrb[0].mxu0
        %2059 = vmatprep.mubr.bf16.mxu0 0
        %2060 = vmatmul.mubr.bf16.gmra.mrb[0].mxu0 %v1970
        %v2061 = vpop.f32.mrb[0].mxu0
        %v2062 = vadd.f32 %v1479, %v2061
        %v2063 = vpop.f32.mrb[0].mxu0
        %v2064 = vpop.f32.mrb[0].mxu0
        %v2065 = vadd.f32 %v1479, %v2064
        %v2066 = vpop.f32.mrb[0].mxu0
        %2067 = vmatprep.mubr.bf16.mxu0 0
        %2068 = vmatmul.mubr.bf16.gmra.mrb[0].mxu0 %v1973
        %v2069 = vpop.f32.mrb[0].mxu0
        %v2070 = vadd.f32 %v1479, %v2069
        %v2071 = vpop.f32.mrb[0].mxu0
        %v2072 = vpop.f32.mrb[0].mxu0
        %v2073 = vadd.f32 %v1479, %v2072
        %v2074 = vpop.f32.mrb[0].mxu0
        %2075 = vmatprep.mubr.bf16.mxu0 0
        %2076 = vmatmul.mubr.bf16.gmra.mrb[0].mxu0 %v1976
        %v2077 = vpop.f32.mrb[0].mxu0
        %v2078 = vadd.f32 %v1479, %v2077
        %v2079 = vpop.f32.mrb[0].mxu0
        %v2080 = vpop.f32.mrb[0].mxu0
        %v2081 = vadd.f32 %v1479, %v2080
        %v2082 = vpop.f32.mrb[0].mxu0
        %2083 = vmatprep.mubr.bf16.mxu0 0
        %2084 = vmatmul.mubr.bf16.gmra.mrb[0].mxu0 %v1979
        %v2085 = vpop.f32.mrb[0].mxu0
        %v2086 = vadd.f32 %v1479, %v2085
        %v2087 = vpop.f32.mrb[0].mxu0
        %v2088 = vpop.f32.mrb[0].mxu0
        %v2089 = vadd.f32 %v1479, %v2088
        %v2090 = vpop.f32.mrb[0].mxu0
        %2091 = vmatprep.mubr.bf16.mxu0 0
        %2092 = vmatmul.mubr.bf16.gmra.mrb[0].mxu0 %v1982
        %v2093 = vpop.f32.mrb[0].mxu0
        %v2094 = vadd.f32 %v1479, %v2093
        %v2095 = vpop.f32.mrb[0].mxu0
        %v2096 = vpop.f32.mrb[0].mxu0
        %v2097 = vadd.f32 %v1479, %v2096
        %v2098 = vpop.f32.mrb[0].mxu0
        %2099 = vmatprep.mubr.bf16.mxu0 0
        %2100 = vmatmul.mubr.bf16.gmra.mrb[0].mxu0 %v1985
        %v2101 = vpop.f32.mrb[0].mxu0
        %v2102 = vadd.f32 %v1479, %v2101
        %v2103 = vpop.f32.mrb[0].mxu0
        %v2104 = vpop.f32.mrb[0].mxu0
        %v2105 = vadd.f32 %v1479, %v2104
        %v2106 = vpop.f32.mrb[0].mxu0
        %2107 = vdwg.mxu0
        %2108 = vmax.xlane.f32.xlu0 %v2046
        %v2109 = vpop.xlane.xlu0 %2108
        %2110 = vmax.xlane.f32.xlu0 %v2049
        %v2111 = vpop.xlane.xlu0 %2110
        %2112 = vmax.xlane.f32.xlu0 %v2054
        %v2113 = vpop.xlane.xlu0 %2112
        %2114 = vmax.xlane.f32.xlu0 %v2057
        %v2115 = vpop.xlane.xlu0 %2114
        %2116 = vmax.xlane.f32.xlu0 %v2062
        %v2117 = vpop.xlane.xlu0 %2116
        %2118 = vmax.xlane.f32.xlu0 %v2065
        %v2119 = vpop.xlane.xlu0 %2118
        %2120 = vmax.xlane.f32.xlu0 %v2070
        %v2121 = vpop.xlane.xlu0 %2120
        %2122 = vmax.xlane.f32.xlu0 %v2073
        %v2123 = vpop.xlane.xlu0 %2122
        %2124 = vmax.xlane.f32.xlu0 %v2078
        %v2125 = vpop.xlane.xlu0 %2124
        %2126 = vmax.xlane.f32.xlu0 %v2081
        %v2127 = vpop.xlane.xlu0 %2126
        %2128 = vmax.xlane.f32.xlu0 %v2086
        %v2129 = vpop.xlane.xlu0 %2128
        %2130 = vmax.xlane.f32.xlu0 %v2089
        %v2131 = vpop.xlane.xlu0 %2130
        %2132 = vmax.xlane.f32.xlu0 %v2094
        %v2133 = vpop.xlane.xlu0 %2132
        %2134 = vmax.xlane.f32.xlu0 %v2097
        %v2135 = vpop.xlane.xlu0 %2134
        %2136 = vmax.xlane.f32.xlu0 %v2102
        %v2137 = vpop.xlane.xlu0 %2136
        %2138 = vmax.xlane.f32.xlu0 %v2105
        %v2139 = vpop.xlane.xlu0 %2138
        %v2140 = vsub.f32 %v2046, %v2109
        %v2141 = vsub.f32 %v2049, %v2111
        %v2142 = vsub.f32 %v2054, %v2113
        %v2143 = vsub.f32 %v2057, %v2115
        %v2144 = vsub.f32 %v2062, %v2117
        %v2145 = vsub.f32 %v2065, %v2119
        %v2146 = vsub.f32 %v2070, %v2121
        %v2147 = vsub.f32 %v2073, %v2123
        %v2148 = vsub.f32 %v2078, %v2125
        %v2149 = vsub.f32 %v2081, %v2127
        %v2150 = vsub.f32 %v2086, %v2129
        %v2151 = vsub.f32 %v2089, %v2131
        %v2152 = vsub.f32 %v2094, %v2133
        %v2153 = vsub.f32 %v2097, %v2135
        %v2154 = vsub.f32 %v2102, %v2137
        %v2155 = vsub.f32 %v2105, %v2139
        %v2156 = vmul.f32 %v2140, 1.442695
        %v2157 = vpow.pop %v2156
        %v2158 = vmul.f32 %v2141, 1.442695
        %v2159 = vpow.pop %v2158
        %v2160 = vmul.f32 %v2142, 1.442695
        %v2161 = vpow.pop %v2160
        %v2162 = vmul.f32 %v2143, 1.442695
        %v2163 = vpow.pop %v2162
        %v2164 = vmul.f32 %v2144, 1.442695
        %v2165 = vpow.pop %v2164
        %v2166 = vmul.f32 %v2145, 1.442695
        %v2167 = vpow.pop %v2166
        %v2168 = vmul.f32 %v2146, 1.442695
        %v2169 = vpow.pop %v2168
        %v2170 = vmul.f32 %v2147, 1.442695
        %v2171 = vpow.pop %v2170
        %v2172 = vmul.f32 %v2148, 1.442695
        %v2173 = vpow.pop %v2172
        %v2174 = vmul.f32 %v2149, 1.442695
        %v2175 = vpow.pop %v2174
        %v2176 = vmul.f32 %v2150, 1.442695
        %v2177 = vpow.pop %v2176
        %v2178 = vmul.f32 %v2151, 1.442695
        %v2179 = vpow.pop %v2178
        %v2180 = vmul.f32 %v2152, 1.442695
        %v2181 = vpow.pop %v2180
        %v2182 = vmul.f32 %v2153, 1.442695
        %v2183 = vpow.pop %v2182
        %v2184 = vmul.f32 %v2154, 1.442695
        %v2185 = vpow.pop %v2184
        %v2186 = vmul.f32 %v2155, 1.442695
        %v2187 = vpow.pop %v2186
        %2188 = vadd.xlane.f32.xlu0 %v2157
        %v2189 = vpop.xlane.xlu0 %2188
        %2190 = vadd.xlane.f32.xlu0 %v2159
        %v2191 = vpop.xlane.xlu0 %2190
        %2192 = vadd.xlane.f32.xlu0 %v2161
        %v2193 = vpop.xlane.xlu0 %2192
        %2194 = vadd.xlane.f32.xlu0 %v2163
        %v2195 = vpop.xlane.xlu0 %2194
        %2196 = vadd.xlane.f32.xlu0 %v2165
        %v2197 = vpop.xlane.xlu0 %2196
        %2198 = vadd.xlane.f32.xlu0 %v2167
        %v2199 = vpop.xlane.xlu0 %2198
        %2200 = vadd.xlane.f32.xlu0 %v2169
        %v2201 = vpop.xlane.xlu0 %2200
        %2202 = vadd.xlane.f32.xlu0 %v2171
        %v2203 = vpop.xlane.xlu0 %2202
        %2204 = vadd.xlane.f32.xlu0 %v2173
        %v2205 = vpop.xlane.xlu0 %2204
        %2206 = vadd.xlane.f32.xlu0 %v2175
        %v2207 = vpop.xlane.xlu0 %2206
        %2208 = vadd.xlane.f32.xlu0 %v2177
        %v2209 = vpop.xlane.xlu0 %2208
        %2210 = vadd.xlane.f32.xlu0 %v2179
        %v2211 = vpop.xlane.xlu0 %2210
        %2212 = vadd.xlane.f32.xlu0 %v2181
        %v2213 = vpop.xlane.xlu0 %2212
        %2214 = vadd.xlane.f32.xlu0 %v2183
        %v2215 = vpop.xlane.xlu0 %2214
        %2216 = vadd.xlane.f32.xlu0 %v2185
        %v2217 = vpop.xlane.xlu0 %2216
        %2218 = vadd.xlane.f32.xlu0 %v2187
        %v2219 = vpop.xlane.xlu0 %2218
        %v2220 = vrcp.pop %v2189
        %v2221 = vrcp.pop %v2191
        %v2222 = vrcp.pop %v2193
        %v2223 = vrcp.pop %v2195
        %v2224 = vrcp.pop %v2197
        %v2225 = vrcp.pop %v2199
        %v2226 = vrcp.pop %v2201
        %v2227 = vrcp.pop %v2203
        %v2228 = vrcp.pop %v2205
        %v2229 = vrcp.pop %v2207
        %v2230 = vrcp.pop %v2209
        %v2231 = vrcp.pop %v2211
        %v2232 = vrcp.pop %v2213
        %v2233 = vrcp.pop %v2215
        %v2234 = vrcp.pop %v2217
        %v2235 = vrcp.pop %v2219
        %v2236 = vmul.f32 %v2157, %v2220
        %v2237 = vmul.f32 %v2159, %v2221
        %v2238 = vmul.f32 %v2161, %v2222
        %v2239 = vmul.f32 %v2163, %v2223
        %v2240 = vmul.f32 %v2165, %v2224
        %v2241 = vmul.f32 %v2167, %v2225
        %v2242 = vmul.f32 %v2169, %v2226
        %v2243 = vmul.f32 %v2171, %v2227
        %v2244 = vmul.f32 %v2173, %v2228
        %v2245 = vmul.f32 %v2175, %v2229
        %v2246 = vmul.f32 %v2177, %v2230
        %v2247 = vmul.f32 %v2179, %v2231
        %v2248 = vmul.f32 %v2181, %v2232
        %v2249 = vmul.f32 %v2183, %v2233
        %v2250 = vmul.f32 %v2185, %v2234
        %v2251 = vmul.f32 %v2187, %v2235
        %v2252 = vpack.c.bf16 %v2237, %v2236
        %v2253 = vpack.c.bf16 %v2239, %v2238
        %v2254 = vpack.c.bf16 %v2241, %v2240
        %v2255 = vpack.c.bf16 %v2243, %v2242
        %v2256 = vpack.c.bf16 %v2245, %v2244
        %v2257 = vpack.c.bf16 %v2247, %v2246
        %v2258 = vpack.c.bf16 %v2249, %v2248
        %v2259 = vpack.c.bf16 %v2251, %v2250
        %2260 = vrot.lane.b32.xlu0 %v1468, 48
        %v2261 = vpop.permute.xlu0 %2260
        %2262 = vrot.lane.b32.xlu0 %v1469, 48
        %v2263 = vpop.permute.xlu0 %2262
        %2264 = vrot.lane.b32.xlu0 %v1470, 48
        %v2265 = vpop.permute.xlu0 %2264
        %2266 = vrot.lane.b32.xlu0 %v1471, 48
        %v2267 = vpop.permute.xlu0 %2266
        %2268 = vrot.lane.b32.xlu0 %v1472, 48
        %v2269 = vpop.permute.xlu0 %2268
        %2270 = vrot.lane.b32.xlu0 %v1473, 48
        %v2271 = vpop.permute.xlu0 %2270
        %2272 = vrot.lane.b32.xlu0 %v1474, 48
        %v2273 = vpop.permute.xlu0 %2272
        %2274 = vrot.lane.b32.xlu0 %v1475, 48
        %v2275 = vpop.permute.xlu0 %2274
        %2284 = vmatprep.subr.bf16.mxu0 0
        %2285 = vmatpush1.bf16.msra.mxu0 %v2261
        %2286 = vmatprep.subr.bf16.mxu0 0
        %2287 = vmatpush1.bf16.msra.mxu0 %v2263
        %2288 = vmatprep.subr.bf16.mxu0 0
        %2289 = vmatpush1.bf16.msra.mxu0 %v2265
        %2290 = vmatprep.subr.bf16.mxu0 0
        %2291 = vmatpush1.bf16.msra.mxu0 %v2267
        %2292 = vmatprep.subr.bf16.mxu0 0
        %2293 = vmatpush1.bf16.msra.mxu0 %v2269
        %2294 = vmatprep.subr.bf16.mxu0 0
        %2295 = vmatpush1.bf16.msra.mxu0 %v2271
        %2296 = vmatprep.subr.bf16.mxu0 0
        %2297 = vmatpush1.bf16.msra.mxu0 %v2273
        %2298 = vmatprep.subr.bf16.mxu0 0
        %2299 = vmatpush1.bf16.msra.mxu0 %v2275
        %2300 = vmatprep.subr.bf16.mxu0 0
        %2301 = vmatpush1.bf16.msra.mxu0 0
        %2302 = vmatprep.subr.bf16.mxu0 0
        %2303 = vmatpush1.bf16.msra.mxu0 0
        %2304 = vmatprep.subr.bf16.mxu0 0
        %2305 = vmatpush1.bf16.msra.mxu0 0
        %2306 = vmatprep.subr.bf16.mxu0 0
        %2307 = vmatpush1.bf16.msra.mxu0 0
        %2308 = vmatprep.subr.bf16.mxu0 0
        %2309 = vmatpush1.bf16.msra.mxu0 0
        %2310 = vmatprep.subr.bf16.mxu0 0
        %2311 = vmatpush1.bf16.msra.mxu0 0
        %2312 = vmatprep.subr.bf16.mxu0 0
        %2313 = vmatpush1.bf16.msra.mxu0 0
        %2314 = vmatprep.subr.bf16.mxu0 0
        %2315 = vmatpush1.bf16.msra.mxu0 0
        %2316 = vmatprep.mubr.bf16.mxu0 0
        %2317 = vmatmul.mubr.bf16.gmra.mrb[0].mxu0 %v2252
        %v2318 = vpop.f32.mrb[0].mxu0
        %v2319 = vadd.f32 0.0, %v2318
        %v2320 = vpop.f32.mrb[0].mxu0
        %v2321 = vpop.f32.mrb[0].mxu0
        %v2322 = vadd.f32 0.0, %v2321
        %v2323 = vpop.f32.mrb[0].mxu0
        %2324 = vmatprep.mubr.bf16.mxu0 0
        %2325 = vmatmul.mubr.bf16.gmra.mrb[0].mxu0 %v2253
        %v2326 = vpop.f32.mrb[0].mxu0
        %v2327 = vadd.f32 0.0, %v2326
        %v2328 = vpop.f32.mrb[0].mxu0
        %v2329 = vpop.f32.mrb[0].mxu0
        %v2330 = vadd.f32 0.0, %v2329
        %v2331 = vpop.f32.mrb[0].mxu0
        %2332 = vmatprep.mubr.bf16.mxu0 0
        %2333 = vmatmul.mubr.bf16.gmra.mrb[0].mxu0 %v2254
        %v2334 = vpop.f32.mrb[0].mxu0
        %v2335 = vadd.f32 0.0, %v2334
        %v2336 = vpop.f32.mrb[0].mxu0
        %v2337 = vpop.f32.mrb[0].mxu0
        %v2338 = vadd.f32 0.0, %v2337
        %v2339 = vpop.f32.mrb[0].mxu0
        %2340 = vmatprep.mubr.bf16.mxu0 0
        %2341 = vmatmul.mubr.bf16.gmra.mrb[0].mxu0 %v2255
        %v2342 = vpop.f32.mrb[0].mxu0
        %v2343 = vadd.f32 0.0, %v2342
        %v2344 = vpop.f32.mrb[0].mxu0
        %v2345 = vpop.f32.mrb[0].mxu0
        %v2346 = vadd.f32 0.0, %v2345
        %v2347 = vpop.f32.mrb[0].mxu0
        %2348 = vmatprep.mubr.bf16.mxu0 0
        %2349 = vmatmul.mubr.bf16.gmra.mrb[0].mxu0 %v2256
        %v2350 = vpop.f32.mrb[0].mxu0
        %v2351 = vadd.f32 0.0, %v2350
        %v2352 = vpop.f32.mrb[0].mxu0
        %v2353 = vpop.f32.mrb[0].mxu0
        %v2354 = vadd.f32 0.0, %v2353
        %v2355 = vpop.f32.mrb[0].mxu0
        %2356 = vmatprep.mubr.bf16.mxu0 0
        %2357 = vmatmul.mubr.bf16.gmra.mrb[0].mxu0 %v2257
        %v2358 = vpop.f32.mrb[0].mxu0
        %v2359 = vadd.f32 0.0, %v2358
        %v2360 = vpop.f32.mrb[0].mxu0
        %v2361 = vpop.f32.mrb[0].mxu0
        %v2362 = vadd.f32 0.0, %v2361
        %v2363 = vpop.f32.mrb[0].mxu0
        %2364 = vmatprep.mubr.bf16.mxu0 0
        %2365 = vmatmul.mubr.bf16.gmra.mrb[0].mxu0 %v2258
        %v2366 = vpop.f32.mrb[0].mxu0
        %v2367 = vadd.f32 0.0, %v2366
        %v2368 = vpop.f32.mrb[0].mxu0
        %v2369 = vpop.f32.mrb[0].mxu0
        %v2370 = vadd.f32 0.0, %v2369
        %v2371 = vpop.f32.mrb[0].mxu0
        %2372 = vmatprep.mubr.bf16.mxu0 0
        %2373 = vmatmul.mubr.bf16.gmra.mrb[0].mxu0 %v2259
        %v2374 = vpop.f32.mrb[0].mxu0
        %v2375 = vadd.f32 0.0, %v2374
        %v2376 = vpop.f32.mrb[0].mxu0
        %v2377 = vpop.f32.mrb[0].mxu0
        %v2378 = vadd.f32 0.0, %v2377
        %v2379 = vpop.f32.mrb[0].mxu0
        %2380 = vdwg.mxu0
        %2397 = vrot.lane.b32.xlu0 %v2319, 16
        %v2398 = vpop.permute.xlu0 %2397
        %2399 = vrot.lane.b32.xlu0 %v2322, 16
        %v2400 = vpop.permute.xlu0 %2399
        %2401 = vrot.lane.b32.xlu0 %v2327, 16
        %v2402 = vpop.permute.xlu0 %2401
        %2403 = vrot.lane.b32.xlu0 %v2330, 16
        %v2404 = vpop.permute.xlu0 %2403
        %2405 = vrot.lane.b32.xlu0 %v2335, 16
        %v2406 = vpop.permute.xlu0 %2405
        %2407 = vrot.lane.b32.xlu0 %v2338, 16
        %v2408 = vpop.permute.xlu0 %2407
        %2409 = vrot.lane.b32.xlu0 %v2343, 16
        %v2410 = vpop.permute.xlu0 %2409
        %2411 = vrot.lane.b32.xlu0 %v2346, 16
        %v2412 = vpop.permute.xlu0 %2411
        %2413 = vrot.lane.b32.xlu0 %v2351, 16
        %v2414 = vpop.permute.xlu0 %2413
        %2415 = vrot.lane.b32.xlu0 %v2354, 16
        %v2416 = vpop.permute.xlu0 %2415
        %2417 = vrot.lane.b32.xlu0 %v2359, 16
        %v2418 = vpop.permute.xlu0 %2417
        %2419 = vrot.lane.b32.xlu0 %v2362, 16
        %v2420 = vpop.permute.xlu0 %2419
        %2421 = vrot.lane.b32.xlu0 %v2367, 16
        %v2422 = vpop.permute.xlu0 %2421
        %2423 = vrot.lane.b32.xlu0 %v2370, 16
        %v2424 = vpop.permute.xlu0 %2423
        %2425 = vrot.lane.b32.xlu0 %v2375, 16
        %v2426 = vpop.permute.xlu0 %2425
        %2427 = vrot.lane.b32.xlu0 %v2378, 16
        %v2428 = vpop.permute.xlu0 %2427
        %v2445 = vsel %vm1504, %v1861, %v2398
        %v2446 = vsel %vm1504, %v1864, %v2400
        %v2447 = vsel %vm1504, %v1869, %v2402
        %v2448 = vsel %vm1504, %v1872, %v2404
        %v2449 = vsel %vm1504, %v1877, %v2406
        %v2450 = vsel %vm1504, %v1880, %v2408
        %v2451 = vsel %vm1504, %v1885, %v2410
        %v2452 = vsel %vm1504, %v1888, %v2412
        %v2453 = vsel %vm1504, %v1893, %v2414
        %v2454 = vsel %vm1504, %v1896, %v2416
        %v2455 = vsel %vm1504, %v1901, %v2418
        %v2456 = vsel %vm1504, %v1904, %v2420
        %v2457 = vsel %vm1504, %v1909, %v2422
        %v2458 = vsel %vm1504, %v1912, %v2424
        %v2459 = vsel %vm1504, %v1917, %v2426
        %v2460 = vsel %vm1504, %v1920, %v2428
        %v2461 = vpack.c.bf16 %v2446, %v2445
        %v2462 = vpack.c.bf16 %v2448, %v2447
        %v2463 = vpack.c.bf16 %v2450, %v2449
        %v2464 = vpack.c.bf16 %v2452, %v2451
        %v2465 = vpack.c.bf16 %v2454, %v2453
        %v2466 = vpack.c.bf16 %v2456, %v2455
        %v2467 = vpack.c.bf16 %v2458, %v2457
        %v2468 = vpack.c.bf16 %v2460, %v2459
        %v2469 = vld [vmem:[%s828] sm:$0xf]
        %v2470 = vld [vmem:[%s828 + $0x4] sm:$0xf]
        %v2471 = vld [vmem:[%s828 + $0x8] sm:$0xf]
        %v2472 = vld [vmem:[%s828 + $0xc] sm:$0xf]
        %v2477 = vunpack.c.l.b16 %v2469
        %v2478 = vunpack.c.l.b16 %v2470
        %v2479 = vunpack.c.l.b16 %v2471
        %v2480 = vunpack.c.l.b16 %v2472
        %v2481 = vpack.c.b16 %v2478, %v2477
        %v2482 = vpack.c.b16 %v2480, %v2479
        %v2486 = vsel %vm1038, %v2461, 0
        %v2489 = vsel %vm1038, %v2462, 0
        %v2492 = vsel %vm1038, %v2463, 0
        %v2495 = vsel %vm1038, %v2464, 0
        %v2498 = vsel %vm1038, %v2465, 0
        %v2501 = vsel %vm1038, %v2466, 0
        %v2504 = vsel %vm1038, %v2467, 0
        %v2507 = vsel %vm1038, %v2468, 0
        %2509 = vmatprep.subr.bf16.mxu0 0
        %2510 = vmatpush1.bf16.msra.mxu0 %v2481
        %2511 = vmatprep.subr.bf16.mxu0 0
        %2512 = vmatpush1.bf16.msra.mxu0 %v2482
        %2513 = vmatprep.subr.bf16.mxu0 0
        %2514 = vmatpush1.bf16.msra.mxu0 0
        %2515 = vmatprep.subr.bf16.mxu0 0
        %2516 = vmatpush1.bf16.msra.mxu0 0
        %2517 = vmatprep.subr.bf16.mxu0 0
        %2518 = vmatpush1.bf16.msra.mxu0 0
        %2519 = vmatprep.subr.bf16.mxu0 0
        %2520 = vmatpush1.bf16.msra.mxu0 0
        %2521 = vmatprep.subr.bf16.mxu0 0
        %2522 = vmatpush1.bf16.msra.mxu0 0
        %2523 = vmatprep.subr.bf16.mxu0 0
        %2524 = vmatpush1.bf16.msra.mxu0 0
        %2525 = vmatprep.subr.bf16.mxu0 0
        %2526 = vmatpush1.bf16.msra.mxu0 0
        %2527 = vmatprep.subr.bf16.mxu0 0
        %2528 = vmatpush1.bf16.msra.mxu0 0
        %2529 = vmatprep.subr.bf16.mxu0 0
        %2530 = vmatpush1.bf16.msra.mxu0 0
        %2531 = vmatprep.subr.bf16.mxu0 0
        %2532 = vmatpush1.bf16.msra.mxu0 0
        %2533 = vmatprep.subr.bf16.mxu0 0
        %2534 = vmatpush1.bf16.msra.mxu0 0
        %2535 = vmatprep.subr.bf16.mxu0 0
        %2536 = vmatpush1.bf16.msra.mxu0 0
        %2537 = vmatprep.subr.bf16.mxu0 0
        %2538 = vmatpush1.bf16.msra.mxu0 0
        %2539 = vmatprep.subr.bf16.mxu0 0
        %2540 = vmatpush1.bf16.msra.mxu0 0
        %2541 = vmatprep.mubr.bf16.mxu0 0
        %2542 = vmatmul.mubr.bf16.gmra.mrb[0].mxu0 %v2486
        %v2543 = vpop.f32.mrb[0].mxu0
        %v2544 = vadd.f32 0.0, %v2543
        %v2545 = vpop.f32.mrb[0].mxu0
        %v2546 = vpop.f32.mrb[0].mxu0
        %v2547 = vadd.f32 0.0, %v2546
        %v2548 = vpop.f32.mrb[0].mxu0
        %2549 = vmatprep.mubr.bf16.mxu0 0
        %2550 = vmatmul.mubr.bf16.gmra.mrb[0].mxu0 %v2489
        %v2551 = vpop.f32.mrb[0].mxu0
        %v2552 = vadd.f32 0.0, %v2551
        %v2553 = vpop.f32.mrb[0].mxu0
        %v2554 = vpop.f32.mrb[0].mxu0
        %v2555 = vadd.f32 0.0, %v2554
        %v2556 = vpop.f32.mrb[0].mxu0
        %2557 = vmatprep.mubr.bf16.mxu0 0
        %2558 = vmatmul.mubr.bf16.gmra.mrb[0].mxu0 %v2492
        %v2559 = vpop.f32.mrb[0].mxu0
        %v2560 = vadd.f32 0.0, %v2559
        %v2561 = vpop.f32.mrb[0].mxu0
        %v2562 = vpop.f32.mrb[0].mxu0
        %v2563 = vadd.f32 0.0, %v2562
        %v2564 = vpop.f32.mrb[0].mxu0
        %2565 = vmatprep.mubr.bf16.mxu0 0
        %2566 = vmatmul.mubr.bf16.gmra.mrb[0].mxu0 %v2495
        %v2567 = vpop.f32.mrb[0].mxu0
        %v2568 = vadd.f32 0.0, %v2567
        %v2569 = vpop.f32.mrb[0].mxu0
        %v2570 = vpop.f32.mrb[0].mxu0
        %v2571 = vadd.f32 0.0, %v2570
        %v2572 = vpop.f32.mrb[0].mxu0
        %2573 = vmatprep.mubr.bf16.mxu0 0
        %2574 = vmatmul.mubr.bf16.gmra.mrb[0].mxu0 %v2498
        %v2575 = vpop.f32.mrb[0].mxu0
        %v2576 = vadd.f32 0.0, %v2575
        %v2577 = vpop.f32.mrb[0].mxu0
        %v2578 = vpop.f32.mrb[0].mxu0
        %v2579 = vadd.f32 0.0, %v2578
        %v2580 = vpop.f32.mrb[0].mxu0
        %2581 = vmatprep.mubr.bf16.mxu0 0
        %2582 = vmatmul.mubr.bf16.gmra.mrb[0].mxu0 %v2501
        %v2583 = vpop.f32.mrb[0].mxu0
        %v2584 = vadd.f32 0.0, %v2583
        %v2585 = vpop.f32.mrb[0].mxu0
        %v2586 = vpop.f32.mrb[0].mxu0
        %v2587 = vadd.f32 0.0, %v2586
        %v2588 = vpop.f32.mrb[0].mxu0
        %2589 = vmatprep.mubr.bf16.mxu0 0
        %2590 = vmatmul.mubr.bf16.gmra.mrb[0].mxu0 %v2504
        %v2591 = vpop.f32.mrb[0].mxu0
        %v2592 = vadd.f32 0.0, %v2591
        %v2593 = vpop.f32.mrb[0].mxu0
        %v2594 = vpop.f32.mrb[0].mxu0
        %v2595 = vadd.f32 0.0, %v2594
        %v2596 = vpop.f32.mrb[0].mxu0
        %2597 = vmatprep.mubr.bf16.mxu0 0
        %2598 = vmatmul.mubr.bf16.gmra.mrb[0].mxu0 %v2507
        %v2599 = vpop.f32.mrb[0].mxu0
        %v2600 = vadd.f32 0.0, %v2599
        %v2601 = vpop.f32.mrb[0].mxu0
        %v2602 = vpop.f32.mrb[0].mxu0
        %v2603 = vadd.f32 0.0, %v2602
        %v2604 = vpop.f32.mrb[0].mxu0
        %2605 = vdwg.mxu0
        %v2606 = vadd.f32 %v1020, %v2544
        %v2607 = vadd.f32 %v1021, %v2547
        %v2608 = vadd.f32 %v1022, %v2552
        %v2609 = vadd.f32 %v1023, %v2555
        %v2610 = vadd.f32 %v1024, %v2560
        %v2611 = vadd.f32 %v1025, %v2563
        %v2612 = vadd.f32 %v1026, %v2568
        %v2613 = vadd.f32 %v1027, %v2571
        %v2614 = vadd.f32 %v1028, %v2576
        %v2615 = vadd.f32 %v1029, %v2579
        %v2616 = vadd.f32 %v1030, %v2584
        %v2617 = vadd.f32 %v1031, %v2587
        %v2618 = vadd.f32 %v1032, %v2592
        %v2619 = vadd.f32 %v1033, %v2595
        %v2620 = vadd.f32 %v1034, %v2600
        %v2621 = vadd.f32 %v1035, %v2603
        %v2622 = vld [vmem:[%s831] sm:$0x1]
        %v2624 = vlaneseq
        %v2625 = vshrl.u32 %v2624, 7
        %v2626 = vsub.s32 0, %v2625
        %v2627 = vrot.slane %v2622, %v2626
        %v2629 = vadd.f32 %v2606, %v2627
        %v2630 = vadd.f32 %v2607, %v2627
        %v2631 = vadd.f32 %v2608, %v2627
        %v2632 = vadd.f32 %v2609, %v2627
        %v2633 = vadd.f32 %v2610, %v2627
        %v2634 = vadd.f32 %v2611, %v2627
        %v2635 = vadd.f32 %v2612, %v2627
        %v2636 = vadd.f32 %v2613, %v2627
        %v2637 = vadd.f32 %v2614, %v2627
        %v2638 = vadd.f32 %v2615, %v2627
        %v2639 = vadd.f32 %v2616, %v2627
        %v2640 = vadd.f32 %v2617, %v2627
        %v2641 = vadd.f32 %v2618, %v2627
        %v2642 = vadd.f32 %v2619, %v2627
        %v2643 = vadd.f32 %v2620, %v2627
        %v2644 = vadd.f32 %v2621, %v2627
        %v2645 = vld [vmem:[%s840] sm:$0x1]
        %v2646 = vld [vmem:[%s843] sm:$0x1]
        %v2647 = vsel %vm1038, %v2629, 0.0
        %2648 = vadd.xlane.f32.xlu0 %v2647
        %v2649 = vpop.xlane.xlu0 %2648
        %v2650 = vsel %vm1038, %v2630, 0.0
        %2651 = vadd.xlane.f32.xlu0 %v2650
        %v2652 = vpop.xlane.xlu0 %2651
        %v2653 = vsel %vm1038, %v2631, 0.0
        %2654 = vadd.xlane.f32.xlu0 %v2653
        %v2655 = vpop.xlane.xlu0 %2654
        %v2656 = vsel %vm1038, %v2632, 0.0
        %2657 = vadd.xlane.f32.xlu0 %v2656
        %v2658 = vpop.xlane.xlu0 %2657
        %v2659 = vsel %vm1038, %v2633, 0.0
        %2660 = vadd.xlane.f32.xlu0 %v2659
        %v2661 = vpop.xlane.xlu0 %2660
        %v2662 = vsel %vm1038, %v2634, 0.0
        %2663 = vadd.xlane.f32.xlu0 %v2662
        %v2664 = vpop.xlane.xlu0 %2663
        %v2665 = vsel %vm1038, %v2635, 0.0
        %2666 = vadd.xlane.f32.xlu0 %v2665
        %v2667 = vpop.xlane.xlu0 %2666
        %v2668 = vsel %vm1038, %v2636, 0.0
        %2669 = vadd.xlane.f32.xlu0 %v2668
        %v2670 = vpop.xlane.xlu0 %2669
        %v2671 = vsel %vm1038, %v2637, 0.0
        %2672 = vadd.xlane.f32.xlu0 %v2671
        %v2673 = vpop.xlane.xlu0 %2672
        %v2674 = vsel %vm1038, %v2638, 0.0
        %2675 = vadd.xlane.f32.xlu0 %v2674
        %v2676 = vpop.xlane.xlu0 %2675
        %v2677 = vsel %vm1038, %v2639, 0.0
        %2678 = vadd.xlane.f32.xlu0 %v2677
        %v2679 = vpop.xlane.xlu0 %2678
        %v2680 = vsel %vm1038, %v2640, 0.0
        %2681 = vadd.xlane.f32.xlu0 %v2680
        %v2682 = vpop.xlane.xlu0 %2681
        %v2683 = vsel %vm1038, %v2641, 0.0
        %2684 = vadd.xlane.f32.xlu0 %v2683
        %v2685 = vpop.xlane.xlu0 %2684
        %v2686 = vsel %vm1038, %v2642, 0.0
        %2687 = vadd.xlane.f32.xlu0 %v2686
        %v2688 = vpop.xlane.xlu0 %2687
        %v2689 = vsel %vm1038, %v2643, 0.0
        %2690 = vadd.xlane.f32.xlu0 %v2689
        %v2691 = vpop.xlane.xlu0 %2690
        %v2692 = vsel %vm1038, %v2644, 0.0
        %2693 = vadd.xlane.f32.xlu0 %v2692
        %v2694 = vpop.xlane.xlu0 %2693
        %v2695 = vmul.f32 %v2649, %v1087
        %v2696 = vmul.f32 %v2652, %v1087
        %v2697 = vmul.f32 %v2655, %v1087
        %v2698 = vmul.f32 %v2658, %v1087
        %v2699 = vmul.f32 %v2661, %v1087
        %v2700 = vmul.f32 %v2664, %v1087
        %v2701 = vmul.f32 %v2667, %v1087
        %v2702 = vmul.f32 %v2670, %v1087
        %v2703 = vmul.f32 %v2673, %v1087
        %v2704 = vmul.f32 %v2676, %v1087
        %v2705 = vmul.f32 %v2679, %v1087
        %v2706 = vmul.f32 %v2682, %v1087
        %v2707 = vmul.f32 %v2685, %v1087
        %v2708 = vmul.f32 %v2688, %v1087
        %v2709 = vmul.f32 %v2691, %v1087
        %v2710 = vmul.f32 %v2694, %v1087
        %v2711 = vsub.f32 %v2629, %v2695
        %v2712 = vsub.f32 %v2630, %v2696
        %v2713 = vsub.f32 %v2631, %v2697
        %v2714 = vsub.f32 %v2632, %v2698
        %v2715 = vsub.f32 %v2633, %v2699
        %v2716 = vsub.f32 %v2634, %v2700
        %v2717 = vsub.f32 %v2635, %v2701
        %v2718 = vsub.f32 %v2636, %v2702
        %v2719 = vsub.f32 %v2637, %v2703
        %v2720 = vsub.f32 %v2638, %v2704
        %v2721 = vsub.f32 %v2639, %v2705
        %v2722 = vsub.f32 %v2640, %v2706
        %v2723 = vsub.f32 %v2641, %v2707
        %v2724 = vsub.f32 %v2642, %v2708
        %v2725 = vsub.f32 %v2643, %v2709
        %v2726 = vsub.f32 %v2644, %v2710
        %v2727 = vmul.f32 %v2711, %v2711
        %v2728 = vmul.f32 %v2712, %v2712
        %v2729 = vmul.f32 %v2713, %v2713
        %v2730 = vmul.f32 %v2714, %v2714
        %v2731 = vmul.f32 %v2715, %v2715
        %v2732 = vmul.f32 %v2716, %v2716
        %v2733 = vmul.f32 %v2717, %v2717
        %v2734 = vmul.f32 %v2718, %v2718
        %v2735 = vmul.f32 %v2719, %v2719
        %v2736 = vmul.f32 %v2720, %v2720
        %v2737 = vmul.f32 %v2721, %v2721
        %v2738 = vmul.f32 %v2722, %v2722
        %v2739 = vmul.f32 %v2723, %v2723
        %v2740 = vmul.f32 %v2724, %v2724
        %v2741 = vmul.f32 %v2725, %v2725
        %v2742 = vmul.f32 %v2726, %v2726
        %v2743 = vsel %vm1038, %v2727, 0.0
        %2744 = vadd.xlane.f32.xlu0 %v2743
        %v2745 = vpop.xlane.xlu0 %2744
        %v2746 = vsel %vm1038, %v2728, 0.0
        %2747 = vadd.xlane.f32.xlu0 %v2746
        %v2748 = vpop.xlane.xlu0 %2747
        %v2749 = vsel %vm1038, %v2729, 0.0
        %2750 = vadd.xlane.f32.xlu0 %v2749
        %v2751 = vpop.xlane.xlu0 %2750
        %v2752 = vsel %vm1038, %v2730, 0.0
        %2753 = vadd.xlane.f32.xlu0 %v2752
        %v2754 = vpop.xlane.xlu0 %2753
        %v2755 = vsel %vm1038, %v2731, 0.0
        %2756 = vadd.xlane.f32.xlu0 %v2755
        %v2757 = vpop.xlane.xlu0 %2756
        %v2758 = vsel %vm1038, %v2732, 0.0
        %2759 = vadd.xlane.f32.xlu0 %v2758
        %v2760 = vpop.xlane.xlu0 %2759
        %v2761 = vsel %vm1038, %v2733, 0.0
        %2762 = vadd.xlane.f32.xlu0 %v2761
        %v2763 = vpop.xlane.xlu0 %2762
        %v2764 = vsel %vm1038, %v2734, 0.0
        %2765 = vadd.xlane.f32.xlu0 %v2764
        %v2766 = vpop.xlane.xlu0 %2765
        %v2767 = vsel %vm1038, %v2735, 0.0
        %2768 = vadd.xlane.f32.xlu0 %v2767
        %v2769 = vpop.xlane.xlu0 %2768
        %v2770 = vsel %vm1038, %v2736, 0.0
        %2771 = vadd.xlane.f32.xlu0 %v2770
        %v2772 = vpop.xlane.xlu0 %2771
        %v2773 = vsel %vm1038, %v2737, 0.0
        %2774 = vadd.xlane.f32.xlu0 %v2773
        %v2775 = vpop.xlane.xlu0 %2774
        %v2776 = vsel %vm1038, %v2738, 0.0
        %2777 = vadd.xlane.f32.xlu0 %v2776
        %v2778 = vpop.xlane.xlu0 %2777
        %v2779 = vsel %vm1038, %v2739, 0.0
        %2780 = vadd.xlane.f32.xlu0 %v2779
        %v2781 = vpop.xlane.xlu0 %2780
        %v2782 = vsel %vm1038, %v2740, 0.0
        %2783 = vadd.xlane.f32.xlu0 %v2782
        %v2784 = vpop.xlane.xlu0 %2783
        %v2785 = vsel %vm1038, %v2741, 0.0
        %2786 = vadd.xlane.f32.xlu0 %v2785
        %v2787 = vpop.xlane.xlu0 %2786
        %v2788 = vsel %vm1038, %v2742, 0.0
        %2789 = vadd.xlane.f32.xlu0 %v2788
        %v2790 = vpop.xlane.xlu0 %2789
        %v2791 = vmul.f32 %v2745, %v1087
        %v2792 = vmul.f32 %v2748, %v1087
        %v2793 = vmul.f32 %v2751, %v1087
        %v2794 = vmul.f32 %v2754, %v1087
        %v2795 = vmul.f32 %v2757, %v1087
        %v2796 = vmul.f32 %v2760, %v1087
        %v2797 = vmul.f32 %v2763, %v1087
        %v2798 = vmul.f32 %v2766, %v1087
        %v2799 = vmul.f32 %v2769, %v1087
        %v2800 = vmul.f32 %v2772, %v1087
        %v2801 = vmul.f32 %v2775, %v1087
        %v2802 = vmul.f32 %v2778, %v1087
        %v2803 = vmul.f32 %v2781, %v1087
        %v2804 = vmul.f32 %v2784, %v1087
        %v2805 = vmul.f32 %v2787, %v1087
        %v2806 = vmul.f32 %v2790, %v1087
        %v2807 = vadd.f32 %v2791, 1e-05
        %v2808 = vadd.f32 %v2792, 1e-05
        %v2809 = vadd.f32 %v2793, 1e-05
        %v2810 = vadd.f32 %v2794, 1e-05
        %v2811 = vadd.f32 %v2795, 1e-05
        %v2812 = vadd.f32 %v2796, 1e-05
        %v2813 = vadd.f32 %v2797, 1e-05
        %v2814 = vadd.f32 %v2798, 1e-05
        %v2815 = vadd.f32 %v2799, 1e-05
        %v2816 = vadd.f32 %v2800, 1e-05
        %v2817 = vadd.f32 %v2801, 1e-05
        %v2818 = vadd.f32 %v2802, 1e-05
        %v2819 = vadd.f32 %v2803, 1e-05
        %v2820 = vadd.f32 %v2804, 1e-05
        %v2821 = vadd.f32 %v2805, 1e-05
        %v2822 = vadd.f32 %v2806, 1e-05
        %v2823 = vrsqrt.pop %v2807
        %v2824 = vrsqrt.pop %v2808
        %v2825 = vrsqrt.pop %v2809
        %v2826 = vrsqrt.pop %v2810
        %v2827 = vrsqrt.pop %v2811
        %v2828 = vrsqrt.pop %v2812
        %v2829 = vrsqrt.pop %v2813
        %v2830 = vrsqrt.pop %v2814
        %v2831 = vrsqrt.pop %v2815
        %v2832 = vrsqrt.pop %v2816
        %v2833 = vrsqrt.pop %v2817
        %v2834 = vrsqrt.pop %v2818
        %v2835 = vrsqrt.pop %v2819
        %v2836 = vrsqrt.pop %v2820
        %v2837 = vrsqrt.pop %v2821
        %v2838 = vrsqrt.pop %v2822
        %v2839 = vmul.f32 %v2711, %v2823
        %v2840 = vmul.f32 %v2712, %v2824
        %v2841 = vmul.f32 %v2713, %v2825
        %v2842 = vmul.f32 %v2714, %v2826
        %v2843 = vmul.f32 %v2715, %v2827
        %v2844 = vmul.f32 %v2716, %v2828
        %v2845 = vmul.f32 %v2717, %v2829
        %v2846 = vmul.f32 %v2718, %v2830
        %v2847 = vmul.f32 %v2719, %v2831
        %v2848 = vmul.f32 %v2720, %v2832
        %v2849 = vmul.f32 %v2721, %v2833
        %v2850 = vmul.f32 %v2722, %v2834
        %v2851 = vmul.f32 %v2723, %v2835
        %v2852 = vmul.f32 %v2724, %v2836
        %v2853 = vmul.f32 %v2725, %v2837
        %v2854 = vmul.f32 %v2726, %v2838
        %v2856 = vlaneseq
        %v2857 = vshrl.u32 %v2856, 7
        %v2858 = vsub.s32 0, %v2857
        %v2859 = vrot.slane %v2645, %v2858
        %v2861 = vmul.f32 %v2839, %v2859
        %v2862 = vmul.f32 %v2840, %v2859
        %v2863 = vmul.f32 %v2841, %v2859
        %v2864 = vmul.f32 %v2842, %v2859
        %v2865 = vmul.f32 %v2843, %v2859
        %v2866 = vmul.f32 %v2844, %v2859
        %v2867 = vmul.f32 %v2845, %v2859
        %v2868 = vmul.f32 %v2846, %v2859
        %v2869 = vmul.f32 %v2847, %v2859
        %v2870 = vmul.f32 %v2848, %v2859
        %v2871 = vmul.f32 %v2849, %v2859
        %v2872 = vmul.f32 %v2850, %v2859
        %v2873 = vmul.f32 %v2851, %v2859
        %v2874 = vmul.f32 %v2852, %v2859
        %v2875 = vmul.f32 %v2853, %v2859
        %v2876 = vmul.f32 %v2854, %v2859
        %v2878 = vlaneseq
        %v2879 = vshrl.u32 %v2878, 7
        %v2880 = vsub.s32 0, %v2879
        %v2881 = vrot.slane %v2646, %v2880
        %v2883 = vadd.f32 %v2861, %v2881
        %v2884 = vadd.f32 %v2862, %v2881
        %v2885 = vadd.f32 %v2863, %v2881
        %v2886 = vadd.f32 %v2864, %v2881
        %v2887 = vadd.f32 %v2865, %v2881
        %v2888 = vadd.f32 %v2866, %v2881
        %v2889 = vadd.f32 %v2867, %v2881
        %v2890 = vadd.f32 %v2868, %v2881
        %v2891 = vadd.f32 %v2869, %v2881
        %v2892 = vadd.f32 %v2870, %v2881
        %v2893 = vadd.f32 %v2871, %v2881
        %v2894 = vadd.f32 %v2872, %v2881
        %v2895 = vadd.f32 %v2873, %v2881
        %v2896 = vadd.f32 %v2874, %v2881
        %v2897 = vadd.f32 %v2875, %v2881
        %v2898 = vadd.f32 %v2876, %v2881
        %v2899 = vpack.c.bf16 %v2884, %v2883
        %v2900 = vpack.c.bf16 %v2886, %v2885
        %v2901 = vpack.c.bf16 %v2888, %v2887
        %v2902 = vpack.c.bf16 %v2890, %v2889
        %v2903 = vpack.c.bf16 %v2892, %v2891
        %v2904 = vpack.c.bf16 %v2894, %v2893
        %v2905 = vpack.c.bf16 %v2896, %v2895
        %v2906 = vpack.c.bf16 %v2898, %v2897
        %v2907 = vld [vmem:[%s848] sm:$0xff]
        %v2908 = vld [vmem:[%s848 + $0x8] sm:$0xff]
        %v2909 = vld [vmem:[%s848 + $0x10] sm:$0xff]
        %v2910 = vld [vmem:[%s848 + $0x18] sm:$0xff]
        %v2911 = vld [vmem:[%s848 + $0x20] sm:$0xff]
        %v2912 = vld [vmem:[%s848 + $0x28] sm:$0xff]
        %v2913 = vld [vmem:[%s848 + $0x30] sm:$0xff]
        %v2914 = vld [vmem:[%s848 + $0x38] sm:$0xff]
        %v2915 = vld [vmem:[%s848 + $0x40] sm:$0xff]
        %v2916 = vld [vmem:[%s848 + $0x48] sm:$0xff]
        %v2917 = vld [vmem:[%s848 + $0x50] sm:$0xff]
        %v2918 = vld [vmem:[%s848 + $0x58] sm:$0xff]
        %v2919 = vld [vmem:[%s848 + $0x60] sm:$0xff]
        %v2920 = vld [vmem:[%s848 + $0x68] sm:$0xff]
        %v2921 = vld [vmem:[%s848 + $0x70] sm:$0xff]
        %v2922 = vld [vmem:[%s848 + $0x78] sm:$0xff]
        %v2923 = vld [vmem:[%s848 + $0x80] sm:$0xff]
        %v2924 = vld [vmem:[%s848 + $0x88] sm:$0xff]
        %v2925 = vld [vmem:[%s848 + $0x90] sm:$0xff]
        %v2926 = vld [vmem:[%s848 + $0x98] sm:$0xff]
        %v2927 = vld [vmem:[%s848 + $0xa0] sm:$0xff]
        %v2928 = vld [vmem:[%s848 + $0xa8] sm:$0xff]
        %v2929 = vld [vmem:[%s848 + $0xb0] sm:$0xff]
        %v2930 = vld [vmem:[%s848 + $0xb8] sm:$0xff]
        %v2931 = vld [vmem:[%s848 + $0xc0] sm:$0xff]
        %v2932 = vld [vmem:[%s848 + $0xc8] sm:$0xff]
        %v2933 = vld [vmem:[%s848 + $0xd0] sm:$0xff]
        %v2934 = vld [vmem:[%s848 + $0xd8] sm:$0xff]
        %v2935 = vld [vmem:[%s848 + $0xe0] sm:$0xff]
        %v2936 = vld [vmem:[%s848 + $0xe8] sm:$0xff]
        %v2937 = vld [vmem:[%s848 + $0xf0] sm:$0xff]
        %v2938 = vld [vmem:[%s848 + $0xf8] sm:$0xff]
        %v2939 = vld [vmem:[%s852] sm:$0xff]
        %v2940 = vld [vmem:[%s852 + $0x8] sm:$0xff]
        %v2943 = vlaneseq
        %v2944 = vshrl.u32 %v2943, 7
        %v2945 = vsub.s32 0, %v2944
        %v2946 = vrot.slane %v2939, %v2945
        %v2947 = vlaneseq
        %v2948 = vshrl.u32 %v2947, 7
        %v2949 = vsub.s32 1, %v2948
        %v2950 = vrot.slane %v2939, %v2949
        %v2951 = vlaneseq
        %v2952 = vshrl.u32 %v2951, 7
        %v2953 = vsub.s32 2, %v2952
        %v2954 = vrot.slane %v2939, %v2953
        %v2955 = vlaneseq
        %v2956 = vshrl.u32 %v2955, 7
        %v2957 = vsub.s32 3, %v2956
        %v2958 = vrot.slane %v2939, %v2957
        %v2959 = vlaneseq
        %v2960 = vshrl.u32 %v2959, 7
        %v2961 = vsub.s32 4, %v2960
        %v2962 = vrot.slane %v2939, %v2961
        %v2963 = vlaneseq
        %v2964 = vshrl.u32 %v2963, 7
        %v2965 = vsub.s32 5, %v2964
        %v2966 = vrot.slane %v2939, %v2965
        %v2967 = vlaneseq
        %v2968 = vshrl.u32 %v2967, 7
        %v2969 = vsub.s32 6, %v2968
        %v2970 = vrot.slane %v2939, %v2969
        %v2971 = vlaneseq
        %v2972 = vshrl.u32 %v2971, 7
        %v2973 = vsub.s32 7, %v2972
        %v2974 = vrot.slane %v2939, %v2973
        %v2975 = vlaneseq
        %v2976 = vshrl.u32 %v2975, 7
        %v2977 = vsub.s32 0, %v2976
        %v2978 = vrot.slane %v2940, %v2977
        %v2979 = vlaneseq
        %v2980 = vshrl.u32 %v2979, 7
        %v2981 = vsub.s32 1, %v2980
        %v2982 = vrot.slane %v2940, %v2981
        %v2983 = vlaneseq
        %v2984 = vshrl.u32 %v2983, 7
        %v2985 = vsub.s32 2, %v2984
        %v2986 = vrot.slane %v2940, %v2985
        %v2987 = vlaneseq
        %v2988 = vshrl.u32 %v2987, 7
        %v2989 = vsub.s32 3, %v2988
        %v2990 = vrot.slane %v2940, %v2989
        %v2991 = vlaneseq
        %v2992 = vshrl.u32 %v2991, 7
        %v2993 = vsub.s32 4, %v2992
        %v2994 = vrot.slane %v2940, %v2993
        %v2995 = vlaneseq
        %v2996 = vshrl.u32 %v2995, 7
        %v2997 = vsub.s32 5, %v2996
        %v2998 = vrot.slane %v2940, %v2997
        %v2999 = vlaneseq
        %v3000 = vshrl.u32 %v2999, 7
        %v3001 = vsub.s32 6, %v3000
        %v3002 = vrot.slane %v2940, %v3001
        %v3003 = vlaneseq
        %v3004 = vshrl.u32 %v3003, 7
        %v3005 = vsub.s32 7, %v3004
        %v3006 = vrot.slane %v2940, %v3005
        %v3055 = vunpack.c.l.b16 %v2907
        %v3056 = vunpack.c.h.b16 %v2907
        %v3057 = vunpack.c.l.b16 %v2908
        %v3058 = vunpack.c.h.b16 %v2908
        %v3059 = vunpack.c.l.b16 %v2909
        %v3060 = vunpack.c.h.b16 %v2909
        %v3061 = vunpack.c.l.b16 %v2910
        %v3062 = vunpack.c.h.b16 %v2910
        %v3063 = vunpack.c.l.b16 %v2911
        %v3064 = vunpack.c.h.b16 %v2911
        %v3065 = vunpack.c.l.b16 %v2912
        %v3066 = vunpack.c.h.b16 %v2912
        %v3067 = vunpack.c.l.b16 %v2913
        %v3068 = vunpack.c.h.b16 %v2913
        %v3069 = vunpack.c.l.b16 %v2914
        %v3070 = vunpack.c.h.b16 %v2914
        %v3071 = vunpack.c.l.b16 %v2915
        %v3072 = vunpack.c.h.b16 %v2915
        %v3073 = vunpack.c.l.b16 %v2916
        %v3074 = vunpack.c.h.b16 %v2916
        %v3075 = vunpack.c.l.b16 %v2917
        %v3076 = vunpack.c.h.b16 %v2917
        %v3077 = vunpack.c.l.b16 %v2918
        %v3078 = vunpack.c.h.b16 %v2918
        %v3079 = vunpack.c.l.b16 %v2919
        %v3080 = vunpack.c.h.b16 %v2919
        %v3081 = vunpack.c.l.b16 %v2920
        %v3082 = vunpack.c.h.b16 %v2920
        %v3083 = vunpack.c.l.b16 %v2921
        %v3084 = vunpack.c.h.b16 %v2921
        %v3085 = vunpack.c.l.b16 %v2922
        %v3086 = vunpack.c.h.b16 %v2922
        %v3087 = vunpack.c.l.b16 %v2923
        %v3088 = vunpack.c.h.b16 %v2923
        %v3089 = vunpack.c.l.b16 %v2924
        %v3090 = vunpack.c.h.b16 %v2924
        %v3091 = vunpack.c.l.b16 %v2925
        %v3092 = vunpack.c.h.b16 %v2925
        %v3093 = vunpack.c.l.b16 %v2926
        %v3094 = vunpack.c.h.b16 %v2926
        %v3095 = vunpack.c.l.b16 %v2927
        %v3096 = vunpack.c.h.b16 %v2927
        %v3097 = vunpack.c.l.b16 %v2928
        %v3098 = vunpack.c.h.b16 %v2928
        %v3099 = vunpack.c.l.b16 %v2929
        %v3100 = vunpack.c.h.b16 %v2929
        %v3101 = vunpack.c.l.b16 %v2930
        %v3102 = vunpack.c.h.b16 %v2930
        %v3103 = vunpack.c.l.b16 %v2931
        %v3104 = vunpack.c.h.b16 %v2931
        %v3105 = vunpack.c.l.b16 %v2932
        %v3106 = vunpack.c.h.b16 %v2932
        %v3107 = vunpack.c.l.b16 %v2933
        %v3108 = vunpack.c.h.b16 %v2933
        %v3109 = vunpack.c.l.b16 %v2934
        %v3110 = vunpack.c.h.b16 %v2934
        %v3111 = vunpack.c.l.b16 %v2935
        %v3112 = vunpack.c.h.b16 %v2935
        %v3113 = vunpack.c.l.b16 %v2936
        %v3114 = vunpack.c.h.b16 %v2936
        %v3115 = vunpack.c.l.b16 %v2937
        %v3116 = vunpack.c.h.b16 %v2937
        %v3117 = vunpack.c.l.b16 %v2938
        %v3118 = vunpack.c.h.b16 %v2938
        %v3119 = vpack.c.b16 %v3071, %v3055
        %v3120 = vpack.c.b16 %v3072, %v3056
        %v3121 = vpack.c.b16 %v3073, %v3057
        %v3122 = vpack.c.b16 %v3074, %v3058
        %v3123 = vpack.c.b16 %v3075, %v3059
        %v3124 = vpack.c.b16 %v3076, %v3060
        %v3125 = vpack.c.b16 %v3077, %v3061
        %v3126 = vpack.c.b16 %v3078, %v3062
        %v3127 = vpack.c.b16 %v3079, %v3063
        %v3128 = vpack.c.b16 %v3080, %v3064
        %v3129 = vpack.c.b16 %v3081, %v3065
        %v3130 = vpack.c.b16 %v3082, %v3066
        %v3131 = vpack.c.b16 %v3083, %v3067
        %v3132 = vpack.c.b16 %v3084, %v3068
        %v3133 = vpack.c.b16 %v3085, %v3069
        %v3134 = vpack.c.b16 %v3086, %v3070
        %v3135 = vpack.c.b16 %v3103, %v3087
        %v3136 = vpack.c.b16 %v3104, %v3088
        %v3137 = vpack.c.b16 %v3105, %v3089
        %v3138 = vpack.c.b16 %v3106, %v3090
        %v3139 = vpack.c.b16 %v3107, %v3091
        %v3140 = vpack.c.b16 %v3108, %v3092
        %v3141 = vpack.c.b16 %v3109, %v3093
        %v3142 = vpack.c.b16 %v3110, %v3094
        %v3143 = vpack.c.b16 %v3111, %v3095
        %v3144 = vpack.c.b16 %v3112, %v3096
        %v3145 = vpack.c.b16 %v3113, %v3097
        %v3146 = vpack.c.b16 %v3114, %v3098
        %v3147 = vpack.c.b16 %v3115, %v3099
        %v3148 = vpack.c.b16 %v3116, %v3100
        %v3149 = vpack.c.b16 %v3117, %v3101
        %v3150 = vpack.c.b16 %v3118, %v3102
        %v3184 = vsel %vm1038, %v2899, 0
        %v3187 = vsel %vm1038, %v2900, 0
        %v3190 = vsel %vm1038, %v2901, 0
        %v3193 = vsel %vm1038, %v2902, 0
        %v3196 = vsel %vm1038, %v2903, 0
        %v3199 = vsel %vm1038, %v2904, 0
        %v3202 = vsel %vm1038, %v2905, 0
        %v3205 = vsel %vm1038, %v2906, 0
        %3207 = vmatprep.subr.bf16.mxu0 %v3120
        %3208 = vmatpush1.bf16.msra.mxu0 %v3119
        %3209 = vmatprep.subr.bf16.mxu0 %v3136
        %3210 = vmatpush1.bf16.msra.mxu0 %v3135
        %3211 = vmatprep.subr.bf16.mxu0 0
        %3212 = vmatpush1.bf16.msra.mxu0 0
        %3213 = vmatprep.subr.bf16.mxu0 0
        %3214 = vmatpush1.bf16.msra.mxu0 0
        %3215 = vmatprep.subr.bf16.mxu0 0
        %3216 = vmatpush1.bf16.msra.mxu0 0
        %3217 = vmatprep.subr.bf16.mxu0 0
        %3218 = vmatpush1.bf16.msra.mxu0 0
        %3219 = vmatprep.subr.bf16.mxu0 0
        %3220 = vmatpush1.bf16.msra.mxu0 0
        %3221 = vmatprep.subr.bf16.mxu0 0
        %3222 = vmatpush1.bf16.msra.mxu0 0
        %3223 = vmatprep.subr.bf16.mxu0 0
        %3224 = vmatpush1.bf16.msra.mxu0 0
        %3225 = vmatprep.subr.bf16.mxu0 0
        %3226 = vmatpush1.bf16.msra.mxu0 0
        %3227 = vmatprep.subr.bf16.mxu0 0
        %3228 = vmatpush1.bf16.msra.mxu0 0
        %3229 = vmatprep.subr.bf16.mxu0 0
        %3230 = vmatpush1.bf16.msra.mxu0 0
        %3231 = vmatprep.subr.bf16.mxu0 0
        %3232 = vmatpush1.bf16.msra.mxu0 0
        %3233 = vmatprep.subr.bf16.mxu0 0
        %3234 = vmatpush1.bf16.msra.mxu0 0
        %3235 = vmatprep.subr.bf16.mxu0 0
        %3236 = vmatpush1.bf16.msra.mxu0 0
        %3237 = vmatprep.subr.bf16.mxu0 0
        %3238 = vmatpush1.bf16.msra.mxu0 0
        %3239 = vmatprep.mubr.bf16.mxu0 0
        %3240 = vmatmul.mubr.bf16.gmra.mrb[0].mxu0 %v3184
        %v3241 = vpop.f32.mrb[0].mxu0
        %v3242 = vadd.f32 %v2946, %v3241
        %v3243 = vpop.f32.mrb[0].mxu0
        %v3244 = vadd.f32 %v2950, %v3243
        %v3245 = vpop.f32.mrb[0].mxu0
        %v3246 = vadd.f32 %v2946, %v3245
        %v3247 = vpop.f32.mrb[0].mxu0
        %v3248 = vadd.f32 %v2950, %v3247
        %3249 = vmatprep.mubr.bf16.mxu0 0
        %3250 = vmatmul.mubr.bf16.gmra.mrb[0].mxu0 %v3187
        %v3251 = vpop.f32.mrb[0].mxu0
        %v3252 = vadd.f32 %v2946, %v3251
        %v3253 = vpop.f32.mrb[0].mxu0
        %v3254 = vadd.f32 %v2950, %v3253
        %v3255 = vpop.f32.mrb[0].mxu0
        %v3256 = vadd.f32 %v2946, %v3255
        %v3257 = vpop.f32.mrb[0].mxu0
        %v3258 = vadd.f32 %v2950, %v3257
        %3259 = vmatprep.mubr.bf16.mxu0 0
        %3260 = vmatmul.mubr.bf16.gmra.mrb[0].mxu0 %v3190
        %v3261 = vpop.f32.mrb[0].mxu0
        %v3262 = vadd.f32 %v2946, %v3261
        %v3263 = vpop.f32.mrb[0].mxu0
        %v3264 = vadd.f32 %v2950, %v3263
        %v3265 = vpop.f32.mrb[0].mxu0
        %v3266 = vadd.f32 %v2946, %v3265
        %v3267 = vpop.f32.mrb[0].mxu0
        %v3268 = vadd.f32 %v2950, %v3267
        %3269 = vmatprep.mubr.bf16.mxu0 0
        %3270 = vmatmul.mubr.bf16.gmra.mrb[0].mxu0 %v3193
        %v3271 = vpop.f32.mrb[0].mxu0
        %v3272 = vadd.f32 %v2946, %v3271
        %v3273 = vpop.f32.mrb[0].mxu0
        %v3274 = vadd.f32 %v2950, %v3273
        %v3275 = vpop.f32.mrb[0].mxu0
        %v3276 = vadd.f32 %v2946, %v3275
        %v3277 = vpop.f32.mrb[0].mxu0
        %v3278 = vadd.f32 %v2950, %v3277
        %3279 = vmatprep.mubr.bf16.mxu0 0
        %3280 = vmatmul.mubr.bf16.gmra.mrb[0].mxu0 %v3196
        %v3281 = vpop.f32.mrb[0].mxu0
        %v3282 = vadd.f32 %v2946, %v3281
        %v3283 = vpop.f32.mrb[0].mxu0
        %v3284 = vadd.f32 %v2950, %v3283
        %v3285 = vpop.f32.mrb[0].mxu0
        %v3286 = vadd.f32 %v2946, %v3285
        %v3287 = vpop.f32.mrb[0].mxu0
        %v3288 = vadd.f32 %v2950, %v3287
        %3289 = vmatprep.mubr.bf16.mxu0 0
        %3290 = vmatmul.mubr.bf16.gmra.mrb[0].mxu0 %v3199
        %v3291 = vpop.f32.mrb[0].mxu0
        %v3292 = vadd.f32 %v2946, %v3291
        %v3293 = vpop.f32.mrb[0].mxu0
        %v3294 = vadd.f32 %v2950, %v3293
        %v3295 = vpop.f32.mrb[0].mxu0
        %v3296 = vadd.f32 %v2946, %v3295
        %v3297 = vpop.f32.mrb[0].mxu0
        %v3298 = vadd.f32 %v2950, %v3297
        %3299 = vmatprep.mubr.bf16.mxu0 0
        %3300 = vmatmul.mubr.bf16.gmra.mrb[0].mxu0 %v3202
        %v3301 = vpop.f32.mrb[0].mxu0
        %v3302 = vadd.f32 %v2946, %v3301
        %v3303 = vpop.f32.mrb[0].mxu0
        %v3304 = vadd.f32 %v2950, %v3303
        %v3305 = vpop.f32.mrb[0].mxu0
        %v3306 = vadd.f32 %v2946, %v3305
        %v3307 = vpop.f32.mrb[0].mxu0
        %v3308 = vadd.f32 %v2950, %v3307
        %3309 = vmatprep.mubr.bf16.mxu0 0
        %3310 = vmatmul.mubr.bf16.gmra.mrb[0].mxu0 %v3205
        %v3311 = vpop.f32.mrb[0].mxu0
        %v3312 = vadd.f32 %v2946, %v3311
        %v3313 = vpop.f32.mrb[0].mxu0
        %v3314 = vadd.f32 %v2950, %v3313
        %v3315 = vpop.f32.mrb[0].mxu0
        %v3316 = vadd.f32 %v2946, %v3315
        %v3317 = vpop.f32.mrb[0].mxu0
        %v3318 = vadd.f32 %v2950, %v3317
        %3319 = vdwg.mxu0
        %3320 = vmatprep.subr.bf16.mxu0 %v3122
        %3321 = vmatpush1.bf16.msra.mxu0 %v3121
        %3322 = vmatprep.subr.bf16.mxu0 %v3138
        %3323 = vmatpush1.bf16.msra.mxu0 %v3137
        %3324 = vmatprep.subr.bf16.mxu0 0
        %3325 = vmatpush1.bf16.msra.mxu0 0
        %3326 = vmatprep.subr.bf16.mxu0 0
        %3327 = vmatpush1.bf16.msra.mxu0 0
        %3328 = vmatprep.subr.bf16.mxu0 0
        %3329 = vmatpush1.bf16.msra.mxu0 0
        %3330 = vmatprep.subr.bf16.mxu0 0
        %3331 = vmatpush1.bf16.msra.mxu0 0
        %3332 = vmatprep.subr.bf16.mxu0 0
        %3333 = vmatpush1.bf16.msra.mxu0 0
        %3334 = vmatprep.subr.bf16.mxu0 0
        %3335 = vmatpush1.bf16.msra.mxu0 0
        %3336 = vmatprep.subr.bf16.mxu0 0
        %3337 = vmatpush1.bf16.msra.mxu0 0
        %3338 = vmatprep.subr.bf16.mxu0 0
        %3339 = vmatpush1.bf16.msra.mxu0 0
        %3340 = vmatprep.subr.bf16.mxu0 0
        %3341 = vmatpush1.bf16.msra.mxu0 0
        %3342 = vmatprep.subr.bf16.mxu0 0
        %3343 = vmatpush1.bf16.msra.mxu0 0
        %3344 = vmatprep.subr.bf16.mxu0 0
        %3345 = vmatpush1.bf16.msra.mxu0 0
        %3346 = vmatprep.subr.bf16.mxu0 0
        %3347 = vmatpush1.bf16.msra.mxu0 0
        %3348 = vmatprep.subr.bf16.mxu0 0
        %3349 = vmatpush1.bf16.msra.mxu0 0
        %3350 = vmatprep.subr.bf16.mxu0 0
        %3351 = vmatpush1.bf16.msra.mxu0 0
        %3352 = vmatprep.mubr.bf16.mxu0 0
        %3353 = vmatmul.mubr.bf16.gmra.mrb[0].mxu0 %v3184
        %v3354 = vpop.f32.mrb[0].mxu0
        %v3355 = vadd.f32 %v2954, %v3354
        %v3356 = vpop.f32.mrb[0].mxu0
        %v3357 = vadd.f32 %v2958, %v3356
        %v3358 = vpop.f32.mrb[0].mxu0
        %v3359 = vadd.f32 %v2954, %v3358
        %v3360 = vpop.f32.mrb[0].mxu0
        %v3361 = vadd.f32 %v2958, %v3360
        %3362 = vmatprep.mubr.bf16.mxu0 0
        %3363 = vmatmul.mubr.bf16.gmra.mrb[0].mxu0 %v3187
        %v3364 = vpop.f32.mrb[0].mxu0
        %v3365 = vadd.f32 %v2954, %v3364
        %v3366 = vpop.f32.mrb[0].mxu0
        %v3367 = vadd.f32 %v2958, %v3366
        %v3368 = vpop.f32.mrb[0].mxu0
        %v3369 = vadd.f32 %v2954, %v3368
        %v3370 = vpop.f32.mrb[0].mxu0
        %v3371 = vadd.f32 %v2958, %v3370
        %3372 = vmatprep.mubr.bf16.mxu0 0
        %3373 = vmatmul.mubr.bf16.gmra.mrb[0].mxu0 %v3190
        %v3374 = vpop.f32.mrb[0].mxu0
        %v3375 = vadd.f32 %v2954, %v3374
        %v3376 = vpop.f32.mrb[0].mxu0
        %v3377 = vadd.f32 %v2958, %v3376
        %v3378 = vpop.f32.mrb[0].mxu0
        %v3379 = vadd.f32 %v2954, %v3378
        %v3380 = vpop.f32.mrb[0].mxu0
        %v3381 = vadd.f32 %v2958, %v3380
        %3382 = vmatprep.mubr.bf16.mxu0 0
        %3383 = vmatmul.mubr.bf16.gmra.mrb[0].mxu0 %v3193
        %v3384 = vpop.f32.mrb[0].mxu0
        %v3385 = vadd.f32 %v2954, %v3384
        %v3386 = vpop.f32.mrb[0].mxu0
        %v3387 = vadd.f32 %v2958, %v3386
        %v3388 = vpop.f32.mrb[0].mxu0
        %v3389 = vadd.f32 %v2954, %v3388
        %v3390 = vpop.f32.mrb[0].mxu0
        %v3391 = vadd.f32 %v2958, %v3390
        %3392 = vmatprep.mubr.bf16.mxu0 0
        %3393 = vmatmul.mubr.bf16.gmra.mrb[0].mxu0 %v3196
        %v3394 = vpop.f32.mrb[0].mxu0
        %v3395 = vadd.f32 %v2954, %v3394
        %v3396 = vpop.f32.mrb[0].mxu0
        %v3397 = vadd.f32 %v2958, %v3396
        %v3398 = vpop.f32.mrb[0].mxu0
        %v3399 = vadd.f32 %v2954, %v3398
        %v3400 = vpop.f32.mrb[0].mxu0
        %v3401 = vadd.f32 %v2958, %v3400
        %3402 = vmatprep.mubr.bf16.mxu0 0
        %3403 = vmatmul.mubr.bf16.gmra.mrb[0].mxu0 %v3199
        %v3404 = vpop.f32.mrb[0].mxu0
        %v3405 = vadd.f32 %v2954, %v3404
        %v3406 = vpop.f32.mrb[0].mxu0
        %v3407 = vadd.f32 %v2958, %v3406
        %v3408 = vpop.f32.mrb[0].mxu0
        %v3409 = vadd.f32 %v2954, %v3408
        %v3410 = vpop.f32.mrb[0].mxu0
        %v3411 = vadd.f32 %v2958, %v3410
        %3412 = vmatprep.mubr.bf16.mxu0 0
        %3413 = vmatmul.mubr.bf16.gmra.mrb[0].mxu0 %v3202
        %v3414 = vpop.f32.mrb[0].mxu0
        %v3415 = vadd.f32 %v2954, %v3414
        %v3416 = vpop.f32.mrb[0].mxu0
        %v3417 = vadd.f32 %v2958, %v3416
        %v3418 = vpop.f32.mrb[0].mxu0
        %v3419 = vadd.f32 %v2954, %v3418
        %v3420 = vpop.f32.mrb[0].mxu0
        %v3421 = vadd.f32 %v2958, %v3420
        %3422 = vmatprep.mubr.bf16.mxu0 0
        %3423 = vmatmul.mubr.bf16.gmra.mrb[0].mxu0 %v3205
        %v3424 = vpop.f32.mrb[0].mxu0
        %v3425 = vadd.f32 %v2954, %v3424
        %v3426 = vpop.f32.mrb[0].mxu0
        %v3427 = vadd.f32 %v2958, %v3426
        %v3428 = vpop.f32.mrb[0].mxu0
        %v3429 = vadd.f32 %v2954, %v3428
        %v3430 = vpop.f32.mrb[0].mxu0
        %v3431 = vadd.f32 %v2958, %v3430
        %3432 = vdwg.mxu0
        %3433 = vmatprep.subr.bf16.mxu0 %v3124
        %3434 = vmatpush1.bf16.msra.mxu0 %v3123
        %3435 = vmatprep.subr.bf16.mxu0 %v3140
        %3436 = vmatpush1.bf16.msra.mxu0 %v3139
        %3437 = vmatprep.subr.bf16.mxu0 0
        %3438 = vmatpush1.bf16.msra.mxu0 0
        %3439 = vmatprep.subr.bf16.mxu0 0
        %3440 = vmatpush1.bf16.msra.mxu0 0
        %3441 = vmatprep.subr.bf16.mxu0 0
        %3442 = vmatpush1.bf16.msra.mxu0 0
        %3443 = vmatprep.subr.bf16.mxu0 0
        %3444 = vmatpush1.bf16.msra.mxu0 0
        %3445 = vmatprep.subr.bf16.mxu0 0
        %3446 = vmatpush1.bf16.msra.mxu0 0
        %3447 = vmatprep.subr.bf16.mxu0 0
        %3448 = vmatpush1.bf16.msra.mxu0 0
        %3449 = vmatprep.subr.bf16.mxu0 0
        %3450 = vmatpush1.bf16.msra.mxu0 0
        %3451 = vmatprep.subr.bf16.mxu0 0
        %3452 = vmatpush1.bf16.msra.mxu0 0
        %3453 = vmatprep.subr.bf16.mxu0 0
        %3454 = vmatpush1.bf16.msra.mxu0 0
        %3455 = vmatprep.subr.bf16.mxu0 0
        %3456 = vmatpush1.bf16.msra.mxu0 0
        %3457 = vmatprep.subr.bf16.mxu0 0
        %3458 = vmatpush1.bf16.msra.mxu0 0
        %3459 = vmatprep.subr.bf16.mxu0 0
        %3460 = vmatpush1.bf16.msra.mxu0 0
        %3461 = vmatprep.subr.bf16.mxu0 0
        %3462 = vmatpush1.bf16.msra.mxu0 0
        %3463 = vmatprep.subr.bf16.mxu0 0
        %3464 = vmatpush1.bf16.msra.mxu0 0
        %3465 = vmatprep.mubr.bf16.mxu0 0
        %3466 = vmatmul.mubr.bf16.gmra.mrb[0].mxu0 %v3184
        %v3467 = vpop.f32.mrb[0].mxu0
        %v3468 = vadd.f32 %v2962, %v3467
        %v3469 = vpop.f32.mrb[0].mxu0
        %v3470 = vadd.f32 %v2966, %v3469
        %v3471 = vpop.f32.mrb[0].mxu0
        %v3472 = vadd.f32 %v2962, %v3471
        %v3473 = vpop.f32.mrb[0].mxu0
        %v3474 = vadd.f32 %v2966, %v3473
        %3475 = vmatprep.mubr.bf16.mxu0 0
        %3476 = vmatmul.mubr.bf16.gmra.mrb[0].mxu0 %v3187
        %v3477 = vpop.f32.mrb[0].mxu0
        %v3478 = vadd.f32 %v2962, %v3477
        %v3479 = vpop.f32.mrb[0].mxu0
        %v3480 = vadd.f32 %v2966, %v3479
        %v3481 = vpop.f32.mrb[0].mxu0
        %v3482 = vadd.f32 %v2962, %v3481
        %v3483 = vpop.f32.mrb[0].mxu0
        %v3484 = vadd.f32 %v2966, %v3483
        %3485 = vmatprep.mubr.bf16.mxu0 0
        %3486 = vmatmul.mubr.bf16.gmra.mrb[0].mxu0 %v3190
        %v3487 = vpop.f32.mrb[0].mxu0
        %v3488 = vadd.f32 %v2962, %v3487
        %v3489 = vpop.f32.mrb[0].mxu0
        %v3490 = vadd.f32 %v2966, %v3489
        %v3491 = vpop.f32.mrb[0].mxu0
        %v3492 = vadd.f32 %v2962, %v3491
        %v3493 = vpop.f32.mrb[0].mxu0
        %v3494 = vadd.f32 %v2966, %v3493
        %3495 = vmatprep.mubr.bf16.mxu0 0
        %3496 = vmatmul.mubr.bf16.gmra.mrb[0].mxu0 %v3193
        %v3497 = vpop.f32.mrb[0].mxu0
        %v3498 = vadd.f32 %v2962, %v3497
        %v3499 = vpop.f32.mrb[0].mxu0
        %v3500 = vadd.f32 %v2966, %v3499
        %v3501 = vpop.f32.mrb[0].mxu0
        %v3502 = vadd.f32 %v2962, %v3501
        %v3503 = vpop.f32.mrb[0].mxu0
        %v3504 = vadd.f32 %v2966, %v3503
        %3505 = vmatprep.mubr.bf16.mxu0 0
        %3506 = vmatmul.mubr.bf16.gmra.mrb[0].mxu0 %v3196
        %v3507 = vpop.f32.mrb[0].mxu0
        %v3508 = vadd.f32 %v2962, %v3507
        %v3509 = vpop.f32.mrb[0].mxu0
        %v3510 = vadd.f32 %v2966, %v3509
        %v3511 = vpop.f32.mrb[0].mxu0
        %v3512 = vadd.f32 %v2962, %v3511
        %v3513 = vpop.f32.mrb[0].mxu0
        %v3514 = vadd.f32 %v2966, %v3513
        %3515 = vmatprep.mubr.bf16.mxu0 0
        %3516 = vmatmul.mubr.bf16.gmra.mrb[0].mxu0 %v3199
        %v3517 = vpop.f32.mrb[0].mxu0
        %v3518 = vadd.f32 %v2962, %v3517
        %v3519 = vpop.f32.mrb[0].mxu0
        %v3520 = vadd.f32 %v2966, %v3519
        %v3521 = vpop.f32.mrb[0].mxu0
        %v3522 = vadd.f32 %v2962, %v3521
        %v3523 = vpop.f32.mrb[0].mxu0
        %v3524 = vadd.f32 %v2966, %v3523
        %3525 = vmatprep.mubr.bf16.mxu0 0
        %3526 = vmatmul.mubr.bf16.gmra.mrb[0].mxu0 %v3202
        %v3527 = vpop.f32.mrb[0].mxu0
        %v3528 = vadd.f32 %v2962, %v3527
        %v3529 = vpop.f32.mrb[0].mxu0
        %v3530 = vadd.f32 %v2966, %v3529
        %v3531 = vpop.f32.mrb[0].mxu0
        %v3532 = vadd.f32 %v2962, %v3531
        %v3533 = vpop.f32.mrb[0].mxu0
        %v3534 = vadd.f32 %v2966, %v3533
        %3535 = vmatprep.mubr.bf16.mxu0 0
        %3536 = vmatmul.mubr.bf16.gmra.mrb[0].mxu0 %v3205
        %v3537 = vpop.f32.mrb[0].mxu0
        %v3538 = vadd.f32 %v2962, %v3537
        %v3539 = vpop.f32.mrb[0].mxu0
        %v3540 = vadd.f32 %v2966, %v3539
        %v3541 = vpop.f32.mrb[0].mxu0
        %v3542 = vadd.f32 %v2962, %v3541
        %v3543 = vpop.f32.mrb[0].mxu0
        %v3544 = vadd.f32 %v2966, %v3543
        %3545 = vdwg.mxu0
        %3546 = vmatprep.subr.bf16.mxu0 %v3126
        %3547 = vmatpush1.bf16.msra.mxu0 %v3125
        %3548 = vmatprep.subr.bf16.mxu0 %v3142
        %3549 = vmatpush1.bf16.msra.mxu0 %v3141
        %3550 = vmatprep.subr.bf16.mxu0 0
        %3551 = vmatpush1.bf16.msra.mxu0 0
        %3552 = vmatprep.subr.bf16.mxu0 0
        %3553 = vmatpush1.bf16.msra.mxu0 0
        %3554 = vmatprep.subr.bf16.mxu0 0
        %3555 = vmatpush1.bf16.msra.mxu0 0
        %3556 = vmatprep.subr.bf16.mxu0 0
        %3557 = vmatpush1.bf16.msra.mxu0 0
        %3558 = vmatprep.subr.bf16.mxu0 0
        %3559 = vmatpush1.bf16.msra.mxu0 0
        %3560 = vmatprep.subr.bf16.mxu0 0
        %3561 = vmatpush1.bf16.msra.mxu0 0
        %3562 = vmatprep.subr.bf16.mxu0 0
        %3563 = vmatpush1.bf16.msra.mxu0 0
        %3564 = vmatprep.subr.bf16.mxu0 0
        %3565 = vmatpush1.bf16.msra.mxu0 0
        %3566 = vmatprep.subr.bf16.mxu0 0
        %3567 = vmatpush1.bf16.msra.mxu0 0
        %3568 = vmatprep.subr.bf16.mxu0 0
        %3569 = vmatpush1.bf16.msra.mxu0 0
        %3570 = vmatprep.subr.bf16.mxu0 0
        %3571 = vmatpush1.bf16.msra.mxu0 0
        %3572 = vmatprep.subr.bf16.mxu0 0
        %3573 = vmatpush1.bf16.msra.mxu0 0
        %3574 = vmatprep.subr.bf16.mxu0 0
        %3575 = vmatpush1.bf16.msra.mxu0 0
        %3576 = vmatprep.subr.bf16.mxu0 0
        %3577 = vmatpush1.bf16.msra.mxu0 0
        %3578 = vmatprep.mubr.bf16.mxu0 0
        %3579 = vmatmul.mubr.bf16.gmra.mrb[0].mxu0 %v3184
        %v3580 = vpop.f32.mrb[0].mxu0
        %v3581 = vadd.f32 %v2970, %v3580
        %v3582 = vpop.f32.mrb[0].mxu0
        %v3583 = vadd.f32 %v2974, %v3582
        %v3584 = vpop.f32.mrb[0].mxu0
        %v3585 = vadd.f32 %v2970, %v3584
        %v3586 = vpop.f32.mrb[0].mxu0
        %v3587 = vadd.f32 %v2974, %v3586
        %3588 = vmatprep.mubr.bf16.mxu0 0
        %3589 = vmatmul.mubr.bf16.gmra.mrb[0].mxu0 %v3187
        %v3590 = vpop.f32.mrb[0].mxu0
        %v3591 = vadd.f32 %v2970, %v3590
        %v3592 = vpop.f32.mrb[0].mxu0
        %v3593 = vadd.f32 %v2974, %v3592
        %v3594 = vpop.f32.mrb[0].mxu0
        %v3595 = vadd.f32 %v2970, %v3594
        %v3596 = vpop.f32.mrb[0].mxu0
        %v3597 = vadd.f32 %v2974, %v3596
        %3598 = vmatprep.mubr.bf16.mxu0 0
        %3599 = vmatmul.mubr.bf16.gmra.mrb[0].mxu0 %v3190
        %v3600 = vpop.f32.mrb[0].mxu0
        %v3601 = vadd.f32 %v2970, %v3600
        %v3602 = vpop.f32.mrb[0].mxu0
        %v3603 = vadd.f32 %v2974, %v3602
        %v3604 = vpop.f32.mrb[0].mxu0
        %v3605 = vadd.f32 %v2970, %v3604
        %v3606 = vpop.f32.mrb[0].mxu0
        %v3607 = vadd.f32 %v2974, %v3606
        %3608 = vmatprep.mubr.bf16.mxu0 0
        %3609 = vmatmul.mubr.bf16.gmra.mrb[0].mxu0 %v3193
        %v3610 = vpop.f32.mrb[0].mxu0
        %v3611 = vadd.f32 %v2970, %v3610
        %v3612 = vpop.f32.mrb[0].mxu0
        %v3613 = vadd.f32 %v2974, %v3612
        %v3614 = vpop.f32.mrb[0].mxu0
        %v3615 = vadd.f32 %v2970, %v3614
        %v3616 = vpop.f32.mrb[0].mxu0
        %v3617 = vadd.f32 %v2974, %v3616
        %3618 = vmatprep.mubr.bf16.mxu0 0
        %3619 = vmatmul.mubr.bf16.gmra.mrb[0].mxu0 %v3196
        %v3620 = vpop.f32.mrb[0].mxu0
        %v3621 = vadd.f32 %v2970, %v3620
        %v3622 = vpop.f32.mrb[0].mxu0
        %v3623 = vadd.f32 %v2974, %v3622
        %v3624 = vpop.f32.mrb[0].mxu0
        %v3625 = vadd.f32 %v2970, %v3624
        %v3626 = vpop.f32.mrb[0].mxu0
        %v3627 = vadd.f32 %v2974, %v3626
        %3628 = vmatprep.mubr.bf16.mxu0 0
        %3629 = vmatmul.mubr.bf16.gmra.mrb[0].mxu0 %v3199
        %v3630 = vpop.f32.mrb[0].mxu0
        %v3631 = vadd.f32 %v2970, %v3630
        %v3632 = vpop.f32.mrb[0].mxu0
        %v3633 = vadd.f32 %v2974, %v3632
        %v3634 = vpop.f32.mrb[0].mxu0
        %v3635 = vadd.f32 %v2970, %v3634
        %v3636 = vpop.f32.mrb[0].mxu0
        %v3637 = vadd.f32 %v2974, %v3636
        %3638 = vmatprep.mubr.bf16.mxu0 0
        %3639 = vmatmul.mubr.bf16.gmra.mrb[0].mxu0 %v3202
        %v3640 = vpop.f32.mrb[0].mxu0
        %v3641 = vadd.f32 %v2970, %v3640
        %v3642 = vpop.f32.mrb[0].mxu0
        %v3643 = vadd.f32 %v2974, %v3642
        %v3644 = vpop.f32.mrb[0].mxu0
        %v3645 = vadd.f32 %v2970, %v3644
        %v3646 = vpop.f32.mrb[0].mxu0
        %v3647 = vadd.f32 %v2974, %v3646
        %3648 = vmatprep.mubr.bf16.mxu0 0
        %3649 = vmatmul.mubr.bf16.gmra.mrb[0].mxu0 %v3205
        %v3650 = vpop.f32.mrb[0].mxu0
        %v3651 = vadd.f32 %v2970, %v3650
        %v3652 = vpop.f32.mrb[0].mxu0
        %v3653 = vadd.f32 %v2974, %v3652
        %v3654 = vpop.f32.mrb[0].mxu0
        %v3655 = vadd.f32 %v2970, %v3654
        %v3656 = vpop.f32.mrb[0].mxu0
        %v3657 = vadd.f32 %v2974, %v3656
        %3658 = vdwg.mxu0
        %3659 = vmatprep.subr.bf16.mxu0 %v3128
        %3660 = vmatpush1.bf16.msra.mxu0 %v3127
        %3661 = vmatprep.subr.bf16.mxu0 %v3144
        %3662 = vmatpush1.bf16.msra.mxu0 %v3143
        %3663 = vmatprep.subr.bf16.mxu0 0
        %3664 = vmatpush1.bf16.msra.mxu0 0
        %3665 = vmatprep.subr.bf16.mxu0 0
        %3666 = vmatpush1.bf16.msra.mxu0 0
        %3667 = vmatprep.subr.bf16.mxu0 0
        %3668 = vmatpush1.bf16.msra.mxu0 0
        %3669 = vmatprep.subr.bf16.mxu0 0
        %3670 = vmatpush1.bf16.msra.mxu0 0
        %3671 = vmatprep.subr.bf16.mxu0 0
        %3672 = vmatpush1.bf16.msra.mxu0 0
        %3673 = vmatprep.subr.bf16.mxu0 0
        %3674 = vmatpush1.bf16.msra.mxu0 0
        %3675 = vmatprep.subr.bf16.mxu0 0
        %3676 = vmatpush1.bf16.msra.mxu0 0
        %3677 = vmatprep.subr.bf16.mxu0 0
        %3678 = vmatpush1.bf16.msra.mxu0 0
        %3679 = vmatprep.subr.bf16.mxu0 0
        %3680 = vmatpush1.bf16.msra.mxu0 0
        %3681 = vmatprep.subr.bf16.mxu0 0
        %3682 = vmatpush1.bf16.msra.mxu0 0
        %3683 = vmatprep.subr.bf16.mxu0 0
        %3684 = vmatpush1.bf16.msra.mxu0 0
        %3685 = vmatprep.subr.bf16.mxu0 0
        %3686 = vmatpush1.bf16.msra.mxu0 0
        %3687 = vmatprep.subr.bf16.mxu0 0
        %3688 = vmatpush1.bf16.msra.mxu0 0
        %3689 = vmatprep.subr.bf16.mxu0 0
        %3690 = vmatpush1.bf16.msra.mxu0 0
        %3691 = vmatprep.mubr.bf16.mxu0 0
        %3692 = vmatmul.mubr.bf16.gmra.mrb[0].mxu0 %v3184
        %v3693 = vpop.f32.mrb[0].mxu0
        %v3694 = vadd.f32 %v2978, %v3693
        %v3695 = vpop.f32.mrb[0].mxu0
        %v3696 = vadd.f32 %v2982, %v3695
        %v3697 = vpop.f32.mrb[0].mxu0
        %v3698 = vadd.f32 %v2978, %v3697
        %v3699 = vpop.f32.mrb[0].mxu0
        %v3700 = vadd.f32 %v2982, %v3699
        %3701 = vmatprep.mubr.bf16.mxu0 0
        %3702 = vmatmul.mubr.bf16.gmra.mrb[0].mxu0 %v3187
        %v3703 = vpop.f32.mrb[0].mxu0
        %v3704 = vadd.f32 %v2978, %v3703
        %v3705 = vpop.f32.mrb[0].mxu0
        %v3706 = vadd.f32 %v2982, %v3705
        %v3707 = vpop.f32.mrb[0].mxu0
        %v3708 = vadd.f32 %v2978, %v3707
        %v3709 = vpop.f32.mrb[0].mxu0
        %v3710 = vadd.f32 %v2982, %v3709
        %3711 = vmatprep.mubr.bf16.mxu0 0
        %3712 = vmatmul.mubr.bf16.gmra.mrb[0].mxu0 %v3190
        %v3713 = vpop.f32.mrb[0].mxu0
        %v3714 = vadd.f32 %v2978, %v3713
        %v3715 = vpop.f32.mrb[0].mxu0
        %v3716 = vadd.f32 %v2982, %v3715
        %v3717 = vpop.f32.mrb[0].mxu0
        %v3718 = vadd.f32 %v2978, %v3717
        %v3719 = vpop.f32.mrb[0].mxu0
        %v3720 = vadd.f32 %v2982, %v3719
        %3721 = vmatprep.mubr.bf16.mxu0 0
        %3722 = vmatmul.mubr.bf16.gmra.mrb[0].mxu0 %v3193
        %v3723 = vpop.f32.mrb[0].mxu0
        %v3724 = vadd.f32 %v2978, %v3723
        %v3725 = vpop.f32.mrb[0].mxu0
        %v3726 = vadd.f32 %v2982, %v3725
        %v3727 = vpop.f32.mrb[0].mxu0
        %v3728 = vadd.f32 %v2978, %v3727
        %v3729 = vpop.f32.mrb[0].mxu0
        %v3730 = vadd.f32 %v2982, %v3729
        %3731 = vmatprep.mubr.bf16.mxu0 0
        %3732 = vmatmul.mubr.bf16.gmra.mrb[0].mxu0 %v3196
        %v3733 = vpop.f32.mrb[0].mxu0
        %v3734 = vadd.f32 %v2978, %v3733
        %v3735 = vpop.f32.mrb[0].mxu0
        %v3736 = vadd.f32 %v2982, %v3735
        %v3737 = vpop.f32.mrb[0].mxu0
        %v3738 = vadd.f32 %v2978, %v3737
        %v3739 = vpop.f32.mrb[0].mxu0
        %v3740 = vadd.f32 %v2982, %v3739
        %3741 = vmatprep.mubr.bf16.mxu0 0
        %3742 = vmatmul.mubr.bf16.gmra.mrb[0].mxu0 %v3199
        %v3743 = vpop.f32.mrb[0].mxu0
        %v3744 = vadd.f32 %v2978, %v3743
        %v3745 = vpop.f32.mrb[0].mxu0
        %v3746 = vadd.f32 %v2982, %v3745
        %v3747 = vpop.f32.mrb[0].mxu0
        %v3748 = vadd.f32 %v2978, %v3747
        %v3749 = vpop.f32.mrb[0].mxu0
        %v3750 = vadd.f32 %v2982, %v3749
        %3751 = vmatprep.mubr.bf16.mxu0 0
        %3752 = vmatmul.mubr.bf16.gmra.mrb[0].mxu0 %v3202
        %v3753 = vpop.f32.mrb[0].mxu0
        %v3754 = vadd.f32 %v2978, %v3753
        %v3755 = vpop.f32.mrb[0].mxu0
        %v3756 = vadd.f32 %v2982, %v3755
        %v3757 = vpop.f32.mrb[0].mxu0
        %v3758 = vadd.f32 %v2978, %v3757
        %v3759 = vpop.f32.mrb[0].mxu0
        %v3760 = vadd.f32 %v2982, %v3759
        %3761 = vmatprep.mubr.bf16.mxu0 0
        %3762 = vmatmul.mubr.bf16.gmra.mrb[0].mxu0 %v3205
        %v3763 = vpop.f32.mrb[0].mxu0
        %v3764 = vadd.f32 %v2978, %v3763
        %v3765 = vpop.f32.mrb[0].mxu0
        %v3766 = vadd.f32 %v2982, %v3765
        %v3767 = vpop.f32.mrb[0].mxu0
        %v3768 = vadd.f32 %v2978, %v3767
        %v3769 = vpop.f32.mrb[0].mxu0
        %v3770 = vadd.f32 %v2982, %v3769
        %3771 = vdwg.mxu0
        %3772 = vmatprep.subr.bf16.mxu0 %v3130
        %3773 = vmatpush1.bf16.msra.mxu0 %v3129
        %3774 = vmatprep.subr.bf16.mxu0 %v3146
        %3775 = vmatpush1.bf16.msra.mxu0 %v3145
        %3776 = vmatprep.subr.bf16.mxu0 0
        %3777 = vmatpush1.bf16.msra.mxu0 0
        %3778 = vmatprep.subr.bf16.mxu0 0
        %3779 = vmatpush1.bf16.msra.mxu0 0
        %3780 = vmatprep.subr.bf16.mxu0 0
        %3781 = vmatpush1.bf16.msra.mxu0 0
        %3782 = vmatprep.subr.bf16.mxu0 0
        %3783 = vmatpush1.bf16.msra.mxu0 0
        %3784 = vmatprep.subr.bf16.mxu0 0
        %3785 = vmatpush1.bf16.msra.mxu0 0
        %3786 = vmatprep.subr.bf16.mxu0 0
        %3787 = vmatpush1.bf16.msra.mxu0 0
        %3788 = vmatprep.subr.bf16.mxu0 0
        %3789 = vmatpush1.bf16.msra.mxu0 0
        %3790 = vmatprep.subr.bf16.mxu0 0
        %3791 = vmatpush1.bf16.msra.mxu0 0
        %3792 = vmatprep.subr.bf16.mxu0 0
        %3793 = vmatpush1.bf16.msra.mxu0 0
        %3794 = vmatprep.subr.bf16.mxu0 0
        %3795 = vmatpush1.bf16.msra.mxu0 0
        %3796 = vmatprep.subr.bf16.mxu0 0
        %3797 = vmatpush1.bf16.msra.mxu0 0
        %3798 = vmatprep.subr.bf16.mxu0 0
        %3799 = vmatpush1.bf16.msra.mxu0 0
        %3800 = vmatprep.subr.bf16.mxu0 0
        %3801 = vmatpush1.bf16.msra.mxu0 0
        %3802 = vmatprep.subr.bf16.mxu0 0
        %3803 = vmatpush1.bf16.msra.mxu0 0
        %3804 = vmatprep.mubr.bf16.mxu0 0
        %3805 = vmatmul.mubr.bf16.gmra.mrb[0].mxu0 %v3184
        %v3806 = vpop.f32.mrb[0].mxu0
        %v3807 = vadd.f32 %v2986, %v3806
        %v3808 = vpop.f32.mrb[0].mxu0
        %v3809 = vadd.f32 %v2990, %v3808
        %v3810 = vpop.f32.mrb[0].mxu0
        %v3811 = vadd.f32 %v2986, %v3810
        %v3812 = vpop.f32.mrb[0].mxu0
        %v3813 = vadd.f32 %v2990, %v3812
        %3814 = vmatprep.mubr.bf16.mxu0 0
        %3815 = vmatmul.mubr.bf16.gmra.mrb[0].mxu0 %v3187
        %v3816 = vpop.f32.mrb[0].mxu0
        %v3817 = vadd.f32 %v2986, %v3816
        %v3818 = vpop.f32.mrb[0].mxu0
        %v3819 = vadd.f32 %v2990, %v3818
        %v3820 = vpop.f32.mrb[0].mxu0
        %v3821 = vadd.f32 %v2986, %v3820
        %v3822 = vpop.f32.mrb[0].mxu0
        %v3823 = vadd.f32 %v2990, %v3822
        %3824 = vmatprep.mubr.bf16.mxu0 0
        %3825 = vmatmul.mubr.bf16.gmra.mrb[0].mxu0 %v3190
        %v3826 = vpop.f32.mrb[0].mxu0
        %v3827 = vadd.f32 %v2986, %v3826
        %v3828 = vpop.f32.mrb[0].mxu0
        %v3829 = vadd.f32 %v2990, %v3828
        %v3830 = vpop.f32.mrb[0].mxu0
        %v3831 = vadd.f32 %v2986, %v3830
        %v3832 = vpop.f32.mrb[0].mxu0
        %v3833 = vadd.f32 %v2990, %v3832
        %3834 = vmatprep.mubr.bf16.mxu0 0
        %3835 = vmatmul.mubr.bf16.gmra.mrb[0].mxu0 %v3193
        %v3836 = vpop.f32.mrb[0].mxu0
        %v3837 = vadd.f32 %v2986, %v3836
        %v3838 = vpop.f32.mrb[0].mxu0
        %v3839 = vadd.f32 %v2990, %v3838
        %v3840 = vpop.f32.mrb[0].mxu0
        %v3841 = vadd.f32 %v2986, %v3840
        %v3842 = vpop.f32.mrb[0].mxu0
        %v3843 = vadd.f32 %v2990, %v3842
        %3844 = vmatprep.mubr.bf16.mxu0 0
        %3845 = vmatmul.mubr.bf16.gmra.mrb[0].mxu0 %v3196
        %v3846 = vpop.f32.mrb[0].mxu0
        %v3847 = vadd.f32 %v2986, %v3846
        %v3848 = vpop.f32.mrb[0].mxu0
        %v3849 = vadd.f32 %v2990, %v3848
        %v3850 = vpop.f32.mrb[0].mxu0
        %v3851 = vadd.f32 %v2986, %v3850
        %v3852 = vpop.f32.mrb[0].mxu0
        %v3853 = vadd.f32 %v2990, %v3852
        %3854 = vmatprep.mubr.bf16.mxu0 0
        %3855 = vmatmul.mubr.bf16.gmra.mrb[0].mxu0 %v3199
        %v3856 = vpop.f32.mrb[0].mxu0
        %v3857 = vadd.f32 %v2986, %v3856
        %v3858 = vpop.f32.mrb[0].mxu0
        %v3859 = vadd.f32 %v2990, %v3858
        %v3860 = vpop.f32.mrb[0].mxu0
        %v3861 = vadd.f32 %v2986, %v3860
        %v3862 = vpop.f32.mrb[0].mxu0
        %v3863 = vadd.f32 %v2990, %v3862
        %3864 = vmatprep.mubr.bf16.mxu0 0
        %3865 = vmatmul.mubr.bf16.gmra.mrb[0].mxu0 %v3202
        %v3866 = vpop.f32.mrb[0].mxu0
        %v3867 = vadd.f32 %v2986, %v3866
        %v3868 = vpop.f32.mrb[0].mxu0
        %v3869 = vadd.f32 %v2990, %v3868
        %v3870 = vpop.f32.mrb[0].mxu0
        %v3871 = vadd.f32 %v2986, %v3870
        %v3872 = vpop.f32.mrb[0].mxu0
        %v3873 = vadd.f32 %v2990, %v3872
        %3874 = vmatprep.mubr.bf16.mxu0 0
        %3875 = vmatmul.mubr.bf16.gmra.mrb[0].mxu0 %v3205
        %v3876 = vpop.f32.mrb[0].mxu0
        %v3877 = vadd.f32 %v2986, %v3876
        %v3878 = vpop.f32.mrb[0].mxu0
        %v3879 = vadd.f32 %v2990, %v3878
        %v3880 = vpop.f32.mrb[0].mxu0
        %v3881 = vadd.f32 %v2986, %v3880
        %v3882 = vpop.f32.mrb[0].mxu0
        %v3883 = vadd.f32 %v2990, %v3882
        %3884 = vdwg.mxu0
        %3885 = vmatprep.subr.bf16.mxu0 %v3132
        %3886 = vmatpush1.bf16.msra.mxu0 %v3131
        %3887 = vmatprep.subr.bf16.mxu0 %v3148
        %3888 = vmatpush1.bf16.msra.mxu0 %v3147
        %3889 = vmatprep.subr.bf16.mxu0 0
        %3890 = vmatpush1.bf16.msra.mxu0 0
        %3891 = vmatprep.subr.bf16.mxu0 0
        %3892 = vmatpush1.bf16.msra.mxu0 0
        %3893 = vmatprep.subr.bf16.mxu0 0
        %3894 = vmatpush1.bf16.msra.mxu0 0
        %3895 = vmatprep.subr.bf16.mxu0 0
        %3896 = vmatpush1.bf16.msra.mxu0 0
        %3897 = vmatprep.subr.bf16.mxu0 0
        %3898 = vmatpush1.bf16.msra.mxu0 0
        %3899 = vmatprep.subr.bf16.mxu0 0
        %3900 = vmatpush1.bf16.msra.mxu0 0
        %3901 = vmatprep.subr.bf16.mxu0 0
        %3902 = vmatpush1.bf16.msra.mxu0 0
        %3903 = vmatprep.subr.bf16.mxu0 0
        %3904 = vmatpush1.bf16.msra.mxu0 0
        %3905 = vmatprep.subr.bf16.mxu0 0
        %3906 = vmatpush1.bf16.msra.mxu0 0
        %3907 = vmatprep.subr.bf16.mxu0 0
        %3908 = vmatpush1.bf16.msra.mxu0 0
        %3909 = vmatprep.subr.bf16.mxu0 0
        %3910 = vmatpush1.bf16.msra.mxu0 0
        %3911 = vmatprep.subr.bf16.mxu0 0
        %3912 = vmatpush1.bf16.msra.mxu0 0
        %3913 = vmatprep.subr.bf16.mxu0 0
        %3914 = vmatpush1.bf16.msra.mxu0 0
        %3915 = vmatprep.subr.bf16.mxu0 0
        %3916 = vmatpush1.bf16.msra.mxu0 0
        %3917 = vmatprep.mubr.bf16.mxu0 0
        %3918 = vmatmul.mubr.bf16.gmra.mrb[0].mxu0 %v3184
        %v3919 = vpop.f32.mrb[0].mxu0
        %v3920 = vadd.f32 %v2994, %v3919
        %v3921 = vpop.f32.mrb[0].mxu0
        %v3922 = vadd.f32 %v2998, %v3921
        %v3923 = vpop.f32.mrb[0].mxu0
        %v3924 = vadd.f32 %v2994, %v3923
        %v3925 = vpop.f32.mrb[0].mxu0
        %v3926 = vadd.f32 %v2998, %v3925
        %3927 = vmatprep.mubr.bf16.mxu0 0
        %3928 = vmatmul.mubr.bf16.gmra.mrb[0].mxu0 %v3187
        %v3929 = vpop.f32.mrb[0].mxu0
        %v3930 = vadd.f32 %v2994, %v3929
        %v3931 = vpop.f32.mrb[0].mxu0
        %v3932 = vadd.f32 %v2998, %v3931
        %v3933 = vpop.f32.mrb[0].mxu0
        %v3934 = vadd.f32 %v2994, %v3933
        %v3935 = vpop.f32.mrb[0].mxu0
        %v3936 = vadd.f32 %v2998, %v3935
        %3937 = vmatprep.mubr.bf16.mxu0 0
        %3938 = vmatmul.mubr.bf16.gmra.mrb[0].mxu0 %v3190
        %v3939 = vpop.f32.mrb[0].mxu0
        %v3940 = vadd.f32 %v2994, %v3939
        %v3941 = vpop.f32.mrb[0].mxu0
        %v3942 = vadd.f32 %v2998, %v3941
        %v3943 = vpop.f32.mrb[0].mxu0
        %v3944 = vadd.f32 %v2994, %v3943
        %v3945 = vpop.f32.mrb[0].mxu0
        %v3946 = vadd.f32 %v2998, %v3945
        %3947 = vmatprep.mubr.bf16.mxu0 0
        %3948 = vmatmul.mubr.bf16.gmra.mrb[0].mxu0 %v3193
        %v3949 = vpop.f32.mrb[0].mxu0
        %v3950 = vadd.f32 %v2994, %v3949
        %v3951 = vpop.f32.mrb[0].mxu0
        %v3952 = vadd.f32 %v2998, %v3951
        %v3953 = vpop.f32.mrb[0].mxu0
        %v3954 = vadd.f32 %v2994, %v3953
        %v3955 = vpop.f32.mrb[0].mxu0
        %v3956 = vadd.f32 %v2998, %v3955
        %3957 = vmatprep.mubr.bf16.mxu0 0
        %3958 = vmatmul.mubr.bf16.gmra.mrb[0].mxu0 %v3196
        %v3959 = vpop.f32.mrb[0].mxu0
        %v3960 = vadd.f32 %v2994, %v3959
        %v3961 = vpop.f32.mrb[0].mxu0
        %v3962 = vadd.f32 %v2998, %v3961
        %v3963 = vpop.f32.mrb[0].mxu0
        %v3964 = vadd.f32 %v2994, %v3963
        %v3965 = vpop.f32.mrb[0].mxu0
        %v3966 = vadd.f32 %v2998, %v3965
        %3967 = vmatprep.mubr.bf16.mxu0 0
        %3968 = vmatmul.mubr.bf16.gmra.mrb[0].mxu0 %v3199
        %v3969 = vpop.f32.mrb[0].mxu0
        %v3970 = vadd.f32 %v2994, %v3969
        %v3971 = vpop.f32.mrb[0].mxu0
        %v3972 = vadd.f32 %v2998, %v3971
        %v3973 = vpop.f32.mrb[0].mxu0
        %v3974 = vadd.f32 %v2994, %v3973
        %v3975 = vpop.f32.mrb[0].mxu0
        %v3976 = vadd.f32 %v2998, %v3975
        %3977 = vmatprep.mubr.bf16.mxu0 0
        %3978 = vmatmul.mubr.bf16.gmra.mrb[0].mxu0 %v3202
        %v3979 = vpop.f32.mrb[0].mxu0
        %v3980 = vadd.f32 %v2994, %v3979
        %v3981 = vpop.f32.mrb[0].mxu0
        %v3982 = vadd.f32 %v2998, %v3981
        %v3983 = vpop.f32.mrb[0].mxu0
        %v3984 = vadd.f32 %v2994, %v3983
        %v3985 = vpop.f32.mrb[0].mxu0
        %v3986 = vadd.f32 %v2998, %v3985
        %3987 = vmatprep.mubr.bf16.mxu0 0
        %3988 = vmatmul.mubr.bf16.gmra.mrb[0].mxu0 %v3205
        %v3989 = vpop.f32.mrb[0].mxu0
        %v3990 = vadd.f32 %v2994, %v3989
        %v3991 = vpop.f32.mrb[0].mxu0
        %v3992 = vadd.f32 %v2998, %v3991
        %v3993 = vpop.f32.mrb[0].mxu0
        %v3994 = vadd.f32 %v2994, %v3993
        %v3995 = vpop.f32.mrb[0].mxu0
        %v3996 = vadd.f32 %v2998, %v3995
        %3997 = vdwg.mxu0
        %3998 = vmatprep.subr.bf16.mxu0 %v3134
        %3999 = vmatpush1.bf16.msra.mxu0 %v3133
        %4000 = vmatprep.subr.bf16.mxu0 %v3150
        %4001 = vmatpush1.bf16.msra.mxu0 %v3149
        %4002 = vmatprep.subr.bf16.mxu0 0
        %4003 = vmatpush1.bf16.msra.mxu0 0
        %4004 = vmatprep.subr.bf16.mxu0 0
        %4005 = vmatpush1.bf16.msra.mxu0 0
        %4006 = vmatprep.subr.bf16.mxu0 0
        %4007 = vmatpush1.bf16.msra.mxu0 0
        %4008 = vmatprep.subr.bf16.mxu0 0
        %4009 = vmatpush1.bf16.msra.mxu0 0
        %4010 = vmatprep.subr.bf16.mxu0 0
        %4011 = vmatpush1.bf16.msra.mxu0 0
        %4012 = vmatprep.subr.bf16.mxu0 0
        %4013 = vmatpush1.bf16.msra.mxu0 0
        %4014 = vmatprep.subr.bf16.mxu0 0
        %4015 = vmatpush1.bf16.msra.mxu0 0
        %4016 = vmatprep.subr.bf16.mxu0 0
        %4017 = vmatpush1.bf16.msra.mxu0 0
        %4018 = vmatprep.subr.bf16.mxu0 0
        %4019 = vmatpush1.bf16.msra.mxu0 0
        %4020 = vmatprep.subr.bf16.mxu0 0
        %4021 = vmatpush1.bf16.msra.mxu0 0
        %4022 = vmatprep.subr.bf16.mxu0 0
        %4023 = vmatpush1.bf16.msra.mxu0 0
        %4024 = vmatprep.subr.bf16.mxu0 0
        %4025 = vmatpush1.bf16.msra.mxu0 0
        %4026 = vmatprep.subr.bf16.mxu0 0
        %4027 = vmatpush1.bf16.msra.mxu0 0
        %4028 = vmatprep.subr.bf16.mxu0 0
        %4029 = vmatpush1.bf16.msra.mxu0 0
        %4030 = vmatprep.mubr.bf16.mxu0 0
        %4031 = vmatmul.mubr.bf16.gmra.mrb[0].mxu0 %v3184
        %v4032 = vpop.f32.mrb[0].mxu0
        %v4033 = vadd.f32 %v3002, %v4032
        %v4034 = vpop.f32.mrb[0].mxu0
        %v4035 = vadd.f32 %v3006, %v4034
        %v4036 = vpop.f32.mrb[0].mxu0
        %v4037 = vadd.f32 %v3002, %v4036
        %v4038 = vpop.f32.mrb[0].mxu0
        %v4039 = vadd.f32 %v3006, %v4038
        %4040 = vmatprep.mubr.bf16.mxu0 0
        %4041 = vmatmul.mubr.bf16.gmra.mrb[0].mxu0 %v3187
        %v4042 = vpop.f32.mrb[0].mxu0
        %v4043 = vadd.f32 %v3002, %v4042
        %v4044 = vpop.f32.mrb[0].mxu0
        %v4045 = vadd.f32 %v3006, %v4044
        %v4046 = vpop.f32.mrb[0].mxu0
        %v4047 = vadd.f32 %v3002, %v4046
        %v4048 = vpop.f32.mrb[0].mxu0
        %v4049 = vadd.f32 %v3006, %v4048
        %4050 = vmatprep.mubr.bf16.mxu0 0
        %4051 = vmatmul.mubr.bf16.gmra.mrb[0].mxu0 %v3190
        %v4052 = vpop.f32.mrb[0].mxu0
        %v4053 = vadd.f32 %v3002, %v4052
        %v4054 = vpop.f32.mrb[0].mxu0
        %v4055 = vadd.f32 %v3006, %v4054
        %v4056 = vpop.f32.mrb[0].mxu0
        %v4057 = vadd.f32 %v3002, %v4056
        %v4058 = vpop.f32.mrb[0].mxu0
        %v4059 = vadd.f32 %v3006, %v4058
        %4060 = vmatprep.mubr.bf16.mxu0 0
        %4061 = vmatmul.mubr.bf16.gmra.mrb[0].mxu0 %v3193
        %v4062 = vpop.f32.mrb[0].mxu0
        %v4063 = vadd.f32 %v3002, %v4062
        %v4064 = vpop.f32.mrb[0].mxu0
        %v4065 = vadd.f32 %v3006, %v4064
        %v4066 = vpop.f32.mrb[0].mxu0
        %v4067 = vadd.f32 %v3002, %v4066
        %v4068 = vpop.f32.mrb[0].mxu0
        %v4069 = vadd.f32 %v3006, %v4068
        %4070 = vmatprep.mubr.bf16.mxu0 0
        %4071 = vmatmul.mubr.bf16.gmra.mrb[0].mxu0 %v3196
        %v4072 = vpop.f32.mrb[0].mxu0
        %v4073 = vadd.f32 %v3002, %v4072
        %v4074 = vpop.f32.mrb[0].mxu0
        %v4075 = vadd.f32 %v3006, %v4074
        %v4076 = vpop.f32.mrb[0].mxu0
        %v4077 = vadd.f32 %v3002, %v4076
        %v4078 = vpop.f32.mrb[0].mxu0
        %v4079 = vadd.f32 %v3006, %v4078
        %4080 = vmatprep.mubr.bf16.mxu0 0
        %4081 = vmatmul.mubr.bf16.gmra.mrb[0].mxu0 %v3199
        %v4082 = vpop.f32.mrb[0].mxu0
        %v4083 = vadd.f32 %v3002, %v4082
        %v4084 = vpop.f32.mrb[0].mxu0
        %v4085 = vadd.f32 %v3006, %v4084
        %v4086 = vpop.f32.mrb[0].mxu0
        %v4087 = vadd.f32 %v3002, %v4086
        %v4088 = vpop.f32.mrb[0].mxu0
        %v4089 = vadd.f32 %v3006, %v4088
        %4090 = vmatprep.mubr.bf16.mxu0 0
        %4091 = vmatmul.mubr.bf16.gmra.mrb[0].mxu0 %v3202
        %v4092 = vpop.f32.mrb[0].mxu0
        %v4093 = vadd.f32 %v3002, %v4092
        %v4094 = vpop.f32.mrb[0].mxu0
        %v4095 = vadd.f32 %v3006, %v4094
        %v4096 = vpop.f32.mrb[0].mxu0
        %v4097 = vadd.f32 %v3002, %v4096
        %v4098 = vpop.f32.mrb[0].mxu0
        %v4099 = vadd.f32 %v3006, %v4098
        %4100 = vmatprep.mubr.bf16.mxu0 0
        %4101 = vmatmul.mubr.bf16.gmra.mrb[0].mxu0 %v3205
        %v4102 = vpop.f32.mrb[0].mxu0
        %v4103 = vadd.f32 %v3002, %v4102
        %v4104 = vpop.f32.mrb[0].mxu0
        %v4105 = vadd.f32 %v3006, %v4104
        %v4106 = vpop.f32.mrb[0].mxu0
        %v4107 = vadd.f32 %v3002, %v4106
        %v4108 = vpop.f32.mrb[0].mxu0
        %v4109 = vadd.f32 %v3006, %v4108
        %4110 = vdwg.mxu0
        %v4111 = vmax.f32 %v3242, 0.0
        %v4112 = vmax.f32 %v3244, 0.0
        %v4113 = vmax.f32 %v3355, 0.0
        %v4114 = vmax.f32 %v3357, 0.0
        %v4115 = vmax.f32 %v3468, 0.0
        %v4116 = vmax.f32 %v3470, 0.0
        %v4117 = vmax.f32 %v3581, 0.0
        %v4118 = vmax.f32 %v3583, 0.0
        %v4119 = vmax.f32 %v3694, 0.0
        %v4120 = vmax.f32 %v3696, 0.0
        %v4121 = vmax.f32 %v3807, 0.0
        %v4122 = vmax.f32 %v3809, 0.0
        %v4123 = vmax.f32 %v3920, 0.0
        %v4124 = vmax.f32 %v3922, 0.0
        %v4125 = vmax.f32 %v4033, 0.0
        %v4126 = vmax.f32 %v4035, 0.0
        %v4127 = vmax.f32 %v3246, 0.0
        %v4128 = vmax.f32 %v3248, 0.0
        %v4129 = vmax.f32 %v3359, 0.0
        %v4130 = vmax.f32 %v3361, 0.0
        %v4131 = vmax.f32 %v3472, 0.0
        %v4132 = vmax.f32 %v3474, 0.0
        %v4133 = vmax.f32 %v3585, 0.0
        %v4134 = vmax.f32 %v3587, 0.0
        %v4135 = vmax.f32 %v3698, 0.0
        %v4136 = vmax.f32 %v3700, 0.0
        %v4137 = vmax.f32 %v3811, 0.0
        %v4138 = vmax.f32 %v3813, 0.0
        %v4139 = vmax.f32 %v3924, 0.0
        %v4140 = vmax.f32 %v3926, 0.0
        %v4141 = vmax.f32 %v4037, 0.0
        %v4142 = vmax.f32 %v4039, 0.0
        %v4143 = vmax.f32 %v3252, 0.0
        %v4144 = vmax.f32 %v3254, 0.0
        %v4145 = vmax.f32 %v3365, 0.0
        %v4146 = vmax.f32 %v3367, 0.0
        %v4147 = vmax.f32 %v3478, 0.0
        %v4148 = vmax.f32 %v3480, 0.0
        %v4149 = vmax.f32 %v3591, 0.0
        %v4150 = vmax.f32 %v3593, 0.0
        %v4151 = vmax.f32 %v3704, 0.0
        %v4152 = vmax.f32 %v3706, 0.0
        %v4153 = vmax.f32 %v3817, 0.0
        %v4154 = vmax.f32 %v3819, 0.0
        %v4155 = vmax.f32 %v3930, 0.0
        %v4156 = vmax.f32 %v3932, 0.0
        %v4157 = vmax.f32 %v4043, 0.0
        %v4158 = vmax.f32 %v4045, 0.0
        %v4159 = vmax.f32 %v3256, 0.0
        %v4160 = vmax.f32 %v3258, 0.0
        %v4161 = vmax.f32 %v3369, 0.0
        %v4162 = vmax.f32 %v3371, 0.0
        %v4163 = vmax.f32 %v3482, 0.0
        %v4164 = vmax.f32 %v3484, 0.0
        %v4165 = vmax.f32 %v3595, 0.0
        %v4166 = vmax.f32 %v3597, 0.0
        %v4167 = vmax.f32 %v3708, 0.0
        %v4168 = vmax.f32 %v3710, 0.0
        %v4169 = vmax.f32 %v3821, 0.0
        %v4170 = vmax.f32 %v3823, 0.0
        %v4171 = vmax.f32 %v3934, 0.0
        %v4172 = vmax.f32 %v3936, 0.0
        %v4173 = vmax.f32 %v4047, 0.0
        %v4174 = vmax.f32 %v4049, 0.0
        %v4175 = vmax.f32 %v3262, 0.0
        %v4176 = vmax.f32 %v3264, 0.0
        %v4177 = vmax.f32 %v3375, 0.0
        %v4178 = vmax.f32 %v3377, 0.0
        %v4179 = vmax.f32 %v3488, 0.0
        %v4180 = vmax.f32 %v3490, 0.0
        %v4181 = vmax.f32 %v3601, 0.0
        %v4182 = vmax.f32 %v3603, 0.0
        %v4183 = vmax.f32 %v3714, 0.0
        %v4184 = vmax.f32 %v3716, 0.0
        %v4185 = vmax.f32 %v3827, 0.0
        %v4186 = vmax.f32 %v3829, 0.0
        %v4187 = vmax.f32 %v3940, 0.0
        %v4188 = vmax.f32 %v3942, 0.0
        %v4189 = vmax.f32 %v4053, 0.0
        %v4190 = vmax.f32 %v4055, 0.0
        %v4191 = vmax.f32 %v3266, 0.0
        %v4192 = vmax.f32 %v3268, 0.0
        %v4193 = vmax.f32 %v3379, 0.0
        %v4194 = vmax.f32 %v3381, 0.0
        %v4195 = vmax.f32 %v3492, 0.0
        %v4196 = vmax.f32 %v3494, 0.0
        %v4197 = vmax.f32 %v3605, 0.0
        %v4198 = vmax.f32 %v3607, 0.0
        %v4199 = vmax.f32 %v3718, 0.0
        %v4200 = vmax.f32 %v3720, 0.0
        %v4201 = vmax.f32 %v3831, 0.0
        %v4202 = vmax.f32 %v3833, 0.0
        %v4203 = vmax.f32 %v3944, 0.0
        %v4204 = vmax.f32 %v3946, 0.0
        %v4205 = vmax.f32 %v4057, 0.0
        %v4206 = vmax.f32 %v4059, 0.0
        %v4207 = vmax.f32 %v3272, 0.0
        %v4208 = vmax.f32 %v3274, 0.0
        %v4209 = vmax.f32 %v3385, 0.0
        %v4210 = vmax.f32 %v3387, 0.0
        %v4211 = vmax.f32 %v3498, 0.0
        %v4212 = vmax.f32 %v3500, 0.0
        %v4213 = vmax.f32 %v3611, 0.0
        %v4214 = vmax.f32 %v3613, 0.0
        %v4215 = vmax.f32 %v3724, 0.0
        %v4216 = vmax.f32 %v3726, 0.0
        %v4217 = vmax.f32 %v3837, 0.0
        %v4218 = vmax.f32 %v3839, 0.0
        %v4219 = vmax.f32 %v3950, 0.0
        %v4220 = vmax.f32 %v3952, 0.0
        %v4221 = vmax.f32 %v4063, 0.0
        %v4222 = vmax.f32 %v4065, 0.0
        %v4223 = vmax.f32 %v3276, 0.0
        %v4224 = vmax.f32 %v3278, 0.0
        %v4225 = vmax.f32 %v3389, 0.0
        %v4226 = vmax.f32 %v3391, 0.0
        %v4227 = vmax.f32 %v3502, 0.0
        %v4228 = vmax.f32 %v3504, 0.0
        %v4229 = vmax.f32 %v3615, 0.0
        %v4230 = vmax.f32 %v3617, 0.0
        %v4231 = vmax.f32 %v3728, 0.0
        %v4232 = vmax.f32 %v3730, 0.0
        %v4233 = vmax.f32 %v3841, 0.0
        %v4234 = vmax.f32 %v3843, 0.0
        %v4235 = vmax.f32 %v3954, 0.0
        %v4236 = vmax.f32 %v3956, 0.0
        %v4237 = vmax.f32 %v4067, 0.0
        %v4238 = vmax.f32 %v4069, 0.0
        %v4239 = vmax.f32 %v3282, 0.0
        %v4240 = vmax.f32 %v3284, 0.0
        %v4241 = vmax.f32 %v3395, 0.0
        %v4242 = vmax.f32 %v3397, 0.0
        %v4243 = vmax.f32 %v3508, 0.0
        %v4244 = vmax.f32 %v3510, 0.0
        %v4245 = vmax.f32 %v3621, 0.0
        %v4246 = vmax.f32 %v3623, 0.0
        %v4247 = vmax.f32 %v3734, 0.0
        %v4248 = vmax.f32 %v3736, 0.0
        %v4249 = vmax.f32 %v3847, 0.0
        %v4250 = vmax.f32 %v3849, 0.0
        %v4251 = vmax.f32 %v3960, 0.0
        %v4252 = vmax.f32 %v3962, 0.0
        %v4253 = vmax.f32 %v4073, 0.0
        %v4254 = vmax.f32 %v4075, 0.0
        %v4255 = vmax.f32 %v3286, 0.0
        %v4256 = vmax.f32 %v3288, 0.0
        %v4257 = vmax.f32 %v3399, 0.0
        %v4258 = vmax.f32 %v3401, 0.0
        %v4259 = vmax.f32 %v3512, 0.0
        %v4260 = vmax.f32 %v3514, 0.0
        %v4261 = vmax.f32 %v3625, 0.0
        %v4262 = vmax.f32 %v3627, 0.0
        %v4263 = vmax.f32 %v3738, 0.0
        %v4264 = vmax.f32 %v3740, 0.0
        %v4265 = vmax.f32 %v3851, 0.0
        %v4266 = vmax.f32 %v3853, 0.0
        %v4267 = vmax.f32 %v3964, 0.0
        %v4268 = vmax.f32 %v3966, 0.0
        %v4269 = vmax.f32 %v4077, 0.0
        %v4270 = vmax.f32 %v4079, 0.0
        %v4271 = vmax.f32 %v3292, 0.0
        %v4272 = vmax.f32 %v3294, 0.0
        %v4273 = vmax.f32 %v3405, 0.0
        %v4274 = vmax.f32 %v3407, 0.0
        %v4275 = vmax.f32 %v3518, 0.0
        %v4276 = vmax.f32 %v3520, 0.0
        %v4277 = vmax.f32 %v3631, 0.0
        %v4278 = vmax.f32 %v3633, 0.0
        %v4279 = vmax.f32 %v3744, 0.0
        %v4280 = vmax.f32 %v3746, 0.0
        %v4281 = vmax.f32 %v3857, 0.0
        %v4282 = vmax.f32 %v3859, 0.0
        %v4283 = vmax.f32 %v3970, 0.0
        %v4284 = vmax.f32 %v3972, 0.0
        %v4285 = vmax.f32 %v4083, 0.0
        %v4286 = vmax.f32 %v4085, 0.0
        %v4287 = vmax.f32 %v3296, 0.0
        %v4288 = vmax.f32 %v3298, 0.0
        %v4289 = vmax.f32 %v3409, 0.0
        %v4290 = vmax.f32 %v3411, 0.0
        %v4291 = vmax.f32 %v3522, 0.0
        %v4292 = vmax.f32 %v3524, 0.0
        %v4293 = vmax.f32 %v3635, 0.0
        %v4294 = vmax.f32 %v3637, 0.0
        %v4295 = vmax.f32 %v3748, 0.0
        %v4296 = vmax.f32 %v3750, 0.0
        %v4297 = vmax.f32 %v3861, 0.0
        %v4298 = vmax.f32 %v3863, 0.0
        %v4299 = vmax.f32 %v3974, 0.0
        %v4300 = vmax.f32 %v3976, 0.0
        %v4301 = vmax.f32 %v4087, 0.0
        %v4302 = vmax.f32 %v4089, 0.0
        %v4303 = vmax.f32 %v3302, 0.0
        %v4304 = vmax.f32 %v3304, 0.0
        %v4305 = vmax.f32 %v3415, 0.0
        %v4306 = vmax.f32 %v3417, 0.0
        %v4307 = vmax.f32 %v3528, 0.0
        %v4308 = vmax.f32 %v3530, 0.0
        %v4309 = vmax.f32 %v3641, 0.0
        %v4310 = vmax.f32 %v3643, 0.0
        %v4311 = vmax.f32 %v3754, 0.0
        %v4312 = vmax.f32 %v3756, 0.0
        %v4313 = vmax.f32 %v3867, 0.0
        %v4314 = vmax.f32 %v3869, 0.0
        %v4315 = vmax.f32 %v3980, 0.0
        %v4316 = vmax.f32 %v3982, 0.0
        %v4317 = vmax.f32 %v4093, 0.0
        %v4318 = vmax.f32 %v4095, 0.0
        %v4319 = vmax.f32 %v3306, 0.0
        %v4320 = vmax.f32 %v3308, 0.0
        %v4321 = vmax.f32 %v3419, 0.0
        %v4322 = vmax.f32 %v3421, 0.0
        %v4323 = vmax.f32 %v3532, 0.0
        %v4324 = vmax.f32 %v3534, 0.0
        %v4325 = vmax.f32 %v3645, 0.0
        %v4326 = vmax.f32 %v3647, 0.0
        %v4327 = vmax.f32 %v3758, 0.0
        %v4328 = vmax.f32 %v3760, 0.0
        %v4329 = vmax.f32 %v3871, 0.0
        %v4330 = vmax.f32 %v3873, 0.0
        %v4331 = vmax.f32 %v3984, 0.0
        %v4332 = vmax.f32 %v3986, 0.0
        %v4333 = vmax.f32 %v4097, 0.0
        %v4334 = vmax.f32 %v4099, 0.0
        %v4335 = vmax.f32 %v3312, 0.0
        %v4336 = vmax.f32 %v3314, 0.0
        %v4337 = vmax.f32 %v3425, 0.0
        %v4338 = vmax.f32 %v3427, 0.0
        %v4339 = vmax.f32 %v3538, 0.0
        %v4340 = vmax.f32 %v3540, 0.0
        %v4341 = vmax.f32 %v3651, 0.0
        %v4342 = vmax.f32 %v3653, 0.0
        %v4343 = vmax.f32 %v3764, 0.0
        %v4344 = vmax.f32 %v3766, 0.0
        %v4345 = vmax.f32 %v3877, 0.0
        %v4346 = vmax.f32 %v3879, 0.0
        %v4347 = vmax.f32 %v3990, 0.0
        %v4348 = vmax.f32 %v3992, 0.0
        %v4349 = vmax.f32 %v4103, 0.0
        %v4350 = vmax.f32 %v4105, 0.0
        %v4351 = vmax.f32 %v3316, 0.0
        %v4352 = vmax.f32 %v3318, 0.0
        %v4353 = vmax.f32 %v3429, 0.0
        %v4354 = vmax.f32 %v3431, 0.0
        %v4355 = vmax.f32 %v3542, 0.0
        %v4356 = vmax.f32 %v3544, 0.0
        %v4357 = vmax.f32 %v3655, 0.0
        %v4358 = vmax.f32 %v3657, 0.0
        %v4359 = vmax.f32 %v3768, 0.0
        %v4360 = vmax.f32 %v3770, 0.0
        %v4361 = vmax.f32 %v3881, 0.0
        %v4362 = vmax.f32 %v3883, 0.0
        %v4363 = vmax.f32 %v3994, 0.0
        %v4364 = vmax.f32 %v3996, 0.0
        %v4365 = vmax.f32 %v4107, 0.0
        %v4366 = vmax.f32 %v4109, 0.0
        %v4367 = vpack.c.bf16 %v4127, %v4111
        %v4368 = vpack.c.bf16 %v4128, %v4112
        %v4369 = vpack.c.bf16 %v4129, %v4113
        %v4370 = vpack.c.bf16 %v4130, %v4114
        %v4371 = vpack.c.bf16 %v4131, %v4115
        %v4372 = vpack.c.bf16 %v4132, %v4116
        %v4373 = vpack.c.bf16 %v4133, %v4117
        %v4374 = vpack.c.bf16 %v4134, %v4118
        %v4375 = vpack.c.bf16 %v4135, %v4119
        %v4376 = vpack.c.bf16 %v4136, %v4120
        %v4377 = vpack.c.bf16 %v4137, %v4121
        %v4378 = vpack.c.bf16 %v4138, %v4122
        %v4379 = vpack.c.bf16 %v4139, %v4123
        %v4380 = vpack.c.bf16 %v4140, %v4124
        %v4381 = vpack.c.bf16 %v4141, %v4125
        %v4382 = vpack.c.bf16 %v4142, %v4126
        %v4383 = vpack.c.bf16 %v4159, %v4143
        %v4384 = vpack.c.bf16 %v4160, %v4144
        %v4385 = vpack.c.bf16 %v4161, %v4145
        %v4386 = vpack.c.bf16 %v4162, %v4146
        %v4387 = vpack.c.bf16 %v4163, %v4147
        %v4388 = vpack.c.bf16 %v4164, %v4148
        %v4389 = vpack.c.bf16 %v4165, %v4149
        %v4390 = vpack.c.bf16 %v4166, %v4150
        %v4391 = vpack.c.bf16 %v4167, %v4151
        %v4392 = vpack.c.bf16 %v4168, %v4152
        %v4393 = vpack.c.bf16 %v4169, %v4153
        %v4394 = vpack.c.bf16 %v4170, %v4154
        %v4395 = vpack.c.bf16 %v4171, %v4155
        %v4396 = vpack.c.bf16 %v4172, %v4156
        %v4397 = vpack.c.bf16 %v4173, %v4157
        %v4398 = vpack.c.bf16 %v4174, %v4158
        %v4399 = vpack.c.bf16 %v4191, %v4175
        %v4400 = vpack.c.bf16 %v4192, %v4176
        %v4401 = vpack.c.bf16 %v4193, %v4177
        %v4402 = vpack.c.bf16 %v4194, %v4178
        %v4403 = vpack.c.bf16 %v4195, %v4179
        %v4404 = vpack.c.bf16 %v4196, %v4180
        %v4405 = vpack.c.bf16 %v4197, %v4181
        %v4406 = vpack.c.bf16 %v4198, %v4182
        %v4407 = vpack.c.bf16 %v4199, %v4183
        %v4408 = vpack.c.bf16 %v4200, %v4184
        %v4409 = vpack.c.bf16 %v4201, %v4185
        %v4410 = vpack.c.bf16 %v4202, %v4186
        %v4411 = vpack.c.bf16 %v4203, %v4187
        %v4412 = vpack.c.bf16 %v4204, %v4188
        %v4413 = vpack.c.bf16 %v4205, %v4189
        %v4414 = vpack.c.bf16 %v4206, %v4190
        %v4415 = vpack.c.bf16 %v4223, %v4207
        %v4416 = vpack.c.bf16 %v4224, %v4208
        %v4417 = vpack.c.bf16 %v4225, %v4209
        %v4418 = vpack.c.bf16 %v4226, %v4210
        %v4419 = vpack.c.bf16 %v4227, %v4211
        %v4420 = vpack.c.bf16 %v4228, %v4212
        %v4421 = vpack.c.bf16 %v4229, %v4213
        %v4422 = vpack.c.bf16 %v4230, %v4214
        %v4423 = vpack.c.bf16 %v4231, %v4215
        %v4424 = vpack.c.bf16 %v4232, %v4216
        %v4425 = vpack.c.bf16 %v4233, %v4217
        %v4426 = vpack.c.bf16 %v4234, %v4218
        %v4427 = vpack.c.bf16 %v4235, %v4219
        %v4428 = vpack.c.bf16 %v4236, %v4220
        %v4429 = vpack.c.bf16 %v4237, %v4221
        %v4430 = vpack.c.bf16 %v4238, %v4222
        %v4431 = vpack.c.bf16 %v4255, %v4239
        %v4432 = vpack.c.bf16 %v4256, %v4240
        %v4433 = vpack.c.bf16 %v4257, %v4241
        %v4434 = vpack.c.bf16 %v4258, %v4242
        %v4435 = vpack.c.bf16 %v4259, %v4243
        %v4436 = vpack.c.bf16 %v4260, %v4244
        %v4437 = vpack.c.bf16 %v4261, %v4245
        %v4438 = vpack.c.bf16 %v4262, %v4246
        %v4439 = vpack.c.bf16 %v4263, %v4247
        %v4440 = vpack.c.bf16 %v4264, %v4248
        %v4441 = vpack.c.bf16 %v4265, %v4249
        %v4442 = vpack.c.bf16 %v4266, %v4250
        %v4443 = vpack.c.bf16 %v4267, %v4251
        %v4444 = vpack.c.bf16 %v4268, %v4252
        %v4445 = vpack.c.bf16 %v4269, %v4253
        %v4446 = vpack.c.bf16 %v4270, %v4254
        %v4447 = vpack.c.bf16 %v4287, %v4271
        %v4448 = vpack.c.bf16 %v4288, %v4272
        %v4449 = vpack.c.bf16 %v4289, %v4273
        %v4450 = vpack.c.bf16 %v4290, %v4274
        %v4451 = vpack.c.bf16 %v4291, %v4275
        %v4452 = vpack.c.bf16 %v4292, %v4276
        %v4453 = vpack.c.bf16 %v4293, %v4277
        %v4454 = vpack.c.bf16 %v4294, %v4278
        %v4455 = vpack.c.bf16 %v4295, %v4279
        %v4456 = vpack.c.bf16 %v4296, %v4280
        %v4457 = vpack.c.bf16 %v4297, %v4281
        %v4458 = vpack.c.bf16 %v4298, %v4282
        %v4459 = vpack.c.bf16 %v4299, %v4283
        %v4460 = vpack.c.bf16 %v4300, %v4284
        %v4461 = vpack.c.bf16 %v4301, %v4285
        %v4462 = vpack.c.bf16 %v4302, %v4286
        %v4463 = vpack.c.bf16 %v4319, %v4303
        %v4464 = vpack.c.bf16 %v4320, %v4304
        %v4465 = vpack.c.bf16 %v4321, %v4305
        %v4466 = vpack.c.bf16 %v4322, %v4306
        %v4467 = vpack.c.bf16 %v4323, %v4307
        %v4468 = vpack.c.bf16 %v4324, %v4308
        %v4469 = vpack.c.bf16 %v4325, %v4309
        %v4470 = vpack.c.bf16 %v4326, %v4310
        %v4471 = vpack.c.bf16 %v4327, %v4311
        %v4472 = vpack.c.bf16 %v4328, %v4312
        %v4473 = vpack.c.bf16 %v4329, %v4313
        %v4474 = vpack.c.bf16 %v4330, %v4314
        %v4475 = vpack.c.bf16 %v4331, %v4315
        %v4476 = vpack.c.bf16 %v4332, %v4316
        %v4477 = vpack.c.bf16 %v4333, %v4317
        %v4478 = vpack.c.bf16 %v4334, %v4318
        %v4479 = vpack.c.bf16 %v4351, %v4335
        %v4480 = vpack.c.bf16 %v4352, %v4336
        %v4481 = vpack.c.bf16 %v4353, %v4337
        %v4482 = vpack.c.bf16 %v4354, %v4338
        %v4483 = vpack.c.bf16 %v4355, %v4339
        %v4484 = vpack.c.bf16 %v4356, %v4340
        %v4485 = vpack.c.bf16 %v4357, %v4341
        %v4486 = vpack.c.bf16 %v4358, %v4342
        %v4487 = vpack.c.bf16 %v4359, %v4343
        %v4488 = vpack.c.bf16 %v4360, %v4344
        %v4489 = vpack.c.bf16 %v4361, %v4345
        %v4490 = vpack.c.bf16 %v4362, %v4346
        %v4491 = vpack.c.bf16 %v4363, %v4347
        %v4492 = vpack.c.bf16 %v4364, %v4348
        %v4493 = vpack.c.bf16 %v4365, %v4349
        %v4494 = vpack.c.bf16 %v4366, %v4350
        %v4495 = vld [vmem:[%s857] sm:$0xf]
        %v4496 = vld [vmem:[%s857 + $0x4] sm:$0xf]
        %v4497 = vld [vmem:[%s857 + $0x8] sm:$0xf]
        %v4498 = vld [vmem:[%s857 + $0xc] sm:$0xf]
        %v4499 = vld [vmem:[%s857 + $0x10] sm:$0xf]
        %v4500 = vld [vmem:[%s857 + $0x14] sm:$0xf]
        %v4501 = vld [vmem:[%s857 + $0x18] sm:$0xf]
        %v4502 = vld [vmem:[%s857 + $0x1c] sm:$0xf]
        %v4503 = vld [vmem:[%s857 + $0x20] sm:$0xf]
        %v4504 = vld [vmem:[%s857 + $0x24] sm:$0xf]
        %v4505 = vld [vmem:[%s857 + $0x28] sm:$0xf]
        %v4506 = vld [vmem:[%s857 + $0x2c] sm:$0xf]
        %v4507 = vld [vmem:[%s857 + $0x30] sm:$0xf]
        %v4508 = vld [vmem:[%s857 + $0x34] sm:$0xf]
        %v4509 = vld [vmem:[%s857 + $0x38] sm:$0xf]
        %v4510 = vld [vmem:[%s857 + $0x3c] sm:$0xf]
        %v4511 = vld [vmem:[%s857 + $0x40] sm:$0xf]
        %v4512 = vld [vmem:[%s857 + $0x44] sm:$0xf]
        %v4513 = vld [vmem:[%s857 + $0x48] sm:$0xf]
        %v4514 = vld [vmem:[%s857 + $0x4c] sm:$0xf]
        %v4515 = vld [vmem:[%s857 + $0x50] sm:$0xf]
        %v4516 = vld [vmem:[%s857 + $0x54] sm:$0xf]
        %v4517 = vld [vmem:[%s857 + $0x58] sm:$0xf]
        %v4518 = vld [vmem:[%s857 + $0x5c] sm:$0xf]
        %v4519 = vld [vmem:[%s857 + $0x60] sm:$0xf]
        %v4520 = vld [vmem:[%s857 + $0x64] sm:$0xf]
        %v4521 = vld [vmem:[%s857 + $0x68] sm:$0xf]
        %v4522 = vld [vmem:[%s857 + $0x6c] sm:$0xf]
        %v4523 = vld [vmem:[%s857 + $0x70] sm:$0xf]
        %v4524 = vld [vmem:[%s857 + $0x74] sm:$0xf]
        %v4525 = vld [vmem:[%s857 + $0x78] sm:$0xf]
        %v4526 = vld [vmem:[%s857 + $0x7c] sm:$0xf]
        %v4527 = vld [vmem:[%s857 + $0x80] sm:$0xf]
        %v4528 = vld [vmem:[%s857 + $0x84] sm:$0xf]
        %v4529 = vld [vmem:[%s857 + $0x88] sm:$0xf]
        %v4530 = vld [vmem:[%s857 + $0x8c] sm:$0xf]
        %v4531 = vld [vmem:[%s857 + $0x90] sm:$0xf]
        %v4532 = vld [vmem:[%s857 + $0x94] sm:$0xf]
        %v4533 = vld [vmem:[%s857 + $0x98] sm:$0xf]
        %v4534 = vld [vmem:[%s857 + $0x9c] sm:$0xf]
        %v4535 = vld [vmem:[%s857 + $0xa0] sm:$0xf]
        %v4536 = vld [vmem:[%s857 + $0xa4] sm:$0xf]
        %v4537 = vld [vmem:[%s857 + $0xa8] sm:$0xf]
        %v4538 = vld [vmem:[%s857 + $0xac] sm:$0xf]
        %v4539 = vld [vmem:[%s857 + $0xb0] sm:$0xf]
        %v4540 = vld [vmem:[%s857 + $0xb4] sm:$0xf]
        %v4541 = vld [vmem:[%s857 + $0xb8] sm:$0xf]
        %v4542 = vld [vmem:[%s857 + $0xbc] sm:$0xf]
        %v4543 = vld [vmem:[%s857 + $0xc0] sm:$0xf]
        %v4544 = vld [vmem:[%s857 + $0xc4] sm:$0xf]
        %v4545 = vld [vmem:[%s857 + $0xc8] sm:$0xf]
        %v4546 = vld [vmem:[%s857 + $0xcc] sm:$0xf]
        %v4547 = vld [vmem:[%s857 + $0xd0] sm:$0xf]
        %v4548 = vld [vmem:[%s857 + $0xd4] sm:$0xf]
        %v4549 = vld [vmem:[%s857 + $0xd8] sm:$0xf]
        %v4550 = vld [vmem:[%s857 + $0xdc] sm:$0xf]
        %v4551 = vld [vmem:[%s857 + $0xe0] sm:$0xf]
        %v4552 = vld [vmem:[%s857 + $0xe4] sm:$0xf]
        %v4553 = vld [vmem:[%s857 + $0xe8] sm:$0xf]
        %v4554 = vld [vmem:[%s857 + $0xec] sm:$0xf]
        %v4555 = vld [vmem:[%s857 + $0xf0] sm:$0xf]
        %v4556 = vld [vmem:[%s857 + $0xf4] sm:$0xf]
        %v4557 = vld [vmem:[%s857 + $0xf8] sm:$0xf]
        %v4558 = vld [vmem:[%s857 + $0xfc] sm:$0xf]
        %v4559 = vld [vmem:[%s857 + $0x100] sm:$0xf]
        %v4560 = vld [vmem:[%s857 + $0x104] sm:$0xf]
        %v4561 = vld [vmem:[%s857 + $0x108] sm:$0xf]
        %v4562 = vld [vmem:[%s857 + $0x10c] sm:$0xf]
        %v4563 = vld [vmem:[%s857 + $0x110] sm:$0xf]
        %v4564 = vld [vmem:[%s857 + $0x114] sm:$0xf]
        %v4565 = vld [vmem:[%s857 + $0x118] sm:$0xf]
        %v4566 = vld [vmem:[%s857 + $0x11c] sm:$0xf]
        %v4567 = vld [vmem:[%s857 + $0x120] sm:$0xf]
        %v4568 = vld [vmem:[%s857 + $0x124] sm:$0xf]
        %v4569 = vld [vmem:[%s857 + $0x128] sm:$0xf]
        %v4570 = vld [vmem:[%s857 + $0x12c] sm:$0xf]
        %v4571 = vld [vmem:[%s857 + $0x130] sm:$0xf]
        %v4572 = vld [vmem:[%s857 + $0x134] sm:$0xf]
        %v4573 = vld [vmem:[%s857 + $0x138] sm:$0xf]
        %v4574 = vld [vmem:[%s857 + $0x13c] sm:$0xf]
        %v4575 = vld [vmem:[%s857 + $0x140] sm:$0xf]
        %v4576 = vld [vmem:[%s857 + $0x144] sm:$0xf]
        %v4577 = vld [vmem:[%s857 + $0x148] sm:$0xf]
        %v4578 = vld [vmem:[%s857 + $0x14c] sm:$0xf]
        %v4579 = vld [vmem:[%s857 + $0x150] sm:$0xf]
        %v4580 = vld [vmem:[%s857 + $0x154] sm:$0xf]
        %v4581 = vld [vmem:[%s857 + $0x158] sm:$0xf]
        %v4582 = vld [vmem:[%s857 + $0x15c] sm:$0xf]
        %v4583 = vld [vmem:[%s857 + $0x160] sm:$0xf]
        %v4584 = vld [vmem:[%s857 + $0x164] sm:$0xf]
        %v4585 = vld [vmem:[%s857 + $0x168] sm:$0xf]
        %v4586 = vld [vmem:[%s857 + $0x16c] sm:$0xf]
        %v4587 = vld [vmem:[%s857 + $0x170] sm:$0xf]
        %v4588 = vld [vmem:[%s857 + $0x174] sm:$0xf]
        %v4589 = vld [vmem:[%s857 + $0x178] sm:$0xf]
        %v4590 = vld [vmem:[%s857 + $0x17c] sm:$0xf]
        %v4591 = vld [vmem:[%s857 + $0x180] sm:$0xf]
        %v4592 = vld [vmem:[%s857 + $0x184] sm:$0xf]
        %v4593 = vld [vmem:[%s857 + $0x188] sm:$0xf]
        %v4594 = vld [vmem:[%s857 + $0x18c] sm:$0xf]
        %v4595 = vld [vmem:[%s857 + $0x190] sm:$0xf]
        %v4596 = vld [vmem:[%s857 + $0x194] sm:$0xf]
        %v4597 = vld [vmem:[%s857 + $0x198] sm:$0xf]
        %v4598 = vld [vmem:[%s857 + $0x19c] sm:$0xf]
        %v4599 = vld [vmem:[%s857 + $0x1a0] sm:$0xf]
        %v4600 = vld [vmem:[%s857 + $0x1a4] sm:$0xf]
        %v4601 = vld [vmem:[%s857 + $0x1a8] sm:$0xf]
        %v4602 = vld [vmem:[%s857 + $0x1ac] sm:$0xf]
        %v4603 = vld [vmem:[%s857 + $0x1b0] sm:$0xf]
        %v4604 = vld [vmem:[%s857 + $0x1b4] sm:$0xf]
        %v4605 = vld [vmem:[%s857 + $0x1b8] sm:$0xf]
        %v4606 = vld [vmem:[%s857 + $0x1bc] sm:$0xf]
        %v4607 = vld [vmem:[%s857 + $0x1c0] sm:$0xf]
        %v4608 = vld [vmem:[%s857 + $0x1c4] sm:$0xf]
        %v4609 = vld [vmem:[%s857 + $0x1c8] sm:$0xf]
        %v4610 = vld [vmem:[%s857 + $0x1cc] sm:$0xf]
        %v4611 = vld [vmem:[%s857 + $0x1d0] sm:$0xf]
        %v4612 = vld [vmem:[%s857 + $0x1d4] sm:$0xf]
        %v4613 = vld [vmem:[%s857 + $0x1d8] sm:$0xf]
        %v4614 = vld [vmem:[%s857 + $0x1dc] sm:$0xf]
        %v4615 = vld [vmem:[%s857 + $0x1e0] sm:$0xf]
        %v4616 = vld [vmem:[%s857 + $0x1e4] sm:$0xf]
        %v4617 = vld [vmem:[%s857 + $0x1e8] sm:$0xf]
        %v4618 = vld [vmem:[%s857 + $0x1ec] sm:$0xf]
        %v4619 = vld [vmem:[%s857 + $0x1f0] sm:$0xf]
        %v4620 = vld [vmem:[%s857 + $0x1f4] sm:$0xf]
        %v4621 = vld [vmem:[%s857 + $0x1f8] sm:$0xf]
        %v4622 = vld [vmem:[%s857 + $0x1fc] sm:$0xf]
        %v4623 = vld [vmem:[%s857 + $0x200] sm:$0xf]
        %v4624 = vld [vmem:[%s857 + $0x204] sm:$0xf]
        %v4625 = vld [vmem:[%s857 + $0x208] sm:$0xf]
        %v4626 = vld [vmem:[%s857 + $0x20c] sm:$0xf]
        %v4627 = vld [vmem:[%s857 + $0x210] sm:$0xf]
        %v4628 = vld [vmem:[%s857 + $0x214] sm:$0xf]
        %v4629 = vld [vmem:[%s857 + $0x218] sm:$0xf]
        %v4630 = vld [vmem:[%s857 + $0x21c] sm:$0xf]
        %v4631 = vld [vmem:[%s857 + $0x220] sm:$0xf]
        %v4632 = vld [vmem:[%s857 + $0x224] sm:$0xf]
        %v4633 = vld [vmem:[%s857 + $0x228] sm:$0xf]
        %v4634 = vld [vmem:[%s857 + $0x22c] sm:$0xf]
        %v4635 = vld [vmem:[%s857 + $0x230] sm:$0xf]
        %v4636 = vld [vmem:[%s857 + $0x234] sm:$0xf]
        %v4637 = vld [vmem:[%s857 + $0x238] sm:$0xf]
        %v4638 = vld [vmem:[%s857 + $0x23c] sm:$0xf]
        %v4639 = vld [vmem:[%s857 + $0x240] sm:$0xf]
        %v4640 = vld [vmem:[%s857 + $0x244] sm:$0xf]
        %v4641 = vld [vmem:[%s857 + $0x248] sm:$0xf]
        %v4642 = vld [vmem:[%s857 + $0x24c] sm:$0xf]
        %v4643 = vld [vmem:[%s857 + $0x250] sm:$0xf]
        %v4644 = vld [vmem:[%s857 + $0x254] sm:$0xf]
        %v4645 = vld [vmem:[%s857 + $0x258] sm:$0xf]
        %v4646 = vld [vmem:[%s857 + $0x25c] sm:$0xf]
        %v4647 = vld [vmem:[%s857 + $0x260] sm:$0xf]
        %v4648 = vld [vmem:[%s857 + $0x264] sm:$0xf]
        %v4649 = vld [vmem:[%s857 + $0x268] sm:$0xf]
        %v4650 = vld [vmem:[%s857 + $0x26c] sm:$0xf]
        %v4651 = vld [vmem:[%s857 + $0x270] sm:$0xf]
        %v4652 = vld [vmem:[%s857 + $0x274] sm:$0xf]
        %v4653 = vld [vmem:[%s857 + $0x278] sm:$0xf]
        %v4654 = vld [vmem:[%s857 + $0x27c] sm:$0xf]
        %v4655 = vld [vmem:[%s857 + $0x280] sm:$0xf]
        %v4656 = vld [vmem:[%s857 + $0x284] sm:$0xf]
        %v4657 = vld [vmem:[%s857 + $0x288] sm:$0xf]
        %v4658 = vld [vmem:[%s857 + $0x28c] sm:$0xf]
        %v4659 = vld [vmem:[%s857 + $0x290] sm:$0xf]
        %v4660 = vld [vmem:[%s857 + $0x294] sm:$0xf]
        %v4661 = vld [vmem:[%s857 + $0x298] sm:$0xf]
        %v4662 = vld [vmem:[%s857 + $0x29c] sm:$0xf]
        %v4663 = vld [vmem:[%s857 + $0x2a0] sm:$0xf]
        %v4664 = vld [vmem:[%s857 + $0x2a4] sm:$0xf]
        %v4665 = vld [vmem:[%s857 + $0x2a8] sm:$0xf]
        %v4666 = vld [vmem:[%s857 + $0x2ac] sm:$0xf]
        %v4667 = vld [vmem:[%s857 + $0x2b0] sm:$0xf]
        %v4668 = vld [vmem:[%s857 + $0x2b4] sm:$0xf]
        %v4669 = vld [vmem:[%s857 + $0x2b8] sm:$0xf]
        %v4670 = vld [vmem:[%s857 + $0x2bc] sm:$0xf]
        %v4671 = vld [vmem:[%s857 + $0x2c0] sm:$0xf]
        %v4672 = vld [vmem:[%s857 + $0x2c4] sm:$0xf]
        %v4673 = vld [vmem:[%s857 + $0x2c8] sm:$0xf]
        %v4674 = vld [vmem:[%s857 + $0x2cc] sm:$0xf]
        %v4675 = vld [vmem:[%s857 + $0x2d0] sm:$0xf]
        %v4676 = vld [vmem:[%s857 + $0x2d4] sm:$0xf]
        %v4677 = vld [vmem:[%s857 + $0x2d8] sm:$0xf]
        %v4678 = vld [vmem:[%s857 + $0x2dc] sm:$0xf]
        %v4679 = vld [vmem:[%s857 + $0x2e0] sm:$0xf]
        %v4680 = vld [vmem:[%s857 + $0x2e4] sm:$0xf]
        %v4681 = vld [vmem:[%s857 + $0x2e8] sm:$0xf]
        %v4682 = vld [vmem:[%s857 + $0x2ec] sm:$0xf]
        %v4683 = vld [vmem:[%s857 + $0x2f0] sm:$0xf]
        %v4684 = vld [vmem:[%s857 + $0x2f4] sm:$0xf]
        %v4685 = vld [vmem:[%s857 + $0x2f8] sm:$0xf]
        %v4686 = vld [vmem:[%s857 + $0x2fc] sm:$0xf]
        %v4687 = vld [vmem:[%s857 + $0x300] sm:$0xf]
        %v4688 = vld [vmem:[%s857 + $0x304] sm:$0xf]
        %v4689 = vld [vmem:[%s857 + $0x308] sm:$0xf]
        %v4690 = vld [vmem:[%s857 + $0x30c] sm:$0xf]
        %v4691 = vld [vmem:[%s857 + $0x310] sm:$0xf]
        %v4692 = vld [vmem:[%s857 + $0x314] sm:$0xf]
        %v4693 = vld [vmem:[%s857 + $0x318] sm:$0xf]
        %v4694 = vld [vmem:[%s857 + $0x31c] sm:$0xf]
        %v4695 = vld [vmem:[%s857 + $0x320] sm:$0xf]
        %v4696 = vld [vmem:[%s857 + $0x324] sm:$0xf]
        %v4697 = vld [vmem:[%s857 + $0x328] sm:$0xf]
        %v4698 = vld [vmem:[%s857 + $0x32c] sm:$0xf]
        %v4699 = vld [vmem:[%s857 + $0x330] sm:$0xf]
        %v4700 = vld [vmem:[%s857 + $0x334] sm:$0xf]
        %v4701 = vld [vmem:[%s857 + $0x338] sm:$0xf]
        %v4702 = vld [vmem:[%s857 + $0x33c] sm:$0xf]
        %v4703 = vld [vmem:[%s857 + $0x340] sm:$0xf]
        %v4704 = vld [vmem:[%s857 + $0x344] sm:$0xf]
        %v4705 = vld [vmem:[%s857 + $0x348] sm:$0xf]
        %v4706 = vld [vmem:[%s857 + $0x34c] sm:$0xf]
        %v4707 = vld [vmem:[%s857 + $0x350] sm:$0xf]
        %v4708 = vld [vmem:[%s857 + $0x354] sm:$0xf]
        %v4709 = vld [vmem:[%s857 + $0x358] sm:$0xf]
        %v4710 = vld [vmem:[%s857 + $0x35c] sm:$0xf]
        %v4711 = vld [vmem:[%s857 + $0x360] sm:$0xf]
        %v4712 = vld [vmem:[%s857 + $0x364] sm:$0xf]
        %v4713 = vld [vmem:[%s857 + $0x368] sm:$0xf]
        %v4714 = vld [vmem:[%s857 + $0x36c] sm:$0xf]
        %v4715 = vld [vmem:[%s857 + $0x370] sm:$0xf]
        %v4716 = vld [vmem:[%s857 + $0x374] sm:$0xf]
        %v4717 = vld [vmem:[%s857 + $0x378] sm:$0xf]
        %v4718 = vld [vmem:[%s857 + $0x37c] sm:$0xf]
        %v4719 = vld [vmem:[%s857 + $0x380] sm:$0xf]
        %v4720 = vld [vmem:[%s857 + $0x384] sm:$0xf]
        %v4721 = vld [vmem:[%s857 + $0x388] sm:$0xf]
        %v4722 = vld [vmem:[%s857 + $0x38c] sm:$0xf]
        %v4723 = vld [vmem:[%s857 + $0x390] sm:$0xf]
        %v4724 = vld [vmem:[%s857 + $0x394] sm:$0xf]
        %v4725 = vld [vmem:[%s857 + $0x398] sm:$0xf]
        %v4726 = vld [vmem:[%s857 + $0x39c] sm:$0xf]
        %v4727 = vld [vmem:[%s857 + $0x3a0] sm:$0xf]
        %v4728 = vld [vmem:[%s857 + $0x3a4] sm:$0xf]
        %v4729 = vld [vmem:[%s857 + $0x3a8] sm:$0xf]
        %v4730 = vld [vmem:[%s857 + $0x3ac] sm:$0xf]
        %v4731 = vld [vmem:[%s857 + $0x3b0] sm:$0xf]
        %v4732 = vld [vmem:[%s857 + $0x3b4] sm:$0xf]
        %v4733 = vld [vmem:[%s857 + $0x3b8] sm:$0xf]
        %v4734 = vld [vmem:[%s857 + $0x3bc] sm:$0xf]
        %v4735 = vld [vmem:[%s857 + $0x3c0] sm:$0xf]
        %v4736 = vld [vmem:[%s857 + $0x3c4] sm:$0xf]
        %v4737 = vld [vmem:[%s857 + $0x3c8] sm:$0xf]
        %v4738 = vld [vmem:[%s857 + $0x3cc] sm:$0xf]
        %v4739 = vld [vmem:[%s857 + $0x3d0] sm:$0xf]
        %v4740 = vld [vmem:[%s857 + $0x3d4] sm:$0xf]
        %v4741 = vld [vmem:[%s857 + $0x3d8] sm:$0xf]
        %v4742 = vld [vmem:[%s857 + $0x3dc] sm:$0xf]
        %v4743 = vld [vmem:[%s857 + $0x3e0] sm:$0xf]
        %v4744 = vld [vmem:[%s857 + $0x3e4] sm:$0xf]
        %v4745 = vld [vmem:[%s857 + $0x3e8] sm:$0xf]
        %v4746 = vld [vmem:[%s857 + $0x3ec] sm:$0xf]
        %v4747 = vld [vmem:[%s857 + $0x3f0] sm:$0xf]
        %v4748 = vld [vmem:[%s857 + $0x3f4] sm:$0xf]
        %v4749 = vld [vmem:[%s857 + $0x3f8] sm:$0xf]
        %v4750 = vld [vmem:[%s857 + $0x3fc] sm:$0xf]
        %v4751 = vld [vmem:[%s860] sm:$0x1]
        %v4753 = vlaneseq
        %v4754 = vshrl.u32 %v4753, 7
        %v4755 = vsub.s32 0, %v4754
        %v4756 = vrot.slane %v4751, %v4755
        %v5014 = vunpack.c.l.b16 %v4495
        %v5015 = vunpack.c.l.b16 %v4496
        %v5016 = vunpack.c.l.b16 %v4497
        %v5017 = vunpack.c.l.b16 %v4498
        %v5018 = vunpack.c.l.b16 %v4499
        %v5019 = vunpack.c.l.b16 %v4500
        %v5020 = vunpack.c.l.b16 %v4501
        %v5021 = vunpack.c.l.b16 %v4502
        %v5022 = vunpack.c.l.b16 %v4503
        %v5023 = vunpack.c.l.b16 %v4504
        %v5024 = vunpack.c.l.b16 %v4505
        %v5025 = vunpack.c.l.b16 %v4506
        %v5026 = vunpack.c.l.b16 %v4507
        %v5027 = vunpack.c.l.b16 %v4508
        %v5028 = vunpack.c.l.b16 %v4509
        %v5029 = vunpack.c.l.b16 %v4510
        %v5030 = vunpack.c.l.b16 %v4511
        %v5031 = vunpack.c.l.b16 %v4512
        %v5032 = vunpack.c.l.b16 %v4513
        %v5033 = vunpack.c.l.b16 %v4514
        %v5034 = vunpack.c.l.b16 %v4515
        %v5035 = vunpack.c.l.b16 %v4516
        %v5036 = vunpack.c.l.b16 %v4517
        %v5037 = vunpack.c.l.b16 %v4518
        %v5038 = vunpack.c.l.b16 %v4519
        %v5039 = vunpack.c.l.b16 %v4520
        %v5040 = vunpack.c.l.b16 %v4521
        %v5041 = vunpack.c.l.b16 %v4522
        %v5042 = vunpack.c.l.b16 %v4523
        %v5043 = vunpack.c.l.b16 %v4524
        %v5044 = vunpack.c.l.b16 %v4525
        %v5045 = vunpack.c.l.b16 %v4526
        %v5046 = vunpack.c.l.b16 %v4527
        %v5047 = vunpack.c.l.b16 %v4528
        %v5048 = vunpack.c.l.b16 %v4529
        %v5049 = vunpack.c.l.b16 %v4530
        %v5050 = vunpack.c.l.b16 %v4531
        %v5051 = vunpack.c.l.b16 %v4532
        %v5052 = vunpack.c.l.b16 %v4533
        %v5053 = vunpack.c.l.b16 %v4534
        %v5054 = vunpack.c.l.b16 %v4535
        %v5055 = vunpack.c.l.b16 %v4536
        %v5056 = vunpack.c.l.b16 %v4537
        %v5057 = vunpack.c.l.b16 %v4538
        %v5058 = vunpack.c.l.b16 %v4539
        %v5059 = vunpack.c.l.b16 %v4540
        %v5060 = vunpack.c.l.b16 %v4541
        %v5061 = vunpack.c.l.b16 %v4542
        %v5062 = vunpack.c.l.b16 %v4543
        %v5063 = vunpack.c.l.b16 %v4544
        %v5064 = vunpack.c.l.b16 %v4545
        %v5065 = vunpack.c.l.b16 %v4546
        %v5066 = vunpack.c.l.b16 %v4547
        %v5067 = vunpack.c.l.b16 %v4548
        %v5068 = vunpack.c.l.b16 %v4549
        %v5069 = vunpack.c.l.b16 %v4550
        %v5070 = vunpack.c.l.b16 %v4551
        %v5071 = vunpack.c.l.b16 %v4552
        %v5072 = vunpack.c.l.b16 %v4553
        %v5073 = vunpack.c.l.b16 %v4554
        %v5074 = vunpack.c.l.b16 %v4555
        %v5075 = vunpack.c.l.b16 %v4556
        %v5076 = vunpack.c.l.b16 %v4557
        %v5077 = vunpack.c.l.b16 %v4558
        %v5078 = vunpack.c.l.b16 %v4559
        %v5079 = vunpack.c.l.b16 %v4560
        %v5080 = vunpack.c.l.b16 %v4561
        %v5081 = vunpack.c.l.b16 %v4562
        %v5082 = vunpack.c.l.b16 %v4563
        %v5083 = vunpack.c.l.b16 %v4564
        %v5084 = vunpack.c.l.b16 %v4565
        %v5085 = vunpack.c.l.b16 %v4566
        %v5086 = vunpack.c.l.b16 %v4567
        %v5087 = vunpack.c.l.b16 %v4568
        %v5088 = vunpack.c.l.b16 %v4569
        %v5089 = vunpack.c.l.b16 %v4570
        %v5090 = vunpack.c.l.b16 %v4571
        %v5091 = vunpack.c.l.b16 %v4572
        %v5092 = vunpack.c.l.b16 %v4573
        %v5093 = vunpack.c.l.b16 %v4574
        %v5094 = vunpack.c.l.b16 %v4575
        %v5095 = vunpack.c.l.b16 %v4576
        %v5096 = vunpack.c.l.b16 %v4577
        %v5097 = vunpack.c.l.b16 %v4578
        %v5098 = vunpack.c.l.b16 %v4579
        %v5099 = vunpack.c.l.b16 %v4580
        %v5100 = vunpack.c.l.b16 %v4581
        %v5101 = vunpack.c.l.b16 %v4582
        %v5102 = vunpack.c.l.b16 %v4583
        %v5103 = vunpack.c.l.b16 %v4584
        %v5104 = vunpack.c.l.b16 %v4585
        %v5105 = vunpack.c.l.b16 %v4586
        %v5106 = vunpack.c.l.b16 %v4587
        %v5107 = vunpack.c.l.b16 %v4588
        %v5108 = vunpack.c.l.b16 %v4589
        %v5109 = vunpack.c.l.b16 %v4590
        %v5110 = vunpack.c.l.b16 %v4591
        %v5111 = vunpack.c.l.b16 %v4592
        %v5112 = vunpack.c.l.b16 %v4593
        %v5113 = vunpack.c.l.b16 %v4594
        %v5114 = vunpack.c.l.b16 %v4595
        %v5115 = vunpack.c.l.b16 %v4596
        %v5116 = vunpack.c.l.b16 %v4597
        %v5117 = vunpack.c.l.b16 %v4598
        %v5118 = vunpack.c.l.b16 %v4599
        %v5119 = vunpack.c.l.b16 %v4600
        %v5120 = vunpack.c.l.b16 %v4601
        %v5121 = vunpack.c.l.b16 %v4602
        %v5122 = vunpack.c.l.b16 %v4603
        %v5123 = vunpack.c.l.b16 %v4604
        %v5124 = vunpack.c.l.b16 %v4605
        %v5125 = vunpack.c.l.b16 %v4606
        %v5126 = vunpack.c.l.b16 %v4607
        %v5127 = vunpack.c.l.b16 %v4608
        %v5128 = vunpack.c.l.b16 %v4609
        %v5129 = vunpack.c.l.b16 %v4610
        %v5130 = vunpack.c.l.b16 %v4611
        %v5131 = vunpack.c.l.b16 %v4612
        %v5132 = vunpack.c.l.b16 %v4613
        %v5133 = vunpack.c.l.b16 %v4614
        %v5134 = vunpack.c.l.b16 %v4615
        %v5135 = vunpack.c.l.b16 %v4616
        %v5136 = vunpack.c.l.b16 %v4617
        %v5137 = vunpack.c.l.b16 %v4618
        %v5138 = vunpack.c.l.b16 %v4619
        %v5139 = vunpack.c.l.b16 %v4620
        %v5140 = vunpack.c.l.b16 %v4621
        %v5141 = vunpack.c.l.b16 %v4622
        %v5142 = vunpack.c.l.b16 %v4623
        %v5143 = vunpack.c.l.b16 %v4624
        %v5144 = vunpack.c.l.b16 %v4625
        %v5145 = vunpack.c.l.b16 %v4626
        %v5146 = vunpack.c.l.b16 %v4627
        %v5147 = vunpack.c.l.b16 %v4628
        %v5148 = vunpack.c.l.b16 %v4629
        %v5149 = vunpack.c.l.b16 %v4630
        %v5150 = vunpack.c.l.b16 %v4631
        %v5151 = vunpack.c.l.b16 %v4632
        %v5152 = vunpack.c.l.b16 %v4633
        %v5153 = vunpack.c.l.b16 %v4634
        %v5154 = vunpack.c.l.b16 %v4635
        %v5155 = vunpack.c.l.b16 %v4636
        %v5156 = vunpack.c.l.b16 %v4637
        %v5157 = vunpack.c.l.b16 %v4638
        %v5158 = vunpack.c.l.b16 %v4639
        %v5159 = vunpack.c.l.b16 %v4640
        %v5160 = vunpack.c.l.b16 %v4641
        %v5161 = vunpack.c.l.b16 %v4642
        %v5162 = vunpack.c.l.b16 %v4643
        %v5163 = vunpack.c.l.b16 %v4644
        %v5164 = vunpack.c.l.b16 %v4645
        %v5165 = vunpack.c.l.b16 %v4646
        %v5166 = vunpack.c.l.b16 %v4647
        %v5167 = vunpack.c.l.b16 %v4648
        %v5168 = vunpack.c.l.b16 %v4649
        %v5169 = vunpack.c.l.b16 %v4650
        %v5170 = vunpack.c.l.b16 %v4651
        %v5171 = vunpack.c.l.b16 %v4652
        %v5172 = vunpack.c.l.b16 %v4653
        %v5173 = vunpack.c.l.b16 %v4654
        %v5174 = vunpack.c.l.b16 %v4655
        %v5175 = vunpack.c.l.b16 %v4656
        %v5176 = vunpack.c.l.b16 %v4657
        %v5177 = vunpack.c.l.b16 %v4658
        %v5178 = vunpack.c.l.b16 %v4659
        %v5179 = vunpack.c.l.b16 %v4660
        %v5180 = vunpack.c.l.b16 %v4661
        %v5181 = vunpack.c.l.b16 %v4662
        %v5182 = vunpack.c.l.b16 %v4663
        %v5183 = vunpack.c.l.b16 %v4664
        %v5184 = vunpack.c.l.b16 %v4665
        %v5185 = vunpack.c.l.b16 %v4666
        %v5186 = vunpack.c.l.b16 %v4667
        %v5187 = vunpack.c.l.b16 %v4668
        %v5188 = vunpack.c.l.b16 %v4669
        %v5189 = vunpack.c.l.b16 %v4670
        %v5190 = vunpack.c.l.b16 %v4671
        %v5191 = vunpack.c.l.b16 %v4672
        %v5192 = vunpack.c.l.b16 %v4673
        %v5193 = vunpack.c.l.b16 %v4674
        %v5194 = vunpack.c.l.b16 %v4675
        %v5195 = vunpack.c.l.b16 %v4676
        %v5196 = vunpack.c.l.b16 %v4677
        %v5197 = vunpack.c.l.b16 %v4678
        %v5198 = vunpack.c.l.b16 %v4679
        %v5199 = vunpack.c.l.b16 %v4680
        %v5200 = vunpack.c.l.b16 %v4681
        %v5201 = vunpack.c.l.b16 %v4682
        %v5202 = vunpack.c.l.b16 %v4683
        %v5203 = vunpack.c.l.b16 %v4684
        %v5204 = vunpack.c.l.b16 %v4685
        %v5205 = vunpack.c.l.b16 %v4686
        %v5206 = vunpack.c.l.b16 %v4687
        %v5207 = vunpack.c.l.b16 %v4688
        %v5208 = vunpack.c.l.b16 %v4689
        %v5209 = vunpack.c.l.b16 %v4690
        %v5210 = vunpack.c.l.b16 %v4691
        %v5211 = vunpack.c.l.b16 %v4692
        %v5212 = vunpack.c.l.b16 %v4693
        %v5213 = vunpack.c.l.b16 %v4694
        %v5214 = vunpack.c.l.b16 %v4695
        %v5215 = vunpack.c.l.b16 %v4696
        %v5216 = vunpack.c.l.b16 %v4697
        %v5217 = vunpack.c.l.b16 %v4698
        %v5218 = vunpack.c.l.b16 %v4699
        %v5219 = vunpack.c.l.b16 %v4700
        %v5220 = vunpack.c.l.b16 %v4701
        %v5221 = vunpack.c.l.b16 %v4702
        %v5222 = vunpack.c.l.b16 %v4703
        %v5223 = vunpack.c.l.b16 %v4704
        %v5224 = vunpack.c.l.b16 %v4705
        %v5225 = vunpack.c.l.b16 %v4706
        %v5226 = vunpack.c.l.b16 %v4707
        %v5227 = vunpack.c.l.b16 %v4708
        %v5228 = vunpack.c.l.b16 %v4709
        %v5229 = vunpack.c.l.b16 %v4710
        %v5230 = vunpack.c.l.b16 %v4711
        %v5231 = vunpack.c.l.b16 %v4712
        %v5232 = vunpack.c.l.b16 %v4713
        %v5233 = vunpack.c.l.b16 %v4714
        %v5234 = vunpack.c.l.b16 %v4715
        %v5235 = vunpack.c.l.b16 %v4716
        %v5236 = vunpack.c.l.b16 %v4717
        %v5237 = vunpack.c.l.b16 %v4718
        %v5238 = vunpack.c.l.b16 %v4719
        %v5239 = vunpack.c.l.b16 %v4720
        %v5240 = vunpack.c.l.b16 %v4721
        %v5241 = vunpack.c.l.b16 %v4722
        %v5242 = vunpack.c.l.b16 %v4723
        %v5243 = vunpack.c.l.b16 %v4724
        %v5244 = vunpack.c.l.b16 %v4725
        %v5245 = vunpack.c.l.b16 %v4726
        %v5246 = vunpack.c.l.b16 %v4727
        %v5247 = vunpack.c.l.b16 %v4728
        %v5248 = vunpack.c.l.b16 %v4729
        %v5249 = vunpack.c.l.b16 %v4730
        %v5250 = vunpack.c.l.b16 %v4731
        %v5251 = vunpack.c.l.b16 %v4732
        %v5252 = vunpack.c.l.b16 %v4733
        %v5253 = vunpack.c.l.b16 %v4734
        %v5254 = vunpack.c.l.b16 %v4735
        %v5255 = vunpack.c.l.b16 %v4736
        %v5256 = vunpack.c.l.b16 %v4737
        %v5257 = vunpack.c.l.b16 %v4738
        %v5258 = vunpack.c.l.b16 %v4739
        %v5259 = vunpack.c.l.b16 %v4740
        %v5260 = vunpack.c.l.b16 %v4741
        %v5261 = vunpack.c.l.b16 %v4742
        %v5262 = vunpack.c.l.b16 %v4743
        %v5263 = vunpack.c.l.b16 %v4744
        %v5264 = vunpack.c.l.b16 %v4745
        %v5265 = vunpack.c.l.b16 %v4746
        %v5266 = vunpack.c.l.b16 %v4747
        %v5267 = vunpack.c.l.b16 %v4748
        %v5268 = vunpack.c.l.b16 %v4749
        %v5269 = vunpack.c.l.b16 %v4750
        %v5270 = vpack.c.b16 %v5015, %v5014
        %v5271 = vpack.c.b16 %v5017, %v5016
        %v5272 = vpack.c.b16 %v5019, %v5018
        %v5273 = vpack.c.b16 %v5021, %v5020
        %v5274 = vpack.c.b16 %v5023, %v5022
        %v5275 = vpack.c.b16 %v5025, %v5024
        %v5276 = vpack.c.b16 %v5027, %v5026
        %v5277 = vpack.c.b16 %v5029, %v5028
        %v5278 = vpack.c.b16 %v5031, %v5030
        %v5279 = vpack.c.b16 %v5033, %v5032
        %v5280 = vpack.c.b16 %v5035, %v5034
        %v5281 = vpack.c.b16 %v5037, %v5036
        %v5282 = vpack.c.b16 %v5039, %v5038
        %v5283 = vpack.c.b16 %v5041, %v5040
        %v5284 = vpack.c.b16 %v5043, %v5042
        %v5285 = vpack.c.b16 %v5045, %v5044
        %v5286 = vpack.c.b16 %v5047, %v5046
        %v5287 = vpack.c.b16 %v5049, %v5048
        %v5288 = vpack.c.b16 %v5051, %v5050
        %v5289 = vpack.c.b16 %v5053, %v5052
        %v5290 = vpack.c.b16 %v5055, %v5054
        %v5291 = vpack.c.b16 %v5057, %v5056
        %v5292 = vpack.c.b16 %v5059, %v5058
        %v5293 = vpack.c.b16 %v5061, %v5060
        %v5294 = vpack.c.b16 %v5063, %v5062
        %v5295 = vpack.c.b16 %v5065, %v5064
        %v5296 = vpack.c.b16 %v5067, %v5066
        %v5297 = vpack.c.b16 %v5069, %v5068
        %v5298 = vpack.c.b16 %v5071, %v5070
        %v5299 = vpack.c.b16 %v5073, %v5072
        %v5300 = vpack.c.b16 %v5075, %v5074
        %v5301 = vpack.c.b16 %v5077, %v5076
        %v5302 = vpack.c.b16 %v5079, %v5078
        %v5303 = vpack.c.b16 %v5081, %v5080
        %v5304 = vpack.c.b16 %v5083, %v5082
        %v5305 = vpack.c.b16 %v5085, %v5084
        %v5306 = vpack.c.b16 %v5087, %v5086
        %v5307 = vpack.c.b16 %v5089, %v5088
        %v5308 = vpack.c.b16 %v5091, %v5090
        %v5309 = vpack.c.b16 %v5093, %v5092
        %v5310 = vpack.c.b16 %v5095, %v5094
        %v5311 = vpack.c.b16 %v5097, %v5096
        %v5312 = vpack.c.b16 %v5099, %v5098
        %v5313 = vpack.c.b16 %v5101, %v5100
        %v5314 = vpack.c.b16 %v5103, %v5102
        %v5315 = vpack.c.b16 %v5105, %v5104
        %v5316 = vpack.c.b16 %v5107, %v5106
        %v5317 = vpack.c.b16 %v5109, %v5108
        %v5318 = vpack.c.b16 %v5111, %v5110
        %v5319 = vpack.c.b16 %v5113, %v5112
        %v5320 = vpack.c.b16 %v5115, %v5114
        %v5321 = vpack.c.b16 %v5117, %v5116
        %v5322 = vpack.c.b16 %v5119, %v5118
        %v5323 = vpack.c.b16 %v5121, %v5120
        %v5324 = vpack.c.b16 %v5123, %v5122
        %v5325 = vpack.c.b16 %v5125, %v5124
        %v5326 = vpack.c.b16 %v5127, %v5126
        %v5327 = vpack.c.b16 %v5129, %v5128
        %v5328 = vpack.c.b16 %v5131, %v5130
        %v5329 = vpack.c.b16 %v5133, %v5132
        %v5330 = vpack.c.b16 %v5135, %v5134
        %v5331 = vpack.c.b16 %v5137, %v5136
        %v5332 = vpack.c.b16 %v5139, %v5138
        %v5333 = vpack.c.b16 %v5141, %v5140
        %v5334 = vpack.c.b16 %v5143, %v5142
        %v5335 = vpack.c.b16 %v5145, %v5144
        %v5336 = vpack.c.b16 %v5147, %v5146
        %v5337 = vpack.c.b16 %v5149, %v5148
        %v5338 = vpack.c.b16 %v5151, %v5150
        %v5339 = vpack.c.b16 %v5153, %v5152
        %v5340 = vpack.c.b16 %v5155, %v5154
        %v5341 = vpack.c.b16 %v5157, %v5156
        %v5342 = vpack.c.b16 %v5159, %v5158
        %v5343 = vpack.c.b16 %v5161, %v5160
        %v5344 = vpack.c.b16 %v5163, %v5162
        %v5345 = vpack.c.b16 %v5165, %v5164
        %v5346 = vpack.c.b16 %v5167, %v5166
        %v5347 = vpack.c.b16 %v5169, %v5168
        %v5348 = vpack.c.b16 %v5171, %v5170
        %v5349 = vpack.c.b16 %v5173, %v5172
        %v5350 = vpack.c.b16 %v5175, %v5174
        %v5351 = vpack.c.b16 %v5177, %v5176
        %v5352 = vpack.c.b16 %v5179, %v5178
        %v5353 = vpack.c.b16 %v5181, %v5180
        %v5354 = vpack.c.b16 %v5183, %v5182
        %v5355 = vpack.c.b16 %v5185, %v5184
        %v5356 = vpack.c.b16 %v5187, %v5186
        %v5357 = vpack.c.b16 %v5189, %v5188
        %v5358 = vpack.c.b16 %v5191, %v5190
        %v5359 = vpack.c.b16 %v5193, %v5192
        %v5360 = vpack.c.b16 %v5195, %v5194
        %v5361 = vpack.c.b16 %v5197, %v5196
        %v5362 = vpack.c.b16 %v5199, %v5198
        %v5363 = vpack.c.b16 %v5201, %v5200
        %v5364 = vpack.c.b16 %v5203, %v5202
        %v5365 = vpack.c.b16 %v5205, %v5204
        %v5366 = vpack.c.b16 %v5207, %v5206
        %v5367 = vpack.c.b16 %v5209, %v5208
        %v5368 = vpack.c.b16 %v5211, %v5210
        %v5369 = vpack.c.b16 %v5213, %v5212
        %v5370 = vpack.c.b16 %v5215, %v5214
        %v5371 = vpack.c.b16 %v5217, %v5216
        %v5372 = vpack.c.b16 %v5219, %v5218
        %v5373 = vpack.c.b16 %v5221, %v5220
        %v5374 = vpack.c.b16 %v5223, %v5222
        %v5375 = vpack.c.b16 %v5225, %v5224
        %v5376 = vpack.c.b16 %v5227, %v5226
        %v5377 = vpack.c.b16 %v5229, %v5228
        %v5378 = vpack.c.b16 %v5231, %v5230
        %v5379 = vpack.c.b16 %v5233, %v5232
        %v5380 = vpack.c.b16 %v5235, %v5234
        %v5381 = vpack.c.b16 %v5237, %v5236
        %v5382 = vpack.c.b16 %v5239, %v5238
        %v5383 = vpack.c.b16 %v5241, %v5240
        %v5384 = vpack.c.b16 %v5243, %v5242
        %v5385 = vpack.c.b16 %v5245, %v5244
        %v5386 = vpack.c.b16 %v5247, %v5246
        %v5387 = vpack.c.b16 %v5249, %v5248
        %v5388 = vpack.c.b16 %v5251, %v5250
        %v5389 = vpack.c.b16 %v5253, %v5252
        %v5390 = vpack.c.b16 %v5255, %v5254
        %v5391 = vpack.c.b16 %v5257, %v5256
        %v5392 = vpack.c.b16 %v5259, %v5258
        %v5393 = vpack.c.b16 %v5261, %v5260
        %v5394 = vpack.c.b16 %v5263, %v5262
        %v5395 = vpack.c.b16 %v5265, %v5264
        %v5396 = vpack.c.b16 %v5267, %v5266
        %v5397 = vpack.c.b16 %v5269, %v5268
        %5526 = vmatprep.subr.bf16.mxu0 0
        %5527 = vmatpush1.bf16.msra.mxu0 %v5270
        %5528 = vmatprep.subr.bf16.mxu0 0
        %5529 = vmatpush1.bf16.msra.mxu0 %v5271
        %5530 = vmatprep.subr.bf16.mxu0 0
        %5531 = vmatpush1.bf16.msra.mxu0 %v5272
        %5532 = vmatprep.subr.bf16.mxu0 0
        %5533 = vmatpush1.bf16.msra.mxu0 %v5273
        %5534 = vmatprep.subr.bf16.mxu0 0
        %5535 = vmatpush1.bf16.msra.mxu0 %v5274
        %5536 = vmatprep.subr.bf16.mxu0 0
        %5537 = vmatpush1.bf16.msra.mxu0 %v5275
        %5538 = vmatprep.subr.bf16.mxu0 0
        %5539 = vmatpush1.bf16.msra.mxu0 %v5276
        %5540 = vmatprep.subr.bf16.mxu0 0
        %5541 = vmatpush1.bf16.msra.mxu0 %v5277
        %5542 = vmatprep.subr.bf16.mxu0 0
        %5543 = vmatpush1.bf16.msra.mxu0 %v5278
        %5544 = vmatprep.subr.bf16.mxu0 0
        %5545 = vmatpush1.bf16.msra.mxu0 %v5279
        %5546 = vmatprep.subr.bf16.mxu0 0
        %5547 = vmatpush1.bf16.msra.mxu0 %v5280
        %5548 = vmatprep.subr.bf16.mxu0 0
        %5549 = vmatpush1.bf16.msra.mxu0 %v5281
        %5550 = vmatprep.subr.bf16.mxu0 0
        %5551 = vmatpush1.bf16.msra.mxu0 %v5282
        %5552 = vmatprep.subr.bf16.mxu0 0
        %5553 = vmatpush1.bf16.msra.mxu0 %v5283
        %5554 = vmatprep.subr.bf16.mxu0 0
        %5555 = vmatpush1.bf16.msra.mxu0 %v5284
        %5556 = vmatprep.subr.bf16.mxu0 0
        %5557 = vmatpush1.bf16.msra.mxu0 %v5285
        %5558 = vmatprep.mubr.bf16.mxu0 %v4368
        %5559 = vmatmul.mubr.bf16.gmra.mrb[0].mxu0 %v4367
        %v5560 = vpop.f32.mrb[0].mxu0
        %v5561 = vadd.f32 %v4756, %v5560
        %v5562 = vpop.f32.mrb[0].mxu0
        %v5563 = vpop.f32.mrb[0].mxu0
        %v5564 = vadd.f32 %v4756, %v5563
        %v5565 = vpop.f32.mrb[0].mxu0
        %5566 = vmatprep.mubr.bf16.mxu0 %v4384
        %5567 = vmatmul.mubr.bf16.gmra.mrb[0].mxu0 %v4383
        %v5568 = vpop.f32.mrb[0].mxu0
        %v5569 = vadd.f32 %v4756, %v5568
        %v5570 = vpop.f32.mrb[0].mxu0
        %v5571 = vpop.f32.mrb[0].mxu0
        %v5572 = vadd.f32 %v4756, %v5571
        %v5573 = vpop.f32.mrb[0].mxu0
        %5574 = vmatprep.mubr.bf16.mxu0 %v4400
        %5575 = vmatmul.mubr.bf16.gmra.mrb[0].mxu0 %v4399
        %v5576 = vpop.f32.mrb[0].mxu0
        %v5577 = vadd.f32 %v4756, %v5576
        %v5578 = vpop.f32.mrb[0].mxu0
        %v5579 = vpop.f32.mrb[0].mxu0
        %v5580 = vadd.f32 %v4756, %v5579
        %v5581 = vpop.f32.mrb[0].mxu0
        %5582 = vmatprep.mubr.bf16.mxu0 %v4416
        %5583 = vmatmul.mubr.bf16.gmra.mrb[0].mxu0 %v4415
        %v5584 = vpop.f32.mrb[0].mxu0
        %v5585 = vadd.f32 %v4756, %v5584
        %v5586 = vpop.f32.mrb[0].mxu0
        %v5587 = vpop.f32.mrb[0].mxu0
        %v5588 = vadd.f32 %v4756, %v5587
        %v5589 = vpop.f32.mrb[0].mxu0
        %5590 = vmatprep.mubr.bf16.mxu0 %v4432
        %5591 = vmatmul.mubr.bf16.gmra.mrb[0].mxu0 %v4431
        %v5592 = vpop.f32.mrb[0].mxu0
        %v5593 = vadd.f32 %v4756, %v5592
        %v5594 = vpop.f32.mrb[0].mxu0
        %v5595 = vpop.f32.mrb[0].mxu0
        %v5596 = vadd.f32 %v4756, %v5595
        %v5597 = vpop.f32.mrb[0].mxu0
        %5598 = vmatprep.mubr.bf16.mxu0 %v4448
        %5599 = vmatmul.mubr.bf16.gmra.mrb[0].mxu0 %v4447
        %v5600 = vpop.f32.mrb[0].mxu0
        %v5601 = vadd.f32 %v4756, %v5600
        %v5602 = vpop.f32.mrb[0].mxu0
        %v5603 = vpop.f32.mrb[0].mxu0
        %v5604 = vadd.f32 %v4756, %v5603
        %v5605 = vpop.f32.mrb[0].mxu0
        %5606 = vmatprep.mubr.bf16.mxu0 %v4464
        %5607 = vmatmul.mubr.bf16.gmra.mrb[0].mxu0 %v4463
        %v5608 = vpop.f32.mrb[0].mxu0
        %v5609 = vadd.f32 %v4756, %v5608
        %v5610 = vpop.f32.mrb[0].mxu0
        %v5611 = vpop.f32.mrb[0].mxu0
        %v5612 = vadd.f32 %v4756, %v5611
        %v5613 = vpop.f32.mrb[0].mxu0
        %5614 = vmatprep.mubr.bf16.mxu0 %v4480
        %5615 = vmatmul.mubr.bf16.gmra.mrb[0].mxu0 %v4479
        %v5616 = vpop.f32.mrb[0].mxu0
        %v5617 = vadd.f32 %v4756, %v5616
        %v5618 = vpop.f32.mrb[0].mxu0
        %v5619 = vpop.f32.mrb[0].mxu0
        %v5620 = vadd.f32 %v4756, %v5619
        %v5621 = vpop.f32.mrb[0].mxu0
        %5622 = vdwg.mxu0
        %5623 = vmatprep.subr.bf16.mxu0 0
        %5624 = vmatpush1.bf16.msra.mxu0 %v5286
        %5625 = vmatprep.subr.bf16.mxu0 0
        %5626 = vmatpush1.bf16.msra.mxu0 %v5287
        %5627 = vmatprep.subr.bf16.mxu0 0
        %5628 = vmatpush1.bf16.msra.mxu0 %v5288
        %5629 = vmatprep.subr.bf16.mxu0 0
        %5630 = vmatpush1.bf16.msra.mxu0 %v5289
        %5631 = vmatprep.subr.bf16.mxu0 0
        %5632 = vmatpush1.bf16.msra.mxu0 %v5290
        %5633 = vmatprep.subr.bf16.mxu0 0
        %5634 = vmatpush1.bf16.msra.mxu0 %v5291
        %5635 = vmatprep.subr.bf16.mxu0 0
        %5636 = vmatpush1.bf16.msra.mxu0 %v5292
        %5637 = vmatprep.subr.bf16.mxu0 0
        %5638 = vmatpush1.bf16.msra.mxu0 %v5293
        %5639 = vmatprep.subr.bf16.mxu0 0
        %5640 = vmatpush1.bf16.msra.mxu0 %v5294
        %5641 = vmatprep.subr.bf16.mxu0 0
        %5642 = vmatpush1.bf16.msra.mxu0 %v5295
        %5643 = vmatprep.subr.bf16.mxu0 0
        %5644 = vmatpush1.bf16.msra.mxu0 %v5296
        %5645 = vmatprep.subr.bf16.mxu0 0
        %5646 = vmatpush1.bf16.msra.mxu0 %v5297
        %5647 = vmatprep.subr.bf16.mxu0 0
        %5648 = vmatpush1.bf16.msra.mxu0 %v5298
        %5649 = vmatprep.subr.bf16.mxu0 0
        %5650 = vmatpush1.bf16.msra.mxu0 %v5299
        %5651 = vmatprep.subr.bf16.mxu0 0
        %5652 = vmatpush1.bf16.msra.mxu0 %v5300
        %5653 = vmatprep.subr.bf16.mxu0 0
        %5654 = vmatpush1.bf16.msra.mxu0 %v5301
        %5655 = vmatprep.mubr.bf16.mxu0 %v4370
        %5656 = vmatmul.mubr.bf16.gmra.mrb[0].mxu0 %v4369
        %v5657 = vpop.f32.mrb[0].mxu0
        %v5658 = vadd.f32 %v5561, %v5657
        %v5659 = vpop.f32.mrb[0].mxu0
        %v5660 = vpop.f32.mrb[0].mxu0
        %v5661 = vadd.f32 %v5564, %v5660
        %v5662 = vpop.f32.mrb[0].mxu0
        %5663 = vmatprep.mubr.bf16.mxu0 %v4386
        %5664 = vmatmul.mubr.bf16.gmra.mrb[0].mxu0 %v4385
        %v5665 = vpop.f32.mrb[0].mxu0
        %v5666 = vadd.f32 %v5569, %v5665
        %v5667 = vpop.f32.mrb[0].mxu0
        %v5668 = vpop.f32.mrb[0].mxu0
        %v5669 = vadd.f32 %v5572, %v5668
        %v5670 = vpop.f32.mrb[0].mxu0
        %5671 = vmatprep.mubr.bf16.mxu0 %v4402
        %5672 = vmatmul.mubr.bf16.gmra.mrb[0].mxu0 %v4401
        %v5673 = vpop.f32.mrb[0].mxu0
        %v5674 = vadd.f32 %v5577, %v5673
        %v5675 = vpop.f32.mrb[0].mxu0
        %v5676 = vpop.f32.mrb[0].mxu0
        %v5677 = vadd.f32 %v5580, %v5676
        %v5678 = vpop.f32.mrb[0].mxu0
        %5679 = vmatprep.mubr.bf16.mxu0 %v4418
        %5680 = vmatmul.mubr.bf16.gmra.mrb[0].mxu0 %v4417
        %v5681 = vpop.f32.mrb[0].mxu0
        %v5682 = vadd.f32 %v5585, %v5681
        %v5683 = vpop.f32.mrb[0].mxu0
        %v5684 = vpop.f32.mrb[0].mxu0
        %v5685 = vadd.f32 %v5588, %v5684
        %v5686 = vpop.f32.mrb[0].mxu0
        %5687 = vmatprep.mubr.bf16.mxu0 %v4434
        %5688 = vmatmul.mubr.bf16.gmra.mrb[0].mxu0 %v4433
        %v5689 = vpop.f32.mrb[0].mxu0
        %v5690 = vadd.f32 %v5593, %v5689
        %v5691 = vpop.f32.mrb[0].mxu0
        %v5692 = vpop.f32.mrb[0].mxu0
        %v5693 = vadd.f32 %v5596, %v5692
        %v5694 = vpop.f32.mrb[0].mxu0
        %5695 = vmatprep.mubr.bf16.mxu0 %v4450
        %5696 = vmatmul.mubr.bf16.gmra.mrb[0].mxu0 %v4449
        %v5697 = vpop.f32.mrb[0].mxu0
        %v5698 = vadd.f32 %v5601, %v5697
        %v5699 = vpop.f32.mrb[0].mxu0
        %v5700 = vpop.f32.mrb[0].mxu0
        %v5701 = vadd.f32 %v5604, %v5700
        %v5702 = vpop.f32.mrb[0].mxu0
        %5703 = vmatprep.mubr.bf16.mxu0 %v4466
        %5704 = vmatmul.mubr.bf16.gmra.mrb[0].mxu0 %v4465
        %v5705 = vpop.f32.mrb[0].mxu0
        %v5706 = vadd.f32 %v5609, %v5705
        %v5707 = vpop.f32.mrb[0].mxu0
        %v5708 = vpop.f32.mrb[0].mxu0
        %v5709 = vadd.f32 %v5612, %v5708
        %v5710 = vpop.f32.mrb[0].mxu0
        %5711 = vmatprep.mubr.bf16.mxu0 %v4482
        %5712 = vmatmul.mubr.bf16.gmra.mrb[0].mxu0 %v4481
        %v5713 = vpop.f32.mrb[0].mxu0
        %v5714 = vadd.f32 %v5617, %v5713
        %v5715 = vpop.f32.mrb[0].mxu0
        %v5716 = vpop.f32.mrb[0].mxu0
        %v5717 = vadd.f32 %v5620, %v5716
        %v5718 = vpop.f32.mrb[0].mxu0
        %5719 = vdwg.mxu0
        %5720 = vmatprep.subr.bf16.mxu0 0
        %5721 = vmatpush1.bf16.msra.mxu0 %v5302
        %5722 = vmatprep.subr.bf16.mxu0 0
        %5723 = vmatpush1.bf16.msra.mxu0 %v5303
        %5724 = vmatprep.subr.bf16.mxu0 0
        %5725 = vmatpush1.bf16.msra.mxu0 %v5304
        %5726 = vmatprep.subr.bf16.mxu0 0
        %5727 = vmatpush1.bf16.msra.mxu0 %v5305
        %5728 = vmatprep.subr.bf16.mxu0 0
        %5729 = vmatpush1.bf16.msra.mxu0 %v5306
        %5730 = vmatprep.subr.bf16.mxu0 0
        %5731 = vmatpush1.bf16.msra.mxu0 %v5307
        %5732 = vmatprep.subr.bf16.mxu0 0
        %5733 = vmatpush1.bf16.msra.mxu0 %v5308
        %5734 = vmatprep.subr.bf16.mxu0 0
        %5735 = vmatpush1.bf16.msra.mxu0 %v5309
        %5736 = vmatprep.subr.bf16.mxu0 0
        %5737 = vmatpush1.bf16.msra.mxu0 %v5310
        %5738 = vmatprep.subr.bf16.mxu0 0
        %5739 = vmatpush1.bf16.msra.mxu0 %v5311
        %5740 = vmatprep.subr.bf16.mxu0 0
        %5741 = vmatpush1.bf16.msra.mxu0 %v5312
        %5742 = vmatprep.subr.bf16.mxu0 0
        %5743 = vmatpush1.bf16.msra.mxu0 %v5313
        %5744 = vmatprep.subr.bf16.mxu0 0
        %5745 = vmatpush1.bf16.msra.mxu0 %v5314
        %5746 = vmatprep.subr.bf16.mxu0 0
        %5747 = vmatpush1.bf16.msra.mxu0 %v5315
        %5748 = vmatprep.subr.bf16.mxu0 0
        %5749 = vmatpush1.bf16.msra.mxu0 %v5316
        %5750 = vmatprep.subr.bf16.mxu0 0
        %5751 = vmatpush1.bf16.msra.mxu0 %v5317
        %5752 = vmatprep.mubr.bf16.mxu0 %v4372
        %5753 = vmatmul.mubr.bf16.gmra.mrb[0].mxu0 %v4371
        %v5754 = vpop.f32.mrb[0].mxu0
        %v5755 = vadd.f32 %v5658, %v5754
        %v5756 = vpop.f32.mrb[0].mxu0
        %v5757 = vpop.f32.mrb[0].mxu0
        %v5758 = vadd.f32 %v5661, %v5757
        %v5759 = vpop.f32.mrb[0].mxu0
        %5760 = vmatprep.mubr.bf16.mxu0 %v4388
        %5761 = vmatmul.mubr.bf16.gmra.mrb[0].mxu0 %v4387
        %v5762 = vpop.f32.mrb[0].mxu0
        %v5763 = vadd.f32 %v5666, %v5762
        %v5764 = vpop.f32.mrb[0].mxu0
        %v5765 = vpop.f32.mrb[0].mxu0
        %v5766 = vadd.f32 %v5669, %v5765
        %v5767 = vpop.f32.mrb[0].mxu0
        %5768 = vmatprep.mubr.bf16.mxu0 %v4404
        %5769 = vmatmul.mubr.bf16.gmra.mrb[0].mxu0 %v4403
        %v5770 = vpop.f32.mrb[0].mxu0
        %v5771 = vadd.f32 %v5674, %v5770
        %v5772 = vpop.f32.mrb[0].mxu0
        %v5773 = vpop.f32.mrb[0].mxu0
        %v5774 = vadd.f32 %v5677, %v5773
        %v5775 = vpop.f32.mrb[0].mxu0
        %5776 = vmatprep.mubr.bf16.mxu0 %v4420
        %5777 = vmatmul.mubr.bf16.gmra.mrb[0].mxu0 %v4419
        %v5778 = vpop.f32.mrb[0].mxu0
        %v5779 = vadd.f32 %v5682, %v5778
        %v5780 = vpop.f32.mrb[0].mxu0
        %v5781 = vpop.f32.mrb[0].mxu0
        %v5782 = vadd.f32 %v5685, %v5781
        %v5783 = vpop.f32.mrb[0].mxu0
        %5784 = vmatprep.mubr.bf16.mxu0 %v4436
        %5785 = vmatmul.mubr.bf16.gmra.mrb[0].mxu0 %v4435
        %v5786 = vpop.f32.mrb[0].mxu0
        %v5787 = vadd.f32 %v5690, %v5786
        %v5788 = vpop.f32.mrb[0].mxu0
        %v5789 = vpop.f32.mrb[0].mxu0
        %v5790 = vadd.f32 %v5693, %v5789
        %v5791 = vpop.f32.mrb[0].mxu0
        %5792 = vmatprep.mubr.bf16.mxu0 %v4452
        %5793 = vmatmul.mubr.bf16.gmra.mrb[0].mxu0 %v4451
        %v5794 = vpop.f32.mrb[0].mxu0
        %v5795 = vadd.f32 %v5698, %v5794
        %v5796 = vpop.f32.mrb[0].mxu0
        %v5797 = vpop.f32.mrb[0].mxu0
        %v5798 = vadd.f32 %v5701, %v5797
        %v5799 = vpop.f32.mrb[0].mxu0
        %5800 = vmatprep.mubr.bf16.mxu0 %v4468
        %5801 = vmatmul.mubr.bf16.gmra.mrb[0].mxu0 %v4467
        %v5802 = vpop.f32.mrb[0].mxu0
        %v5803 = vadd.f32 %v5706, %v5802
        %v5804 = vpop.f32.mrb[0].mxu0
        %v5805 = vpop.f32.mrb[0].mxu0
        %v5806 = vadd.f32 %v5709, %v5805
        %v5807 = vpop.f32.mrb[0].mxu0
        %5808 = vmatprep.mubr.bf16.mxu0 %v4484
        %5809 = vmatmul.mubr.bf16.gmra.mrb[0].mxu0 %v4483
        %v5810 = vpop.f32.mrb[0].mxu0
        %v5811 = vadd.f32 %v5714, %v5810
        %v5812 = vpop.f32.mrb[0].mxu0
        %v5813 = vpop.f32.mrb[0].mxu0
        %v5814 = vadd.f32 %v5717, %v5813
        %v5815 = vpop.f32.mrb[0].mxu0
        %5816 = vdwg.mxu0
        %5817 = vmatprep.subr.bf16.mxu0 0
        %5818 = vmatpush1.bf16.msra.mxu0 %v5318
        %5819 = vmatprep.subr.bf16.mxu0 0
        %5820 = vmatpush1.bf16.msra.mxu0 %v5319
        %5821 = vmatprep.subr.bf16.mxu0 0
        %5822 = vmatpush1.bf16.msra.mxu0 %v5320
        %5823 = vmatprep.subr.bf16.mxu0 0
        %5824 = vmatpush1.bf16.msra.mxu0 %v5321
        %5825 = vmatprep.subr.bf16.mxu0 0
        %5826 = vmatpush1.bf16.msra.mxu0 %v5322
        %5827 = vmatprep.subr.bf16.mxu0 0
        %5828 = vmatpush1.bf16.msra.mxu0 %v5323
        %5829 = vmatprep.subr.bf16.mxu0 0
        %5830 = vmatpush1.bf16.msra.mxu0 %v5324
        %5831 = vmatprep.subr.bf16.mxu0 0
        %5832 = vmatpush1.bf16.msra.mxu0 %v5325
        %5833 = vmatprep.subr.bf16.mxu0 0
        %5834 = vmatpush1.bf16.msra.mxu0 %v5326
        %5835 = vmatprep.subr.bf16.mxu0 0
        %5836 = vmatpush1.bf16.msra.mxu0 %v5327
        %5837 = vmatprep.subr.bf16.mxu0 0
        %5838 = vmatpush1.bf16.msra.mxu0 %v5328
        %5839 = vmatprep.subr.bf16.mxu0 0
        %5840 = vmatpush1.bf16.msra.mxu0 %v5329
        %5841 = vmatprep.subr.bf16.mxu0 0
        %5842 = vmatpush1.bf16.msra.mxu0 %v5330
        %5843 = vmatprep.subr.bf16.mxu0 0
        %5844 = vmatpush1.bf16.msra.mxu0 %v5331
        %5845 = vmatprep.subr.bf16.mxu0 0
        %5846 = vmatpush1.bf16.msra.mxu0 %v5332
        %5847 = vmatprep.subr.bf16.mxu0 0
        %5848 = vmatpush1.bf16.msra.mxu0 %v5333
        %5849 = vmatprep.mubr.bf16.mxu0 %v4374
        %5850 = vmatmul.mubr.bf16.gmra.mrb[0].mxu0 %v4373
        %v5851 = vpop.f32.mrb[0].mxu0
        %v5852 = vadd.f32 %v5755, %v5851
        %v5853 = vpop.f32.mrb[0].mxu0
        %v5854 = vpop.f32.mrb[0].mxu0
        %v5855 = vadd.f32 %v5758, %v5854
        %v5856 = vpop.f32.mrb[0].mxu0
        %5857 = vmatprep.mubr.bf16.mxu0 %v4390
        %5858 = vmatmul.mubr.bf16.gmra.mrb[0].mxu0 %v4389
        %v5859 = vpop.f32.mrb[0].mxu0
        %v5860 = vadd.f32 %v5763, %v5859
        %v5861 = vpop.f32.mrb[0].mxu0
        %v5862 = vpop.f32.mrb[0].mxu0
        %v5863 = vadd.f32 %v5766, %v5862
        %v5864 = vpop.f32.mrb[0].mxu0
        %5865 = vmatprep.mubr.bf16.mxu0 %v4406
        %5866 = vmatmul.mubr.bf16.gmra.mrb[0].mxu0 %v4405
        %v5867 = vpop.f32.mrb[0].mxu0
        %v5868 = vadd.f32 %v5771, %v5867
        %v5869 = vpop.f32.mrb[0].mxu0
        %v5870 = vpop.f32.mrb[0].mxu0
        %v5871 = vadd.f32 %v5774, %v5870
        %v5872 = vpop.f32.mrb[0].mxu0
        %5873 = vmatprep.mubr.bf16.mxu0 %v4422
        %5874 = vmatmul.mubr.bf16.gmra.mrb[0].mxu0 %v4421
        %v5875 = vpop.f32.mrb[0].mxu0
        %v5876 = vadd.f32 %v5779, %v5875
        %v5877 = vpop.f32.mrb[0].mxu0
        %v5878 = vpop.f32.mrb[0].mxu0
        %v5879 = vadd.f32 %v5782, %v5878
        %v5880 = vpop.f32.mrb[0].mxu0
        %5881 = vmatprep.mubr.bf16.mxu0 %v4438
        %5882 = vmatmul.mubr.bf16.gmra.mrb[0].mxu0 %v4437
        %v5883 = vpop.f32.mrb[0].mxu0
        %v5884 = vadd.f32 %v5787, %v5883
        %v5885 = vpop.f32.mrb[0].mxu0
        %v5886 = vpop.f32.mrb[0].mxu0
        %v5887 = vadd.f32 %v5790, %v5886
        %v5888 = vpop.f32.mrb[0].mxu0
        %5889 = vmatprep.mubr.bf16.mxu0 %v4454
        %5890 = vmatmul.mubr.bf16.gmra.mrb[0].mxu0 %v4453
        %v5891 = vpop.f32.mrb[0].mxu0
        %v5892 = vadd.f32 %v5795, %v5891
        %v5893 = vpop.f32.mrb[0].mxu0
        %v5894 = vpop.f32.mrb[0].mxu0
        %v5895 = vadd.f32 %v5798, %v5894
        %v5896 = vpop.f32.mrb[0].mxu0
        %5897 = vmatprep.mubr.bf16.mxu0 %v4470
        %5898 = vmatmul.mubr.bf16.gmra.mrb[0].mxu0 %v4469
        %v5899 = vpop.f32.mrb[0].mxu0
        %v5900 = vadd.f32 %v5803, %v5899
        %v5901 = vpop.f32.mrb[0].mxu0
        %v5902 = vpop.f32.mrb[0].mxu0
        %v5903 = vadd.f32 %v5806, %v5902
        %v5904 = vpop.f32.mrb[0].mxu0
        %5905 = vmatprep.mubr.bf16.mxu0 %v4486
        %5906 = vmatmul.mubr.bf16.gmra.mrb[0].mxu0 %v4485
        %v5907 = vpop.f32.mrb[0].mxu0
        %v5908 = vadd.f32 %v5811, %v5907
        %v5909 = vpop.f32.mrb[0].mxu0
        %v5910 = vpop.f32.mrb[0].mxu0
        %v5911 = vadd.f32 %v5814, %v5910
        %v5912 = vpop.f32.mrb[0].mxu0
        %5913 = vdwg.mxu0
        %5914 = vmatprep.subr.bf16.mxu0 0
        %5915 = vmatpush1.bf16.msra.mxu0 %v5334
        %5916 = vmatprep.subr.bf16.mxu0 0
        %5917 = vmatpush1.bf16.msra.mxu0 %v5335
        %5918 = vmatprep.subr.bf16.mxu0 0
        %5919 = vmatpush1.bf16.msra.mxu0 %v5336
        %5920 = vmatprep.subr.bf16.mxu0 0
        %5921 = vmatpush1.bf16.msra.mxu0 %v5337
        %5922 = vmatprep.subr.bf16.mxu0 0
        %5923 = vmatpush1.bf16.msra.mxu0 %v5338
        %5924 = vmatprep.subr.bf16.mxu0 0
        %5925 = vmatpush1.bf16.msra.mxu0 %v5339
        %5926 = vmatprep.subr.bf16.mxu0 0
        %5927 = vmatpush1.bf16.msra.mxu0 %v5340
        %5928 = vmatprep.subr.bf16.mxu0 0
        %5929 = vmatpush1.bf16.msra.mxu0 %v5341
        %5930 = vmatprep.subr.bf16.mxu0 0
        %5931 = vmatpush1.bf16.msra.mxu0 %v5342
        %5932 = vmatprep.subr.bf16.mxu0 0
        %5933 = vmatpush1.bf16.msra.mxu0 %v5343
        %5934 = vmatprep.subr.bf16.mxu0 0
        %5935 = vmatpush1.bf16.msra.mxu0 %v5344
        %5936 = vmatprep.subr.bf16.mxu0 0
        %5937 = vmatpush1.bf16.msra.mxu0 %v5345
        %5938 = vmatprep.subr.bf16.mxu0 0
        %5939 = vmatpush1.bf16.msra.mxu0 %v5346
        %5940 = vmatprep.subr.bf16.mxu0 0
        %5941 = vmatpush1.bf16.msra.mxu0 %v5347
        %5942 = vmatprep.subr.bf16.mxu0 0
        %5943 = vmatpush1.bf16.msra.mxu0 %v5348
        %5944 = vmatprep.subr.bf16.mxu0 0
        %5945 = vmatpush1.bf16.msra.mxu0 %v5349
        %5946 = vmatprep.mubr.bf16.mxu0 %v4376
        %5947 = vmatmul.mubr.bf16.gmra.mrb[0].mxu0 %v4375
        %v5948 = vpop.f32.mrb[0].mxu0
        %v5949 = vadd.f32 %v5852, %v5948
        %v5950 = vpop.f32.mrb[0].mxu0
        %v5951 = vpop.f32.mrb[0].mxu0
        %v5952 = vadd.f32 %v5855, %v5951
        %v5953 = vpop.f32.mrb[0].mxu0
        %5954 = vmatprep.mubr.bf16.mxu0 %v4392
        %5955 = vmatmul.mubr.bf16.gmra.mrb[0].mxu0 %v4391
        %v5956 = vpop.f32.mrb[0].mxu0
        %v5957 = vadd.f32 %v5860, %v5956
        %v5958 = vpop.f32.mrb[0].mxu0
        %v5959 = vpop.f32.mrb[0].mxu0
        %v5960 = vadd.f32 %v5863, %v5959
        %v5961 = vpop.f32.mrb[0].mxu0
        %5962 = vmatprep.mubr.bf16.mxu0 %v4408
        %5963 = vmatmul.mubr.bf16.gmra.mrb[0].mxu0 %v4407
        %v5964 = vpop.f32.mrb[0].mxu0
        %v5965 = vadd.f32 %v5868, %v5964
        %v5966 = vpop.f32.mrb[0].mxu0
        %v5967 = vpop.f32.mrb[0].mxu0
        %v5968 = vadd.f32 %v5871, %v5967
        %v5969 = vpop.f32.mrb[0].mxu0
        %5970 = vmatprep.mubr.bf16.mxu0 %v4424
        %5971 = vmatmul.mubr.bf16.gmra.mrb[0].mxu0 %v4423
        %v5972 = vpop.f32.mrb[0].mxu0
        %v5973 = vadd.f32 %v5876, %v5972
        %v5974 = vpop.f32.mrb[0].mxu0
        %v5975 = vpop.f32.mrb[0].mxu0
        %v5976 = vadd.f32 %v5879, %v5975
        %v5977 = vpop.f32.mrb[0].mxu0
        %5978 = vmatprep.mubr.bf16.mxu0 %v4440
        %5979 = vmatmul.mubr.bf16.gmra.mrb[0].mxu0 %v4439
        %v5980 = vpop.f32.mrb[0].mxu0
        %v5981 = vadd.f32 %v5884, %v5980
        %v5982 = vpop.f32.mrb[0].mxu0
        %v5983 = vpop.f32.mrb[0].mxu0
        %v5984 = vadd.f32 %v5887, %v5983
        %v5985 = vpop.f32.mrb[0].mxu0
        %5986 = vmatprep.mubr.bf16.mxu0 %v4456
        %5987 = vmatmul.mubr.bf16.gmra.mrb[0].mxu0 %v4455
        %v5988 = vpop.f32.mrb[0].mxu0
        %v5989 = vadd.f32 %v5892, %v5988
        %v5990 = vpop.f32.mrb[0].mxu0
        %v5991 = vpop.f32.mrb[0].mxu0
        %v5992 = vadd.f32 %v5895, %v5991
        %v5993 = vpop.f32.mrb[0].mxu0
        %5994 = vmatprep.mubr.bf16.mxu0 %v4472
        %5995 = vmatmul.mubr.bf16.gmra.mrb[0].mxu0 %v4471
        %v5996 = vpop.f32.mrb[0].mxu0
        %v5997 = vadd.f32 %v5900, %v5996
        %v5998 = vpop.f32.mrb[0].mxu0
        %v5999 = vpop.f32.mrb[0].mxu0
        %v6000 = vadd.f32 %v5903, %v5999
        %v6001 = vpop.f32.mrb[0].mxu0
        %6002 = vmatprep.mubr.bf16.mxu0 %v4488
        %6003 = vmatmul.mubr.bf16.gmra.mrb[0].mxu0 %v4487
        %v6004 = vpop.f32.mrb[0].mxu0
        %v6005 = vadd.f32 %v5908, %v6004
        %v6006 = vpop.f32.mrb[0].mxu0
        %v6007 = vpop.f32.mrb[0].mxu0
        %v6008 = vadd.f32 %v5911, %v6007
        %v6009 = vpop.f32.mrb[0].mxu0
        %6010 = vdwg.mxu0
        %6011 = vmatprep.subr.bf16.mxu0 0
        %6012 = vmatpush1.bf16.msra.mxu0 %v5350
        %6013 = vmatprep.subr.bf16.mxu0 0
        %6014 = vmatpush1.bf16.msra.mxu0 %v5351
        %6015 = vmatprep.subr.bf16.mxu0 0
        %6016 = vmatpush1.bf16.msra.mxu0 %v5352
        %6017 = vmatprep.subr.bf16.mxu0 0
        %6018 = vmatpush1.bf16.msra.mxu0 %v5353
        %6019 = vmatprep.subr.bf16.mxu0 0
        %6020 = vmatpush1.bf16.msra.mxu0 %v5354
        %6021 = vmatprep.subr.bf16.mxu0 0
        %6022 = vmatpush1.bf16.msra.mxu0 %v5355
        %6023 = vmatprep.subr.bf16.mxu0 0
        %6024 = vmatpush1.bf16.msra.mxu0 %v5356
        %6025 = vmatprep.subr.bf16.mxu0 0
        %6026 = vmatpush1.bf16.msra.mxu0 %v5357
        %6027 = vmatprep.subr.bf16.mxu0 0
        %6028 = vmatpush1.bf16.msra.mxu0 %v5358
        %6029 = vmatprep.subr.bf16.mxu0 0
        %6030 = vmatpush1.bf16.msra.mxu0 %v5359
        %6031 = vmatprep.subr.bf16.mxu0 0
        %6032 = vmatpush1.bf16.msra.mxu0 %v5360
        %6033 = vmatprep.subr.bf16.mxu0 0
        %6034 = vmatpush1.bf16.msra.mxu0 %v5361
        %6035 = vmatprep.subr.bf16.mxu0 0
        %6036 = vmatpush1.bf16.msra.mxu0 %v5362
        %6037 = vmatprep.subr.bf16.mxu0 0
        %6038 = vmatpush1.bf16.msra.mxu0 %v5363
        %6039 = vmatprep.subr.bf16.mxu0 0
        %6040 = vmatpush1.bf16.msra.mxu0 %v5364
        %6041 = vmatprep.subr.bf16.mxu0 0
        %6042 = vmatpush1.bf16.msra.mxu0 %v5365
        %6043 = vmatprep.mubr.bf16.mxu0 %v4378
        %6044 = vmatmul.mubr.bf16.gmra.mrb[0].mxu0 %v4377
        %v6045 = vpop.f32.mrb[0].mxu0
        %v6046 = vadd.f32 %v5949, %v6045
        %v6047 = vpop.f32.mrb[0].mxu0
        %v6048 = vpop.f32.mrb[0].mxu0
        %v6049 = vadd.f32 %v5952, %v6048
        %v6050 = vpop.f32.mrb[0].mxu0
        %6051 = vmatprep.mubr.bf16.mxu0 %v4394
        %6052 = vmatmul.mubr.bf16.gmra.mrb[0].mxu0 %v4393
        %v6053 = vpop.f32.mrb[0].mxu0
        %v6054 = vadd.f32 %v5957, %v6053
        %v6055 = vpop.f32.mrb[0].mxu0
        %v6056 = vpop.f32.mrb[0].mxu0
        %v6057 = vadd.f32 %v5960, %v6056
        %v6058 = vpop.f32.mrb[0].mxu0
        %6059 = vmatprep.mubr.bf16.mxu0 %v4410
        %6060 = vmatmul.mubr.bf16.gmra.mrb[0].mxu0 %v4409
        %v6061 = vpop.f32.mrb[0].mxu0
        %v6062 = vadd.f32 %v5965, %v6061
        %v6063 = vpop.f32.mrb[0].mxu0
        %v6064 = vpop.f32.mrb[0].mxu0
        %v6065 = vadd.f32 %v5968, %v6064
        %v6066 = vpop.f32.mrb[0].mxu0
        %6067 = vmatprep.mubr.bf16.mxu0 %v4426
        %6068 = vmatmul.mubr.bf16.gmra.mrb[0].mxu0 %v4425
        %v6069 = vpop.f32.mrb[0].mxu0
        %v6070 = vadd.f32 %v5973, %v6069
        %v6071 = vpop.f32.mrb[0].mxu0
        %v6072 = vpop.f32.mrb[0].mxu0
        %v6073 = vadd.f32 %v5976, %v6072
        %v6074 = vpop.f32.mrb[0].mxu0
        %6075 = vmatprep.mubr.bf16.mxu0 %v4442
        %6076 = vmatmul.mubr.bf16.gmra.mrb[0].mxu0 %v4441
        %v6077 = vpop.f32.mrb[0].mxu0
        %v6078 = vadd.f32 %v5981, %v6077
        %v6079 = vpop.f32.mrb[0].mxu0
        %v6080 = vpop.f32.mrb[0].mxu0
        %v6081 = vadd.f32 %v5984, %v6080
        %v6082 = vpop.f32.mrb[0].mxu0
        %6083 = vmatprep.mubr.bf16.mxu0 %v4458
        %6084 = vmatmul.mubr.bf16.gmra.mrb[0].mxu0 %v4457
        %v6085 = vpop.f32.mrb[0].mxu0
        %v6086 = vadd.f32 %v5989, %v6085
        %v6087 = vpop.f32.mrb[0].mxu0
        %v6088 = vpop.f32.mrb[0].mxu0
        %v6089 = vadd.f32 %v5992, %v6088
        %v6090 = vpop.f32.mrb[0].mxu0
        %6091 = vmatprep.mubr.bf16.mxu0 %v4474
        %6092 = vmatmul.mubr.bf16.gmra.mrb[0].mxu0 %v4473
        %v6093 = vpop.f32.mrb[0].mxu0
        %v6094 = vadd.f32 %v5997, %v6093
        %v6095 = vpop.f32.mrb[0].mxu0
        %v6096 = vpop.f32.mrb[0].mxu0
        %v6097 = vadd.f32 %v6000, %v6096
        %v6098 = vpop.f32.mrb[0].mxu0
        %6099 = vmatprep.mubr.bf16.mxu0 %v4490
        %6100 = vmatmul.mubr.bf16.gmra.mrb[0].mxu0 %v4489
        %v6101 = vpop.f32.mrb[0].mxu0
        %v6102 = vadd.f32 %v6005, %v6101
        %v6103 = vpop.f32.mrb[0].mxu0
        %v6104 = vpop.f32.mrb[0].mxu0
        %v6105 = vadd.f32 %v6008, %v6104
        %v6106 = vpop.f32.mrb[0].mxu0
        %6107 = vdwg.mxu0
        %6108 = vmatprep.subr.bf16.mxu0 0
        %6109 = vmatpush1.bf16.msra.mxu0 %v5366
        %6110 = vmatprep.subr.bf16.mxu0 0
        %6111 = vmatpush1.bf16.msra.mxu0 %v5367
        %6112 = vmatprep.subr.bf16.mxu0 0
        %6113 = vmatpush1.bf16.msra.mxu0 %v5368
        %6114 = vmatprep.subr.bf16.mxu0 0
        %6115 = vmatpush1.bf16.msra.mxu0 %v5369
        %6116 = vmatprep.subr.bf16.mxu0 0
        %6117 = vmatpush1.bf16.msra.mxu0 %v5370
        %6118 = vmatprep.subr.bf16.mxu0 0
        %6119 = vmatpush1.bf16.msra.mxu0 %v5371
        %6120 = vmatprep.subr.bf16.mxu0 0
        %6121 = vmatpush1.bf16.msra.mxu0 %v5372
        %6122 = vmatprep.subr.bf16.mxu0 0
        %6123 = vmatpush1.bf16.msra.mxu0 %v5373
        %6124 = vmatprep.subr.bf16.mxu0 0
        %6125 = vmatpush1.bf16.msra.mxu0 %v5374
        %6126 = vmatprep.subr.bf16.mxu0 0
        %6127 = vmatpush1.bf16.msra.mxu0 %v5375
        %6128 = vmatprep.subr.bf16.mxu0 0
        %6129 = vmatpush1.bf16.msra.mxu0 %v5376
        %6130 = vmatprep.subr.bf16.mxu0 0
        %6131 = vmatpush1.bf16.msra.mxu0 %v5377
        %6132 = vmatprep.subr.bf16.mxu0 0
        %6133 = vmatpush1.bf16.msra.mxu0 %v5378
        %6134 = vmatprep.subr.bf16.mxu0 0
        %6135 = vmatpush1.bf16.msra.mxu0 %v5379
        %6136 = vmatprep.subr.bf16.mxu0 0
        %6137 = vmatpush1.bf16.msra.mxu0 %v5380
        %6138 = vmatprep.subr.bf16.mxu0 0
        %6139 = vmatpush1.bf16.msra.mxu0 %v5381
        %6140 = vmatprep.mubr.bf16.mxu0 %v4380
        %6141 = vmatmul.mubr.bf16.gmra.mrb[0].mxu0 %v4379
        %v6142 = vpop.f32.mrb[0].mxu0
        %v6143 = vadd.f32 %v6046, %v6142
        %v6144 = vpop.f32.mrb[0].mxu0
        %v6145 = vpop.f32.mrb[0].mxu0
        %v6146 = vadd.f32 %v6049, %v6145
        %v6147 = vpop.f32.mrb[0].mxu0
        %6148 = vmatprep.mubr.bf16.mxu0 %v4396
        %6149 = vmatmul.mubr.bf16.gmra.mrb[0].mxu0 %v4395
        %v6150 = vpop.f32.mrb[0].mxu0
        %v6151 = vadd.f32 %v6054, %v6150
        %v6152 = vpop.f32.mrb[0].mxu0
        %v6153 = vpop.f32.mrb[0].mxu0
        %v6154 = vadd.f32 %v6057, %v6153
        %v6155 = vpop.f32.mrb[0].mxu0
        %6156 = vmatprep.mubr.bf16.mxu0 %v4412
        %6157 = vmatmul.mubr.bf16.gmra.mrb[0].mxu0 %v4411
        %v6158 = vpop.f32.mrb[0].mxu0
        %v6159 = vadd.f32 %v6062, %v6158
        %v6160 = vpop.f32.mrb[0].mxu0
        %v6161 = vpop.f32.mrb[0].mxu0
        %v6162 = vadd.f32 %v6065, %v6161
        %v6163 = vpop.f32.mrb[0].mxu0
        %6164 = vmatprep.mubr.bf16.mxu0 %v4428
        %6165 = vmatmul.mubr.bf16.gmra.mrb[0].mxu0 %v4427
        %v6166 = vpop.f32.mrb[0].mxu0
        %v6167 = vadd.f32 %v6070, %v6166
        %v6168 = vpop.f32.mrb[0].mxu0
        %v6169 = vpop.f32.mrb[0].mxu0
        %v6170 = vadd.f32 %v6073, %v6169
        %v6171 = vpop.f32.mrb[0].mxu0
        %6172 = vmatprep.mubr.bf16.mxu0 %v4444
        %6173 = vmatmul.mubr.bf16.gmra.mrb[0].mxu0 %v4443
        %v6174 = vpop.f32.mrb[0].mxu0
        %v6175 = vadd.f32 %v6078, %v6174
        %v6176 = vpop.f32.mrb[0].mxu0
        %v6177 = vpop.f32.mrb[0].mxu0
        %v6178 = vadd.f32 %v6081, %v6177
        %v6179 = vpop.f32.mrb[0].mxu0
        %6180 = vmatprep.mubr.bf16.mxu0 %v4460
        %6181 = vmatmul.mubr.bf16.gmra.mrb[0].mxu0 %v4459
        %v6182 = vpop.f32.mrb[0].mxu0
        %v6183 = vadd.f32 %v6086, %v6182
        %v6184 = vpop.f32.mrb[0].mxu0
        %v6185 = vpop.f32.mrb[0].mxu0
        %v6186 = vadd.f32 %v6089, %v6185
        %v6187 = vpop.f32.mrb[0].mxu0
        %6188 = vmatprep.mubr.bf16.mxu0 %v4476
        %6189 = vmatmul.mubr.bf16.gmra.mrb[0].mxu0 %v4475
        %v6190 = vpop.f32.mrb[0].mxu0
        %v6191 = vadd.f32 %v6094, %v6190
        %v6192 = vpop.f32.mrb[0].mxu0
        %v6193 = vpop.f32.mrb[0].mxu0
        %v6194 = vadd.f32 %v6097, %v6193
        %v6195 = vpop.f32.mrb[0].mxu0
        %6196 = vmatprep.mubr.bf16.mxu0 %v4492
        %6197 = vmatmul.mubr.bf16.gmra.mrb[0].mxu0 %v4491
        %v6198 = vpop.f32.mrb[0].mxu0
        %v6199 = vadd.f32 %v6102, %v6198
        %v6200 = vpop.f32.mrb[0].mxu0
        %v6201 = vpop.f32.mrb[0].mxu0
        %v6202 = vadd.f32 %v6105, %v6201
        %v6203 = vpop.f32.mrb[0].mxu0
        %6204 = vdwg.mxu0
        %6205 = vmatprep.subr.bf16.mxu0 0
        %6206 = vmatpush1.bf16.msra.mxu0 %v5382
        %6207 = vmatprep.subr.bf16.mxu0 0
        %6208 = vmatpush1.bf16.msra.mxu0 %v5383
        %6209 = vmatprep.subr.bf16.mxu0 0
        %6210 = vmatpush1.bf16.msra.mxu0 %v5384
        %6211 = vmatprep.subr.bf16.mxu0 0
        %6212 = vmatpush1.bf16.msra.mxu0 %v5385
        %6213 = vmatprep.subr.bf16.mxu0 0
        %6214 = vmatpush1.bf16.msra.mxu0 %v5386
        %6215 = vmatprep.subr.bf16.mxu0 0
        %6216 = vmatpush1.bf16.msra.mxu0 %v5387
        %6217 = vmatprep.subr.bf16.mxu0 0
        %6218 = vmatpush1.bf16.msra.mxu0 %v5388
        %6219 = vmatprep.subr.bf16.mxu0 0
        %6220 = vmatpush1.bf16.msra.mxu0 %v5389
        %6221 = vmatprep.subr.bf16.mxu0 0
        %6222 = vmatpush1.bf16.msra.mxu0 %v5390
        %6223 = vmatprep.subr.bf16.mxu0 0
        %6224 = vmatpush1.bf16.msra.mxu0 %v5391
        %6225 = vmatprep.subr.bf16.mxu0 0
        %6226 = vmatpush1.bf16.msra.mxu0 %v5392
        %6227 = vmatprep.subr.bf16.mxu0 0
        %6228 = vmatpush1.bf16.msra.mxu0 %v5393
        %6229 = vmatprep.subr.bf16.mxu0 0
        %6230 = vmatpush1.bf16.msra.mxu0 %v5394
        %6231 = vmatprep.subr.bf16.mxu0 0
        %6232 = vmatpush1.bf16.msra.mxu0 %v5395
        %6233 = vmatprep.subr.bf16.mxu0 0
        %6234 = vmatpush1.bf16.msra.mxu0 %v5396
        %6235 = vmatprep.subr.bf16.mxu0 0
        %6236 = vmatpush1.bf16.msra.mxu0 %v5397
        %6237 = vmatprep.mubr.bf16.mxu0 %v4382
        %6238 = vmatmul.mubr.bf16.gmra.mrb[0].mxu0 %v4381
        %v6239 = vpop.f32.mrb[0].mxu0
        %v6240 = vadd.f32 %v6143, %v6239
        %v6241 = vpop.f32.mrb[0].mxu0
        %v6242 = vpop.f32.mrb[0].mxu0
        %v6243 = vadd.f32 %v6146, %v6242
        %v6244 = vpop.f32.mrb[0].mxu0
        %6245 = vmatprep.mubr.bf16.mxu0 %v4398
        %6246 = vmatmul.mubr.bf16.gmra.mrb[0].mxu0 %v4397
        %v6247 = vpop.f32.mrb[0].mxu0
        %v6248 = vadd.f32 %v6151, %v6247
        %v6249 = vpop.f32.mrb[0].mxu0
        %v6250 = vpop.f32.mrb[0].mxu0
        %v6251 = vadd.f32 %v6154, %v6250
        %v6252 = vpop.f32.mrb[0].mxu0
        %6253 = vmatprep.mubr.bf16.mxu0 %v4414
        %6254 = vmatmul.mubr.bf16.gmra.mrb[0].mxu0 %v4413
        %v6255 = vpop.f32.mrb[0].mxu0
        %v6256 = vadd.f32 %v6159, %v6255
        %v6257 = vpop.f32.mrb[0].mxu0
        %v6258 = vpop.f32.mrb[0].mxu0
        %v6259 = vadd.f32 %v6162, %v6258
        %v6260 = vpop.f32.mrb[0].mxu0
        %6261 = vmatprep.mubr.bf16.mxu0 %v4430
        %6262 = vmatmul.mubr.bf16.gmra.mrb[0].mxu0 %v4429
        %v6263 = vpop.f32.mrb[0].mxu0
        %v6264 = vadd.f32 %v6167, %v6263
        %v6265 = vpop.f32.mrb[0].mxu0
        %v6266 = vpop.f32.mrb[0].mxu0
        %v6267 = vadd.f32 %v6170, %v6266
        %v6268 = vpop.f32.mrb[0].mxu0
        %6269 = vmatprep.mubr.bf16.mxu0 %v4446
        %6270 = vmatmul.mubr.bf16.gmra.mrb[0].mxu0 %v4445
        %v6271 = vpop.f32.mrb[0].mxu0
        %v6272 = vadd.f32 %v6175, %v6271
        %v6273 = vpop.f32.mrb[0].mxu0
        %v6274 = vpop.f32.mrb[0].mxu0
        %v6275 = vadd.f32 %v6178, %v6274
        %v6276 = vpop.f32.mrb[0].mxu0
        %6277 = vmatprep.mubr.bf16.mxu0 %v4462
        %6278 = vmatmul.mubr.bf16.gmra.mrb[0].mxu0 %v4461
        %v6279 = vpop.f32.mrb[0].mxu0
        %v6280 = vadd.f32 %v6183, %v6279
        %v6281 = vpop.f32.mrb[0].mxu0
        %v6282 = vpop.f32.mrb[0].mxu0
        %v6283 = vadd.f32 %v6186, %v6282
        %v6284 = vpop.f32.mrb[0].mxu0
        %6285 = vmatprep.mubr.bf16.mxu0 %v4478
        %6286 = vmatmul.mubr.bf16.gmra.mrb[0].mxu0 %v4477
        %v6287 = vpop.f32.mrb[0].mxu0
        %v6288 = vadd.f32 %v6191, %v6287
        %v6289 = vpop.f32.mrb[0].mxu0
        %v6290 = vpop.f32.mrb[0].mxu0
        %v6291 = vadd.f32 %v6194, %v6290
        %v6292 = vpop.f32.mrb[0].mxu0
        %6293 = vmatprep.mubr.bf16.mxu0 %v4494
        %6294 = vmatmul.mubr.bf16.gmra.mrb[0].mxu0 %v4493
        %v6295 = vpop.f32.mrb[0].mxu0
        %v6296 = vadd.f32 %v6199, %v6295
        %v6297 = vpop.f32.mrb[0].mxu0
        %v6298 = vpop.f32.mrb[0].mxu0
        %v6299 = vadd.f32 %v6202, %v6298
        %v6300 = vpop.f32.mrb[0].mxu0
        %6301 = vdwg.mxu0
        %v6302 = vadd.f32 %v2629, %v6240
        %v6303 = vadd.f32 %v2630, %v6243
        %v6304 = vadd.f32 %v2631, %v6248
        %v6305 = vadd.f32 %v2632, %v6251
        %v6306 = vadd.f32 %v2633, %v6256
        %v6307 = vadd.f32 %v2634, %v6259
        %v6308 = vadd.f32 %v2635, %v6264
        %v6309 = vadd.f32 %v2636, %v6267
        %v6310 = vadd.f32 %v2637, %v6272
        %v6311 = vadd.f32 %v2638, %v6275
        %v6312 = vadd.f32 %v2639, %v6280
        %v6313 = vadd.f32 %v2640, %v6283
        %v6314 = vadd.f32 %v2641, %v6288
        %v6315 = vadd.f32 %v2642, %v6291
        %v6316 = vadd.f32 %v2643, %v6296
        %v6317 = vadd.f32 %v2644, %v6299
        %6318 = vst.msk [vmem:[#allocation2] sm:$0xff] %vm1038, %v6302
        %6319 = vst.msk [vmem:[#allocation2 + $0x8] sm:$0xff] %vm1038, %v6303
        %6320 = vst.msk [vmem:[#allocation2 + $0x10] sm:$0xff] %vm1038, %v6304
        %6321 = vst.msk [vmem:[#allocation2 + $0x18] sm:$0xff] %vm1038, %v6305
        %6322 = vst.msk [vmem:[#allocation2 + $0x20] sm:$0xff] %vm1038, %v6306
        %6323 = vst.msk [vmem:[#allocation2 + $0x28] sm:$0xff] %vm1038, %v6307
        %6324 = vst.msk [vmem:[#allocation2 + $0x30] sm:$0xff] %vm1038, %v6308
        %6325 = vst.msk [vmem:[#allocation2 + $0x38] sm:$0xff] %vm1038, %v6309
        %6326 = vst.msk [vmem:[#allocation2 + $0x40] sm:$0xff] %vm1038, %v6310
        %6327 = vst.msk [vmem:[#allocation2 + $0x48] sm:$0xff] %vm1038, %v6311
        %6328 = vst.msk [vmem:[#allocation2 + $0x50] sm:$0xff] %vm1038, %v6312
        %6329 = vst.msk [vmem:[#allocation2 + $0x58] sm:$0xff] %vm1038, %v6313
        %6330 = vst.msk [vmem:[#allocation2 + $0x60] sm:$0xff] %vm1038, %v6314
        %6331 = vst.msk [vmem:[#allocation2 + $0x68] sm:$0xff] %vm1038, %v6315
        %6332 = vst.msk [vmem:[#allocation2 + $0x70] sm:$0xff] %vm1038, %v6316
        %6333 = vst.msk [vmem:[#allocation2 + $0x78] sm:$0xff] %vm1038, %v6317
        %p6334 = scmp.eq.s32.totalorder %s40, 1
        // Predicated region
        $region109: #{tpu_custom_call.1} parent=103 // pred_check
          %p6335 = pneg %p6334
        $region110: #{tpu_custom_call.1} parent=103 // pred_check_branch
          %6337 = sbr.rel (%p6335) target = $region112
        $region111: #{tpu_custom_call.1} parent=103 // pred_region
          %v6338 = vld [vmem:[%s17] sm:$0x1]
          %v6339 = vld [vmem:[%s18] sm:$0x1]
          %vm6340 = vcmask 253952
          %v6341 = vsel %vm6340, %v6302, 0.0
          %6342 = vadd.xlane.f32.xlu0 %v6341
          %v6343 = vpop.xlane.xlu0 %6342
          %v6344 = vmul.f32 %v6343, %v1087
          %v6345 = vsub.f32 %v6302, %v6344
          %v6346 = vmul.f32 %v6345, %v6345
          %v6347 = vsel %vm6340, %v6346, 0.0
          %6348 = vadd.xlane.f32.xlu0 %v6347
          %v6349 = vpop.xlane.xlu0 %6348
          %v6350 = vmul.f32 %v6349, %v1087
          %v6351 = vadd.f32 %v6350, 1e-05
          %v6352 = vrsqrt.pop %v6351
          %v6353 = vmul.f32 %v6345, %v6352
          %v6354 = vmul.f32 %v6353, %v6338
          %v6355 = vadd.f32 %v6354, %v6339
          %v6356 = vpack.c.bf16 %v6355, %v6355
          %v6357 = vld [vmem:[%s19] sm:$0xf]
          %v6358 = vld [vmem:[%s19 + $0x4] sm:$0xf]
          %v6359 = vld [vmem:[%s19 + $0x8] sm:$0xf]
          %v6360 = vld [vmem:[%s19 + $0xc] sm:$0xf]
          %v6361 = vld [vmem:[%s20] sm:$0x1]
          %v6366 = vunpack.c.l.b16 %v6357
          %v6367 = vunpack.c.l.b16 %v6358
          %v6368 = vunpack.c.l.b16 %v6359
          %v6369 = vunpack.c.l.b16 %v6360
          %v6370 = vpack.c.b16 %v6367, %v6366
          %v6371 = vpack.c.b16 %v6369, %v6368
          %v6375 = vsel %vm1038, %v6356, 0
          %6377 = vmatprep.subr.bf16.mxu0 0
          %6378 = vmatpush1.bf16.msra.mxu0 %v6370
          %6379 = vmatprep.subr.bf16.mxu0 0
          %6380 = vmatpush1.bf16.msra.mxu0 %v6371
          %6381 = vmatprep.subr.bf16.mxu0 0
          %6382 = vmatpush1.bf16.msra.mxu0 0
          %6383 = vmatprep.subr.bf16.mxu0 0
          %6384 = vmatpush1.bf16.msra.mxu0 0
          %6385 = vmatprep.subr.bf16.mxu0 0
          %6386 = vmatpush1.bf16.msra.mxu0 0
          %6387 = vmatprep.subr.bf16.mxu0 0
          %6388 = vmatpush1.bf16.msra.mxu0 0
          %6389 = vmatprep.subr.bf16.mxu0 0
          %6390 = vmatpush1.bf16.msra.mxu0 0
          %6391 = vmatprep.subr.bf16.mxu0 0
          %6392 = vmatpush1.bf16.msra.mxu0 0
          %6393 = vmatprep.subr.bf16.mxu0 0
          %6394 = vmatpush1.bf16.msra.mxu0 0
          %6395 = vmatprep.subr.bf16.mxu0 0
          %6396 = vmatpush1.bf16.msra.mxu0 0
          %6397 = vmatprep.subr.bf16.mxu0 0
          %6398 = vmatpush1.bf16.msra.mxu0 0
          %6399 = vmatprep.subr.bf16.mxu0 0
          %6400 = vmatpush1.bf16.msra.mxu0 0
          %6401 = vmatprep.subr.bf16.mxu0 0
          %6402 = vmatpush1.bf16.msra.mxu0 0
          %6403 = vmatprep.subr.bf16.mxu0 0
          %6404 = vmatpush1.bf16.msra.mxu0 0
          %6405 = vmatprep.subr.bf16.mxu0 0
          %6406 = vmatpush1.bf16.msra.mxu0 0
          %6407 = vmatprep.subr.bf16.mxu0 0
          %6408 = vmatpush1.bf16.msra.mxu0 0
          %6409 = vmatprep.mubr.bf16.mxu0 0
          %6410 = vmatmul.mubr.bf16.gmra.mrb[0].mxu0 %v6375
          %v6411 = vpop.f32.mrb[0].mxu0
          %v6412 = vadd.f32 %v6361, %v6411
          %v6413 = vpop.f32.mrb[0].mxu0
          %v6414 = vpop.f32.mrb[0].mxu0
          %v6415 = vpop.f32.mrb[0].mxu0
          %6416 = vdwg.mxu0
          %6417 = vst [vmem:[%s810] sm:$0x1] %v6412
        $region112: #{tpu_custom_call.1} parent=103 // pred_fallthru
          _
        %s6418 = sand.u32 %s561, 1
        %s6419 = scalar_lea.sflag [#allocation4], %s6418
        %s6420 = sand.u32 %s561, 1
        %s6421 = scalar_lea.vmem [#allocation3], %s6420
        // Predicated region
        $region113: #{tpu_custom_call.1} parent=103 // pred_check
          %p6422 = pneg %p571
        $region114: #{tpu_custom_call.1} parent=103 // pred_check_branch
          %6424 = sbr.rel (%p6422) target = $region116
        $region115: #{tpu_custom_call.1} parent=103 // pred_region
          %s6426 = ssub.s32 16, 16
          %6427 = vsyncadd %s6419, %s6426
          %s6428 = smul.addr %s39, 16
          %s6429 = scalar_lea.hbm %s21, %s6428
          %s6431 = sshll.u32 %s6421, 4
          %s6432 = int_to_ptr.vmem [resolvable:$true] %s6431
          %6434 = dma.vmem_to_hbm [thread:$0]  %s6432, 16, %s6429, %s6419
        $region116: #{tpu_custom_call.1} parent=103 // pred_fallthru
          _
      $region104: #{tpu_custom_call.1} parent=5 // pred_fallthru
        _
      %p6435 = scmp.le.s32.totalorder 2, %s30
      // Predicated region
      $region117: #{tpu_custom_call.1} parent=5 // pred_check
        %p6436 = pneg %p6435
      $region118: #{tpu_custom_call.1} parent=5 // pred_check_branch
        %6438 = sbr.rel (%p6436) target = $region120
      $region119: #{tpu_custom_call.1} parent=5 // pred_region
        %s6439 = ssub.s32 %s30, 2
        // Predicated region
        $region121: #{tpu_custom_call.1} parent=119 // pred_check
          %p6440 = pneg %p577
        $region122: #{tpu_custom_call.1} parent=119 // pred_check_branch
          %6442 = sbr.rel (%p6440) target = $region124
        $region123: #{tpu_custom_call.1} parent=119 // pred_region
          %s6443 = sand.u32 %s562, 1
          %s6444 = scalar_lea.sflag [#allocation4], %s6443
          %s6445 = sand.u32 %s562, 1
          %s6446 = scalar_lea.vmem [#allocation3], %s6445
          %6447 = dma.done %s6444, 16
        $region124: #{tpu_custom_call.1} parent=119 // pred_fallthru
          _
      $region120: #{tpu_custom_call.1} parent=5 // pred_fallthru
        _
    $region6: #{tpu_custom_call.1} parent=1 // loop_footer
      %s34 = sadd.s32 1, %s30
    $region7: #{tpu_custom_call.1} parent=1 // loop_footer_branch
      %29 = sbr.rel target = $region3
    $region8: #{tpu_custom_call.1} parent=1 // loop_exit
      _
    %6448 = vsyncpa [#allocation4], 1
    %s6449 = scalar_lea.sflag [#allocation4], 1
    %6450 = vsyncpa %s6449, 1

</llo_original>
